<compile_context>
chip_gen: v5e
topology: v5e:2x2
jax: 0.10.0
libtpu: 0.0.40
codegen_flags: <defaults>
</compile_context>

<pallas_src>
import jax
import jax.numpy as jnp
from jax import lax
from jax.experimental import pallas as pl
from jax.experimental.pallas import tpu as pltpu


def _bottleneck_kernel(x_ref, w1_ref, b1_ref, w2_ref, b2_ref, w3_ref, b3_ref,
                       out_ref, pad_ref, col_ref):
    nb, H, W, Cin = x_ref.shape
    gw = w1_ref.shape[1]
    Cout = w3_ref.shape[1]

    # ---- conv1 (1x1, BN scale pre-folded into w1) + bias + relu ----------
    x_flat = x_ref[...].reshape(nb * H * W, Cin)             # f32, kept for residual
    h1 = jnp.dot(x_flat.astype(jnp.bfloat16), w1_ref[...],
                 preferred_element_type=jnp.float32)
    h1 = jnp.maximum(h1 + b1_ref[...], 0.0)                  # (M, gw) f32

    # ---- stage conv2 input into a zero-bordered bf16 pad scratch ---------
    # Zero only the 1-pixel border (interior is fully overwritten each step).
    pad_ref[:, 0:1, :, :] = jnp.zeros((nb, 1, W + 2, gw), pad_ref.dtype)
    pad_ref[:, H + 1:H + 2, :, :] = jnp.zeros((nb, 1, W + 2, gw), pad_ref.dtype)
    pad_ref[:, :, 0:1, :] = jnp.zeros((nb, H + 2, 1, gw), pad_ref.dtype)
    pad_ref[:, :, W + 1:W + 2, :] = jnp.zeros((nb, H + 2, 1, gw), pad_ref.dtype)
    pad_ref[:, 1:H + 1, 1:W + 1, :] = (
        h1.reshape(nb, H, W, gw).astype(pad_ref.dtype))

    # ---- conv2 (3x3, stride 1, pad 1): im2col -> single K = 9*gw matmul --
    t = 0
    for dh in range(3):
        for dw in range(3):
            col_ref[:, :, :, t * gw:(t + 1) * gw] = (
                pad_ref[:, dh:dh + H, dw:dw + W, :])
            t += 1
    patches = col_ref[...].reshape(nb * H * W, 9 * gw)       # bf16
    h2 = jnp.dot(patches, w2_ref[...], preferred_element_type=jnp.float32)
    h2 = jnp.maximum(h2 + b2_ref[...], 0.0)                  # (M, gw) f32

    # ---- conv3 (1x1) + bias + residual + relu -----------------------------
    h3 = jnp.dot(h2.astype(jnp.bfloat16), w3_ref[...],
                 preferred_element_type=jnp.float32)
    out = jnp.maximum(h3 + b3_ref[...] + x_flat, 0.0)        # Cin == Cout
    out_ref[...] = out.reshape(nb, H, W, Cout).astype(out_ref.dtype)


def bottleneck_pallas(x_nchw, params, block_n=1):
    """x_nchw: (N, Cin, H, W) float32. Returns (N, Cout, H, W) float32."""
    (w1, s1, b1, w2, s2, b2, w3, s3, b3) = params
    # NOTE: in a full network keep activations NHWC end-to-end and drop these
    # transposes; they are only here to match the PyTorch NCHW interface.
    x = jnp.transpose(x_nchw, (0, 2, 3, 1)).astype(jnp.float32)
    N, H, W, Cin = x.shape
    gw = w1.shape[1]
    Cout = w3.shape[1]
    assert Cin == Cout, "downsample=None requires inplanes == planes*4"
    assert N % block_n == 0
    nb = block_n

    # Fold eval-mode BN scales into the conv weights (exact in f32), then cast
    # the matmul weights to bf16.  Biases stay in f32.
    w1f = (w1 * s1).astype(jnp.bfloat16)                                  # (Cin, gw)
    w2f = (w2 * s2.reshape(1, 1, 1, gw)).reshape(9 * gw, gw).astype(jnp.bfloat16)
    w3f = (w3 * s3).astype(jnp.bfloat16)                                  # (gw, Cout)
    b1f = b1.astype(jnp.float32)
    b2f = b2.astype(jnp.float32)
    b3f = b3.astype(jnp.float32)

    def const(shape):
        return pl.BlockSpec(shape, lambda n: (0,) * len(shape))

    out = pl.pallas_call(
        _bottleneck_kernel,
        out_shape=jax.ShapeDtypeStruct((N, H, W, Cout), jnp.float32),
        grid_spec=pltpu.PrefetchScalarGridSpec(
            num_scalar_prefetch=0,
            grid=(N // nb,),
            in_specs=[
                pl.BlockSpec((nb, H, W, Cin), lambda n: (n, 0, 0, 0)),
                const((Cin, gw)), const((1, gw)),
                const((9 * gw, gw)), const((1, gw)),
                const((gw, Cout)), const((1, Cout)),
            ],
            out_specs=pl.BlockSpec((nb, H, W, Cout), lambda n: (n, 0, 0, 0)),
            scratch_shapes=[
                pltpu.VMEM((nb, H + 2, W + 2, gw), jnp.bfloat16),   # padded act
                pltpu.VMEM((nb, H, W, 9 * gw), jnp.bfloat16),       # im2col cols
            ]),
        compiler_params=pltpu.CompilerParams(
            dimension_semantics=("parallel",),
            vmem_limit_bytes=32 * 1024 * 1024),
    )(x, w1f, b1f, w2f, b2f, w3f, b3f)
    return jnp.transpose(out, (0, 3, 1, 2))                  # NHWC -> NCHW


# ---------------------------------------------------------------------------
# Parameter construction (deterministic, synthetic) and pure-JAX reference.
# ---------------------------------------------------------------------------
def make_params(key, inplanes, planes):
    gw = planes            # group_width = planes * (64/64) * 1
    cout = planes * 4      # expansion = 4
    ks = jax.random.split(key, 15)
    eps = 1e-5

    def bn_fold(kg, kb, km, kv, c):
        gamma = 1.0 + 0.1 * jax.random.normal(kg, (c,), jnp.float32)
        beta = 0.1 * jax.random.normal(kb, (c,), jnp.float32)
        mean = 0.1 * jax.random.normal(km, (c,), jnp.float32)
        var = jnp.abs(jax.random.normal(kv, (c,), jnp.float32)) + 0.5
        scale = gamma / jnp.sqrt(var + eps)
        bias = beta - mean * scale
        return scale.reshape(1, c), bias.reshape(1, c)

    w1 = jax.random.normal(ks[0], (inplanes, gw), jnp.float32) / jnp.sqrt(1.0 * inplanes)
    s1, b1 = bn_fold(ks[1], ks[2], ks[3], ks[4], gw)
    w2 = jax.random.normal(ks[5], (3, 3, gw, gw), jnp.float32) / jnp.sqrt(9.0 * gw)
    s2, b2 = bn_fold(ks[6], ks[7], ks[8], ks[9], gw)
    w3 = jax.random.normal(ks[10], (gw, cout), jnp.float32) / jnp.sqrt(1.0 * gw)
    s3, b3 = bn_fold(ks[11], ks[12], ks[13], ks[14], cout)
    return (w1, s1, b1, w2, s2, b2, w3, s3, b3)


def bottleneck_ref(x_nchw, params):
    """Plain-JAX NCHW f32 reference (lax.conv), mirrors the PyTorch forward."""
    (w1, s1, b1, w2, s2, b2, w3, s3, b3) = params

    def conv(x, w_oihw, pad):
        return lax.conv_general_dilated(
            x, w_oihw, (1, 1), [(pad, pad), (pad, pad)],
            dimension_numbers=('NCHW', 'OIHW', 'NCHW'),
            precision=lax.Precision.HIGHEST)

    def bn(x, s, b):
        return x * s.reshape(1, -1, 1, 1) + b.reshape(1, -1, 1, 1)

    w1_oihw = jnp.transpose(w1)[:, :, None, None]            # (gw, Cin, 1, 1)
    w2_oihw = jnp.transpose(w2, (3, 2, 0, 1))                # (out, in, 3, 3)
    w3_oihw = jnp.transpose(w3)[:, :, None, None]            # (Cout, gw, 1, 1)

    out = jax.nn.relu(bn(conv(x_nchw, w1_oihw, 0), s1, b1))
    out = jax.nn.relu(bn(conv(out, w2_oihw, 1), s2, b2))
    out = bn(conv(out, w3_oihw, 0), s3, b3)
    return jax.nn.relu(out + x_nchw)


# TODO(synk): radix>1 SplAtConv2d / rSoftMax branch, DropBlock2D (training-time
# stateful RNG schedule), avd pooling / stride>1 / downsample and training-mode
# BatchNorm stats are not exercised by the default Bottleneck config and are
# not implemented here.

if __name__ == "__main__":
    key = jax.random.PRNGKey(0)
    kx, kp = jax.random.split(key)

    # ResNeSt-stage sizes chosen so every channel axis is a multiple of 128
    # (lane-dense DMA, tile-aligned im2col writes): inplanes = 4 * planes.
    N, planes, H, W = 2, 128, 16, 16
    inplanes = planes * 4                                    # 512; residual adds cleanly
    x = jax.random.normal(kx, (N, inplanes, H, W), jnp.float32)
    params = make_params(kp, inplanes, planes)

    out = jax.block_until_ready(bottleneck_pallas(x, params, block_n=1))
    ref = jax.block_until_ready(bottleneck_ref(x, params))

    assert out.shape == (N, planes * 4, H, W)
    err = float(jnp.max(jnp.abs(out - ref) / (1.0 + jnp.abs(ref))))
    assert err < 5e-2, err                                   # bf16 matmuls, f32 accumulate

    print("KERNEL_OK")
</pallas_src>

<mosaic_0001>
module attributes {stable_mosaic.version = 11 : i64} {
  func.func @_bottleneck_kernel(%arg0: i32, %arg1: memref<1x16x16x512xf32, #tpu.memory_space<vmem>>, %arg2: memref<512x128xbf16, #tpu.memory_space<vmem>>, %arg3: memref<1x128xf32, #tpu.memory_space<vmem>>, %arg4: memref<1152x128xbf16, #tpu.memory_space<vmem>>, %arg5: memref<1x128xf32, #tpu.memory_space<vmem>>, %arg6: memref<128x512xbf16, #tpu.memory_space<vmem>>, %arg7: memref<1x512xf32, #tpu.memory_space<vmem>>, %arg8: memref<1x16x16x512xf32, #tpu.memory_space<vmem>>, %arg9: memref<1x18x18x128xbf16, #tpu.memory_space<vmem>>, %arg10: memref<1x16x16x1152xbf16, #tpu.memory_space<vmem>>) attributes {dimension_semantics = [#tpu.dimension_semantics<parallel>], iteration_bounds = array<i64: 2>, scalar_prefetch = 0 : i64, scratch_operands = 2 : i64, tpu.core_type = #tpu.core_type<tc>, window_params = [{transform_indices = @transform_0, window_bounds = array<i64: 1, 16, 16, 512>}, {pipeline_mode = #tpu.pipeline_mode<synchronous>, transform_indices = @transform_1, window_bounds = array<i64: 512, 128>}, {pipeline_mode = #tpu.pipeline_mode<synchronous>, transform_indices = @transform_2, window_bounds = array<i64: 1, 128>}, {pipeline_mode = #tpu.pipeline_mode<synchronous>, transform_indices = @transform_3, window_bounds = array<i64: 1152, 128>}, {pipeline_mode = #tpu.pipeline_mode<synchronous>, transform_indices = @transform_4, window_bounds = array<i64: 1, 128>}, {pipeline_mode = #tpu.pipeline_mode<synchronous>, transform_indices = @transform_5, window_bounds = array<i64: 128, 512>}, {pipeline_mode = #tpu.pipeline_mode<synchronous>, transform_indices = @transform_6, window_bounds = array<i64: 1, 512>}, {transform_indices = @transform_7, window_bounds = array<i64: 1, 16, 16, 512>}]} {
    %c0 = arith.constant 0 : index
    %c0_0 = arith.constant 0 : index
    %c0_1 = arith.constant 0 : index
    %c0_2 = arith.constant 0 : index
    %0 = vector.load %arg1[%c0, %c0_0, %c0_1, %c0_2] : memref<1x16x16x512xf32, #tpu.memory_space<vmem>>, vector<1x16x16x512xf32>
    %1 = vector.shape_cast %0 : vector<1x16x16x512xf32> to vector<256x512xf32>
    %2 = arith.truncf %1 : vector<256x512xf32> to vector<256x512xbf16>
    %c0_3 = arith.constant 0 : index
    %c0_4 = arith.constant 0 : index
    %3 = vector.load %arg2[%c0_3, %c0_4] : memref<512x128xbf16, #tpu.memory_space<vmem>>, vector<512x128xbf16>
    %cst = arith.constant dense<0.000000e+00> : vector<256x128xf32>
    %4 = tpu.matmul %2, %3, %cst {dimension_numbers = #tpu.dot_dimension_numbers<[1], [0], [0], [1], [0, 0, 1, 1], [], []>} : vector<256x512xbf16>, vector<512x128xbf16>, vector<256x128xf32> -> vector<256x128xf32>
    %c0_5 = arith.constant 0 : index
    %c0_6 = arith.constant 0 : index
    %5 = vector.load %arg3[%c0_5, %c0_6] : memref<1x128xf32, #tpu.memory_space<vmem>>, vector<1x128xf32>
    %6 = vector.broadcast %5 : vector<1x128xf32> to vector<256x128xf32>
    %7 = arith.addf %4, %6 : vector<256x128xf32>
    %cst_7 = arith.constant 0.000000e+00 : f32
    %8 = vector.broadcast %cst_7 : f32 to vector<256x128xf32>
    %9 = arith.maximumf %7, %8 : vector<256x128xf32>
    %cst_8 = arith.constant 0.000000e+00 : bf16
    %10 = vector.broadcast %cst_8 : bf16 to vector<1x1x18x128xbf16>
    %c0_9 = arith.constant 0 : index
    %c0_10 = arith.constant 0 : index
    %c0_11 = arith.constant 0 : index
    %c0_12 = arith.constant 0 : index
    %11 = vector.load %arg9[%c0_9, %c0_10, %c0_11, %c0_12] : memref<1x18x18x128xbf16, #tpu.memory_space<vmem>>, vector<1x1x18x128xbf16>
    tpu.vector_store %arg9[%c0_9, %c0_10, %c0_11, %c0_12], %10 {strides = array<i32>} : memref<1x18x18x128xbf16, #tpu.memory_space<vmem>>, vector<1x1x18x128xbf16>,
    %cst_13 = arith.constant 0.000000e+00 : bf16
    %12 = vector.broadcast %cst_13 : bf16 to vector<1x1x18x128xbf16>
    %c0_14 = arith.constant 0 : index
    %c17 = arith.constant 17 : index
    %c0_15 = arith.constant 0 : index
    %c0_16 = arith.constant 0 : index
    %13 = vector.load %arg9[%c0_14, %c17, %c0_15, %c0_16] : memref<1x18x18x128xbf16, #tpu.memory_space<vmem>>, vector<1x1x18x128xbf16>
    tpu.vector_store %arg9[%c0_14, %c17, %c0_15, %c0_16], %12 {strides = array<i32>} : memref<1x18x18x128xbf16, #tpu.memory_space<vmem>>, vector<1x1x18x128xbf16>,
    %cst_17 = arith.constant 0.000000e+00 : bf16
    %14 = vector.broadcast %cst_17 : bf16 to vector<1x18x1x128xbf16>
    %c0_18 = arith.constant 0 : index
    %c0_19 = arith.constant 0 : index
    %c0_20 = arith.constant 0 : index
    %c0_21 = arith.constant 0 : index
    %15 = vector.load %arg9[%c0_18, %c0_19, %c0_20, %c0_21] : memref<1x18x18x128xbf16, #tpu.memory_space<vmem>>, vector<1x18x1x128xbf16>
    tpu.vector_store %arg9[%c0_18, %c0_19, %c0_20, %c0_21], %14 {strides = array<i32>} : memref<1x18x18x128xbf16, #tpu.memory_space<vmem>>, vector<1x18x1x128xbf16>,
    %cst_22 = arith.constant 0.000000e+00 : bf16
    %16 = vector.broadcast %cst_22 : bf16 to vector<1x18x1x128xbf16>
    %c0_23 = arith.constant 0 : index
    %c0_24 = arith.constant 0 : index
    %c17_25 = arith.constant 17 : index
    %c0_26 = arith.constant 0 : index
    %17 = vector.load %arg9[%c0_23, %c0_24, %c17_25, %c0_26] : memref<1x18x18x128xbf16, #tpu.memory_space<vmem>>, vector<1x18x1x128xbf16>
    tpu.vector_store %arg9[%c0_23, %c0_24, %c17_25, %c0_26], %16 {strides = array<i32>} : memref<1x18x18x128xbf16, #tpu.memory_space<vmem>>, vector<1x18x1x128xbf16>,
    %18 = vector.shape_cast %9 : vector<256x128xf32> to vector<1x16x16x128xf32>
    %19 = arith.truncf %18 : vector<1x16x16x128xf32> to vector<1x16x16x128xbf16>
    %c0_27 = arith.constant 0 : index
    %c1 = arith.constant 1 : index
    %c1_28 = arith.constant 1 : index
    %c0_29 = arith.constant 0 : index
    %20 = vector.load %arg9[%c0_27, %c1, %c1_28, %c0_29] : memref<1x18x18x128xbf16, #tpu.memory_space<vmem>>, vector<1x16x16x128xbf16>
    tpu.vector_store %arg9[%c0_27, %c1, %c1_28, %c0_29], %19 {strides = array<i32>} : memref<1x18x18x128xbf16, #tpu.memory_space<vmem>>, vector<1x16x16x128xbf16>,
    %c0_30 = arith.constant 0 : index
    %c0_31 = arith.constant 0 : index
    %c0_32 = arith.constant 0 : index
    %c0_33 = arith.constant 0 : index
    %21 = vector.load %arg9[%c0_30, %c0_31, %c0_32, %c0_33] : memref<1x18x18x128xbf16, #tpu.memory_space<vmem>>, vector<1x16x16x128xbf16>
    %c0_34 = arith.constant 0 : index
    %c0_35 = arith.constant 0 : index
    %c0_36 = arith.constant 0 : index
    %c0_37 = arith.constant 0 : index
    %22 = vector.load %arg10[%c0_34, %c0_35, %c0_36, %c0_37] : memref<1x16x16x1152xbf16, #tpu.memory_space<vmem>>, vector<1x16x16x128xbf16>
    tpu.vector_store %arg10[%c0_34, %c0_35, %c0_36, %c0_37], %21 {strides = array<i32>} : memref<1x16x16x1152xbf16, #tpu.memory_space<vmem>>, vector<1x16x16x128xbf16>,
    %c0_38 = arith.constant 0 : index
    %c0_39 = arith.constant 0 : index
    %c1_40 = arith.constant 1 : index
    %c0_41 = arith.constant 0 : index
    %23 = vector.load %arg9[%c0_38, %c0_39, %c1_40, %c0_41] : memref<1x18x18x128xbf16, #tpu.memory_space<vmem>>, vector<1x16x16x128xbf16>
    %c0_42 = arith.constant 0 : index
    %c0_43 = arith.constant 0 : index
    %c0_44 = arith.constant 0 : index
    %c128 = arith.constant 128 : index
    %24 = vector.load %arg10[%c0_42, %c0_43, %c0_44, %c128] : memref<1x16x16x1152xbf16, #tpu.memory_space<vmem>>, vector<1x16x16x128xbf16>
    tpu.vector_store %arg10[%c0_42, %c0_43, %c0_44, %c128], %23 {strides = array<i32>} : memref<1x16x16x1152xbf16, #tpu.memory_space<vmem>>, vector<1x16x16x128xbf16>,
    %c0_45 = arith.constant 0 : index
    %c0_46 = arith.constant 0 : index
    %c2 = arith.constant 2 : index
    %c0_47 = arith.constant 0 : index
    %25 = vector.load %arg9[%c0_45, %c0_46, %c2, %c0_47] : memref<1x18x18x128xbf16, #tpu.memory_space<vmem>>, vector<1x16x16x128xbf16>
    %c0_48 = arith.constant 0 : index
    %c0_49 = arith.constant 0 : index
    %c0_50 = arith.constant 0 : index
    %c256 = arith.constant 256 : index
    %26 = vector.load %arg10[%c0_48, %c0_49, %c0_50, %c256] : memref<1x16x16x1152xbf16, #tpu.memory_space<vmem>>, vector<1x16x16x128xbf16>
    tpu.vector_store %arg10[%c0_48, %c0_49, %c0_50, %c256], %25 {strides = array<i32>} : memref<1x16x16x1152xbf16, #tpu.memory_space<vmem>>, vector<1x16x16x128xbf16>,
    %c0_51 = arith.constant 0 : index
    %c1_52 = arith.constant 1 : index
    %c0_53 = arith.constant 0 : index
    %c0_54 = arith.constant 0 : index
    %27 = vector.load %arg9[%c0_51, %c1_52, %c0_53, %c0_54] : memref<1x18x18x128xbf16, #tpu.memory_space<vmem>>, vector<1x16x16x128xbf16>
    %c0_55 = arith.constant 0 : index
    %c0_56 = arith.constant 0 : index
    %c0_57 = arith.constant 0 : index
    %c384 = arith.constant 384 : index
    %28 = vector.load %arg10[%c0_55, %c0_56, %c0_57, %c384] : memref<1x16x16x1152xbf16, #tpu.memory_space<vmem>>, vector<1x16x16x128xbf16>
    tpu.vector_store %arg10[%c0_55, %c0_56, %c0_57, %c384], %27 {strides = array<i32>} : memref<1x16x16x1152xbf16, #tpu.memory_space<vmem>>, vector<1x16x16x128xbf16>,
    %c0_58 = arith.constant 0 : index
    %c1_59 = arith.constant 1 : index
    %c1_60 = arith.constant 1 : index
    %c0_61 = arith.constant 0 : index
    %29 = vector.load %arg9[%c0_58, %c1_59, %c1_60, %c0_61] : memref<1x18x18x128xbf16, #tpu.memory_space<vmem>>, vector<1x16x16x128xbf16>
    %c0_62 = arith.constant 0 : index
    %c0_63 = arith.constant 0 : index
    %c0_64 = arith.constant 0 : index
    %c512 = arith.constant 512 : index
    %30 = vector.load %arg10[%c0_62, %c0_63, %c0_64, %c512] : memref<1x16x16x1152xbf16, #tpu.memory_space<vmem>>, vector<1x16x16x128xbf16>
    tpu.vector_store %arg10[%c0_62, %c0_63, %c0_64, %c512], %29 {strides = array<i32>} : memref<1x16x16x1152xbf16, #tpu.memory_space<vmem>>, vector<1x16x16x128xbf16>,
    %c0_65 = arith.constant 0 : index
    %c1_66 = arith.constant 1 : index
    %c2_67 = arith.constant 2 : index
    %c0_68 = arith.constant 0 : index
    %31 = vector.load %arg9[%c0_65, %c1_66, %c2_67, %c0_68] : memref<1x18x18x128xbf16, #tpu.memory_space<vmem>>, vector<1x16x16x128xbf16>
    %c0_69 = arith.constant 0 : index
    %c0_70 = arith.constant 0 : index
    %c0_71 = arith.constant 0 : index
    %c640 = arith.constant 640 : index
    %32 = vector.load %arg10[%c0_69, %c0_70, %c0_71, %c640] : memref<1x16x16x1152xbf16, #tpu.memory_space<vmem>>, vector<1x16x16x128xbf16>
    tpu.vector_store %arg10[%c0_69, %c0_70, %c0_71, %c640], %31 {strides = array<i32>} : memref<1x16x16x1152xbf16, #tpu.memory_space<vmem>>, vector<1x16x16x128xbf16>,
    %c0_72 = arith.constant 0 : index
    %c2_73 = arith.constant 2 : index
    %c0_74 = arith.constant 0 : index
    %c0_75 = arith.constant 0 : index
    %33 = vector.load %arg9[%c0_72, %c2_73, %c0_74, %c0_75] : memref<1x18x18x128xbf16, #tpu.memory_space<vmem>>, vector<1x16x16x128xbf16>
    %c0_76 = arith.constant 0 : index
    %c0_77 = arith.constant 0 : index
    %c0_78 = arith.constant 0 : index
    %c768 = arith.constant 768 : index
    %34 = vector.load %arg10[%c0_76, %c0_77, %c0_78, %c768] : memref<1x16x16x1152xbf16, #tpu.memory_space<vmem>>, vector<1x16x16x128xbf16>
    tpu.vector_store %arg10[%c0_76, %c0_77, %c0_78, %c768], %33 {strides = array<i32>} : memref<1x16x16x1152xbf16, #tpu.memory_space<vmem>>, vector<1x16x16x128xbf16>,
    %c0_79 = arith.constant 0 : index
    %c2_80 = arith.constant 2 : index
    %c1_81 = arith.constant 1 : index
    %c0_82 = arith.constant 0 : index
    %35 = vector.load %arg9[%c0_79, %c2_80, %c1_81, %c0_82] : memref<1x18x18x128xbf16, #tpu.memory_space<vmem>>, vector<1x16x16x128xbf16>
    %c0_83 = arith.constant 0 : index
    %c0_84 = arith.constant 0 : index
    %c0_85 = arith.constant 0 : index
    %c896 = arith.constant 896 : index
    %36 = vector.load %arg10[%c0_83, %c0_84, %c0_85, %c896] : memref<1x16x16x1152xbf16, #tpu.memory_space<vmem>>, vector<1x16x16x128xbf16>
    tpu.vector_store %arg10[%c0_83, %c0_84, %c0_85, %c896], %35 {strides = array<i32>} : memref<1x16x16x1152xbf16, #tpu.memory_space<vmem>>, vector<1x16x16x128xbf16>,
    %c0_86 = arith.constant 0 : index
    %c2_87 = arith.constant 2 : index
    %c2_88 = arith.constant 2 : index
    %c0_89 = arith.constant 0 : index
    %37 = vector.load %arg9[%c0_86, %c2_87, %c2_88, %c0_89] : memref<1x18x18x128xbf16, #tpu.memory_space<vmem>>, vector<1x16x16x128xbf16>
    %c0_90 = arith.constant 0 : index
    %c0_91 = arith.constant 0 : index
    %c0_92 = arith.constant 0 : index
    %c1024 = arith.constant 1024 : index
    %38 = vector.load %arg10[%c0_90, %c0_91, %c0_92, %c1024] : memref<1x16x16x1152xbf16, #tpu.memory_space<vmem>>, vector<1x16x16x128xbf16>
    tpu.vector_store %arg10[%c0_90, %c0_91, %c0_92, %c1024], %37 {strides = array<i32>} : memref<1x16x16x1152xbf16, #tpu.memory_space<vmem>>, vector<1x16x16x128xbf16>,
    %c0_93 = arith.constant 0 : index
    %c0_94 = arith.constant 0 : index
    %c0_95 = arith.constant 0 : index
    %c0_96 = arith.constant 0 : index
    %39 = vector.load %arg10[%c0_93, %c0_94, %c0_95, %c0_96] : memref<1x16x16x1152xbf16, #tpu.memory_space<vmem>>, vector<1x16x16x1152xbf16>
    %40 = vector.shape_cast %39 : vector<1x16x16x1152xbf16> to vector<256x1152xbf16>
    %c0_97 = arith.constant 0 : index
    %c0_98 = arith.constant 0 : index
    %41 = vector.load %arg4[%c0_97, %c0_98] : memref<1152x128xbf16, #tpu.memory_space<vmem>>, vector<1152x128xbf16>
    %cst_99 = arith.constant dense<0.000000e+00> : vector<256x128xf32>
    %42 = tpu.matmul %40, %41, %cst_99 {dimension_numbers = #tpu.dot_dimension_numbers<[1], [0], [0], [1], [0, 0, 1, 1], [], []>} : vector<256x1152xbf16>, vector<1152x128xbf16>, vector<256x128xf32> -> vector<256x128xf32>
    %c0_100 = arith.constant 0 : index
    %c0_101 = arith.constant 0 : index
    %43 = vector.load %arg5[%c0_100, %c0_101] : memref<1x128xf32, #tpu.memory_space<vmem>>, vector<1x128xf32>
    %44 = vector.broadcast %43 : vector<1x128xf32> to vector<256x128xf32>
    %45 = arith.addf %42, %44 : vector<256x128xf32>
    %cst_102 = arith.constant 0.000000e+00 : f32
    %46 = vector.broadcast %cst_102 : f32 to vector<256x128xf32>
    %47 = arith.maximumf %45, %46 : vector<256x128xf32>
    %48 = arith.truncf %47 : vector<256x128xf32> to vector<256x128xbf16>
    %c0_103 = arith.constant 0 : index
    %c0_104 = arith.constant 0 : index
    %49 = vector.load %arg6[%c0_103, %c0_104] : memref<128x512xbf16, #tpu.memory_space<vmem>>, vector<128x512xbf16>
    %cst_105 = arith.constant dense<0.000000e+00> : vector<256x512xf32>
    %50 = tpu.matmul %48, %49, %cst_105 {dimension_numbers = #tpu.dot_dimension_numbers<[1], [0], [0], [1], [0, 0, 1, 1], [], []>} : vector<256x128xbf16>, vector<128x512xbf16>, vector<256x512xf32> -> vector<256x512xf32>
    %c0_106 = arith.constant 0 : index
    %c0_107 = arith.constant 0 : index
    %51 = vector.load %arg7[%c0_106, %c0_107] : memref<1x512xf32, #tpu.memory_space<vmem>>, vector<1x512xf32>
    %52 = vector.broadcast %51 : vector<1x512xf32> to vector<256x512xf32>
    %53 = arith.addf %50, %52 : vector<256x512xf32>
    %54 = arith.addf %53, %1 : vector<256x512xf32>
    %cst_108 = arith.constant 0.000000e+00 : f32
    %55 = vector.broadcast %cst_108 : f32 to vector<256x512xf32>
    %56 = arith.maximumf %54, %55 : vector<256x512xf32>
    %57 = vector.shape_cast %56 : vector<256x512xf32> to vector<1x16x16x512xf32>
    %c0_109 = arith.constant 0 : index
    %c0_110 = arith.constant 0 : index
    %c0_111 = arith.constant 0 : index
    %c0_112 = arith.constant 0 : index
    %58 = vector.load %arg8[%c0_109, %c0_110, %c0_111, %c0_112] : memref<1x16x16x512xf32, #tpu.memory_space<vmem>>, vector<1x16x16x512xf32>
    tpu.vector_store %arg8[%c0_109, %c0_110, %c0_111, %c0_112], %57 {strides = array<i32>} : memref<1x16x16x512xf32, #tpu.memory_space<vmem>>, vector<1x16x16x512xf32>,
    return
  }
  func.func @transform_0(%arg0: i32) -> (i32, i32, i32, i32) {
    %c0_i32 = arith.constant 0 : i32
    %c0_i32_0 = arith.constant 0 : i32
    %c0_i32_1 = arith.constant 0 : i32
    %c0_i32_2 = arith.constant 0 : i32
    return %arg0, %c0_i32, %c0_i32_0, %c0_i32_1 : i32, i32, i32, i32
  }
  func.func @transform_1(%arg0: i32) -> (i32, i32) {
    %c0_i32 = arith.constant 0 : i32
    %c0_i32_0 = arith.constant 0 : i32
    %c0_i32_1 = arith.constant 0 : i32
    return %c0_i32, %c0_i32_0 : i32, i32
  }
  func.func @transform_2(%arg0: i32) -> (i32, i32) {
    %c0_i32 = arith.constant 0 : i32
    %c0_i32_0 = arith.constant 0 : i32
    %c0_i32_1 = arith.constant 0 : i32
    return %c0_i32, %c0_i32_0 : i32, i32
  }
  func.func @transform_3(%arg0: i32) -> (i32, i32) {
    %c0_i32 = arith.constant 0 : i32
    %c0_i32_0 = arith.constant 0 : i32
    %c0_i32_1 = arith.constant 0 : i32
    return %c0_i32, %c0_i32_0 : i32, i32
  }
  func.func @transform_4(%arg0: i32) -> (i32, i32) {
    %c0_i32 = arith.constant 0 : i32
    %c0_i32_0 = arith.constant 0 : i32
    %c0_i32_1 = arith.constant 0 : i32
    return %c0_i32, %c0_i32_0 : i32, i32
  }
  func.func @transform_5(%arg0: i32) -> (i32, i32) {
    %c0_i32 = arith.constant 0 : i32
    %c0_i32_0 = arith.constant 0 : i32
    %c0_i32_1 = arith.constant 0 : i32
    return %c0_i32, %c0_i32_0 : i32, i32
  }
  func.func @transform_6(%arg0: i32) -> (i32, i32) {
    %c0_i32 = arith.constant 0 : i32
    %c0_i32_0 = arith.constant 0 : i32
    %c0_i32_1 = arith.constant 0 : i32
    return %c0_i32, %c0_i32_0 : i32, i32
  }
  func.func @transform_7(%arg0: i32) -> (i32, i32, i32, i32) {
    %c0_i32 = arith.constant 0 : i32
    %c0_i32_0 = arith.constant 0 : i32
    %c0_i32_1 = arith.constant 0 : i32
    %c0_i32_2 = arith.constant 0 : i32
    return %arg0, %c0_i32, %c0_i32_0, %c0_i32_1 : i32, i32, i32, i32
  }
}

</mosaic_0001>

<llo_original>
// kernel: tpu_custom_call.1
$region0: #{tpu_custom_call.1}
  #allocation0 [shape = 'u32[]', space=smem, size = 0x4, offset = 0x4, fixed_abs, tag = 'smem constant byte address 0x4 - core index']
  #allocation1 [shape = 'u32[72,128]{1,0:T(1,128)}', space=vmem, size = 0x9000, scoped, tag = 'internal scratch']
  #allocation2 [shape = 'bf16[1,18,18,128]{3,2,1,0:T(8,128)(2,1)}', space=vmem, size = 0x1b000, scoped, tag = 'scratch operand']
  #allocation3 [shape = 'bf16[1,16,16,1152]{3,2,1,0:T(8,128)(2,1)}', space=vmem, size = 0x90000, scoped, tag = 'scratch operand']
  %s0 = inlined_call_operand.hbm [shape: f32[2,16,16,512], index: 0, kind: input, shape index: {}]
  %s1 = inlined_call_operand.hbm [shape: bf16[512,128], index: 1, kind: input, shape index: {}]
  %s2 = inlined_call_operand.vmem [shape: f32[1,128], index: 2, kind: input, shape index: {}]
  %s3 = inlined_call_operand.hbm [shape: bf16[1152,128], index: 3, kind: input, shape index: {}]
  %s4 = inlined_call_operand.hbm [shape: f32[1,128], index: 4, kind: input, shape index: {}]
  %s5 = inlined_call_operand.hbm [shape: bf16[128,512], index: 5, kind: input, shape index: {}]
  %s6 = inlined_call_operand.vmem [shape: f32[1,512], index: 6, kind: input, shape index: {}]
  %s7 = inlined_call_operand.hbm [shape: f32[2,16,16,512], index: 7, kind: output, shape index: {}]
  %s8 = sld [smem:[#allocation0]]
  $region81: #{tpu_custom_call.1} parent=0
    _
  %s10 = ssub.s32 1, %s8
  %s11 = scalar_select 0, %s10, %s8
  $region1: #{tpu_custom_call.1} parent=0
    #allocation4 [shape = 'u8[1048576]{0}', space=vmem, size = 0x100000, scoped, tag = 'input window, operand 0']
    #allocation5 [shape = 's32[2]{0}', space=sflag, size = 0x8, scoped, tag = 'scoped memory for tpu_custom_call.1']
    #allocation6 [shape = 's32[2]{0}', space=sflag, size = 0x8, scoped, tag = 'scoped memory for tpu_custom_call.1']
    #allocation7 [shape = 'u8[131072]{0}', space=vmem, size = 0x20000, scoped, tag = 'input window, operand 1, single buffered']
    #allocation8 [shape = 's32[1]{0}', space=sflag, size = 0x4, scoped, tag = 'scoped memory for tpu_custom_call.1']
    #allocation9 [shape = 'u8[294912]{0}', space=vmem, size = 0x48000, scoped, tag = 'input window, operand 3, single buffered']
    #allocation10 [shape = 'u8[512]{0}', space=vmem, size = 0x400, scoped, tag = 'input window, operand 4, single buffered']
    #allocation11 [shape = 's32[1]{0}', space=sflag, size = 0x4, scoped, tag = 'scoped memory for tpu_custom_call.1']
    #allocation12 [shape = 'u8[131072]{0}', space=vmem, size = 0x20000, scoped, tag = 'input window, operand 5, single buffered']
    #allocation13 [shape = 'u8[1048576]{0}', space=vmem, size = 0x100000, scoped, tag = 'output window, operand 0']
    %12 = vsyncpa [#allocation5], 0
    %s13 = scalar_lea.sflag [#allocation5], 1
    %14 = vsyncpa %s13, 0
    %15 = vsyncpa [#allocation8], 0
    %16 = vsyncpa [#allocation11], 0
    %17 = vsyncpa [#allocation6], 0
    %s18 = scalar_lea.sflag [#allocation6], 1
    %19 = vsyncpa %s18, 0
    loop: start=0, step=1, limit=4
    $region2: #{tpu_custom_call.1} parent=1 // loop_pre_header
      _
    $region3: #{tpu_custom_call.1} parent=1 // loop_header
      %s21 = sphi 0, %s25
      %p22 = scmp.ge.s32.totalorder %s21, 4
      %s31 = sphi 0, %s33
      %s34 = sphi 0, %s31
      %s35 = sphi 0, %s34
      %s51 = sphi 0, %s35
      %s55 = sphi 0, %s55
      %s57 = sphi 0, %s55
      %s58 = sphi 0, %s57
      %s72 = sphi 0, %s58
      %s76 = sphi 0, %s76
      %s78 = sphi 0, %s76
      %s79 = sphi 0, %s78
      %s93 = sphi 0, %s79
      %s97 = sphi 0, %s97
      %s99 = sphi 0, %s97
      %s100 = sphi 0, %s99
      %s114 = sphi 0, %s100
      %s118 = sphi 0, %s118
      %s120 = sphi 0, %s118
      %s121 = sphi 0, %s120
      %s135 = sphi 0, %s121
      %s139 = sphi 0, %s139
      %s141 = sphi 0, %s139
      %s142 = sphi 0, %s141
      %s156 = sphi 0, %s142
      %s160 = sphi 0, %s160
      %s162 = sphi 0, %s160
      %s163 = sphi 0, %s162
      %s177 = sphi 0, %s163
      %s183 = sphi 0, %s185
      %s186 = sphi 0, %s183
      %s187 = sphi 0, %s186
      %s203 = sphi 0, %s187
    $region4: #{tpu_custom_call.1} parent=1 // loop_header_branch
      %24 = sbr.rel (%p22) target = $region8
    $region5: #{tpu_custom_call.1} parent=1 // loop_body
      %s26 = ssub.s32 %s21, 1
      %s27 = ssub.s32 %s21, 2
      %s28 = sadd.s32 %s21, 1
      %s29 = ssub.s32 %s21, %s28
      %p30 = scmp.eq.s32.totalorder %s29, 0
      %s32 = sadd.s32 %s31, 1
      %s33 = scalar_select %p30, %s31, %s32
      %p36 = pneg %p30
      %p37 = scmp.eq.s32.totalorder %s21, 1
      %p38 = por %p36, %p37
      %p39 = scmp.ne.s32.totalorder %s31, %s34
      %p40 = scmp.eq.s32.totalorder %s21, 0
      %p41 = por %p39, %p40
      %p42 = scmp.ne.s32.totalorder %s31, %s34
      %p43 = scmp.eq.s32.totalorder %s26, 1
      %p44 = por %p42, %p43
      %p45 = scmp.ne.s32.totalorder %s34, %s35
      %p46 = scmp.eq.s32.totalorder %s26, 0
      %p47 = por %p45, %p46
      %p48 = scmp.ne.s32.totalorder %s34, %s35
      %p49 = scmp.eq.s32.totalorder %s27, 1
      %p50 = por %p48, %p49
      %p52 = scmp.ne.s32.totalorder %s35, %s51
      %p53 = scmp.eq.s32.totalorder %s27, 0
      %p54 = por %p52, %p53
      %s56 = sadd.s32 %s55, 1
      %p59 = scmp.eq.s32.totalorder %s21, 1
      %p60 = scmp.ne.s32.totalorder %s55, %s57
      %p61 = scmp.eq.s32.totalorder %s21, 0
      %p62 = por %p60, %p61
      %p63 = scmp.ne.s32.totalorder %s55, %s57
      %p64 = scmp.eq.s32.totalorder %s26, 1
      %p65 = por %p63, %p64
      %p66 = scmp.ne.s32.totalorder %s57, %s58
      %p67 = scmp.eq.s32.totalorder %s26, 0
      %p68 = por %p66, %p67
      %p69 = scmp.ne.s32.totalorder %s57, %s58
      %p70 = scmp.eq.s32.totalorder %s27, 1
      %p71 = por %p69, %p70
      %p73 = scmp.ne.s32.totalorder %s58, %s72
      %p74 = scmp.eq.s32.totalorder %s27, 0
      %p75 = por %p73, %p74
      %s77 = sadd.s32 %s76, 1
      %p80 = scmp.eq.s32.totalorder %s21, 1
      %p81 = scmp.ne.s32.totalorder %s76, %s78
      %p82 = scmp.eq.s32.totalorder %s21, 0
      %p83 = por %p81, %p82
      %p84 = scmp.ne.s32.totalorder %s76, %s78
      %p85 = scmp.eq.s32.totalorder %s26, 1
      %p86 = por %p84, %p85
      %p87 = scmp.ne.s32.totalorder %s78, %s79
      %p88 = scmp.eq.s32.totalorder %s26, 0
      %p89 = por %p87, %p88
      %p90 = scmp.ne.s32.totalorder %s78, %s79
      %p91 = scmp.eq.s32.totalorder %s27, 1
      %p92 = por %p90, %p91
      %p94 = scmp.ne.s32.totalorder %s79, %s93
      %p95 = scmp.eq.s32.totalorder %s27, 0
      %p96 = por %p94, %p95
      %s98 = sadd.s32 %s97, 1
      %p101 = scmp.eq.s32.totalorder %s21, 1
      %p102 = scmp.ne.s32.totalorder %s97, %s99
      %p103 = scmp.eq.s32.totalorder %s21, 0
      %p104 = por %p102, %p103
      %p105 = scmp.ne.s32.totalorder %s97, %s99
      %p106 = scmp.eq.s32.totalorder %s26, 1
      %p107 = por %p105, %p106
      %p108 = scmp.ne.s32.totalorder %s99, %s100
      %p109 = scmp.eq.s32.totalorder %s26, 0
      %p110 = por %p108, %p109
      %p111 = scmp.ne.s32.totalorder %s99, %s100
      %p112 = scmp.eq.s32.totalorder %s27, 1
      %p113 = por %p111, %p112
      %p115 = scmp.ne.s32.totalorder %s100, %s114
      %p116 = scmp.eq.s32.totalorder %s27, 0
      %p117 = por %p115, %p116
      %s119 = sadd.s32 %s118, 1
      %p122 = scmp.eq.s32.totalorder %s21, 1
      %p123 = scmp.ne.s32.totalorder %s118, %s120
      %p124 = scmp.eq.s32.totalorder %s21, 0
      %p125 = por %p123, %p124
      %p126 = scmp.ne.s32.totalorder %s118, %s120
      %p127 = scmp.eq.s32.totalorder %s26, 1
      %p128 = por %p126, %p127
      %p129 = scmp.ne.s32.totalorder %s120, %s121
      %p130 = scmp.eq.s32.totalorder %s26, 0
      %p131 = por %p129, %p130
      %p132 = scmp.ne.s32.totalorder %s120, %s121
      %p133 = scmp.eq.s32.totalorder %s27, 1
      %p134 = por %p132, %p133
      %p136 = scmp.ne.s32.totalorder %s121, %s135
      %p137 = scmp.eq.s32.totalorder %s27, 0
      %p138 = por %p136, %p137
      %s140 = sadd.s32 %s139, 1
      %p143 = scmp.eq.s32.totalorder %s21, 1
      %p144 = scmp.ne.s32.totalorder %s139, %s141
      %p145 = scmp.eq.s32.totalorder %s21, 0
      %p146 = por %p144, %p145
      %p147 = scmp.ne.s32.totalorder %s139, %s141
      %p148 = scmp.eq.s32.totalorder %s26, 1
      %p149 = por %p147, %p148
      %p150 = scmp.ne.s32.totalorder %s141, %s142
      %p151 = scmp.eq.s32.totalorder %s26, 0
      %p152 = por %p150, %p151
      %p153 = scmp.ne.s32.totalorder %s141, %s142
      %p154 = scmp.eq.s32.totalorder %s27, 1
      %p155 = por %p153, %p154
      %p157 = scmp.ne.s32.totalorder %s142, %s156
      %p158 = scmp.eq.s32.totalorder %s27, 0
      %p159 = por %p157, %p158
      %s161 = sadd.s32 %s160, 1
      %p164 = scmp.eq.s32.totalorder %s21, 1
      %p165 = scmp.ne.s32.totalorder %s160, %s162
      %p166 = scmp.eq.s32.totalorder %s21, 0
      %p167 = por %p165, %p166
      %p168 = scmp.ne.s32.totalorder %s160, %s162
      %p169 = scmp.eq.s32.totalorder %s26, 1
      %p170 = por %p168, %p169
      %p171 = scmp.ne.s32.totalorder %s162, %s163
      %p172 = scmp.eq.s32.totalorder %s26, 0
      %p173 = por %p171, %p172
      %p174 = scmp.ne.s32.totalorder %s162, %s163
      %p175 = scmp.eq.s32.totalorder %s27, 1
      %p176 = por %p174, %p175
      %p178 = scmp.ne.s32.totalorder %s163, %s177
      %p179 = scmp.eq.s32.totalorder %s27, 0
      %p180 = por %p178, %p179
      %s181 = ssub.s32 %s21, %s28
      %p182 = scmp.eq.s32.totalorder %s181, 0
      %s184 = sadd.s32 %s183, 1
      %s185 = scalar_select %p182, %s183, %s184
      %p188 = pneg %p182
      %p189 = scmp.eq.s32.totalorder %s21, 1
      %p190 = por %p188, %p189
      %p191 = scmp.ne.s32.totalorder %s183, %s186
      %p192 = scmp.eq.s32.totalorder %s21, 0
      %p193 = por %p191, %p192
      %p194 = scmp.ne.s32.totalorder %s183, %s186
      %p195 = scmp.eq.s32.totalorder %s26, 1
      %p196 = por %p194, %p195
      %p197 = scmp.ne.s32.totalorder %s186, %s187
      %p198 = scmp.eq.s32.totalorder %s26, 0
      %p199 = por %p197, %p198
      %p200 = scmp.ne.s32.totalorder %s186, %s187
      %p201 = scmp.eq.s32.totalorder %s27, 1
      %p202 = por %p200, %p201
      %p204 = scmp.ne.s32.totalorder %s187, %s203
      %p205 = scmp.eq.s32.totalorder %s27, 0
      %p206 = por %p204, %p205
      %p207 = scmp.le.s32.totalorder 1, %s21
      %p208 = scmp.lt.s32.totalorder %s21, 3
      %p209 = pnand %p207, %p208
      %p210 = pneg %p209
      // Predicated region
      $region9: #{tpu_custom_call.1} parent=5 // pred_check
        _
      $region10: #{tpu_custom_call.1} parent=5 // pred_check_branch
        %212 = sbr.rel (%p209) target = $region12
      $region11: #{tpu_custom_call.1} parent=5 // pred_region
        %s213 = ssub.s32 %s21, 1
        // Predicated region
        $region13: #{tpu_custom_call.1} parent=11 // pred_check
          %p214 = pneg %p68
        $region14: #{tpu_custom_call.1} parent=11 // pred_check_branch
          %216 = sbr.rel (%p214) target = $region16
        $region15: #{tpu_custom_call.1} parent=11 // pred_region
          %218 = vsyncadd [#allocation8], 0
          %s219 = sshll.u32 %s1, 4
          %s220 = int_to_ptr.hbm [resolvable:$true] %s219
          %s221 = sshll.u32 [#allocation7], 4
          %s222 = int_to_ptr.vmem [resolvable:$true] %s221
          %227 = dma.hbm_to_vmem [thread:$0]  %s220, 4096, %s222, [#allocation8], 64, 64, 4
        $region16: #{tpu_custom_call.1} parent=11 // pred_fallthru
          _
        // Predicated region
        $region17: #{tpu_custom_call.1} parent=11 // pred_check
          %p228 = pneg %p89
        $region18: #{tpu_custom_call.1} parent=11 // pred_check_branch
          %230 = sbr.rel (%p228) target = $region20
        $region19: #{tpu_custom_call.1} parent=11 // pred_region
          _
        $region20: #{tpu_custom_call.1} parent=11 // pred_fallthru
          _
        // Predicated region
        $region21: #{tpu_custom_call.1} parent=11 // pred_check
          %p231 = pneg %p110
        $region22: #{tpu_custom_call.1} parent=11 // pred_check_branch
          %233 = sbr.rel (%p231) target = $region24
        $region23: #{tpu_custom_call.1} parent=11 // pred_region
          %235 = vsyncadd [#allocation8], 0
          %s236 = sshll.u32 %s3, 4
          %s237 = int_to_ptr.hbm [resolvable:$true] %s236
          %s238 = sshll.u32 [#allocation9], 4
          %s239 = int_to_ptr.vmem [resolvable:$true] %s238
          %244 = dma.hbm_to_vmem [thread:$0]  %s237, 9216, %s239, [#allocation8], 64, 64, 4
        $region24: #{tpu_custom_call.1} parent=11 // pred_fallthru
          _
        // Predicated region
        $region25: #{tpu_custom_call.1} parent=11 // pred_check
          %p245 = pneg %p131
        $region26: #{tpu_custom_call.1} parent=11 // pred_check_branch
          %247 = sbr.rel (%p245) target = $region28
        $region27: #{tpu_custom_call.1} parent=11 // pred_region
          %249 = vsyncadd [#allocation11], 0
          %s251 = sshll.u32 %s4, 4
          %s252 = int_to_ptr.hbm [resolvable:$true] %s251
          %s253 = sshll.u32 [#allocation10], 4
          %s254 = int_to_ptr.vmem [resolvable:$true] %s253
          %256 = dma.hbm_to_vmem [thread:$0]  %s252, 16, %s254, [#allocation11]
        $region28: #{tpu_custom_call.1} parent=11 // pred_fallthru
          _
        // Predicated region
        $region29: #{tpu_custom_call.1} parent=11 // pred_check
          %p257 = pneg %p152
        $region30: #{tpu_custom_call.1} parent=11 // pred_check_branch
          %259 = sbr.rel (%p257) target = $region32
        $region31: #{tpu_custom_call.1} parent=11 // pred_region
          %261 = vsyncadd [#allocation11], 0
          %s262 = sshll.u32 %s5, 4
          %s263 = int_to_ptr.hbm [resolvable:$true] %s262
          %s264 = sshll.u32 [#allocation12], 4
          %s265 = int_to_ptr.vmem [resolvable:$true] %s264
          %270 = dma.hbm_to_vmem [thread:$0]  %s263, 4096, %s265, [#allocation11], 256, 256, 16
        $region32: #{tpu_custom_call.1} parent=11 // pred_fallthru
          _
        // Predicated region
        $region33: #{tpu_custom_call.1} parent=11 // pred_check
          %p271 = pneg %p173
        $region34: #{tpu_custom_call.1} parent=11 // pred_check_branch
          %273 = sbr.rel (%p271) target = $region36
        $region35: #{tpu_custom_call.1} parent=11 // pred_region
          _
        $region36: #{tpu_custom_call.1} parent=11 // pred_fallthru
          _
      $region12: #{tpu_custom_call.1} parent=5 // pred_fallthru
        _
      %p274 = scmp.lt.s32.totalorder %s21, 2
      // Predicated region
      $region37: #{tpu_custom_call.1} parent=5 // pred_check
        %p275 = pneg %p274
      $region38: #{tpu_custom_call.1} parent=5 // pred_check_branch
        %277 = sbr.rel (%p275) target = $region40
      $region39: #{tpu_custom_call.1} parent=5 // pred_region
        // Predicated region
        $region41: #{tpu_custom_call.1} parent=39 // pred_check
          %p278 = pneg %p41
        $region42: #{tpu_custom_call.1} parent=39 // pred_check_branch
          %280 = sbr.rel (%p278) target = $region44
        $region43: #{tpu_custom_call.1} parent=39 // pred_region
          %s281 = sand.u32 %s31, 1
          %s282 = scalar_lea.sflag [#allocation5], %s281
          %s283 = sand.u32 %s31, 1
          %s284 = smul.addr %s283, 1024
          %s285 = scalar_lea.vmem [#allocation4], %s284
          %287 = vsyncadd %s282, 0
          %s288 = smul.addr %s21, 128
          %s289 = smul.addr %s288, 8
          %s290 = scalar_lea.hbm %s0, %s289
          %s291 = sshll.u32 %s290, 4
          %s292 = int_to_ptr.hbm [resolvable:$true] %s291
          %s293 = sshll.u32 %s285, 4
          %s294 = int_to_ptr.vmem [resolvable:$true] %s293
          %299 = dma.hbm_to_vmem [thread:$0]  %s292, 16384, %s294, %s282, 512, 512, 32
        $region44: #{tpu_custom_call.1} parent=39 // pred_fallthru
          _
      $region40: #{tpu_custom_call.1} parent=5 // pred_fallthru
        _
      %p300 = scmp.le.s32.totalorder 1, %s21
      %p301 = scmp.lt.s32.totalorder %s21, 3
      %p302 = pnand %p300, %p301
      %p303 = pneg %p302
      // Predicated region
      $region45: #{tpu_custom_call.1} parent=5 // pred_check
        _
      $region46: #{tpu_custom_call.1} parent=5 // pred_check_branch
        %305 = sbr.rel (%p302) target = $region48
      $region47: #{tpu_custom_call.1} parent=5 // pred_region
        %s306 = ssub.s32 %s21, 1
        %s307 = sand.u32 %s34, 1
        %s308 = scalar_lea.sflag [#allocation5], %s307
        %s309 = sand.u32 %s34, 1
        %s310 = smul.addr %s309, 1024
        %s311 = scalar_lea.vmem [#allocation4], %s310
        // Predicated region
        $region49: #{tpu_custom_call.1} parent=47 // pred_check
          %p312 = pneg %p47
        $region50: #{tpu_custom_call.1} parent=47 // pred_check_branch
          %314 = sbr.rel (%p312) target = $region52
        $region51: #{tpu_custom_call.1} parent=47 // pred_region
          %316 = dma.done %s308, 16384
        $region52: #{tpu_custom_call.1} parent=47 // pred_fallthru
          _
        // Predicated region
        $region53: #{tpu_custom_call.1} parent=47 // pred_check
          %p317 = pneg %p68
        $region54: #{tpu_custom_call.1} parent=47 // pred_check_branch
          %319 = sbr.rel (%p317) target = $region56
        $region55: #{tpu_custom_call.1} parent=47 // pred_region
          %321 = dma.done [#allocation8], 4096
        $region56: #{tpu_custom_call.1} parent=47 // pred_fallthru
          _
        // Predicated region
        $region57: #{tpu_custom_call.1} parent=47 // pred_check
          %p322 = pneg %p110
        $region58: #{tpu_custom_call.1} parent=47 // pred_check_branch
          %324 = sbr.rel (%p322) target = $region60
        $region59: #{tpu_custom_call.1} parent=47 // pred_region
          %326 = dma.done [#allocation8], 9216
        $region60: #{tpu_custom_call.1} parent=47 // pred_fallthru
          _
        // Predicated region
        $region61: #{tpu_custom_call.1} parent=47 // pred_check
          %p327 = pneg %p131
        $region62: #{tpu_custom_call.1} parent=47 // pred_check_branch
          %329 = sbr.rel (%p327) target = $region64
        $region63: #{tpu_custom_call.1} parent=47 // pred_region
          %331 = dma.done [#allocation11], 16
        $region64: #{tpu_custom_call.1} parent=47 // pred_fallthru
          _
        // Predicated region
        $region65: #{tpu_custom_call.1} parent=47 // pred_check
          %p332 = pneg %p152
        $region66: #{tpu_custom_call.1} parent=47 // pred_check_branch
          %334 = sbr.rel (%p332) target = $region68
        $region67: #{tpu_custom_call.1} parent=47 // pred_region
          %336 = dma.done [#allocation11], 4096
        $region68: #{tpu_custom_call.1} parent=47 // pred_fallthru
          _
        %s337 = sand.u32 %s34, 1
        %s338 = scalar_lea.sflag [#allocation5], %s337
        %s339 = sand.u32 %s34, 1
        %s340 = smul.addr %s339, 1024
        %s341 = scalar_lea.vmem [#allocation4], %s340
        %p342 = pneg %p47
        %p343 = pneg %p44
        %p344 = pneg %p68
        %p345 = pneg %p65
        %p346 = pneg %p89
        %p347 = pneg %p86
        %p348 = pneg %p110
        %p349 = pneg %p107
        %p350 = pneg %p131
        %p351 = pneg %p128
        %p352 = pneg %p152
        %p353 = pneg %p149
        %p354 = pneg %p173
        %p355 = pneg %p170
        %p356 = pneg %p199
        %p357 = pneg %p196
        %s358 = sand.u32 %s186, 1
        %s359 = scalar_lea.sflag [#allocation6], %s358
        %s360 = sand.u32 %s186, 1
        %s361 = smul.addr %s360, 1024
        %s362 = scalar_lea.vmem [#allocation13], %s361
        %v364 = vld [vmem:[%s311] sm:$0xff]
        %v365 = vld [vmem:[%s311 + $0x8] sm:$0xff]
        %v366 = vld [vmem:[%s311 + $0x10] sm:$0xff]
        %v367 = vld [vmem:[%s311 + $0x18] sm:$0xff]
        %v368 = vld [vmem:[%s311 + $0x20] sm:$0xff]
        %v369 = vld [vmem:[%s311 + $0x28] sm:$0xff]
        %v370 = vld [vmem:[%s311 + $0x30] sm:$0xff]
        %v371 = vld [vmem:[%s311 + $0x38] sm:$0xff]
        %v372 = vld [vmem:[%s311 + $0x40] sm:$0xff]
        %v373 = vld [vmem:[%s311 + $0x48] sm:$0xff]
        %v374 = vld [vmem:[%s311 + $0x50] sm:$0xff]
        %v375 = vld [vmem:[%s311 + $0x58] sm:$0xff]
        %v376 = vld [vmem:[%s311 + $0x60] sm:$0xff]
        %v377 = vld [vmem:[%s311 + $0x68] sm:$0xff]
        %v378 = vld [vmem:[%s311 + $0x70] sm:$0xff]
        %v379 = vld [vmem:[%s311 + $0x78] sm:$0xff]
        %v380 = vld [vmem:[%s311 + $0x80] sm:$0xff]
        %v381 = vld [vmem:[%s311 + $0x88] sm:$0xff]
        %v382 = vld [vmem:[%s311 + $0x90] sm:$0xff]
        %v383 = vld [vmem:[%s311 + $0x98] sm:$0xff]
        %v384 = vld [vmem:[%s311 + $0xa0] sm:$0xff]
        %v385 = vld [vmem:[%s311 + $0xa8] sm:$0xff]
        %v386 = vld [vmem:[%s311 + $0xb0] sm:$0xff]
        %v387 = vld [vmem:[%s311 + $0xb8] sm:$0xff]
        %v388 = vld [vmem:[%s311 + $0xc0] sm:$0xff]
        %v389 = vld [vmem:[%s311 + $0xc8] sm:$0xff]
        %v390 = vld [vmem:[%s311 + $0xd0] sm:$0xff]
        %v391 = vld [vmem:[%s311 + $0xd8] sm:$0xff]
        %v392 = vld [vmem:[%s311 + $0xe0] sm:$0xff]
        %v393 = vld [vmem:[%s311 + $0xe8] sm:$0xff]
        %v394 = vld [vmem:[%s311 + $0xf0] sm:$0xff]
        %v395 = vld [vmem:[%s311 + $0xf8] sm:$0xff]
        %v396 = vld [vmem:[%s311 + $0x100] sm:$0xff]
        %v397 = vld [vmem:[%s311 + $0x108] sm:$0xff]
        %v398 = vld [vmem:[%s311 + $0x110] sm:$0xff]
        %v399 = vld [vmem:[%s311 + $0x118] sm:$0xff]
        %v400 = vld [vmem:[%s311 + $0x120] sm:$0xff]
        %v401 = vld [vmem:[%s311 + $0x128] sm:$0xff]
        %v402 = vld [vmem:[%s311 + $0x130] sm:$0xff]
        %v403 = vld [vmem:[%s311 + $0x138] sm:$0xff]
        %v404 = vld [vmem:[%s311 + $0x140] sm:$0xff]
        %v405 = vld [vmem:[%s311 + $0x148] sm:$0xff]
        %v406 = vld [vmem:[%s311 + $0x150] sm:$0xff]
        %v407 = vld [vmem:[%s311 + $0x158] sm:$0xff]
        %v408 = vld [vmem:[%s311 + $0x160] sm:$0xff]
        %v409 = vld [vmem:[%s311 + $0x168] sm:$0xff]
        %v410 = vld [vmem:[%s311 + $0x170] sm:$0xff]
        %v411 = vld [vmem:[%s311 + $0x178] sm:$0xff]
        %v412 = vld [vmem:[%s311 + $0x180] sm:$0xff]
        %v413 = vld [vmem:[%s311 + $0x188] sm:$0xff]
        %v414 = vld [vmem:[%s311 + $0x190] sm:$0xff]
        %v415 = vld [vmem:[%s311 + $0x198] sm:$0xff]
        %v416 = vld [vmem:[%s311 + $0x1a0] sm:$0xff]
        %v417 = vld [vmem:[%s311 + $0x1a8] sm:$0xff]
        %v418 = vld [vmem:[%s311 + $0x1b0] sm:$0xff]
        %v419 = vld [vmem:[%s311 + $0x1b8] sm:$0xff]
        %v420 = vld [vmem:[%s311 + $0x1c0] sm:$0xff]
        %v421 = vld [vmem:[%s311 + $0x1c8] sm:$0xff]
        %v422 = vld [vmem:[%s311 + $0x1d0] sm:$0xff]
        %v423 = vld [vmem:[%s311 + $0x1d8] sm:$0xff]
        %v424 = vld [vmem:[%s311 + $0x1e0] sm:$0xff]
        %v425 = vld [vmem:[%s311 + $0x1e8] sm:$0xff]
        %v426 = vld [vmem:[%s311 + $0x1f0] sm:$0xff]
        %v427 = vld [vmem:[%s311 + $0x1f8] sm:$0xff]
        %v428 = vld [vmem:[%s311 + $0x200] sm:$0xff]
        %v429 = vld [vmem:[%s311 + $0x208] sm:$0xff]
        %v430 = vld [vmem:[%s311 + $0x210] sm:$0xff]
        %v431 = vld [vmem:[%s311 + $0x218] sm:$0xff]
        %v432 = vld [vmem:[%s311 + $0x220] sm:$0xff]
        %v433 = vld [vmem:[%s311 + $0x228] sm:$0xff]
        %v434 = vld [vmem:[%s311 + $0x230] sm:$0xff]
        %v435 = vld [vmem:[%s311 + $0x238] sm:$0xff]
        %v436 = vld [vmem:[%s311 + $0x240] sm:$0xff]
        %v437 = vld [vmem:[%s311 + $0x248] sm:$0xff]
        %v438 = vld [vmem:[%s311 + $0x250] sm:$0xff]
        %v439 = vld [vmem:[%s311 + $0x258] sm:$0xff]
        %v440 = vld [vmem:[%s311 + $0x260] sm:$0xff]
        %v441 = vld [vmem:[%s311 + $0x268] sm:$0xff]
        %v442 = vld [vmem:[%s311 + $0x270] sm:$0xff]
        %v443 = vld [vmem:[%s311 + $0x278] sm:$0xff]
        %v444 = vld [vmem:[%s311 + $0x280] sm:$0xff]
        %v445 = vld [vmem:[%s311 + $0x288] sm:$0xff]
        %v446 = vld [vmem:[%s311 + $0x290] sm:$0xff]
        %v447 = vld [vmem:[%s311 + $0x298] sm:$0xff]
        %v448 = vld [vmem:[%s311 + $0x2a0] sm:$0xff]
        %v449 = vld [vmem:[%s311 + $0x2a8] sm:$0xff]
        %v450 = vld [vmem:[%s311 + $0x2b0] sm:$0xff]
        %v451 = vld [vmem:[%s311 + $0x2b8] sm:$0xff]
        %v452 = vld [vmem:[%s311 + $0x2c0] sm:$0xff]
        %v453 = vld [vmem:[%s311 + $0x2c8] sm:$0xff]
        %v454 = vld [vmem:[%s311 + $0x2d0] sm:$0xff]
        %v455 = vld [vmem:[%s311 + $0x2d8] sm:$0xff]
        %v456 = vld [vmem:[%s311 + $0x2e0] sm:$0xff]
        %v457 = vld [vmem:[%s311 + $0x2e8] sm:$0xff]
        %v458 = vld [vmem:[%s311 + $0x2f0] sm:$0xff]
        %v459 = vld [vmem:[%s311 + $0x2f8] sm:$0xff]
        %v460 = vld [vmem:[%s311 + $0x300] sm:$0xff]
        %v461 = vld [vmem:[%s311 + $0x308] sm:$0xff]
        %v462 = vld [vmem:[%s311 + $0x310] sm:$0xff]
        %v463 = vld [vmem:[%s311 + $0x318] sm:$0xff]
        %v464 = vld [vmem:[%s311 + $0x320] sm:$0xff]
        %v465 = vld [vmem:[%s311 + $0x328] sm:$0xff]
        %v466 = vld [vmem:[%s311 + $0x330] sm:$0xff]
        %v467 = vld [vmem:[%s311 + $0x338] sm:$0xff]
        %v468 = vld [vmem:[%s311 + $0x340] sm:$0xff]
        %v469 = vld [vmem:[%s311 + $0x348] sm:$0xff]
        %v470 = vld [vmem:[%s311 + $0x350] sm:$0xff]
        %v471 = vld [vmem:[%s311 + $0x358] sm:$0xff]
        %v472 = vld [vmem:[%s311 + $0x360] sm:$0xff]
        %v473 = vld [vmem:[%s311 + $0x368] sm:$0xff]
        %v474 = vld [vmem:[%s311 + $0x370] sm:$0xff]
        %v475 = vld [vmem:[%s311 + $0x378] sm:$0xff]
        %v476 = vld [vmem:[%s311 + $0x380] sm:$0xff]
        %v477 = vld [vmem:[%s311 + $0x388] sm:$0xff]
        %v478 = vld [vmem:[%s311 + $0x390] sm:$0xff]
        %v479 = vld [vmem:[%s311 + $0x398] sm:$0xff]
        %v480 = vld [vmem:[%s311 + $0x3a0] sm:$0xff]
        %v481 = vld [vmem:[%s311 + $0x3a8] sm:$0xff]
        %v482 = vld [vmem:[%s311 + $0x3b0] sm:$0xff]
        %v483 = vld [vmem:[%s311 + $0x3b8] sm:$0xff]
        %v484 = vld [vmem:[%s311 + $0x3c0] sm:$0xff]
        %v485 = vld [vmem:[%s311 + $0x3c8] sm:$0xff]
        %v486 = vld [vmem:[%s311 + $0x3d0] sm:$0xff]
        %v487 = vld [vmem:[%s311 + $0x3d8] sm:$0xff]
        %v488 = vld [vmem:[%s311 + $0x3e0] sm:$0xff]
        %v489 = vld [vmem:[%s311 + $0x3e8] sm:$0xff]
        %v490 = vld [vmem:[%s311 + $0x3f0] sm:$0xff]
        %v491 = vld [vmem:[%s311 + $0x3f8] sm:$0xff]
        %v492 = vpack.c.bf16 %v368, %v364
        %v493 = vpack.c.bf16 %v369, %v365
        %v494 = vpack.c.bf16 %v370, %v366
        %v495 = vpack.c.bf16 %v371, %v367
        %v496 = vpack.c.bf16 %v376, %v372
        %v497 = vpack.c.bf16 %v377, %v373
        %v498 = vpack.c.bf16 %v378, %v374
        %v499 = vpack.c.bf16 %v379, %v375
        %v500 = vpack.c.bf16 %v384, %v380
        %v501 = vpack.c.bf16 %v385, %v381
        %v502 = vpack.c.bf16 %v386, %v382
        %v503 = vpack.c.bf16 %v387, %v383
        %v504 = vpack.c.bf16 %v392, %v388
        %v505 = vpack.c.bf16 %v393, %v389
        %v506 = vpack.c.bf16 %v394, %v390
        %v507 = vpack.c.bf16 %v395, %v391
        %v508 = vpack.c.bf16 %v400, %v396
        %v509 = vpack.c.bf16 %v401, %v397
        %v510 = vpack.c.bf16 %v402, %v398
        %v511 = vpack.c.bf16 %v403, %v399
        %v512 = vpack.c.bf16 %v408, %v404
        %v513 = vpack.c.bf16 %v409, %v405
        %v514 = vpack.c.bf16 %v410, %v406
        %v515 = vpack.c.bf16 %v411, %v407
        %v516 = vpack.c.bf16 %v416, %v412
        %v517 = vpack.c.bf16 %v417, %v413
        %v518 = vpack.c.bf16 %v418, %v414
        %v519 = vpack.c.bf16 %v419, %v415
        %v520 = vpack.c.bf16 %v424, %v420
        %v521 = vpack.c.bf16 %v425, %v421
        %v522 = vpack.c.bf16 %v426, %v422
        %v523 = vpack.c.bf16 %v427, %v423
        %v524 = vpack.c.bf16 %v432, %v428
        %v525 = vpack.c.bf16 %v433, %v429
        %v526 = vpack.c.bf16 %v434, %v430
        %v527 = vpack.c.bf16 %v435, %v431
        %v528 = vpack.c.bf16 %v440, %v436
        %v529 = vpack.c.bf16 %v441, %v437
        %v530 = vpack.c.bf16 %v442, %v438
        %v531 = vpack.c.bf16 %v443, %v439
        %v532 = vpack.c.bf16 %v448, %v444
        %v533 = vpack.c.bf16 %v449, %v445
        %v534 = vpack.c.bf16 %v450, %v446
        %v535 = vpack.c.bf16 %v451, %v447
        %v536 = vpack.c.bf16 %v456, %v452
        %v537 = vpack.c.bf16 %v457, %v453
        %v538 = vpack.c.bf16 %v458, %v454
        %v539 = vpack.c.bf16 %v459, %v455
        %v540 = vpack.c.bf16 %v464, %v460
        %v541 = vpack.c.bf16 %v465, %v461
        %v542 = vpack.c.bf16 %v466, %v462
        %v543 = vpack.c.bf16 %v467, %v463
        %v544 = vpack.c.bf16 %v472, %v468
        %v545 = vpack.c.bf16 %v473, %v469
        %v546 = vpack.c.bf16 %v474, %v470
        %v547 = vpack.c.bf16 %v475, %v471
        %v548 = vpack.c.bf16 %v480, %v476
        %v549 = vpack.c.bf16 %v481, %v477
        %v550 = vpack.c.bf16 %v482, %v478
        %v551 = vpack.c.bf16 %v483, %v479
        %v552 = vpack.c.bf16 %v488, %v484
        %v553 = vpack.c.bf16 %v489, %v485
        %v554 = vpack.c.bf16 %v490, %v486
        %v555 = vpack.c.bf16 %v491, %v487
        %v556 = vld [vmem:[#allocation7] sm:$0xf]
        %v557 = vld [vmem:[#allocation7 + $0x4] sm:$0xf]
        %v558 = vld [vmem:[#allocation7 + $0x8] sm:$0xf]
        %v559 = vld [vmem:[#allocation7 + $0xc] sm:$0xf]
        %v560 = vld [vmem:[#allocation7 + $0x10] sm:$0xf]
        %v561 = vld [vmem:[#allocation7 + $0x14] sm:$0xf]
        %v562 = vld [vmem:[#allocation7 + $0x18] sm:$0xf]
        %v563 = vld [vmem:[#allocation7 + $0x1c] sm:$0xf]
        %v564 = vld [vmem:[#allocation7 + $0x20] sm:$0xf]
        %v565 = vld [vmem:[#allocation7 + $0x24] sm:$0xf]
        %v566 = vld [vmem:[#allocation7 + $0x28] sm:$0xf]
        %v567 = vld [vmem:[#allocation7 + $0x2c] sm:$0xf]
        %v568 = vld [vmem:[#allocation7 + $0x30] sm:$0xf]
        %v569 = vld [vmem:[#allocation7 + $0x34] sm:$0xf]
        %v570 = vld [vmem:[#allocation7 + $0x38] sm:$0xf]
        %v571 = vld [vmem:[#allocation7 + $0x3c] sm:$0xf]
        %v572 = vld [vmem:[#allocation7 + $0x40] sm:$0xf]
        %v573 = vld [vmem:[#allocation7 + $0x44] sm:$0xf]
        %v574 = vld [vmem:[#allocation7 + $0x48] sm:$0xf]
        %v575 = vld [vmem:[#allocation7 + $0x4c] sm:$0xf]
        %v576 = vld [vmem:[#allocation7 + $0x50] sm:$0xf]
        %v577 = vld [vmem:[#allocation7 + $0x54] sm:$0xf]
        %v578 = vld [vmem:[#allocation7 + $0x58] sm:$0xf]
        %v579 = vld [vmem:[#allocation7 + $0x5c] sm:$0xf]
        %v580 = vld [vmem:[#allocation7 + $0x60] sm:$0xf]
        %v581 = vld [vmem:[#allocation7 + $0x64] sm:$0xf]
        %v582 = vld [vmem:[#allocation7 + $0x68] sm:$0xf]
        %v583 = vld [vmem:[#allocation7 + $0x6c] sm:$0xf]
        %v584 = vld [vmem:[#allocation7 + $0x70] sm:$0xf]
        %v585 = vld [vmem:[#allocation7 + $0x74] sm:$0xf]
        %v586 = vld [vmem:[#allocation7 + $0x78] sm:$0xf]
        %v587 = vld [vmem:[#allocation7 + $0x7c] sm:$0xf]
        %v588 = vld [vmem:[#allocation7 + $0x80] sm:$0xf]
        %v589 = vld [vmem:[#allocation7 + $0x84] sm:$0xf]
        %v590 = vld [vmem:[#allocation7 + $0x88] sm:$0xf]
        %v591 = vld [vmem:[#allocation7 + $0x8c] sm:$0xf]
        %v592 = vld [vmem:[#allocation7 + $0x90] sm:$0xf]
        %v593 = vld [vmem:[#allocation7 + $0x94] sm:$0xf]
        %v594 = vld [vmem:[#allocation7 + $0x98] sm:$0xf]
        %v595 = vld [vmem:[#allocation7 + $0x9c] sm:$0xf]
        %v596 = vld [vmem:[#allocation7 + $0xa0] sm:$0xf]
        %v597 = vld [vmem:[#allocation7 + $0xa4] sm:$0xf]
        %v598 = vld [vmem:[#allocation7 + $0xa8] sm:$0xf]
        %v599 = vld [vmem:[#allocation7 + $0xac] sm:$0xf]
        %v600 = vld [vmem:[#allocation7 + $0xb0] sm:$0xf]
        %v601 = vld [vmem:[#allocation7 + $0xb4] sm:$0xf]
        %v602 = vld [vmem:[#allocation7 + $0xb8] sm:$0xf]
        %v603 = vld [vmem:[#allocation7 + $0xbc] sm:$0xf]
        %v604 = vld [vmem:[#allocation7 + $0xc0] sm:$0xf]
        %v605 = vld [vmem:[#allocation7 + $0xc4] sm:$0xf]
        %v606 = vld [vmem:[#allocation7 + $0xc8] sm:$0xf]
        %v607 = vld [vmem:[#allocation7 + $0xcc] sm:$0xf]
        %v608 = vld [vmem:[#allocation7 + $0xd0] sm:$0xf]
        %v609 = vld [vmem:[#allocation7 + $0xd4] sm:$0xf]
        %v610 = vld [vmem:[#allocation7 + $0xd8] sm:$0xf]
        %v611 = vld [vmem:[#allocation7 + $0xdc] sm:$0xf]
        %v612 = vld [vmem:[#allocation7 + $0xe0] sm:$0xf]
        %v613 = vld [vmem:[#allocation7 + $0xe4] sm:$0xf]
        %v614 = vld [vmem:[#allocation7 + $0xe8] sm:$0xf]
        %v615 = vld [vmem:[#allocation7 + $0xec] sm:$0xf]
        %v616 = vld [vmem:[#allocation7 + $0xf0] sm:$0xf]
        %v617 = vld [vmem:[#allocation7 + $0xf4] sm:$0xf]
        %v618 = vld [vmem:[#allocation7 + $0xf8] sm:$0xf]
        %v619 = vld [vmem:[#allocation7 + $0xfc] sm:$0xf]
        %v620 = vld [vmem:[%s2] sm:$0x1]
        %v622 = vperm.slane %v620, 0
        %v688 = vunpack.c.l.b16 %v556
        %v689 = vunpack.c.l.b16 %v557
        %v690 = vunpack.c.l.b16 %v558
        %v691 = vunpack.c.l.b16 %v559
        %v692 = vunpack.c.l.b16 %v560
        %v693 = vunpack.c.l.b16 %v561
        %v694 = vunpack.c.l.b16 %v562
        %v695 = vunpack.c.l.b16 %v563
        %v696 = vunpack.c.l.b16 %v564
        %v697 = vunpack.c.l.b16 %v565
        %v698 = vunpack.c.l.b16 %v566
        %v699 = vunpack.c.l.b16 %v567
        %v700 = vunpack.c.l.b16 %v568
        %v701 = vunpack.c.l.b16 %v569
        %v702 = vunpack.c.l.b16 %v570
        %v703 = vunpack.c.l.b16 %v571
        %v704 = vunpack.c.l.b16 %v572
        %v705 = vunpack.c.l.b16 %v573
        %v706 = vunpack.c.l.b16 %v574
        %v707 = vunpack.c.l.b16 %v575
        %v708 = vunpack.c.l.b16 %v576
        %v709 = vunpack.c.l.b16 %v577
        %v710 = vunpack.c.l.b16 %v578
        %v711 = vunpack.c.l.b16 %v579
        %v712 = vunpack.c.l.b16 %v580
        %v713 = vunpack.c.l.b16 %v581
        %v714 = vunpack.c.l.b16 %v582
        %v715 = vunpack.c.l.b16 %v583
        %v716 = vunpack.c.l.b16 %v584
        %v717 = vunpack.c.l.b16 %v585
        %v718 = vunpack.c.l.b16 %v586
        %v719 = vunpack.c.l.b16 %v587
        %v720 = vunpack.c.l.b16 %v588
        %v721 = vunpack.c.l.b16 %v589
        %v722 = vunpack.c.l.b16 %v590
        %v723 = vunpack.c.l.b16 %v591
        %v724 = vunpack.c.l.b16 %v592
        %v725 = vunpack.c.l.b16 %v593
        %v726 = vunpack.c.l.b16 %v594
        %v727 = vunpack.c.l.b16 %v595
        %v728 = vunpack.c.l.b16 %v596
        %v729 = vunpack.c.l.b16 %v597
        %v730 = vunpack.c.l.b16 %v598
        %v731 = vunpack.c.l.b16 %v599
        %v732 = vunpack.c.l.b16 %v600
        %v733 = vunpack.c.l.b16 %v601
        %v734 = vunpack.c.l.b16 %v602
        %v735 = vunpack.c.l.b16 %v603
        %v736 = vunpack.c.l.b16 %v604
        %v737 = vunpack.c.l.b16 %v605
        %v738 = vunpack.c.l.b16 %v606
        %v739 = vunpack.c.l.b16 %v607
        %v740 = vunpack.c.l.b16 %v608
        %v741 = vunpack.c.l.b16 %v609
        %v742 = vunpack.c.l.b16 %v610
        %v743 = vunpack.c.l.b16 %v611
        %v744 = vunpack.c.l.b16 %v612
        %v745 = vunpack.c.l.b16 %v613
        %v746 = vunpack.c.l.b16 %v614
        %v747 = vunpack.c.l.b16 %v615
        %v748 = vunpack.c.l.b16 %v616
        %v749 = vunpack.c.l.b16 %v617
        %v750 = vunpack.c.l.b16 %v618
        %v751 = vunpack.c.l.b16 %v619
        %v752 = vpack.c.b16 %v689, %v688
        %v753 = vpack.c.b16 %v691, %v690
        %v754 = vpack.c.b16 %v693, %v692
        %v755 = vpack.c.b16 %v695, %v694
        %v756 = vpack.c.b16 %v697, %v696
        %v757 = vpack.c.b16 %v699, %v698
        %v758 = vpack.c.b16 %v701, %v700
        %v759 = vpack.c.b16 %v703, %v702
        %v760 = vpack.c.b16 %v705, %v704
        %v761 = vpack.c.b16 %v707, %v706
        %v762 = vpack.c.b16 %v709, %v708
        %v763 = vpack.c.b16 %v711, %v710
        %v764 = vpack.c.b16 %v713, %v712
        %v765 = vpack.c.b16 %v715, %v714
        %v766 = vpack.c.b16 %v717, %v716
        %v767 = vpack.c.b16 %v719, %v718
        %v768 = vpack.c.b16 %v721, %v720
        %v769 = vpack.c.b16 %v723, %v722
        %v770 = vpack.c.b16 %v725, %v724
        %v771 = vpack.c.b16 %v727, %v726
        %v772 = vpack.c.b16 %v729, %v728
        %v773 = vpack.c.b16 %v731, %v730
        %v774 = vpack.c.b16 %v733, %v732
        %v775 = vpack.c.b16 %v735, %v734
        %v776 = vpack.c.b16 %v737, %v736
        %v777 = vpack.c.b16 %v739, %v738
        %v778 = vpack.c.b16 %v741, %v740
        %v779 = vpack.c.b16 %v743, %v742
        %v780 = vpack.c.b16 %v745, %v744
        %v781 = vpack.c.b16 %v747, %v746
        %v782 = vpack.c.b16 %v749, %v748
        %v783 = vpack.c.b16 %v751, %v750
        %816 = vmatpush.bf16.msra.mxu0 %v759
        %817 = vmatpush.bf16.msra.mxu0 %v758
        %818 = vmatpush.bf16.msra.mxu0 %v757
        %819 = vmatpush.bf16.msra.mxu0 %v756
        %820 = vmatpush.bf16.msra.mxu0 %v755
        %821 = vmatpush.bf16.msra.mxu0 %v754
        %822 = vmatpush.bf16.msra.mxu0 %v753
        %823 = vmatpush.bf16.msra.mxu0 %v752
        %824 = vmatmul.bf16.gmra.mxu0 %v492
        %v825 = vpop.f32.mrf.mxu0
        %v826 = vadd.f32 %v622, %v825
        %v827 = vpop.f32.mrf.mxu0
        %v828 = vadd.f32 %v622, %v827
        %829 = vmatmul.bf16.gmra.mxu0 %v496
        %v830 = vpop.f32.mrf.mxu0
        %v831 = vadd.f32 %v622, %v830
        %v832 = vpop.f32.mrf.mxu0
        %v833 = vadd.f32 %v622, %v832
        %834 = vmatmul.bf16.gmra.mxu0 %v500
        %v835 = vpop.f32.mrf.mxu0
        %v836 = vadd.f32 %v622, %v835
        %v837 = vpop.f32.mrf.mxu0
        %v838 = vadd.f32 %v622, %v837
        %839 = vmatmul.bf16.gmra.mxu0 %v504
        %v840 = vpop.f32.mrf.mxu0
        %v841 = vadd.f32 %v622, %v840
        %v842 = vpop.f32.mrf.mxu0
        %v843 = vadd.f32 %v622, %v842
        %844 = vmatmul.bf16.gmra.mxu0 %v508
        %v845 = vpop.f32.mrf.mxu0
        %v846 = vadd.f32 %v622, %v845
        %v847 = vpop.f32.mrf.mxu0
        %v848 = vadd.f32 %v622, %v847
        %849 = vmatmul.bf16.gmra.mxu0 %v512
        %v850 = vpop.f32.mrf.mxu0
        %v851 = vadd.f32 %v622, %v850
        %v852 = vpop.f32.mrf.mxu0
        %v853 = vadd.f32 %v622, %v852
        %854 = vmatmul.bf16.gmra.mxu0 %v516
        %v855 = vpop.f32.mrf.mxu0
        %v856 = vadd.f32 %v622, %v855
        %v857 = vpop.f32.mrf.mxu0
        %v858 = vadd.f32 %v622, %v857
        %859 = vmatmul.bf16.gmra.mxu0 %v520
        %v860 = vpop.f32.mrf.mxu0
        %v861 = vadd.f32 %v622, %v860
        %v862 = vpop.f32.mrf.mxu0
        %v863 = vadd.f32 %v622, %v862
        %864 = vmatmul.bf16.gmra.mxu0 %v524
        %v865 = vpop.f32.mrf.mxu0
        %v866 = vadd.f32 %v622, %v865
        %v867 = vpop.f32.mrf.mxu0
        %v868 = vadd.f32 %v622, %v867
        %869 = vmatmul.bf16.gmra.mxu0 %v528
        %v870 = vpop.f32.mrf.mxu0
        %v871 = vadd.f32 %v622, %v870
        %v872 = vpop.f32.mrf.mxu0
        %v873 = vadd.f32 %v622, %v872
        %874 = vmatmul.bf16.gmra.mxu0 %v532
        %v875 = vpop.f32.mrf.mxu0
        %v876 = vadd.f32 %v622, %v875
        %v877 = vpop.f32.mrf.mxu0
        %v878 = vadd.f32 %v622, %v877
        %879 = vmatmul.bf16.gmra.mxu0 %v536
        %v880 = vpop.f32.mrf.mxu0
        %v881 = vadd.f32 %v622, %v880
        %v882 = vpop.f32.mrf.mxu0
        %v883 = vadd.f32 %v622, %v882
        %884 = vmatmul.bf16.gmra.mxu0 %v540
        %v885 = vpop.f32.mrf.mxu0
        %v886 = vadd.f32 %v622, %v885
        %v887 = vpop.f32.mrf.mxu0
        %v888 = vadd.f32 %v622, %v887
        %889 = vmatmul.bf16.gmra.mxu0 %v544
        %v890 = vpop.f32.mrf.mxu0
        %v891 = vadd.f32 %v622, %v890
        %v892 = vpop.f32.mrf.mxu0
        %v893 = vadd.f32 %v622, %v892
        %894 = vmatmul.bf16.gmra.mxu0 %v548
        %v895 = vpop.f32.mrf.mxu0
        %v896 = vadd.f32 %v622, %v895
        %v897 = vpop.f32.mrf.mxu0
        %v898 = vadd.f32 %v622, %v897
        %899 = vmatmul.bf16.gmra.mxu0 %v552
        %v900 = vpop.f32.mrf.mxu0
        %v901 = vadd.f32 %v622, %v900
        %v902 = vpop.f32.mrf.mxu0
        %v903 = vadd.f32 %v622, %v902
        %904 = vdwg.mxu0
        %905 = vmatpush.bf16.msra.mxu0 %v767
        %906 = vmatpush.bf16.msra.mxu0 %v766
        %907 = vmatpush.bf16.msra.mxu0 %v765
        %908 = vmatpush.bf16.msra.mxu0 %v764
        %909 = vmatpush.bf16.msra.mxu0 %v763
        %910 = vmatpush.bf16.msra.mxu0 %v762
        %911 = vmatpush.bf16.msra.mxu0 %v761
        %912 = vmatpush.bf16.msra.mxu0 %v760
        %913 = vmatmul.bf16.gmra.mxu0 %v493
        %v914 = vpop.f32.mrf.mxu0
        %v915 = vadd.f32 %v826, %v914
        %v916 = vpop.f32.mrf.mxu0
        %v917 = vadd.f32 %v828, %v916
        %918 = vmatmul.bf16.gmra.mxu0 %v497
        %v919 = vpop.f32.mrf.mxu0
        %v920 = vadd.f32 %v831, %v919
        %v921 = vpop.f32.mrf.mxu0
        %v922 = vadd.f32 %v833, %v921
        %923 = vmatmul.bf16.gmra.mxu0 %v501
        %v924 = vpop.f32.mrf.mxu0
        %v925 = vadd.f32 %v836, %v924
        %v926 = vpop.f32.mrf.mxu0
        %v927 = vadd.f32 %v838, %v926
        %928 = vmatmul.bf16.gmra.mxu0 %v505
        %v929 = vpop.f32.mrf.mxu0
        %v930 = vadd.f32 %v841, %v929
        %v931 = vpop.f32.mrf.mxu0
        %v932 = vadd.f32 %v843, %v931
        %933 = vmatmul.bf16.gmra.mxu0 %v509
        %v934 = vpop.f32.mrf.mxu0
        %v935 = vadd.f32 %v846, %v934
        %v936 = vpop.f32.mrf.mxu0
        %v937 = vadd.f32 %v848, %v936
        %938 = vmatmul.bf16.gmra.mxu0 %v513
        %v939 = vpop.f32.mrf.mxu0
        %v940 = vadd.f32 %v851, %v939
        %v941 = vpop.f32.mrf.mxu0
        %v942 = vadd.f32 %v853, %v941
        %943 = vmatmul.bf16.gmra.mxu0 %v517
        %v944 = vpop.f32.mrf.mxu0
        %v945 = vadd.f32 %v856, %v944
        %v946 = vpop.f32.mrf.mxu0
        %v947 = vadd.f32 %v858, %v946
        %948 = vmatmul.bf16.gmra.mxu0 %v521
        %v949 = vpop.f32.mrf.mxu0
        %v950 = vadd.f32 %v861, %v949
        %v951 = vpop.f32.mrf.mxu0
        %v952 = vadd.f32 %v863, %v951
        %953 = vmatmul.bf16.gmra.mxu0 %v525
        %v954 = vpop.f32.mrf.mxu0
        %v955 = vadd.f32 %v866, %v954
        %v956 = vpop.f32.mrf.mxu0
        %v957 = vadd.f32 %v868, %v956
        %958 = vmatmul.bf16.gmra.mxu0 %v529
        %v959 = vpop.f32.mrf.mxu0
        %v960 = vadd.f32 %v871, %v959
        %v961 = vpop.f32.mrf.mxu0
        %v962 = vadd.f32 %v873, %v961
        %963 = vmatmul.bf16.gmra.mxu0 %v533
        %v964 = vpop.f32.mrf.mxu0
        %v965 = vadd.f32 %v876, %v964
        %v966 = vpop.f32.mrf.mxu0
        %v967 = vadd.f32 %v878, %v966
        %968 = vmatmul.bf16.gmra.mxu0 %v537
        %v969 = vpop.f32.mrf.mxu0
        %v970 = vadd.f32 %v881, %v969
        %v971 = vpop.f32.mrf.mxu0
        %v972 = vadd.f32 %v883, %v971
        %973 = vmatmul.bf16.gmra.mxu0 %v541
        %v974 = vpop.f32.mrf.mxu0
        %v975 = vadd.f32 %v886, %v974
        %v976 = vpop.f32.mrf.mxu0
        %v977 = vadd.f32 %v888, %v976
        %978 = vmatmul.bf16.gmra.mxu0 %v545
        %v979 = vpop.f32.mrf.mxu0
        %v980 = vadd.f32 %v891, %v979
        %v981 = vpop.f32.mrf.mxu0
        %v982 = vadd.f32 %v893, %v981
        %983 = vmatmul.bf16.gmra.mxu0 %v549
        %v984 = vpop.f32.mrf.mxu0
        %v985 = vadd.f32 %v896, %v984
        %v986 = vpop.f32.mrf.mxu0
        %v987 = vadd.f32 %v898, %v986
        %988 = vmatmul.bf16.gmra.mxu0 %v553
        %v989 = vpop.f32.mrf.mxu0
        %v990 = vadd.f32 %v901, %v989
        %v991 = vpop.f32.mrf.mxu0
        %v992 = vadd.f32 %v903, %v991
        %993 = vdwg.mxu0
        %994 = vmatpush.bf16.msra.mxu0 %v775
        %995 = vmatpush.bf16.msra.mxu0 %v774
        %996 = vmatpush.bf16.msra.mxu0 %v773
        %997 = vmatpush.bf16.msra.mxu0 %v772
        %998 = vmatpush.bf16.msra.mxu0 %v771
        %999 = vmatpush.bf16.msra.mxu0 %v770
        %1000 = vmatpush.bf16.msra.mxu0 %v769
        %1001 = vmatpush.bf16.msra.mxu0 %v768
        %1002 = vmatmul.bf16.gmra.mxu0 %v494
        %v1003 = vpop.f32.mrf.mxu0
        %v1004 = vadd.f32 %v915, %v1003
        %v1005 = vpop.f32.mrf.mxu0
        %v1006 = vadd.f32 %v917, %v1005
        %1007 = vmatmul.bf16.gmra.mxu0 %v498
        %v1008 = vpop.f32.mrf.mxu0
        %v1009 = vadd.f32 %v920, %v1008
        %v1010 = vpop.f32.mrf.mxu0
        %v1011 = vadd.f32 %v922, %v1010
        %1012 = vmatmul.bf16.gmra.mxu0 %v502
        %v1013 = vpop.f32.mrf.mxu0
        %v1014 = vadd.f32 %v925, %v1013
        %v1015 = vpop.f32.mrf.mxu0
        %v1016 = vadd.f32 %v927, %v1015
        %1017 = vmatmul.bf16.gmra.mxu0 %v506
        %v1018 = vpop.f32.mrf.mxu0
        %v1019 = vadd.f32 %v930, %v1018
        %v1020 = vpop.f32.mrf.mxu0
        %v1021 = vadd.f32 %v932, %v1020
        %1022 = vmatmul.bf16.gmra.mxu0 %v510
        %v1023 = vpop.f32.mrf.mxu0
        %v1024 = vadd.f32 %v935, %v1023
        %v1025 = vpop.f32.mrf.mxu0
        %v1026 = vadd.f32 %v937, %v1025
        %1027 = vmatmul.bf16.gmra.mxu0 %v514
        %v1028 = vpop.f32.mrf.mxu0
        %v1029 = vadd.f32 %v940, %v1028
        %v1030 = vpop.f32.mrf.mxu0
        %v1031 = vadd.f32 %v942, %v1030
        %1032 = vmatmul.bf16.gmra.mxu0 %v518
        %v1033 = vpop.f32.mrf.mxu0
        %v1034 = vadd.f32 %v945, %v1033
        %v1035 = vpop.f32.mrf.mxu0
        %v1036 = vadd.f32 %v947, %v1035
        %1037 = vmatmul.bf16.gmra.mxu0 %v522
        %v1038 = vpop.f32.mrf.mxu0
        %v1039 = vadd.f32 %v950, %v1038
        %v1040 = vpop.f32.mrf.mxu0
        %v1041 = vadd.f32 %v952, %v1040
        %1042 = vmatmul.bf16.gmra.mxu0 %v526
        %v1043 = vpop.f32.mrf.mxu0
        %v1044 = vadd.f32 %v955, %v1043
        %v1045 = vpop.f32.mrf.mxu0
        %v1046 = vadd.f32 %v957, %v1045
        %1047 = vmatmul.bf16.gmra.mxu0 %v530
        %v1048 = vpop.f32.mrf.mxu0
        %v1049 = vadd.f32 %v960, %v1048
        %v1050 = vpop.f32.mrf.mxu0
        %v1051 = vadd.f32 %v962, %v1050
        %1052 = vmatmul.bf16.gmra.mxu0 %v534
        %v1053 = vpop.f32.mrf.mxu0
        %v1054 = vadd.f32 %v965, %v1053
        %v1055 = vpop.f32.mrf.mxu0
        %v1056 = vadd.f32 %v967, %v1055
        %1057 = vmatmul.bf16.gmra.mxu0 %v538
        %v1058 = vpop.f32.mrf.mxu0
        %v1059 = vadd.f32 %v970, %v1058
        %v1060 = vpop.f32.mrf.mxu0
        %v1061 = vadd.f32 %v972, %v1060
        %1062 = vmatmul.bf16.gmra.mxu0 %v542
        %v1063 = vpop.f32.mrf.mxu0
        %v1064 = vadd.f32 %v975, %v1063
        %v1065 = vpop.f32.mrf.mxu0
        %v1066 = vadd.f32 %v977, %v1065
        %1067 = vmatmul.bf16.gmra.mxu0 %v546
        %v1068 = vpop.f32.mrf.mxu0
        %v1069 = vadd.f32 %v980, %v1068
        %v1070 = vpop.f32.mrf.mxu0
        %v1071 = vadd.f32 %v982, %v1070
        %1072 = vmatmul.bf16.gmra.mxu0 %v550
        %v1073 = vpop.f32.mrf.mxu0
        %v1074 = vadd.f32 %v985, %v1073
        %v1075 = vpop.f32.mrf.mxu0
        %v1076 = vadd.f32 %v987, %v1075
        %1077 = vmatmul.bf16.gmra.mxu0 %v554
        %v1078 = vpop.f32.mrf.mxu0
        %v1079 = vadd.f32 %v990, %v1078
        %v1080 = vpop.f32.mrf.mxu0
        %v1081 = vadd.f32 %v992, %v1080
        %1082 = vdwg.mxu0
        %1083 = vmatpush.bf16.msra.mxu0 %v783
        %1084 = vmatpush.bf16.msra.mxu0 %v782
        %1085 = vmatpush.bf16.msra.mxu0 %v781
        %1086 = vmatpush.bf16.msra.mxu0 %v780
        %1087 = vmatpush.bf16.msra.mxu0 %v779
        %1088 = vmatpush.bf16.msra.mxu0 %v778
        %1089 = vmatpush.bf16.msra.mxu0 %v777
        %1090 = vmatpush.bf16.msra.mxu0 %v776
        %1091 = vmatmul.bf16.gmra.mxu0 %v495
        %v1092 = vpop.f32.mrf.mxu0
        %v1093 = vadd.f32 %v1004, %v1092
        %v1094 = vpop.f32.mrf.mxu0
        %v1095 = vadd.f32 %v1006, %v1094
        %1096 = vmatmul.bf16.gmra.mxu0 %v499
        %v1097 = vpop.f32.mrf.mxu0
        %v1098 = vadd.f32 %v1009, %v1097
        %v1099 = vpop.f32.mrf.mxu0
        %v1100 = vadd.f32 %v1011, %v1099
        %1101 = vmatmul.bf16.gmra.mxu0 %v503
        %v1102 = vpop.f32.mrf.mxu0
        %v1103 = vadd.f32 %v1014, %v1102
        %v1104 = vpop.f32.mrf.mxu0
        %v1105 = vadd.f32 %v1016, %v1104
        %1106 = vmatmul.bf16.gmra.mxu0 %v507
        %v1107 = vpop.f32.mrf.mxu0
        %v1108 = vadd.f32 %v1019, %v1107
        %v1109 = vpop.f32.mrf.mxu0
        %v1110 = vadd.f32 %v1021, %v1109
        %1111 = vmatmul.bf16.gmra.mxu0 %v511
        %v1112 = vpop.f32.mrf.mxu0
        %v1113 = vadd.f32 %v1024, %v1112
        %v1114 = vpop.f32.mrf.mxu0
        %v1115 = vadd.f32 %v1026, %v1114
        %1116 = vmatmul.bf16.gmra.mxu0 %v515
        %v1117 = vpop.f32.mrf.mxu0
        %v1118 = vadd.f32 %v1029, %v1117
        %v1119 = vpop.f32.mrf.mxu0
        %v1120 = vadd.f32 %v1031, %v1119
        %1121 = vmatmul.bf16.gmra.mxu0 %v519
        %v1122 = vpop.f32.mrf.mxu0
        %v1123 = vadd.f32 %v1034, %v1122
        %v1124 = vpop.f32.mrf.mxu0
        %v1125 = vadd.f32 %v1036, %v1124
        %1126 = vmatmul.bf16.gmra.mxu0 %v523
        %v1127 = vpop.f32.mrf.mxu0
        %v1128 = vadd.f32 %v1039, %v1127
        %v1129 = vpop.f32.mrf.mxu0
        %v1130 = vadd.f32 %v1041, %v1129
        %1131 = vmatmul.bf16.gmra.mxu0 %v527
        %v1132 = vpop.f32.mrf.mxu0
        %v1133 = vadd.f32 %v1044, %v1132
        %v1134 = vpop.f32.mrf.mxu0
        %v1135 = vadd.f32 %v1046, %v1134
        %1136 = vmatmul.bf16.gmra.mxu0 %v531
        %v1137 = vpop.f32.mrf.mxu0
        %v1138 = vadd.f32 %v1049, %v1137
        %v1139 = vpop.f32.mrf.mxu0
        %v1140 = vadd.f32 %v1051, %v1139
        %1141 = vmatmul.bf16.gmra.mxu0 %v535
        %v1142 = vpop.f32.mrf.mxu0
        %v1143 = vadd.f32 %v1054, %v1142
        %v1144 = vpop.f32.mrf.mxu0
        %v1145 = vadd.f32 %v1056, %v1144
        %1146 = vmatmul.bf16.gmra.mxu0 %v539
        %v1147 = vpop.f32.mrf.mxu0
        %v1148 = vadd.f32 %v1059, %v1147
        %v1149 = vpop.f32.mrf.mxu0
        %v1150 = vadd.f32 %v1061, %v1149
        %1151 = vmatmul.bf16.gmra.mxu0 %v543
        %v1152 = vpop.f32.mrf.mxu0
        %v1153 = vadd.f32 %v1064, %v1152
        %v1154 = vpop.f32.mrf.mxu0
        %v1155 = vadd.f32 %v1066, %v1154
        %1156 = vmatmul.bf16.gmra.mxu0 %v547
        %v1157 = vpop.f32.mrf.mxu0
        %v1158 = vadd.f32 %v1069, %v1157
        %v1159 = vpop.f32.mrf.mxu0
        %v1160 = vadd.f32 %v1071, %v1159
        %1161 = vmatmul.bf16.gmra.mxu0 %v551
        %v1162 = vpop.f32.mrf.mxu0
        %v1163 = vadd.f32 %v1074, %v1162
        %v1164 = vpop.f32.mrf.mxu0
        %v1165 = vadd.f32 %v1076, %v1164
        %1166 = vmatmul.bf16.gmra.mxu0 %v555
        %v1167 = vpop.f32.mrf.mxu0
        %v1168 = vadd.f32 %v1079, %v1167
        %v1169 = vpop.f32.mrf.mxu0
        %v1170 = vadd.f32 %v1081, %v1169
        %1171 = vdwg.mxu0
        %v1172 = vmax.f32 %v1093, 0.0
        %v1173 = vmax.f32 %v1095, 0.0
        %v1174 = vmax.f32 %v1098, 0.0
        %v1175 = vmax.f32 %v1100, 0.0
        %v1176 = vmax.f32 %v1103, 0.0
        %v1177 = vmax.f32 %v1105, 0.0
        %v1178 = vmax.f32 %v1108, 0.0
        %v1179 = vmax.f32 %v1110, 0.0
        %v1180 = vmax.f32 %v1113, 0.0
        %v1181 = vmax.f32 %v1115, 0.0
        %v1182 = vmax.f32 %v1118, 0.0
        %v1183 = vmax.f32 %v1120, 0.0
        %v1184 = vmax.f32 %v1123, 0.0
        %v1185 = vmax.f32 %v1125, 0.0
        %v1186 = vmax.f32 %v1128, 0.0
        %v1187 = vmax.f32 %v1130, 0.0
        %v1188 = vmax.f32 %v1133, 0.0
        %v1189 = vmax.f32 %v1135, 0.0
        %v1190 = vmax.f32 %v1138, 0.0
        %v1191 = vmax.f32 %v1140, 0.0
        %v1192 = vmax.f32 %v1143, 0.0
        %v1193 = vmax.f32 %v1145, 0.0
        %v1194 = vmax.f32 %v1148, 0.0
        %v1195 = vmax.f32 %v1150, 0.0
        %v1196 = vmax.f32 %v1153, 0.0
        %v1197 = vmax.f32 %v1155, 0.0
        %v1198 = vmax.f32 %v1158, 0.0
        %v1199 = vmax.f32 %v1160, 0.0
        %v1200 = vmax.f32 %v1163, 0.0
        %v1201 = vmax.f32 %v1165, 0.0
        %v1202 = vmax.f32 %v1168, 0.0
        %v1203 = vmax.f32 %v1170, 0.0
        %1204 = vst [vmem:[#allocation2] sm:$0xf] 0
        %1205 = vst [vmem:[#allocation2 + $0x4] sm:$0xf] 0
        %1206 = vst [vmem:[#allocation2 + $0x8] sm:$0x1] 0
        %s1207 = scalar_lea.vmem [#allocation2], 204
        %1208 = vst [vmem:[%s1207] sm:$0xf] 0
        %1209 = vst [vmem:[%s1207 + $0x4] sm:$0xf] 0
        %1210 = vst [vmem:[%s1207 + $0x8] sm:$0x1] 0
        %vm1211 = vcmask 1040384
        %vm1212 = vsmask.f32 256
        %vm1213 = vmand %vm1211, %vm1212
        %v1214 = vld [vmem:[#allocation2] sm:$0x1]
        %v1215 = vsel %vm1213, 0, %v1214
        %1216 = vst [vmem:[#allocation2] sm:$0x1] %v1215
        %v1217 = vld [vmem:[#allocation2 + $0xc] sm:$0x1]
        %v1218 = vsel %vm1213, 0, %v1217
        %1219 = vst [vmem:[#allocation2 + $0xc] sm:$0x1] %v1218
        %v1220 = vld [vmem:[#allocation2 + $0x18] sm:$0x1]
        %v1221 = vsel %vm1213, 0, %v1220
        %1222 = vst [vmem:[#allocation2 + $0x18] sm:$0x1] %v1221
        %v1223 = vld [vmem:[#allocation2 + $0x24] sm:$0x1]
        %v1224 = vsel %vm1213, 0, %v1223
        %1225 = vst [vmem:[#allocation2 + $0x24] sm:$0x1] %v1224
        %v1226 = vld [vmem:[#allocation2 + $0x30] sm:$0x1]
        %v1227 = vsel %vm1213, 0, %v1226
        %1228 = vst [vmem:[#allocation2 + $0x30] sm:$0x1] %v1227
        %v1229 = vld [vmem:[#allocation2 + $0x3c] sm:$0x1]
        %v1230 = vsel %vm1213, 0, %v1229
        %1231 = vst [vmem:[#allocation2 + $0x3c] sm:$0x1] %v1230
        %v1232 = vld [vmem:[#allocation2 + $0x48] sm:$0x1]
        %v1233 = vsel %vm1213, 0, %v1232
        %1234 = vst [vmem:[#allocation2 + $0x48] sm:$0x1] %v1233
        %v1235 = vld [vmem:[#allocation2 + $0x54] sm:$0x1]
        %v1236 = vsel %vm1213, 0, %v1235
        %1237 = vst [vmem:[#allocation2 + $0x54] sm:$0x1] %v1236
        %v1238 = vld [vmem:[#allocation2 + $0x60] sm:$0x1]
        %v1239 = vsel %vm1213, 0, %v1238
        %1240 = vst [vmem:[#allocation2 + $0x60] sm:$0x1] %v1239
        %v1241 = vld [vmem:[#allocation2 + $0x6c] sm:$0x1]
        %v1242 = vsel %vm1213, 0, %v1241
        %1243 = vst [vmem:[#allocation2 + $0x6c] sm:$0x1] %v1242
        %v1244 = vld [vmem:[#allocation2 + $0x78] sm:$0x1]
        %v1245 = vsel %vm1213, 0, %v1244
        %1246 = vst [vmem:[#allocation2 + $0x78] sm:$0x1] %v1245
        %v1247 = vld [vmem:[#allocation2 + $0x84] sm:$0x1]
        %v1248 = vsel %vm1213, 0, %v1247
        %1249 = vst [vmem:[#allocation2 + $0x84] sm:$0x1] %v1248
        %v1250 = vld [vmem:[#allocation2 + $0x90] sm:$0x1]
        %v1251 = vsel %vm1213, 0, %v1250
        %1252 = vst [vmem:[#allocation2 + $0x90] sm:$0x1] %v1251
        %v1253 = vld [vmem:[#allocation2 + $0x9c] sm:$0x1]
        %v1254 = vsel %vm1213, 0, %v1253
        %1255 = vst [vmem:[#allocation2 + $0x9c] sm:$0x1] %v1254
        %v1256 = vld [vmem:[#allocation2 + $0xa8] sm:$0x1]
        %v1257 = vsel %vm1213, 0, %v1256
        %1258 = vst [vmem:[#allocation2 + $0xa8] sm:$0x1] %v1257
        %v1259 = vld [vmem:[#allocation2 + $0xb4] sm:$0x1]
        %v1260 = vsel %vm1213, 0, %v1259
        %1261 = vst [vmem:[#allocation2 + $0xb4] sm:$0x1] %v1260
        %v1262 = vld [vmem:[#allocation2 + $0xc0] sm:$0x1]
        %v1263 = vsel %vm1213, 0, %v1262
        %1264 = vst [vmem:[#allocation2 + $0xc0] sm:$0x1] %v1263
        %v1265 = vld [vmem:[#allocation2 + $0xcc] sm:$0x1]
        %v1266 = vsel %vm1213, 0, %v1265
        %1267 = vst [vmem:[#allocation2 + $0xcc] sm:$0x1] %v1266
        %vm1268 = vsmask.f32 7938
        %vm1269 = vmand %vm1211, %vm1268
        %v1270 = vld [vmem:[#allocation2 + $0x8] sm:$0x1]
        %v1271 = vsel %vm1269, 0, %v1270
        %1272 = vst [vmem:[#allocation2 + $0x8] sm:$0x1] %v1271
        %v1273 = vld [vmem:[#allocation2 + $0x14] sm:$0x1]
        %v1274 = vsel %vm1269, 0, %v1273
        %1275 = vst [vmem:[#allocation2 + $0x14] sm:$0x1] %v1274
        %v1276 = vld [vmem:[#allocation2 + $0x20] sm:$0x1]
        %v1277 = vsel %vm1269, 0, %v1276
        %1278 = vst [vmem:[#allocation2 + $0x20] sm:$0x1] %v1277
        %v1279 = vld [vmem:[#allocation2 + $0x2c] sm:$0x1]
        %v1280 = vsel %vm1269, 0, %v1279
        %1281 = vst [vmem:[#allocation2 + $0x2c] sm:$0x1] %v1280
        %v1282 = vld [vmem:[#allocation2 + $0x38] sm:$0x1]
        %v1283 = vsel %vm1269, 0, %v1282
        %1284 = vst [vmem:[#allocation2 + $0x38] sm:$0x1] %v1283
        %v1285 = vld [vmem:[#allocation2 + $0x44] sm:$0x1]
        %v1286 = vsel %vm1269, 0, %v1285
        %1287 = vst [vmem:[#allocation2 + $0x44] sm:$0x1] %v1286
        %v1288 = vld [vmem:[#allocation2 + $0x50] sm:$0x1]
        %v1289 = vsel %vm1269, 0, %v1288
        %1290 = vst [vmem:[#allocation2 + $0x50] sm:$0x1] %v1289
        %v1291 = vld [vmem:[#allocation2 + $0x5c] sm:$0x1]
        %v1292 = vsel %vm1269, 0, %v1291
        %1293 = vst [vmem:[#allocation2 + $0x5c] sm:$0x1] %v1292
        %v1294 = vld [vmem:[#allocation2 + $0x68] sm:$0x1]
        %v1295 = vsel %vm1269, 0, %v1294
        %1296 = vst [vmem:[#allocation2 + $0x68] sm:$0x1] %v1295
        %v1297 = vld [vmem:[#allocation2 + $0x74] sm:$0x1]
        %v1298 = vsel %vm1269, 0, %v1297
        %1299 = vst [vmem:[#allocation2 + $0x74] sm:$0x1] %v1298
        %v1300 = vld [vmem:[#allocation2 + $0x80] sm:$0x1]
        %v1301 = vsel %vm1269, 0, %v1300
        %1302 = vst [vmem:[#allocation2 + $0x80] sm:$0x1] %v1301
        %v1303 = vld [vmem:[#allocation2 + $0x8c] sm:$0x1]
        %v1304 = vsel %vm1269, 0, %v1303
        %1305 = vst [vmem:[#allocation2 + $0x8c] sm:$0x1] %v1304
        %v1306 = vld [vmem:[#allocation2 + $0x98] sm:$0x1]
        %v1307 = vsel %vm1269, 0, %v1306
        %1308 = vst [vmem:[#allocation2 + $0x98] sm:$0x1] %v1307
        %v1309 = vld [vmem:[#allocation2 + $0xa4] sm:$0x1]
        %v1310 = vsel %vm1269, 0, %v1309
        %1311 = vst [vmem:[#allocation2 + $0xa4] sm:$0x1] %v1310
        %v1312 = vld [vmem:[#allocation2 + $0xb0] sm:$0x1]
        %v1313 = vsel %vm1269, 0, %v1312
        %1314 = vst [vmem:[#allocation2 + $0xb0] sm:$0x1] %v1313
        %v1315 = vld [vmem:[#allocation2 + $0xbc] sm:$0x1]
        %v1316 = vsel %vm1269, 0, %v1315
        %1317 = vst [vmem:[#allocation2 + $0xbc] sm:$0x1] %v1316
        %v1318 = vld [vmem:[#allocation2 + $0xc8] sm:$0x1]
        %v1319 = vsel %vm1269, 0, %v1318
        %1320 = vst [vmem:[#allocation2 + $0xc8] sm:$0x1] %v1319
        %v1321 = vld [vmem:[#allocation2 + $0xd4] sm:$0x1]
        %v1322 = vsel %vm1269, 0, %v1321
        %1323 = vst [vmem:[#allocation2 + $0xd4] sm:$0x1] %v1322
        %v1324 = vpack.c.bf16 %v1172, %v1172
        %v1325 = vpack.c.bf16 %v1173, %v1173
        %v1326 = vpack.c.bf16 %v1174, %v1174
        %v1327 = vpack.c.bf16 %v1175, %v1175
        %v1328 = vpack.c.bf16 %v1176, %v1176
        %v1329 = vpack.c.bf16 %v1177, %v1177
        %v1330 = vpack.c.bf16 %v1178, %v1178
        %v1331 = vpack.c.bf16 %v1179, %v1179
        %v1332 = vpack.c.bf16 %v1180, %v1180
        %v1333 = vpack.c.bf16 %v1181, %v1181
        %v1334 = vpack.c.bf16 %v1182, %v1182
        %v1335 = vpack.c.bf16 %v1183, %v1183
        %v1336 = vpack.c.bf16 %v1184, %v1184
        %v1337 = vpack.c.bf16 %v1185, %v1185
        %v1338 = vpack.c.bf16 %v1186, %v1186
        %v1339 = vpack.c.bf16 %v1187, %v1187
        %v1340 = vpack.c.bf16 %v1188, %v1188
        %v1341 = vpack.c.bf16 %v1189, %v1189
        %v1342 = vpack.c.bf16 %v1190, %v1190
        %v1343 = vpack.c.bf16 %v1191, %v1191
        %v1344 = vpack.c.bf16 %v1192, %v1192
        %v1345 = vpack.c.bf16 %v1193, %v1193
        %v1346 = vpack.c.bf16 %v1194, %v1194
        %v1347 = vpack.c.bf16 %v1195, %v1195
        %v1348 = vpack.c.bf16 %v1196, %v1196
        %v1349 = vpack.c.bf16 %v1197, %v1197
        %v1350 = vpack.c.bf16 %v1198, %v1198
        %v1351 = vpack.c.bf16 %v1199, %v1199
        %v1352 = vpack.c.bf16 %v1200, %v1200
        %v1353 = vpack.c.bf16 %v1201, %v1201
        %v1354 = vpack.c.bf16 %v1202, %v1202
        %v1355 = vpack.c.bf16 %v1203, %v1203
        %vm1356 = vsmask.f32 4368
        %vm1357 = vmor %vm1212, %vm1356
        %v1359 = vshrl.u32 %v1324, 16
        %v1361 = vrot.slane %v1359, 7
        %v1362 = vshll.u32 %v1324, 16
        %v1364 = vor.u32 %v1361, %v1362
        %v1365 = vrot.slane %v1361, 4
        %v1367 = vshrl.u32 %v1325, 16
        %v1369 = vrot.slane %v1367, 7
        %v1370 = vshll.u32 %v1325, 16
        %v1372 = vor.u32 %v1369, %v1370
        %v1373 = vsel %vm1357, %v1365, %v1372
        %v1374 = vrot.slane %v1369, 4
        %v1376 = vshrl.u32 %v1326, 16
        %v1378 = vrot.slane %v1376, 7
        %v1379 = vshll.u32 %v1326, 16
        %v1381 = vor.u32 %v1378, %v1379
        %v1382 = vrot.slane %v1378, 4
        %v1384 = vshrl.u32 %v1327, 16
        %v1386 = vrot.slane %v1384, 7
        %v1387 = vshll.u32 %v1327, 16
        %v1389 = vor.u32 %v1386, %v1387
        %v1390 = vsel %vm1357, %v1382, %v1389
        %v1391 = vrot.slane %v1386, 4
        %v1393 = vshrl.u32 %v1328, 16
        %v1395 = vrot.slane %v1393, 7
        %v1396 = vshll.u32 %v1328, 16
        %v1398 = vor.u32 %v1395, %v1396
        %v1399 = vrot.slane %v1395, 4
        %v1401 = vshrl.u32 %v1329, 16
        %v1403 = vrot.slane %v1401, 7
        %v1404 = vshll.u32 %v1329, 16
        %v1406 = vor.u32 %v1403, %v1404
        %v1407 = vsel %vm1357, %v1399, %v1406
        %v1408 = vrot.slane %v1403, 4
        %v1410 = vshrl.u32 %v1330, 16
        %v1412 = vrot.slane %v1410, 7
        %v1413 = vshll.u32 %v1330, 16
        %v1415 = vor.u32 %v1412, %v1413
        %v1416 = vrot.slane %v1412, 4
        %v1418 = vshrl.u32 %v1331, 16
        %v1420 = vrot.slane %v1418, 7
        %v1421 = vshll.u32 %v1331, 16
        %v1423 = vor.u32 %v1420, %v1421
        %v1424 = vsel %vm1357, %v1416, %v1423
        %v1425 = vrot.slane %v1420, 4
        %v1427 = vshrl.u32 %v1332, 16
        %v1429 = vrot.slane %v1427, 7
        %v1430 = vshll.u32 %v1332, 16
        %v1432 = vor.u32 %v1429, %v1430
        %v1433 = vrot.slane %v1429, 4
        %v1435 = vshrl.u32 %v1333, 16
        %v1437 = vrot.slane %v1435, 7
        %v1438 = vshll.u32 %v1333, 16
        %v1440 = vor.u32 %v1437, %v1438
        %v1441 = vsel %vm1357, %v1433, %v1440
        %v1442 = vrot.slane %v1437, 4
        %v1444 = vshrl.u32 %v1334, 16
        %v1446 = vrot.slane %v1444, 7
        %v1447 = vshll.u32 %v1334, 16
        %v1449 = vor.u32 %v1446, %v1447
        %v1450 = vrot.slane %v1446, 4
        %v1452 = vshrl.u32 %v1335, 16
        %v1454 = vrot.slane %v1452, 7
        %v1455 = vshll.u32 %v1335, 16
        %v1457 = vor.u32 %v1454, %v1455
        %v1458 = vsel %vm1357, %v1450, %v1457
        %v1459 = vrot.slane %v1454, 4
        %v1461 = vshrl.u32 %v1336, 16
        %v1463 = vrot.slane %v1461, 7
        %v1464 = vshll.u32 %v1336, 16
        %v1466 = vor.u32 %v1463, %v1464
        %v1467 = vrot.slane %v1463, 4
        %v1469 = vshrl.u32 %v1337, 16
        %v1471 = vrot.slane %v1469, 7
        %v1472 = vshll.u32 %v1337, 16
        %v1474 = vor.u32 %v1471, %v1472
        %v1475 = vsel %vm1357, %v1467, %v1474
        %v1476 = vrot.slane %v1471, 4
        %v1478 = vshrl.u32 %v1338, 16
        %v1480 = vrot.slane %v1478, 7
        %v1481 = vshll.u32 %v1338, 16
        %v1483 = vor.u32 %v1480, %v1481
        %v1484 = vrot.slane %v1480, 4
        %v1486 = vshrl.u32 %v1339, 16
        %v1488 = vrot.slane %v1486, 7
        %v1489 = vshll.u32 %v1339, 16
        %v1491 = vor.u32 %v1488, %v1489
        %v1492 = vsel %vm1357, %v1484, %v1491
        %v1493 = vrot.slane %v1488, 4
        %v1495 = vshrl.u32 %v1340, 16
        %v1497 = vrot.slane %v1495, 7
        %v1498 = vshll.u32 %v1340, 16
        %v1500 = vor.u32 %v1497, %v1498
        %v1501 = vrot.slane %v1497, 4
        %v1503 = vshrl.u32 %v1341, 16
        %v1505 = vrot.slane %v1503, 7
        %v1506 = vshll.u32 %v1341, 16
        %v1508 = vor.u32 %v1505, %v1506
        %v1509 = vsel %vm1357, %v1501, %v1508
        %v1510 = vrot.slane %v1505, 4
        %v1512 = vshrl.u32 %v1342, 16
        %v1514 = vrot.slane %v1512, 7
        %v1515 = vshll.u32 %v1342, 16
        %v1517 = vor.u32 %v1514, %v1515
        %v1518 = vrot.slane %v1514, 4
        %v1520 = vshrl.u32 %v1343, 16
        %v1522 = vrot.slane %v1520, 7
        %v1523 = vshll.u32 %v1343, 16
        %v1525 = vor.u32 %v1522, %v1523
        %v1526 = vsel %vm1357, %v1518, %v1525
        %v1527 = vrot.slane %v1522, 4
        %v1529 = vshrl.u32 %v1344, 16
        %v1531 = vrot.slane %v1529, 7
        %v1532 = vshll.u32 %v1344, 16
        %v1534 = vor.u32 %v1531, %v1532
        %v1535 = vrot.slane %v1531, 4
        %v1537 = vshrl.u32 %v1345, 16
        %v1539 = vrot.slane %v1537, 7
        %v1540 = vshll.u32 %v1345, 16
        %v1542 = vor.u32 %v1539, %v1540
        %v1543 = vsel %vm1357, %v1535, %v1542
        %v1544 = vrot.slane %v1539, 4
        %v1546 = vshrl.u32 %v1346, 16
        %v1548 = vrot.slane %v1546, 7
        %v1549 = vshll.u32 %v1346, 16
        %v1551 = vor.u32 %v1548, %v1549
        %v1552 = vrot.slane %v1548, 4
        %v1554 = vshrl.u32 %v1347, 16
        %v1556 = vrot.slane %v1554, 7
        %v1557 = vshll.u32 %v1347, 16
        %v1559 = vor.u32 %v1556, %v1557
        %v1560 = vsel %vm1357, %v1552, %v1559
        %v1561 = vrot.slane %v1556, 4
        %v1563 = vshrl.u32 %v1348, 16
        %v1565 = vrot.slane %v1563, 7
        %v1566 = vshll.u32 %v1348, 16
        %v1568 = vor.u32 %v1565, %v1566
        %v1569 = vrot.slane %v1565, 4
        %v1571 = vshrl.u32 %v1349, 16
        %v1573 = vrot.slane %v1571, 7
        %v1574 = vshll.u32 %v1349, 16
        %v1576 = vor.u32 %v1573, %v1574
        %v1577 = vsel %vm1357, %v1569, %v1576
        %v1578 = vrot.slane %v1573, 4
        %v1580 = vshrl.u32 %v1350, 16
        %v1582 = vrot.slane %v1580, 7
        %v1583 = vshll.u32 %v1350, 16
        %v1585 = vor.u32 %v1582, %v1583
        %v1586 = vrot.slane %v1582, 4
        %v1588 = vshrl.u32 %v1351, 16
        %v1590 = vrot.slane %v1588, 7
        %v1591 = vshll.u32 %v1351, 16
        %v1593 = vor.u32 %v1590, %v1591
        %v1594 = vsel %vm1357, %v1586, %v1593
        %v1595 = vrot.slane %v1590, 4
        %v1597 = vshrl.u32 %v1352, 16
        %v1599 = vrot.slane %v1597, 7
        %v1600 = vshll.u32 %v1352, 16
        %v1602 = vor.u32 %v1599, %v1600
        %v1603 = vrot.slane %v1599, 4
        %v1605 = vshrl.u32 %v1353, 16
        %v1607 = vrot.slane %v1605, 7
        %v1608 = vshll.u32 %v1353, 16
        %v1610 = vor.u32 %v1607, %v1608
        %v1611 = vsel %vm1357, %v1603, %v1610
        %v1612 = vrot.slane %v1607, 4
        %v1614 = vshrl.u32 %v1354, 16
        %v1616 = vrot.slane %v1614, 7
        %v1617 = vshll.u32 %v1354, 16
        %v1619 = vor.u32 %v1616, %v1617
        %v1620 = vrot.slane %v1616, 4
        %v1622 = vshrl.u32 %v1355, 16
        %v1624 = vrot.slane %v1622, 7
        %v1625 = vshll.u32 %v1355, 16
        %v1627 = vor.u32 %v1624, %v1625
        %v1628 = vsel %vm1357, %v1620, %v1627
        %v1629 = vrot.slane %v1624, 4
        %s1678 = scalar_lea.vmem [#allocation2], 12
        %vm1679 = vcmask 1043456
        %vm1680 = vmand %vm1679, %vm1268
        %v1681 = vld [vmem:[%s1678] sm:$0xf]
        %v1682 = vsel %vm1680, %v1364, %v1681
        %1683 = vst [vmem:[%s1678] sm:$0xf] %v1682
        %1684 = vst [vmem:[%s1678 + $0x4] sm:$0xf] %v1373
        %v1685 = vld [vmem:[%s1678 + $0x8] sm:$0x1]
        %v1686 = vsel %vm1213, %v1374, %v1685
        %1687 = vst [vmem:[%s1678 + $0x8] sm:$0x1] %v1686
        %v1688 = vld [vmem:[%s1678 + $0xc] sm:$0xf]
        %v1689 = vsel %vm1680, %v1381, %v1688
        %1690 = vst [vmem:[%s1678 + $0xc] sm:$0xf] %v1689
        %1691 = vst [vmem:[%s1678 + $0x10] sm:$0xf] %v1390
        %v1692 = vld [vmem:[%s1678 + $0x14] sm:$0x1]
        %v1693 = vsel %vm1213, %v1391, %v1692
        %1694 = vst [vmem:[%s1678 + $0x14] sm:$0x1] %v1693
        %v1695 = vld [vmem:[%s1678 + $0x18] sm:$0xf]
        %v1696 = vsel %vm1680, %v1398, %v1695
        %1697 = vst [vmem:[%s1678 + $0x18] sm:$0xf] %v1696
        %1698 = vst [vmem:[%s1678 + $0x1c] sm:$0xf] %v1407
        %v1699 = vld [vmem:[%s1678 + $0x20] sm:$0x1]
        %v1700 = vsel %vm1213, %v1408, %v1699
        %1701 = vst [vmem:[%s1678 + $0x20] sm:$0x1] %v1700
        %v1702 = vld [vmem:[%s1678 + $0x24] sm:$0xf]
        %v1703 = vsel %vm1680, %v1415, %v1702
        %1704 = vst [vmem:[%s1678 + $0x24] sm:$0xf] %v1703
        %1705 = vst [vmem:[%s1678 + $0x28] sm:$0xf] %v1424
        %v1706 = vld [vmem:[%s1678 + $0x2c] sm:$0x1]
        %v1707 = vsel %vm1213, %v1425, %v1706
        %1708 = vst [vmem:[%s1678 + $0x2c] sm:$0x1] %v1707
        %v1709 = vld [vmem:[%s1678 + $0x30] sm:$0xf]
        %v1710 = vsel %vm1680, %v1432, %v1709
        %1711 = vst [vmem:[%s1678 + $0x30] sm:$0xf] %v1710
        %1712 = vst [vmem:[%s1678 + $0x34] sm:$0xf] %v1441
        %v1713 = vld [vmem:[%s1678 + $0x38] sm:$0x1]
        %v1714 = vsel %vm1213, %v1442, %v1713
        %1715 = vst [vmem:[%s1678 + $0x38] sm:$0x1] %v1714
        %v1716 = vld [vmem:[%s1678 + $0x3c] sm:$0xf]
        %v1717 = vsel %vm1680, %v1449, %v1716
        %1718 = vst [vmem:[%s1678 + $0x3c] sm:$0xf] %v1717
        %1719 = vst [vmem:[%s1678 + $0x40] sm:$0xf] %v1458
        %v1720 = vld [vmem:[%s1678 + $0x44] sm:$0x1]
        %v1721 = vsel %vm1213, %v1459, %v1720
        %1722 = vst [vmem:[%s1678 + $0x44] sm:$0x1] %v1721
        %v1723 = vld [vmem:[%s1678 + $0x48] sm:$0xf]
        %v1724 = vsel %vm1680, %v1466, %v1723
        %1725 = vst [vmem:[%s1678 + $0x48] sm:$0xf] %v1724
        %1726 = vst [vmem:[%s1678 + $0x4c] sm:$0xf] %v1475
        %v1727 = vld [vmem:[%s1678 + $0x50] sm:$0x1]
        %v1728 = vsel %vm1213, %v1476, %v1727
        %1729 = vst [vmem:[%s1678 + $0x50] sm:$0x1] %v1728
        %v1730 = vld [vmem:[%s1678 + $0x54] sm:$0xf]
        %v1731 = vsel %vm1680, %v1483, %v1730
        %1732 = vst [vmem:[%s1678 + $0x54] sm:$0xf] %v1731
        %1733 = vst [vmem:[%s1678 + $0x58] sm:$0xf] %v1492
        %v1734 = vld [vmem:[%s1678 + $0x5c] sm:$0x1]
        %v1735 = vsel %vm1213, %v1493, %v1734
        %1736 = vst [vmem:[%s1678 + $0x5c] sm:$0x1] %v1735
        %v1737 = vld [vmem:[%s1678 + $0x60] sm:$0xf]
        %v1738 = vsel %vm1680, %v1500, %v1737
        %1739 = vst [vmem:[%s1678 + $0x60] sm:$0xf] %v1738
        %1740 = vst [vmem:[%s1678 + $0x64] sm:$0xf] %v1509
        %v1741 = vld [vmem:[%s1678 + $0x68] sm:$0x1]
        %v1742 = vsel %vm1213, %v1510, %v1741
        %1743 = vst [vmem:[%s1678 + $0x68] sm:$0x1] %v1742
        %v1744 = vld [vmem:[%s1678 + $0x6c] sm:$0xf]
        %v1745 = vsel %vm1680, %v1517, %v1744
        %1746 = vst [vmem:[%s1678 + $0x6c] sm:$0xf] %v1745
        %1747 = vst [vmem:[%s1678 + $0x70] sm:$0xf] %v1526
        %v1748 = vld [vmem:[%s1678 + $0x74] sm:$0x1]
        %v1749 = vsel %vm1213, %v1527, %v1748
        %1750 = vst [vmem:[%s1678 + $0x74] sm:$0x1] %v1749
        %v1751 = vld [vmem:[%s1678 + $0x78] sm:$0xf]
        %v1752 = vsel %vm1680, %v1534, %v1751
        %1753 = vst [vmem:[%s1678 + $0x78] sm:$0xf] %v1752
        %1754 = vst [vmem:[%s1678 + $0x7c] sm:$0xf] %v1543
        %v1755 = vld [vmem:[%s1678 + $0x80] sm:$0x1]
        %v1756 = vsel %vm1213, %v1544, %v1755
        %1757 = vst [vmem:[%s1678 + $0x80] sm:$0x1] %v1756
        %v1758 = vld [vmem:[%s1678 + $0x84] sm:$0xf]
        %v1759 = vsel %vm1680, %v1551, %v1758
        %1760 = vst [vmem:[%s1678 + $0x84] sm:$0xf] %v1759
        %1761 = vst [vmem:[%s1678 + $0x88] sm:$0xf] %v1560
        %v1762 = vld [vmem:[%s1678 + $0x8c] sm:$0x1]
        %v1763 = vsel %vm1213, %v1561, %v1762
        %1764 = vst [vmem:[%s1678 + $0x8c] sm:$0x1] %v1763
        %v1765 = vld [vmem:[%s1678 + $0x90] sm:$0xf]
        %v1766 = vsel %vm1680, %v1568, %v1765
        %1767 = vst [vmem:[%s1678 + $0x90] sm:$0xf] %v1766
        %1768 = vst [vmem:[%s1678 + $0x94] sm:$0xf] %v1577
        %v1769 = vld [vmem:[%s1678 + $0x98] sm:$0x1]
        %v1770 = vsel %vm1213, %v1578, %v1769
        %1771 = vst [vmem:[%s1678 + $0x98] sm:$0x1] %v1770
        %v1772 = vld [vmem:[%s1678 + $0x9c] sm:$0xf]
        %v1773 = vsel %vm1680, %v1585, %v1772
        %1774 = vst [vmem:[%s1678 + $0x9c] sm:$0xf] %v1773
        %1775 = vst [vmem:[%s1678 + $0xa0] sm:$0xf] %v1594
        %v1776 = vld [vmem:[%s1678 + $0xa4] sm:$0x1]
        %v1777 = vsel %vm1213, %v1595, %v1776
        %1778 = vst [vmem:[%s1678 + $0xa4] sm:$0x1] %v1777
        %v1779 = vld [vmem:[%s1678 + $0xa8] sm:$0xf]
        %v1780 = vsel %vm1680, %v1602, %v1779
        %1781 = vst [vmem:[%s1678 + $0xa8] sm:$0xf] %v1780
        %1782 = vst [vmem:[%s1678 + $0xac] sm:$0xf] %v1611
        %v1783 = vld [vmem:[%s1678 + $0xb0] sm:$0x1]
        %v1784 = vsel %vm1213, %v1612, %v1783
        %1785 = vst [vmem:[%s1678 + $0xb0] sm:$0x1] %v1784
        %v1786 = vld [vmem:[%s1678 + $0xb4] sm:$0xf]
        %v1787 = vsel %vm1680, %v1619, %v1786
        %1788 = vst [vmem:[%s1678 + $0xb4] sm:$0xf] %v1787
        %1789 = vst [vmem:[%s1678 + $0xb8] sm:$0xf] %v1628
        %v1790 = vld [vmem:[%s1678 + $0xbc] sm:$0x1]
        %v1791 = vsel %vm1213, %v1629, %v1790
        %1792 = vst [vmem:[%s1678 + $0xbc] sm:$0x1] %v1791
        %v1793 = vld [vmem:[#allocation2] sm:$0xf]
        %v1794 = vld [vmem:[#allocation2 + $0x4] sm:$0xf]
        %v1795 = vld [vmem:[#allocation2 + $0xc] sm:$0xf]
        %v1796 = vld [vmem:[#allocation2 + $0x10] sm:$0xf]
        %v1797 = vld [vmem:[#allocation2 + $0x18] sm:$0xf]
        %v1798 = vld [vmem:[#allocation2 + $0x1c] sm:$0xf]
        %v1799 = vld [vmem:[#allocation2 + $0x24] sm:$0xf]
        %v1800 = vld [vmem:[#allocation2 + $0x28] sm:$0xf]
        %v1801 = vld [vmem:[#allocation2 + $0x30] sm:$0xf]
        %v1802 = vld [vmem:[#allocation2 + $0x34] sm:$0xf]
        %v1803 = vld [vmem:[#allocation2 + $0x3c] sm:$0xf]
        %v1804 = vld [vmem:[#allocation2 + $0x40] sm:$0xf]
        %v1805 = vld [vmem:[#allocation2 + $0x48] sm:$0xf]
        %v1806 = vld [vmem:[#allocation2 + $0x4c] sm:$0xf]
        %v1807 = vld [vmem:[#allocation2 + $0x54] sm:$0xf]
        %v1808 = vld [vmem:[#allocation2 + $0x58] sm:$0xf]
        %v1809 = vld [vmem:[#allocation2 + $0x60] sm:$0xf]
        %v1810 = vld [vmem:[#allocation2 + $0x64] sm:$0xf]
        %v1811 = vld [vmem:[#allocation2 + $0x6c] sm:$0xf]
        %v1812 = vld [vmem:[#allocation2 + $0x70] sm:$0xf]
        %v1813 = vld [vmem:[#allocation2 + $0x78] sm:$0xf]
        %v1814 = vld [vmem:[#allocation2 + $0x7c] sm:$0xf]
        %v1815 = vld [vmem:[#allocation2 + $0x84] sm:$0xf]
        %v1816 = vld [vmem:[#allocation2 + $0x88] sm:$0xf]
        %v1817 = vld [vmem:[#allocation2 + $0x90] sm:$0xf]
        %v1818 = vld [vmem:[#allocation2 + $0x94] sm:$0xf]
        %v1819 = vld [vmem:[#allocation2 + $0x9c] sm:$0xf]
        %v1820 = vld [vmem:[#allocation2 + $0xa0] sm:$0xf]
        %v1821 = vld [vmem:[#allocation2 + $0xa8] sm:$0xf]
        %v1822 = vld [vmem:[#allocation2 + $0xac] sm:$0xf]
        %v1823 = vld [vmem:[#allocation2 + $0xb4] sm:$0xf]
        %v1824 = vld [vmem:[#allocation2 + $0xb8] sm:$0xf]
        %1825 = vst [vmem:[#allocation3] sm:$0xf] %v1793
        %1826 = vst [vmem:[#allocation3 + $0x24] sm:$0xf] %v1794
        %1827 = vst [vmem:[#allocation3 + $0x48] sm:$0xf] %v1795
        %1828 = vst [vmem:[#allocation3 + $0x6c] sm:$0xf] %v1796
        %1829 = vst [vmem:[#allocation3 + $0x90] sm:$0xf] %v1797
        %1830 = vst [vmem:[#allocation3 + $0xb4] sm:$0xf] %v1798
        %1831 = vst [vmem:[#allocation3 + $0xd8] sm:$0xf] %v1799
        %1832 = vst [vmem:[#allocation3 + $0xfc] sm:$0xf] %v1800
        %1833 = vst [vmem:[#allocation3 + $0x120] sm:$0xf] %v1801
        %1834 = vst [vmem:[#allocation3 + $0x144] sm:$0xf] %v1802
        %1835 = vst [vmem:[#allocation3 + $0x168] sm:$0xf] %v1803
        %1836 = vst [vmem:[#allocation3 + $0x18c] sm:$0xf] %v1804
        %1837 = vst [vmem:[#allocation3 + $0x1b0] sm:$0xf] %v1805
        %1838 = vst [vmem:[#allocation3 + $0x1d4] sm:$0xf] %v1806
        %1839 = vst [vmem:[#allocation3 + $0x1f8] sm:$0xf] %v1807
        %1840 = vst [vmem:[#allocation3 + $0x21c] sm:$0xf] %v1808
        %1841 = vst [vmem:[#allocation3 + $0x240] sm:$0xf] %v1809
        %1842 = vst [vmem:[#allocation3 + $0x264] sm:$0xf] %v1810
        %1843 = vst [vmem:[#allocation3 + $0x288] sm:$0xf] %v1811
        %1844 = vst [vmem:[#allocation3 + $0x2ac] sm:$0xf] %v1812
        %1845 = vst [vmem:[#allocation3 + $0x2d0] sm:$0xf] %v1813
        %1846 = vst [vmem:[#allocation3 + $0x2f4] sm:$0xf] %v1814
        %1847 = vst [vmem:[#allocation3 + $0x318] sm:$0xf] %v1815
        %1848 = vst [vmem:[#allocation3 + $0x33c] sm:$0xf] %v1816
        %1849 = vst [vmem:[#allocation3 + $0x360] sm:$0xf] %v1817
        %1850 = vst [vmem:[#allocation3 + $0x384] sm:$0xf] %v1818
        %1851 = vst [vmem:[#allocation3 + $0x3a8] sm:$0xf] %v1819
        %1852 = vst [vmem:[#allocation3 + $0x3cc] sm:$0xf] %v1820
        %1853 = vst [vmem:[#allocation3 + $0x3f0] sm:$0xf] %v1821
        %1854 = vst [vmem:[#allocation3 + $0x414] sm:$0xf] %v1822
        %1855 = vst [vmem:[#allocation3 + $0x438] sm:$0xf] %v1823
        %1856 = vst [vmem:[#allocation3 + $0x45c] sm:$0xf] %v1824
        %v1857 = vld [vmem:[#allocation2] sm:$0xf]
        %v1858 = vld [vmem:[#allocation2 + $0x4] sm:$0xf]
        %v1859 = vld [vmem:[#allocation2 + $0x8] sm:$0x1]
        %v1860 = vld [vmem:[#allocation2 + $0xc] sm:$0xf]
        %v1861 = vld [vmem:[#allocation2 + $0x10] sm:$0xf]
        %v1862 = vld [vmem:[#allocation2 + $0x14] sm:$0x1]
        %v1863 = vld [vmem:[#allocation2 + $0x18] sm:$0xf]
        %v1864 = vld [vmem:[#allocation2 + $0x1c] sm:$0xf]
        %v1865 = vld [vmem:[#allocation2 + $0x20] sm:$0x1]
        %v1866 = vld [vmem:[#allocation2 + $0x24] sm:$0xf]
        %v1867 = vld [vmem:[#allocation2 + $0x28] sm:$0xf]
        %v1868 = vld [vmem:[#allocation2 + $0x2c] sm:$0x1]
        %v1869 = vld [vmem:[#allocation2 + $0x30] sm:$0xf]
        %v1870 = vld [vmem:[#allocation2 + $0x34] sm:$0xf]
        %v1871 = vld [vmem:[#allocation2 + $0x38] sm:$0x1]
        %v1872 = vld [vmem:[#allocation2 + $0x3c] sm:$0xf]
        %v1873 = vld [vmem:[#allocation2 + $0x40] sm:$0xf]
        %v1874 = vld [vmem:[#allocation2 + $0x44] sm:$0x1]
        %v1875 = vld [vmem:[#allocation2 + $0x48] sm:$0xf]
        %v1876 = vld [vmem:[#allocation2 + $0x4c] sm:$0xf]
        %v1877 = vld [vmem:[#allocation2 + $0x50] sm:$0x1]
        %v1878 = vld [vmem:[#allocation2 + $0x54] sm:$0xf]
        %v1879 = vld [vmem:[#allocation2 + $0x58] sm:$0xf]
        %v1880 = vld [vmem:[#allocation2 + $0x5c] sm:$0x1]
        %v1881 = vld [vmem:[#allocation2 + $0x60] sm:$0xf]
        %v1882 = vld [vmem:[#allocation2 + $0x64] sm:$0xf]
        %v1883 = vld [vmem:[#allocation2 + $0x68] sm:$0x1]
        %v1884 = vld [vmem:[#allocation2 + $0x6c] sm:$0xf]
        %v1885 = vld [vmem:[#allocation2 + $0x70] sm:$0xf]
        %v1886 = vld [vmem:[#allocation2 + $0x74] sm:$0x1]
        %v1887 = vld [vmem:[#allocation2 + $0x78] sm:$0xf]
        %v1888 = vld [vmem:[#allocation2 + $0x7c] sm:$0xf]
        %v1889 = vld [vmem:[#allocation2 + $0x80] sm:$0x1]
        %v1890 = vld [vmem:[#allocation2 + $0x84] sm:$0xf]
        %v1891 = vld [vmem:[#allocation2 + $0x88] sm:$0xf]
        %v1892 = vld [vmem:[#allocation2 + $0x8c] sm:$0x1]
        %v1893 = vld [vmem:[#allocation2 + $0x90] sm:$0xf]
        %v1894 = vld [vmem:[#allocation2 + $0x94] sm:$0xf]
        %v1895 = vld [vmem:[#allocation2 + $0x98] sm:$0x1]
        %v1896 = vld [vmem:[#allocation2 + $0x9c] sm:$0xf]
        %v1897 = vld [vmem:[#allocation2 + $0xa0] sm:$0xf]
        %v1898 = vld [vmem:[#allocation2 + $0xa4] sm:$0x1]
        %v1899 = vld [vmem:[#allocation2 + $0xa8] sm:$0xf]
        %v1900 = vld [vmem:[#allocation2 + $0xac] sm:$0xf]
        %v1901 = vld [vmem:[#allocation2 + $0xb0] sm:$0x1]
        %v1902 = vld [vmem:[#allocation2 + $0xb4] sm:$0xf]
        %v1903 = vld [vmem:[#allocation2 + $0xb8] sm:$0xf]
        %v1904 = vld [vmem:[#allocation2 + $0xbc] sm:$0x1]
        %vm1905 = vsmask.f32 3328
        %vm1906 = vsmask.f32 7440
        %vm1907 = vmor %vm1905, %vm1906
        %v1909 = vshrl.u32 %v1857, 16
        %v1911 = vrot.slane %v1909, 4
        %v1912 = vshll.u32 %v1857, 16
        %v1914 = vrot.slane %v1912, 5
        %v1915 = vor.u32 %v1911, %v1914
        %v1916 = vrot.slane %v1915, 4
        %v1918 = vshll.u32 %v1858, 16
        %v1920 = vrot.slane %v1918, 5
        %v1921 = vsel %vm1907, %v1916, %v1920
        %v1922 = vshrl.u32 %v1858, 16
        %v1924 = vrot.slane %v1922, 4
        %v1925 = vor.u32 %v1924, %v1920
        %v1926 = vrot.slane %v1925, 4
        %v1928 = vshll.u32 %v1859, 16
        %v1930 = vrot.slane %v1928, 5
        %v1931 = vsel %vm1907, %v1926, %v1930
        %v1933 = vshrl.u32 %v1860, 16
        %v1935 = vrot.slane %v1933, 4
        %v1936 = vshll.u32 %v1860, 16
        %v1938 = vrot.slane %v1936, 5
        %v1939 = vor.u32 %v1935, %v1938
        %v1940 = vrot.slane %v1939, 4
        %v1942 = vshll.u32 %v1861, 16
        %v1944 = vrot.slane %v1942, 5
        %v1945 = vsel %vm1907, %v1940, %v1944
        %v1946 = vshrl.u32 %v1861, 16
        %v1948 = vrot.slane %v1946, 4
        %v1949 = vor.u32 %v1948, %v1944
        %v1950 = vrot.slane %v1949, 4
        %v1952 = vshll.u32 %v1862, 16
        %v1954 = vrot.slane %v1952, 5
        %v1955 = vsel %vm1907, %v1950, %v1954
        %v1957 = vshrl.u32 %v1863, 16
        %v1959 = vrot.slane %v1957, 4
        %v1960 = vshll.u32 %v1863, 16
        %v1962 = vrot.slane %v1960, 5
        %v1963 = vor.u32 %v1959, %v1962
        %v1964 = vrot.slane %v1963, 4
        %v1966 = vshll.u32 %v1864, 16
        %v1968 = vrot.slane %v1966, 5
        %v1969 = vsel %vm1907, %v1964, %v1968
        %v1970 = vshrl.u32 %v1864, 16
        %v1972 = vrot.slane %v1970, 4
        %v1973 = vor.u32 %v1972, %v1968
        %v1974 = vrot.slane %v1973, 4
        %v1976 = vshll.u32 %v1865, 16
        %v1978 = vrot.slane %v1976, 5
        %v1979 = vsel %vm1907, %v1974, %v1978
        %v1981 = vshrl.u32 %v1866, 16
        %v1983 = vrot.slane %v1981, 4
        %v1984 = vshll.u32 %v1866, 16
        %v1986 = vrot.slane %v1984, 5
        %v1987 = vor.u32 %v1983, %v1986
        %v1988 = vrot.slane %v1987, 4
        %v1990 = vshll.u32 %v1867, 16
        %v1992 = vrot.slane %v1990, 5
        %v1993 = vsel %vm1907, %v1988, %v1992
        %v1994 = vshrl.u32 %v1867, 16
        %v1996 = vrot.slane %v1994, 4
        %v1997 = vor.u32 %v1996, %v1992
        %v1998 = vrot.slane %v1997, 4
        %v2000 = vshll.u32 %v1868, 16
        %v2002 = vrot.slane %v2000, 5
        %v2003 = vsel %vm1907, %v1998, %v2002
        %v2005 = vshrl.u32 %v1869, 16
        %v2007 = vrot.slane %v2005, 4
        %v2008 = vshll.u32 %v1869, 16
        %v2010 = vrot.slane %v2008, 5
        %v2011 = vor.u32 %v2007, %v2010
        %v2012 = vrot.slane %v2011, 4
        %v2014 = vshll.u32 %v1870, 16
        %v2016 = vrot.slane %v2014, 5
        %v2017 = vsel %vm1907, %v2012, %v2016
        %v2018 = vshrl.u32 %v1870, 16
        %v2020 = vrot.slane %v2018, 4
        %v2021 = vor.u32 %v2020, %v2016
        %v2022 = vrot.slane %v2021, 4
        %v2024 = vshll.u32 %v1871, 16
        %v2026 = vrot.slane %v2024, 5
        %v2027 = vsel %vm1907, %v2022, %v2026
        %v2029 = vshrl.u32 %v1872, 16
        %v2031 = vrot.slane %v2029, 4
        %v2032 = vshll.u32 %v1872, 16
        %v2034 = vrot.slane %v2032, 5
        %v2035 = vor.u32 %v2031, %v2034
        %v2036 = vrot.slane %v2035, 4
        %v2038 = vshll.u32 %v1873, 16
        %v2040 = vrot.slane %v2038, 5
        %v2041 = vsel %vm1907, %v2036, %v2040
        %v2042 = vshrl.u32 %v1873, 16
        %v2044 = vrot.slane %v2042, 4
        %v2045 = vor.u32 %v2044, %v2040
        %v2046 = vrot.slane %v2045, 4
        %v2048 = vshll.u32 %v1874, 16
        %v2050 = vrot.slane %v2048, 5
        %v2051 = vsel %vm1907, %v2046, %v2050
        %v2053 = vshrl.u32 %v1875, 16
        %v2055 = vrot.slane %v2053, 4
        %v2056 = vshll.u32 %v1875, 16
        %v2058 = vrot.slane %v2056, 5
        %v2059 = vor.u32 %v2055, %v2058
        %v2060 = vrot.slane %v2059, 4
        %v2062 = vshll.u32 %v1876, 16
        %v2064 = vrot.slane %v2062, 5
        %v2065 = vsel %vm1907, %v2060, %v2064
        %v2066 = vshrl.u32 %v1876, 16
        %v2068 = vrot.slane %v2066, 4
        %v2069 = vor.u32 %v2068, %v2064
        %v2070 = vrot.slane %v2069, 4
        %v2072 = vshll.u32 %v1877, 16
        %v2074 = vrot.slane %v2072, 5
        %v2075 = vsel %vm1907, %v2070, %v2074
        %v2077 = vshrl.u32 %v1878, 16
        %v2079 = vrot.slane %v2077, 4
        %v2080 = vshll.u32 %v1878, 16
        %v2082 = vrot.slane %v2080, 5
        %v2083 = vor.u32 %v2079, %v2082
        %v2084 = vrot.slane %v2083, 4
        %v2086 = vshll.u32 %v1879, 16
        %v2088 = vrot.slane %v2086, 5
        %v2089 = vsel %vm1907, %v2084, %v2088
        %v2090 = vshrl.u32 %v1879, 16
        %v2092 = vrot.slane %v2090, 4
        %v2093 = vor.u32 %v2092, %v2088
        %v2094 = vrot.slane %v2093, 4
        %v2096 = vshll.u32 %v1880, 16
        %v2098 = vrot.slane %v2096, 5
        %v2099 = vsel %vm1907, %v2094, %v2098
        %v2101 = vshrl.u32 %v1881, 16
        %v2103 = vrot.slane %v2101, 4
        %v2104 = vshll.u32 %v1881, 16
        %v2106 = vrot.slane %v2104, 5
        %v2107 = vor.u32 %v2103, %v2106
        %v2108 = vrot.slane %v2107, 4
        %v2110 = vshll.u32 %v1882, 16
        %v2112 = vrot.slane %v2110, 5
        %v2113 = vsel %vm1907, %v2108, %v2112
        %v2114 = vshrl.u32 %v1882, 16
        %v2116 = vrot.slane %v2114, 4
        %v2117 = vor.u32 %v2116, %v2112
        %v2118 = vrot.slane %v2117, 4
        %v2120 = vshll.u32 %v1883, 16
        %v2122 = vrot.slane %v2120, 5
        %v2123 = vsel %vm1907, %v2118, %v2122
        %v2125 = vshrl.u32 %v1884, 16
        %v2127 = vrot.slane %v2125, 4
        %v2128 = vshll.u32 %v1884, 16
        %v2130 = vrot.slane %v2128, 5
        %v2131 = vor.u32 %v2127, %v2130
        %v2132 = vrot.slane %v2131, 4
        %v2134 = vshll.u32 %v1885, 16
        %v2136 = vrot.slane %v2134, 5
        %v2137 = vsel %vm1907, %v2132, %v2136
        %v2138 = vshrl.u32 %v1885, 16
        %v2140 = vrot.slane %v2138, 4
        %v2141 = vor.u32 %v2140, %v2136
        %v2142 = vrot.slane %v2141, 4
        %v2144 = vshll.u32 %v1886, 16
        %v2146 = vrot.slane %v2144, 5
        %v2147 = vsel %vm1907, %v2142, %v2146
        %v2149 = vshrl.u32 %v1887, 16
        %v2151 = vrot.slane %v2149, 4
        %v2152 = vshll.u32 %v1887, 16
        %v2154 = vrot.slane %v2152, 5
        %v2155 = vor.u32 %v2151, %v2154
        %v2156 = vrot.slane %v2155, 4
        %v2158 = vshll.u32 %v1888, 16
        %v2160 = vrot.slane %v2158, 5
        %v2161 = vsel %vm1907, %v2156, %v2160
        %v2162 = vshrl.u32 %v1888, 16
        %v2164 = vrot.slane %v2162, 4
        %v2165 = vor.u32 %v2164, %v2160
        %v2166 = vrot.slane %v2165, 4
        %v2168 = vshll.u32 %v1889, 16
        %v2170 = vrot.slane %v2168, 5
        %v2171 = vsel %vm1907, %v2166, %v2170
        %v2173 = vshrl.u32 %v1890, 16
        %v2175 = vrot.slane %v2173, 4
        %v2176 = vshll.u32 %v1890, 16
        %v2178 = vrot.slane %v2176, 5
        %v2179 = vor.u32 %v2175, %v2178
        %v2180 = vrot.slane %v2179, 4
        %v2182 = vshll.u32 %v1891, 16
        %v2184 = vrot.slane %v2182, 5
        %v2185 = vsel %vm1907, %v2180, %v2184
        %v2186 = vshrl.u32 %v1891, 16
        %v2188 = vrot.slane %v2186, 4
        %v2189 = vor.u32 %v2188, %v2184
        %v2190 = vrot.slane %v2189, 4
        %v2192 = vshll.u32 %v1892, 16
        %v2194 = vrot.slane %v2192, 5
        %v2195 = vsel %vm1907, %v2190, %v2194
        %v2197 = vshrl.u32 %v1893, 16
        %v2199 = vrot.slane %v2197, 4
        %v2200 = vshll.u32 %v1893, 16
        %v2202 = vrot.slane %v2200, 5
        %v2203 = vor.u32 %v2199, %v2202
        %v2204 = vrot.slane %v2203, 4
        %v2206 = vshll.u32 %v1894, 16
        %v2208 = vrot.slane %v2206, 5
        %v2209 = vsel %vm1907, %v2204, %v2208
        %v2210 = vshrl.u32 %v1894, 16
        %v2212 = vrot.slane %v2210, 4
        %v2213 = vor.u32 %v2212, %v2208
        %v2214 = vrot.slane %v2213, 4
        %v2216 = vshll.u32 %v1895, 16
        %v2218 = vrot.slane %v2216, 5
        %v2219 = vsel %vm1907, %v2214, %v2218
        %v2221 = vshrl.u32 %v1896, 16
        %v2223 = vrot.slane %v2221, 4
        %v2224 = vshll.u32 %v1896, 16
        %v2226 = vrot.slane %v2224, 5
        %v2227 = vor.u32 %v2223, %v2226
        %v2228 = vrot.slane %v2227, 4
        %v2230 = vshll.u32 %v1897, 16
        %v2232 = vrot.slane %v2230, 5
        %v2233 = vsel %vm1907, %v2228, %v2232
        %v2234 = vshrl.u32 %v1897, 16
        %v2236 = vrot.slane %v2234, 4
        %v2237 = vor.u32 %v2236, %v2232
        %v2238 = vrot.slane %v2237, 4
        %v2240 = vshll.u32 %v1898, 16
        %v2242 = vrot.slane %v2240, 5
        %v2243 = vsel %vm1907, %v2238, %v2242
        %v2245 = vshrl.u32 %v1899, 16
        %v2247 = vrot.slane %v2245, 4
        %v2248 = vshll.u32 %v1899, 16
        %v2250 = vrot.slane %v2248, 5
        %v2251 = vor.u32 %v2247, %v2250
        %v2252 = vrot.slane %v2251, 4
        %v2254 = vshll.u32 %v1900, 16
        %v2256 = vrot.slane %v2254, 5
        %v2257 = vsel %vm1907, %v2252, %v2256
        %v2258 = vshrl.u32 %v1900, 16
        %v2260 = vrot.slane %v2258, 4
        %v2261 = vor.u32 %v2260, %v2256
        %v2262 = vrot.slane %v2261, 4
        %v2264 = vshll.u32 %v1901, 16
        %v2266 = vrot.slane %v2264, 5
        %v2267 = vsel %vm1907, %v2262, %v2266
        %v2269 = vshrl.u32 %v1902, 16
        %v2271 = vrot.slane %v2269, 4
        %v2272 = vshll.u32 %v1902, 16
        %v2274 = vrot.slane %v2272, 5
        %v2275 = vor.u32 %v2271, %v2274
        %v2276 = vrot.slane %v2275, 4
        %v2278 = vshll.u32 %v1903, 16
        %v2280 = vrot.slane %v2278, 5
        %v2281 = vsel %vm1907, %v2276, %v2280
        %v2282 = vshrl.u32 %v1903, 16
        %v2284 = vrot.slane %v2282, 4
        %v2285 = vor.u32 %v2284, %v2280
        %v2286 = vrot.slane %v2285, 4
        %v2288 = vshll.u32 %v1904, 16
        %v2290 = vrot.slane %v2288, 5
        %v2291 = vsel %vm1907, %v2286, %v2290
        %2324 = vst [vmem:[#allocation3 + $0x4] sm:$0xf] %v1921
        %2325 = vst [vmem:[#allocation3 + $0x28] sm:$0xf] %v1931
        %2326 = vst [vmem:[#allocation3 + $0x4c] sm:$0xf] %v1945
        %2327 = vst [vmem:[#allocation3 + $0x70] sm:$0xf] %v1955
        %2328 = vst [vmem:[#allocation3 + $0x94] sm:$0xf] %v1969
        %2329 = vst [vmem:[#allocation3 + $0xb8] sm:$0xf] %v1979
        %2330 = vst [vmem:[#allocation3 + $0xdc] sm:$0xf] %v1993
        %2331 = vst [vmem:[#allocation3 + $0x100] sm:$0xf] %v2003
        %2332 = vst [vmem:[#allocation3 + $0x124] sm:$0xf] %v2017
        %2333 = vst [vmem:[#allocation3 + $0x148] sm:$0xf] %v2027
        %2334 = vst [vmem:[#allocation3 + $0x16c] sm:$0xf] %v2041
        %2335 = vst [vmem:[#allocation3 + $0x190] sm:$0xf] %v2051
        %2336 = vst [vmem:[#allocation3 + $0x1b4] sm:$0xf] %v2065
        %2337 = vst [vmem:[#allocation3 + $0x1d8] sm:$0xf] %v2075
        %2338 = vst [vmem:[#allocation3 + $0x1fc] sm:$0xf] %v2089
        %2339 = vst [vmem:[#allocation3 + $0x220] sm:$0xf] %v2099
        %2340 = vst [vmem:[#allocation3 + $0x244] sm:$0xf] %v2113
        %2341 = vst [vmem:[#allocation3 + $0x268] sm:$0xf] %v2123
        %2342 = vst [vmem:[#allocation3 + $0x28c] sm:$0xf] %v2137
        %2343 = vst [vmem:[#allocation3 + $0x2b0] sm:$0xf] %v2147
        %2344 = vst [vmem:[#allocation3 + $0x2d4] sm:$0xf] %v2161
        %2345 = vst [vmem:[#allocation3 + $0x2f8] sm:$0xf] %v2171
        %2346 = vst [vmem:[#allocation3 + $0x31c] sm:$0xf] %v2185
        %2347 = vst [vmem:[#allocation3 + $0x340] sm:$0xf] %v2195
        %2348 = vst [vmem:[#allocation3 + $0x364] sm:$0xf] %v2209
        %2349 = vst [vmem:[#allocation3 + $0x388] sm:$0xf] %v2219
        %2350 = vst [vmem:[#allocation3 + $0x3ac] sm:$0xf] %v2233
        %2351 = vst [vmem:[#allocation3 + $0x3d0] sm:$0xf] %v2243
        %2352 = vst [vmem:[#allocation3 + $0x3f4] sm:$0xf] %v2257
        %2353 = vst [vmem:[#allocation3 + $0x418] sm:$0xf] %v2267
        %2354 = vst [vmem:[#allocation3 + $0x43c] sm:$0xf] %v2281
        %2355 = vst [vmem:[#allocation3 + $0x460] sm:$0xf] %v2291
        %v2356 = vld [vmem:[#allocation2] sm:$0xe]
        %v2357 = vld [vmem:[#allocation2 + $0x4] sm:$0xf]
        %v2358 = vld [vmem:[#allocation2 + $0x8] sm:$0x1]
        %v2359 = vld [vmem:[#allocation2 + $0xc] sm:$0xe]
        %v2360 = vld [vmem:[#allocation2 + $0x10] sm:$0xf]
        %v2361 = vld [vmem:[#allocation2 + $0x14] sm:$0x1]
        %v2362 = vld [vmem:[#allocation2 + $0x18] sm:$0xe]
        %v2363 = vld [vmem:[#allocation2 + $0x1c] sm:$0xf]
        %v2364 = vld [vmem:[#allocation2 + $0x20] sm:$0x1]
        %v2365 = vld [vmem:[#allocation2 + $0x24] sm:$0xe]
        %v2366 = vld [vmem:[#allocation2 + $0x28] sm:$0xf]
        %v2367 = vld [vmem:[#allocation2 + $0x2c] sm:$0x1]
        %v2368 = vld [vmem:[#allocation2 + $0x30] sm:$0xe]
        %v2369 = vld [vmem:[#allocation2 + $0x34] sm:$0xf]
        %v2370 = vld [vmem:[#allocation2 + $0x38] sm:$0x1]
        %v2371 = vld [vmem:[#allocation2 + $0x3c] sm:$0xe]
        %v2372 = vld [vmem:[#allocation2 + $0x40] sm:$0xf]
        %v2373 = vld [vmem:[#allocation2 + $0x44] sm:$0x1]
        %v2374 = vld [vmem:[#allocation2 + $0x48] sm:$0xe]
        %v2375 = vld [vmem:[#allocation2 + $0x4c] sm:$0xf]
        %v2376 = vld [vmem:[#allocation2 + $0x50] sm:$0x1]
        %v2377 = vld [vmem:[#allocation2 + $0x54] sm:$0xe]
        %v2378 = vld [vmem:[#allocation2 + $0x58] sm:$0xf]
        %v2379 = vld [vmem:[#allocation2 + $0x5c] sm:$0x1]
        %v2380 = vld [vmem:[#allocation2 + $0x60] sm:$0xe]
        %v2381 = vld [vmem:[#allocation2 + $0x64] sm:$0xf]
        %v2382 = vld [vmem:[#allocation2 + $0x68] sm:$0x1]
        %v2383 = vld [vmem:[#allocation2 + $0x6c] sm:$0xe]
        %v2384 = vld [vmem:[#allocation2 + $0x70] sm:$0xf]
        %v2385 = vld [vmem:[#allocation2 + $0x74] sm:$0x1]
        %v2386 = vld [vmem:[#allocation2 + $0x78] sm:$0xe]
        %v2387 = vld [vmem:[#allocation2 + $0x7c] sm:$0xf]
        %v2388 = vld [vmem:[#allocation2 + $0x80] sm:$0x1]
        %v2389 = vld [vmem:[#allocation2 + $0x84] sm:$0xe]
        %v2390 = vld [vmem:[#allocation2 + $0x88] sm:$0xf]
        %v2391 = vld [vmem:[#allocation2 + $0x8c] sm:$0x1]
        %v2392 = vld [vmem:[#allocation2 + $0x90] sm:$0xe]
        %v2393 = vld [vmem:[#allocation2 + $0x94] sm:$0xf]
        %v2394 = vld [vmem:[#allocation2 + $0x98] sm:$0x1]
        %v2395 = vld [vmem:[#allocation2 + $0x9c] sm:$0xe]
        %v2396 = vld [vmem:[#allocation2 + $0xa0] sm:$0xf]
        %v2397 = vld [vmem:[#allocation2 + $0xa4] sm:$0x1]
        %v2398 = vld [vmem:[#allocation2 + $0xa8] sm:$0xe]
        %v2399 = vld [vmem:[#allocation2 + $0xac] sm:$0xf]
        %v2400 = vld [vmem:[#allocation2 + $0xb0] sm:$0x1]
        %v2401 = vld [vmem:[#allocation2 + $0xb4] sm:$0xe]
        %v2402 = vld [vmem:[#allocation2 + $0xb8] sm:$0xf]
        %v2403 = vld [vmem:[#allocation2 + $0xbc] sm:$0x1]
        %vm2452 = vcmask 1042432
        %vm2453 = vcmask 1046532
        %vm2454 = vmor %vm2452, %vm2453
        %v2455 = vrot.slane %v2356, 5
        %v2456 = vrot.slane %v2455, 4
        %v2457 = vrot.slane %v2357, 5
        %v2458 = vsel %vm2454, %v2456, %v2457
        %v2459 = vrot.slane %v2457, 4
        %v2460 = vrot.slane %v2358, 5
        %v2461 = vsel %vm2454, %v2459, %v2460
        %v2462 = vrot.slane %v2359, 5
        %v2463 = vrot.slane %v2462, 4
        %v2464 = vrot.slane %v2360, 5
        %v2465 = vsel %vm2454, %v2463, %v2464
        %v2466 = vrot.slane %v2464, 4
        %v2467 = vrot.slane %v2361, 5
        %v2468 = vsel %vm2454, %v2466, %v2467
        %v2469 = vrot.slane %v2362, 5
        %v2470 = vrot.slane %v2469, 4
        %v2471 = vrot.slane %v2363, 5
        %v2472 = vsel %vm2454, %v2470, %v2471
        %v2473 = vrot.slane %v2471, 4
        %v2474 = vrot.slane %v2364, 5
        %v2475 = vsel %vm2454, %v2473, %v2474
        %v2476 = vrot.slane %v2365, 5
        %v2477 = vrot.slane %v2476, 4
        %v2478 = vrot.slane %v2366, 5
        %v2479 = vsel %vm2454, %v2477, %v2478
        %v2480 = vrot.slane %v2478, 4
        %v2481 = vrot.slane %v2367, 5
        %v2482 = vsel %vm2454, %v2480, %v2481
        %v2483 = vrot.slane %v2368, 5
        %v2484 = vrot.slane %v2483, 4
        %v2485 = vrot.slane %v2369, 5
        %v2486 = vsel %vm2454, %v2484, %v2485
        %v2487 = vrot.slane %v2485, 4
        %v2488 = vrot.slane %v2370, 5
        %v2489 = vsel %vm2454, %v2487, %v2488
        %v2490 = vrot.slane %v2371, 5
        %v2491 = vrot.slane %v2490, 4
        %v2492 = vrot.slane %v2372, 5
        %v2493 = vsel %vm2454, %v2491, %v2492
        %v2494 = vrot.slane %v2492, 4
        %v2495 = vrot.slane %v2373, 5
        %v2496 = vsel %vm2454, %v2494, %v2495
        %v2497 = vrot.slane %v2374, 5
        %v2498 = vrot.slane %v2497, 4
        %v2499 = vrot.slane %v2375, 5
        %v2500 = vsel %vm2454, %v2498, %v2499
        %v2501 = vrot.slane %v2499, 4
        %v2502 = vrot.slane %v2376, 5
        %v2503 = vsel %vm2454, %v2501, %v2502
        %v2504 = vrot.slane %v2377, 5
        %v2505 = vrot.slane %v2504, 4
        %v2506 = vrot.slane %v2378, 5
        %v2507 = vsel %vm2454, %v2505, %v2506
        %v2508 = vrot.slane %v2506, 4
        %v2509 = vrot.slane %v2379, 5
        %v2510 = vsel %vm2454, %v2508, %v2509
        %v2511 = vrot.slane %v2380, 5
        %v2512 = vrot.slane %v2511, 4
        %v2513 = vrot.slane %v2381, 5
        %v2514 = vsel %vm2454, %v2512, %v2513
        %v2515 = vrot.slane %v2513, 4
        %v2516 = vrot.slane %v2382, 5
        %v2517 = vsel %vm2454, %v2515, %v2516
        %v2518 = vrot.slane %v2383, 5
        %v2519 = vrot.slane %v2518, 4
        %v2520 = vrot.slane %v2384, 5
        %v2521 = vsel %vm2454, %v2519, %v2520
        %v2522 = vrot.slane %v2520, 4
        %v2523 = vrot.slane %v2385, 5
        %v2524 = vsel %vm2454, %v2522, %v2523
        %v2525 = vrot.slane %v2386, 5
        %v2526 = vrot.slane %v2525, 4
        %v2527 = vrot.slane %v2387, 5
        %v2528 = vsel %vm2454, %v2526, %v2527
        %v2529 = vrot.slane %v2527, 4
        %v2530 = vrot.slane %v2388, 5
        %v2531 = vsel %vm2454, %v2529, %v2530
        %v2532 = vrot.slane %v2389, 5
        %v2533 = vrot.slane %v2532, 4
        %v2534 = vrot.slane %v2390, 5
        %v2535 = vsel %vm2454, %v2533, %v2534
        %v2536 = vrot.slane %v2534, 4
        %v2537 = vrot.slane %v2391, 5
        %v2538 = vsel %vm2454, %v2536, %v2537
        %v2539 = vrot.slane %v2392, 5
        %v2540 = vrot.slane %v2539, 4
        %v2541 = vrot.slane %v2393, 5
        %v2542 = vsel %vm2454, %v2540, %v2541
        %v2543 = vrot.slane %v2541, 4
        %v2544 = vrot.slane %v2394, 5
        %v2545 = vsel %vm2454, %v2543, %v2544
        %v2546 = vrot.slane %v2395, 5
        %v2547 = vrot.slane %v2546, 4
        %v2548 = vrot.slane %v2396, 5
        %v2549 = vsel %vm2454, %v2547, %v2548
        %v2550 = vrot.slane %v2548, 4
        %v2551 = vrot.slane %v2397, 5
        %v2552 = vsel %vm2454, %v2550, %v2551
        %v2553 = vrot.slane %v2398, 5
        %v2554 = vrot.slane %v2553, 4
        %v2555 = vrot.slane %v2399, 5
        %v2556 = vsel %vm2454, %v2554, %v2555
        %v2557 = vrot.slane %v2555, 4
        %v2558 = vrot.slane %v2400, 5
        %v2559 = vsel %vm2454, %v2557, %v2558
        %v2560 = vrot.slane %v2401, 5
        %v2561 = vrot.slane %v2560, 4
        %v2562 = vrot.slane %v2402, 5
        %v2563 = vsel %vm2454, %v2561, %v2562
        %v2564 = vrot.slane %v2562, 4
        %v2565 = vrot.slane %v2403, 5
        %v2566 = vsel %vm2454, %v2564, %v2565
        %2599 = vst [vmem:[#allocation3 + $0x8] sm:$0xf] %v2458
        %2600 = vst [vmem:[#allocation3 + $0x2c] sm:$0xf] %v2461
        %2601 = vst [vmem:[#allocation3 + $0x50] sm:$0xf] %v2465
        %2602 = vst [vmem:[#allocation3 + $0x74] sm:$0xf] %v2468
        %2603 = vst [vmem:[#allocation3 + $0x98] sm:$0xf] %v2472
        %2604 = vst [vmem:[#allocation3 + $0xbc] sm:$0xf] %v2475
        %2605 = vst [vmem:[#allocation3 + $0xe0] sm:$0xf] %v2479
        %2606 = vst [vmem:[#allocation3 + $0x104] sm:$0xf] %v2482
        %2607 = vst [vmem:[#allocation3 + $0x128] sm:$0xf] %v2486
        %2608 = vst [vmem:[#allocation3 + $0x14c] sm:$0xf] %v2489
        %2609 = vst [vmem:[#allocation3 + $0x170] sm:$0xf] %v2493
        %2610 = vst [vmem:[#allocation3 + $0x194] sm:$0xf] %v2496
        %2611 = vst [vmem:[#allocation3 + $0x1b8] sm:$0xf] %v2500
        %2612 = vst [vmem:[#allocation3 + $0x1dc] sm:$0xf] %v2503
        %2613 = vst [vmem:[#allocation3 + $0x200] sm:$0xf] %v2507
        %2614 = vst [vmem:[#allocation3 + $0x224] sm:$0xf] %v2510
        %2615 = vst [vmem:[#allocation3 + $0x248] sm:$0xf] %v2514
        %2616 = vst [vmem:[#allocation3 + $0x26c] sm:$0xf] %v2517
        %2617 = vst [vmem:[#allocation3 + $0x290] sm:$0xf] %v2521
        %2618 = vst [vmem:[#allocation3 + $0x2b4] sm:$0xf] %v2524
        %2619 = vst [vmem:[#allocation3 + $0x2d8] sm:$0xf] %v2528
        %2620 = vst [vmem:[#allocation3 + $0x2fc] sm:$0xf] %v2531
        %2621 = vst [vmem:[#allocation3 + $0x320] sm:$0xf] %v2535
        %2622 = vst [vmem:[#allocation3 + $0x344] sm:$0xf] %v2538
        %2623 = vst [vmem:[#allocation3 + $0x368] sm:$0xf] %v2542
        %2624 = vst [vmem:[#allocation3 + $0x38c] sm:$0xf] %v2545
        %2625 = vst [vmem:[#allocation3 + $0x3b0] sm:$0xf] %v2549
        %2626 = vst [vmem:[#allocation3 + $0x3d4] sm:$0xf] %v2552
        %2627 = vst [vmem:[#allocation3 + $0x3f8] sm:$0xf] %v2556
        %2628 = vst [vmem:[#allocation3 + $0x41c] sm:$0xf] %v2559
        %2629 = vst [vmem:[#allocation3 + $0x440] sm:$0xf] %v2563
        %2630 = vst [vmem:[#allocation3 + $0x464] sm:$0xf] %v2566
        %v2631 = vld [vmem:[%s1678] sm:$0xf]
        %v2632 = vld [vmem:[%s1678 + $0x4] sm:$0xf]
        %v2633 = vld [vmem:[%s1678 + $0xc] sm:$0xf]
        %v2634 = vld [vmem:[%s1678 + $0x10] sm:$0xf]
        %v2635 = vld [vmem:[%s1678 + $0x18] sm:$0xf]
        %v2636 = vld [vmem:[%s1678 + $0x1c] sm:$0xf]
        %v2637 = vld [vmem:[%s1678 + $0x24] sm:$0xf]
        %v2638 = vld [vmem:[%s1678 + $0x28] sm:$0xf]
        %v2639 = vld [vmem:[%s1678 + $0x30] sm:$0xf]
        %v2640 = vld [vmem:[%s1678 + $0x34] sm:$0xf]
        %v2641 = vld [vmem:[%s1678 + $0x3c] sm:$0xf]
        %v2642 = vld [vmem:[%s1678 + $0x40] sm:$0xf]
        %v2643 = vld [vmem:[%s1678 + $0x48] sm:$0xf]
        %v2644 = vld [vmem:[%s1678 + $0x4c] sm:$0xf]
        %v2645 = vld [vmem:[%s1678 + $0x54] sm:$0xf]
        %v2646 = vld [vmem:[%s1678 + $0x58] sm:$0xf]
        %v2647 = vld [vmem:[%s1678 + $0x60] sm:$0xf]
        %v2648 = vld [vmem:[%s1678 + $0x64] sm:$0xf]
        %v2649 = vld [vmem:[%s1678 + $0x6c] sm:$0xf]
        %v2650 = vld [vmem:[%s1678 + $0x70] sm:$0xf]
        %v2651 = vld [vmem:[%s1678 + $0x78] sm:$0xf]
        %v2652 = vld [vmem:[%s1678 + $0x7c] sm:$0xf]
        %v2653 = vld [vmem:[%s1678 + $0x84] sm:$0xf]
        %v2654 = vld [vmem:[%s1678 + $0x88] sm:$0xf]
        %v2655 = vld [vmem:[%s1678 + $0x90] sm:$0xf]
        %v2656 = vld [vmem:[%s1678 + $0x94] sm:$0xf]
        %v2657 = vld [vmem:[%s1678 + $0x9c] sm:$0xf]
        %v2658 = vld [vmem:[%s1678 + $0xa0] sm:$0xf]
        %v2659 = vld [vmem:[%s1678 + $0xa8] sm:$0xf]
        %v2660 = vld [vmem:[%s1678 + $0xac] sm:$0xf]
        %v2661 = vld [vmem:[%s1678 + $0xb4] sm:$0xf]
        %v2662 = vld [vmem:[%s1678 + $0xb8] sm:$0xf]
        %2663 = vst [vmem:[#allocation3 + $0xc] sm:$0xf] %v2631
        %2664 = vst [vmem:[#allocation3 + $0x30] sm:$0xf] %v2632
        %2665 = vst [vmem:[#allocation3 + $0x54] sm:$0xf] %v2633
        %2666 = vst [vmem:[#allocation3 + $0x78] sm:$0xf] %v2634
        %2667 = vst [vmem:[#allocation3 + $0x9c] sm:$0xf] %v2635
        %2668 = vst [vmem:[#allocation3 + $0xc0] sm:$0xf] %v2636
        %2669 = vst [vmem:[#allocation3 + $0xe4] sm:$0xf] %v2637
        %2670 = vst [vmem:[#allocation3 + $0x108] sm:$0xf] %v2638
        %2671 = vst [vmem:[#allocation3 + $0x12c] sm:$0xf] %v2639
        %2672 = vst [vmem:[#allocation3 + $0x150] sm:$0xf] %v2640
        %2673 = vst [vmem:[#allocation3 + $0x174] sm:$0xf] %v2641
        %2674 = vst [vmem:[#allocation3 + $0x198] sm:$0xf] %v2642
        %2675 = vst [vmem:[#allocation3 + $0x1bc] sm:$0xf] %v2643
        %2676 = vst [vmem:[#allocation3 + $0x1e0] sm:$0xf] %v2644
        %2677 = vst [vmem:[#allocation3 + $0x204] sm:$0xf] %v2645
        %2678 = vst [vmem:[#allocation3 + $0x228] sm:$0xf] %v2646
        %2679 = vst [vmem:[#allocation3 + $0x24c] sm:$0xf] %v2647
        %2680 = vst [vmem:[#allocation3 + $0x270] sm:$0xf] %v2648
        %2681 = vst [vmem:[#allocation3 + $0x294] sm:$0xf] %v2649
        %2682 = vst [vmem:[#allocation3 + $0x2b8] sm:$0xf] %v2650
        %2683 = vst [vmem:[#allocation3 + $0x2dc] sm:$0xf] %v2651
        %2684 = vst [vmem:[#allocation3 + $0x300] sm:$0xf] %v2652
        %2685 = vst [vmem:[#allocation3 + $0x324] sm:$0xf] %v2653
        %2686 = vst [vmem:[#allocation3 + $0x348] sm:$0xf] %v2654
        %2687 = vst [vmem:[#allocation3 + $0x36c] sm:$0xf] %v2655
        %2688 = vst [vmem:[#allocation3 + $0x390] sm:$0xf] %v2656
        %2689 = vst [vmem:[#allocation3 + $0x3b4] sm:$0xf] %v2657
        %2690 = vst [vmem:[#allocation3 + $0x3d8] sm:$0xf] %v2658
        %2691 = vst [vmem:[#allocation3 + $0x3fc] sm:$0xf] %v2659
        %2692 = vst [vmem:[#allocation3 + $0x420] sm:$0xf] %v2660
        %2693 = vst [vmem:[#allocation3 + $0x444] sm:$0xf] %v2661
        %2694 = vst [vmem:[#allocation3 + $0x468] sm:$0xf] %v2662
        %v2695 = vld [vmem:[%s1678] sm:$0xf]
        %v2696 = vld [vmem:[%s1678 + $0x4] sm:$0xf]
        %v2697 = vld [vmem:[%s1678 + $0x8] sm:$0x1]
        %v2698 = vld [vmem:[%s1678 + $0xc] sm:$0xf]
        %v2699 = vld [vmem:[%s1678 + $0x10] sm:$0xf]
        %v2700 = vld [vmem:[%s1678 + $0x14] sm:$0x1]
        %v2701 = vld [vmem:[%s1678 + $0x18] sm:$0xf]
        %v2702 = vld [vmem:[%s1678 + $0x1c] sm:$0xf]
        %v2703 = vld [vmem:[%s1678 + $0x20] sm:$0x1]
        %v2704 = vld [vmem:[%s1678 + $0x24] sm:$0xf]
        %v2705 = vld [vmem:[%s1678 + $0x28] sm:$0xf]
        %v2706 = vld [vmem:[%s1678 + $0x2c] sm:$0x1]
        %v2707 = vld [vmem:[%s1678 + $0x30] sm:$0xf]
        %v2708 = vld [vmem:[%s1678 + $0x34] sm:$0xf]
        %v2709 = vld [vmem:[%s1678 + $0x38] sm:$0x1]
        %v2710 = vld [vmem:[%s1678 + $0x3c] sm:$0xf]
        %v2711 = vld [vmem:[%s1678 + $0x40] sm:$0xf]
        %v2712 = vld [vmem:[%s1678 + $0x44] sm:$0x1]
        %v2713 = vld [vmem:[%s1678 + $0x48] sm:$0xf]
        %v2714 = vld [vmem:[%s1678 + $0x4c] sm:$0xf]
        %v2715 = vld [vmem:[%s1678 + $0x50] sm:$0x1]
        %v2716 = vld [vmem:[%s1678 + $0x54] sm:$0xf]
        %v2717 = vld [vmem:[%s1678 + $0x58] sm:$0xf]
        %v2718 = vld [vmem:[%s1678 + $0x5c] sm:$0x1]
        %v2719 = vld [vmem:[%s1678 + $0x60] sm:$0xf]
        %v2720 = vld [vmem:[%s1678 + $0x64] sm:$0xf]
        %v2721 = vld [vmem:[%s1678 + $0x68] sm:$0x1]
        %v2722 = vld [vmem:[%s1678 + $0x6c] sm:$0xf]
        %v2723 = vld [vmem:[%s1678 + $0x70] sm:$0xf]
        %v2724 = vld [vmem:[%s1678 + $0x74] sm:$0x1]
        %v2725 = vld [vmem:[%s1678 + $0x78] sm:$0xf]
        %v2726 = vld [vmem:[%s1678 + $0x7c] sm:$0xf]
        %v2727 = vld [vmem:[%s1678 + $0x80] sm:$0x1]
        %v2728 = vld [vmem:[%s1678 + $0x84] sm:$0xf]
        %v2729 = vld [vmem:[%s1678 + $0x88] sm:$0xf]
        %v2730 = vld [vmem:[%s1678 + $0x8c] sm:$0x1]
        %v2731 = vld [vmem:[%s1678 + $0x90] sm:$0xf]
        %v2732 = vld [vmem:[%s1678 + $0x94] sm:$0xf]
        %v2733 = vld [vmem:[%s1678 + $0x98] sm:$0x1]
        %v2734 = vld [vmem:[%s1678 + $0x9c] sm:$0xf]
        %v2735 = vld [vmem:[%s1678 + $0xa0] sm:$0xf]
        %v2736 = vld [vmem:[%s1678 + $0xa4] sm:$0x1]
        %v2737 = vld [vmem:[%s1678 + $0xa8] sm:$0xf]
        %v2738 = vld [vmem:[%s1678 + $0xac] sm:$0xf]
        %v2739 = vld [vmem:[%s1678 + $0xb0] sm:$0x1]
        %v2740 = vld [vmem:[%s1678 + $0xb4] sm:$0xf]
        %v2741 = vld [vmem:[%s1678 + $0xb8] sm:$0xf]
        %v2742 = vld [vmem:[%s1678 + $0xbc] sm:$0x1]
        %v2744 = vshrl.u32 %v2695, 16
        %v2746 = vrot.slane %v2744, 4
        %v2747 = vshll.u32 %v2695, 16
        %v2749 = vrot.slane %v2747, 5
        %v2750 = vor.u32 %v2746, %v2749
        %v2751 = vrot.slane %v2750, 4
        %v2753 = vshll.u32 %v2696, 16
        %v2755 = vrot.slane %v2753, 5
        %v2756 = vsel %vm1907, %v2751, %v2755
        %v2757 = vshrl.u32 %v2696, 16
        %v2759 = vrot.slane %v2757, 4
        %v2760 = vor.u32 %v2759, %v2755
        %v2761 = vrot.slane %v2760, 4
        %v2763 = vshll.u32 %v2697, 16
        %v2765 = vrot.slane %v2763, 5
        %v2766 = vsel %vm1907, %v2761, %v2765
        %v2768 = vshrl.u32 %v2698, 16
        %v2770 = vrot.slane %v2768, 4
        %v2771 = vshll.u32 %v2698, 16
        %v2773 = vrot.slane %v2771, 5
        %v2774 = vor.u32 %v2770, %v2773
        %v2775 = vrot.slane %v2774, 4
        %v2777 = vshll.u32 %v2699, 16
        %v2779 = vrot.slane %v2777, 5
        %v2780 = vsel %vm1907, %v2775, %v2779
        %v2781 = vshrl.u32 %v2699, 16
        %v2783 = vrot.slane %v2781, 4
        %v2784 = vor.u32 %v2783, %v2779
        %v2785 = vrot.slane %v2784, 4
        %v2787 = vshll.u32 %v2700, 16
        %v2789 = vrot.slane %v2787, 5
        %v2790 = vsel %vm1907, %v2785, %v2789
        %v2792 = vshrl.u32 %v2701, 16
        %v2794 = vrot.slane %v2792, 4
        %v2795 = vshll.u32 %v2701, 16
        %v2797 = vrot.slane %v2795, 5
        %v2798 = vor.u32 %v2794, %v2797
        %v2799 = vrot.slane %v2798, 4
        %v2801 = vshll.u32 %v2702, 16
        %v2803 = vrot.slane %v2801, 5
        %v2804 = vsel %vm1907, %v2799, %v2803
        %v2805 = vshrl.u32 %v2702, 16
        %v2807 = vrot.slane %v2805, 4
        %v2808 = vor.u32 %v2807, %v2803
        %v2809 = vrot.slane %v2808, 4
        %v2811 = vshll.u32 %v2703, 16
        %v2813 = vrot.slane %v2811, 5
        %v2814 = vsel %vm1907, %v2809, %v2813
        %v2816 = vshrl.u32 %v2704, 16
        %v2818 = vrot.slane %v2816, 4
        %v2819 = vshll.u32 %v2704, 16
        %v2821 = vrot.slane %v2819, 5
        %v2822 = vor.u32 %v2818, %v2821
        %v2823 = vrot.slane %v2822, 4
        %v2825 = vshll.u32 %v2705, 16
        %v2827 = vrot.slane %v2825, 5
        %v2828 = vsel %vm1907, %v2823, %v2827
        %v2829 = vshrl.u32 %v2705, 16
        %v2831 = vrot.slane %v2829, 4
        %v2832 = vor.u32 %v2831, %v2827
        %v2833 = vrot.slane %v2832, 4
        %v2835 = vshll.u32 %v2706, 16
        %v2837 = vrot.slane %v2835, 5
        %v2838 = vsel %vm1907, %v2833, %v2837
        %v2840 = vshrl.u32 %v2707, 16
        %v2842 = vrot.slane %v2840, 4
        %v2843 = vshll.u32 %v2707, 16
        %v2845 = vrot.slane %v2843, 5
        %v2846 = vor.u32 %v2842, %v2845
        %v2847 = vrot.slane %v2846, 4
        %v2849 = vshll.u32 %v2708, 16
        %v2851 = vrot.slane %v2849, 5
        %v2852 = vsel %vm1907, %v2847, %v2851
        %v2853 = vshrl.u32 %v2708, 16
        %v2855 = vrot.slane %v2853, 4
        %v2856 = vor.u32 %v2855, %v2851
        %v2857 = vrot.slane %v2856, 4
        %v2859 = vshll.u32 %v2709, 16
        %v2861 = vrot.slane %v2859, 5
        %v2862 = vsel %vm1907, %v2857, %v2861
        %v2864 = vshrl.u32 %v2710, 16
        %v2866 = vrot.slane %v2864, 4
        %v2867 = vshll.u32 %v2710, 16
        %v2869 = vrot.slane %v2867, 5
        %v2870 = vor.u32 %v2866, %v2869
        %v2871 = vrot.slane %v2870, 4
        %v2873 = vshll.u32 %v2711, 16
        %v2875 = vrot.slane %v2873, 5
        %v2876 = vsel %vm1907, %v2871, %v2875
        %v2877 = vshrl.u32 %v2711, 16
        %v2879 = vrot.slane %v2877, 4
        %v2880 = vor.u32 %v2879, %v2875
        %v2881 = vrot.slane %v2880, 4
        %v2883 = vshll.u32 %v2712, 16
        %v2885 = vrot.slane %v2883, 5
        %v2886 = vsel %vm1907, %v2881, %v2885
        %v2888 = vshrl.u32 %v2713, 16
        %v2890 = vrot.slane %v2888, 4
        %v2891 = vshll.u32 %v2713, 16
        %v2893 = vrot.slane %v2891, 5
        %v2894 = vor.u32 %v2890, %v2893
        %v2895 = vrot.slane %v2894, 4
        %v2897 = vshll.u32 %v2714, 16
        %v2899 = vrot.slane %v2897, 5
        %v2900 = vsel %vm1907, %v2895, %v2899
        %v2901 = vshrl.u32 %v2714, 16
        %v2903 = vrot.slane %v2901, 4
        %v2904 = vor.u32 %v2903, %v2899
        %v2905 = vrot.slane %v2904, 4
        %v2907 = vshll.u32 %v2715, 16
        %v2909 = vrot.slane %v2907, 5
        %v2910 = vsel %vm1907, %v2905, %v2909
        %v2912 = vshrl.u32 %v2716, 16
        %v2914 = vrot.slane %v2912, 4
        %v2915 = vshll.u32 %v2716, 16
        %v2917 = vrot.slane %v2915, 5
        %v2918 = vor.u32 %v2914, %v2917
        %v2919 = vrot.slane %v2918, 4
        %v2921 = vshll.u32 %v2717, 16
        %v2923 = vrot.slane %v2921, 5
        %v2924 = vsel %vm1907, %v2919, %v2923
        %v2925 = vshrl.u32 %v2717, 16
        %v2927 = vrot.slane %v2925, 4
        %v2928 = vor.u32 %v2927, %v2923
        %v2929 = vrot.slane %v2928, 4
        %v2931 = vshll.u32 %v2718, 16
        %v2933 = vrot.slane %v2931, 5
        %v2934 = vsel %vm1907, %v2929, %v2933
        %v2936 = vshrl.u32 %v2719, 16
        %v2938 = vrot.slane %v2936, 4
        %v2939 = vshll.u32 %v2719, 16
        %v2941 = vrot.slane %v2939, 5
        %v2942 = vor.u32 %v2938, %v2941
        %v2943 = vrot.slane %v2942, 4
        %v2945 = vshll.u32 %v2720, 16
        %v2947 = vrot.slane %v2945, 5
        %v2948 = vsel %vm1907, %v2943, %v2947
        %v2949 = vshrl.u32 %v2720, 16
        %v2951 = vrot.slane %v2949, 4
        %v2952 = vor.u32 %v2951, %v2947
        %v2953 = vrot.slane %v2952, 4
        %v2955 = vshll.u32 %v2721, 16
        %v2957 = vrot.slane %v2955, 5
        %v2958 = vsel %vm1907, %v2953, %v2957
        %v2960 = vshrl.u32 %v2722, 16
        %v2962 = vrot.slane %v2960, 4
        %v2963 = vshll.u32 %v2722, 16
        %v2965 = vrot.slane %v2963, 5
        %v2966 = vor.u32 %v2962, %v2965
        %v2967 = vrot.slane %v2966, 4
        %v2969 = vshll.u32 %v2723, 16
        %v2971 = vrot.slane %v2969, 5
        %v2972 = vsel %vm1907, %v2967, %v2971
        %v2973 = vshrl.u32 %v2723, 16
        %v2975 = vrot.slane %v2973, 4
        %v2976 = vor.u32 %v2975, %v2971
        %v2977 = vrot.slane %v2976, 4
        %v2979 = vshll.u32 %v2724, 16
        %v2981 = vrot.slane %v2979, 5
        %v2982 = vsel %vm1907, %v2977, %v2981
        %v2984 = vshrl.u32 %v2725, 16
        %v2986 = vrot.slane %v2984, 4
        %v2987 = vshll.u32 %v2725, 16
        %v2989 = vrot.slane %v2987, 5
        %v2990 = vor.u32 %v2986, %v2989
        %v2991 = vrot.slane %v2990, 4
        %v2993 = vshll.u32 %v2726, 16
        %v2995 = vrot.slane %v2993, 5
        %v2996 = vsel %vm1907, %v2991, %v2995
        %v2997 = vshrl.u32 %v2726, 16
        %v2999 = vrot.slane %v2997, 4
        %v3000 = vor.u32 %v2999, %v2995
        %v3001 = vrot.slane %v3000, 4
        %v3003 = vshll.u32 %v2727, 16
        %v3005 = vrot.slane %v3003, 5
        %v3006 = vsel %vm1907, %v3001, %v3005
        %v3008 = vshrl.u32 %v2728, 16
        %v3010 = vrot.slane %v3008, 4
        %v3011 = vshll.u32 %v2728, 16
        %v3013 = vrot.slane %v3011, 5
        %v3014 = vor.u32 %v3010, %v3013
        %v3015 = vrot.slane %v3014, 4
        %v3017 = vshll.u32 %v2729, 16
        %v3019 = vrot.slane %v3017, 5
        %v3020 = vsel %vm1907, %v3015, %v3019
        %v3021 = vshrl.u32 %v2729, 16
        %v3023 = vrot.slane %v3021, 4
        %v3024 = vor.u32 %v3023, %v3019
        %v3025 = vrot.slane %v3024, 4
        %v3027 = vshll.u32 %v2730, 16
        %v3029 = vrot.slane %v3027, 5
        %v3030 = vsel %vm1907, %v3025, %v3029
        %v3032 = vshrl.u32 %v2731, 16
        %v3034 = vrot.slane %v3032, 4
        %v3035 = vshll.u32 %v2731, 16
        %v3037 = vrot.slane %v3035, 5
        %v3038 = vor.u32 %v3034, %v3037
        %v3039 = vrot.slane %v3038, 4
        %v3041 = vshll.u32 %v2732, 16
        %v3043 = vrot.slane %v3041, 5
        %v3044 = vsel %vm1907, %v3039, %v3043
        %v3045 = vshrl.u32 %v2732, 16
        %v3047 = vrot.slane %v3045, 4
        %v3048 = vor.u32 %v3047, %v3043
        %v3049 = vrot.slane %v3048, 4
        %v3051 = vshll.u32 %v2733, 16
        %v3053 = vrot.slane %v3051, 5
        %v3054 = vsel %vm1907, %v3049, %v3053
        %v3056 = vshrl.u32 %v2734, 16
        %v3058 = vrot.slane %v3056, 4
        %v3059 = vshll.u32 %v2734, 16
        %v3061 = vrot.slane %v3059, 5
        %v3062 = vor.u32 %v3058, %v3061
        %v3063 = vrot.slane %v3062, 4
        %v3065 = vshll.u32 %v2735, 16
        %v3067 = vrot.slane %v3065, 5
        %v3068 = vsel %vm1907, %v3063, %v3067
        %v3069 = vshrl.u32 %v2735, 16
        %v3071 = vrot.slane %v3069, 4
        %v3072 = vor.u32 %v3071, %v3067
        %v3073 = vrot.slane %v3072, 4
        %v3075 = vshll.u32 %v2736, 16
        %v3077 = vrot.slane %v3075, 5
        %v3078 = vsel %vm1907, %v3073, %v3077
        %v3080 = vshrl.u32 %v2737, 16
        %v3082 = vrot.slane %v3080, 4
        %v3083 = vshll.u32 %v2737, 16
        %v3085 = vrot.slane %v3083, 5
        %v3086 = vor.u32 %v3082, %v3085
        %v3087 = vrot.slane %v3086, 4
        %v3089 = vshll.u32 %v2738, 16
        %v3091 = vrot.slane %v3089, 5
        %v3092 = vsel %vm1907, %v3087, %v3091
        %v3093 = vshrl.u32 %v2738, 16
        %v3095 = vrot.slane %v3093, 4
        %v3096 = vor.u32 %v3095, %v3091
        %v3097 = vrot.slane %v3096, 4
        %v3099 = vshll.u32 %v2739, 16
        %v3101 = vrot.slane %v3099, 5
        %v3102 = vsel %vm1907, %v3097, %v3101
        %v3104 = vshrl.u32 %v2740, 16
        %v3106 = vrot.slane %v3104, 4
        %v3107 = vshll.u32 %v2740, 16
        %v3109 = vrot.slane %v3107, 5
        %v3110 = vor.u32 %v3106, %v3109
        %v3111 = vrot.slane %v3110, 4
        %v3113 = vshll.u32 %v2741, 16
        %v3115 = vrot.slane %v3113, 5
        %v3116 = vsel %vm1907, %v3111, %v3115
        %v3117 = vshrl.u32 %v2741, 16
        %v3119 = vrot.slane %v3117, 4
        %v3120 = vor.u32 %v3119, %v3115
        %v3121 = vrot.slane %v3120, 4
        %v3123 = vshll.u32 %v2742, 16
        %v3125 = vrot.slane %v3123, 5
        %v3126 = vsel %vm1907, %v3121, %v3125
        %3159 = vst [vmem:[#allocation3 + $0x10] sm:$0xf] %v2756
        %3160 = vst [vmem:[#allocation3 + $0x34] sm:$0xf] %v2766
        %3161 = vst [vmem:[#allocation3 + $0x58] sm:$0xf] %v2780
        %3162 = vst [vmem:[#allocation3 + $0x7c] sm:$0xf] %v2790
        %3163 = vst [vmem:[#allocation3 + $0xa0] sm:$0xf] %v2804
        %3164 = vst [vmem:[#allocation3 + $0xc4] sm:$0xf] %v2814
        %3165 = vst [vmem:[#allocation3 + $0xe8] sm:$0xf] %v2828
        %3166 = vst [vmem:[#allocation3 + $0x10c] sm:$0xf] %v2838
        %3167 = vst [vmem:[#allocation3 + $0x130] sm:$0xf] %v2852
        %3168 = vst [vmem:[#allocation3 + $0x154] sm:$0xf] %v2862
        %3169 = vst [vmem:[#allocation3 + $0x178] sm:$0xf] %v2876
        %3170 = vst [vmem:[#allocation3 + $0x19c] sm:$0xf] %v2886
        %3171 = vst [vmem:[#allocation3 + $0x1c0] sm:$0xf] %v2900
        %3172 = vst [vmem:[#allocation3 + $0x1e4] sm:$0xf] %v2910
        %3173 = vst [vmem:[#allocation3 + $0x208] sm:$0xf] %v2924
        %3174 = vst [vmem:[#allocation3 + $0x22c] sm:$0xf] %v2934
        %3175 = vst [vmem:[#allocation3 + $0x250] sm:$0xf] %v2948
        %3176 = vst [vmem:[#allocation3 + $0x274] sm:$0xf] %v2958
        %3177 = vst [vmem:[#allocation3 + $0x298] sm:$0xf] %v2972
        %3178 = vst [vmem:[#allocation3 + $0x2bc] sm:$0xf] %v2982
        %3179 = vst [vmem:[#allocation3 + $0x2e0] sm:$0xf] %v2996
        %3180 = vst [vmem:[#allocation3 + $0x304] sm:$0xf] %v3006
        %3181 = vst [vmem:[#allocation3 + $0x328] sm:$0xf] %v3020
        %3182 = vst [vmem:[#allocation3 + $0x34c] sm:$0xf] %v3030
        %3183 = vst [vmem:[#allocation3 + $0x370] sm:$0xf] %v3044
        %3184 = vst [vmem:[#allocation3 + $0x394] sm:$0xf] %v3054
        %3185 = vst [vmem:[#allocation3 + $0x3b8] sm:$0xf] %v3068
        %3186 = vst [vmem:[#allocation3 + $0x3dc] sm:$0xf] %v3078
        %3187 = vst [vmem:[#allocation3 + $0x400] sm:$0xf] %v3092
        %3188 = vst [vmem:[#allocation3 + $0x424] sm:$0xf] %v3102
        %3189 = vst [vmem:[#allocation3 + $0x448] sm:$0xf] %v3116
        %3190 = vst [vmem:[#allocation3 + $0x46c] sm:$0xf] %v3126
        %v3191 = vld [vmem:[%s1678] sm:$0xe]
        %v3192 = vld [vmem:[%s1678 + $0x4] sm:$0xf]
        %v3193 = vld [vmem:[%s1678 + $0x8] sm:$0x1]
        %v3194 = vld [vmem:[%s1678 + $0xc] sm:$0xe]
        %v3195 = vld [vmem:[%s1678 + $0x10] sm:$0xf]
        %v3196 = vld [vmem:[%s1678 + $0x14] sm:$0x1]
        %v3197 = vld [vmem:[%s1678 + $0x18] sm:$0xe]
        %v3198 = vld [vmem:[%s1678 + $0x1c] sm:$0xf]
        %v3199 = vld [vmem:[%s1678 + $0x20] sm:$0x1]
        %v3200 = vld [vmem:[%s1678 + $0x24] sm:$0xe]
        %v3201 = vld [vmem:[%s1678 + $0x28] sm:$0xf]
        %v3202 = vld [vmem:[%s1678 + $0x2c] sm:$0x1]
        %v3203 = vld [vmem:[%s1678 + $0x30] sm:$0xe]
        %v3204 = vld [vmem:[%s1678 + $0x34] sm:$0xf]
        %v3205 = vld [vmem:[%s1678 + $0x38] sm:$0x1]
        %v3206 = vld [vmem:[%s1678 + $0x3c] sm:$0xe]
        %v3207 = vld [vmem:[%s1678 + $0x40] sm:$0xf]
        %v3208 = vld [vmem:[%s1678 + $0x44] sm:$0x1]
        %v3209 = vld [vmem:[%s1678 + $0x48] sm:$0xe]
        %v3210 = vld [vmem:[%s1678 + $0x4c] sm:$0xf]
        %v3211 = vld [vmem:[%s1678 + $0x50] sm:$0x1]
        %v3212 = vld [vmem:[%s1678 + $0x54] sm:$0xe]
        %v3213 = vld [vmem:[%s1678 + $0x58] sm:$0xf]
        %v3214 = vld [vmem:[%s1678 + $0x5c] sm:$0x1]
        %v3215 = vld [vmem:[%s1678 + $0x60] sm:$0xe]
        %v3216 = vld [vmem:[%s1678 + $0x64] sm:$0xf]
        %v3217 = vld [vmem:[%s1678 + $0x68] sm:$0x1]
        %v3218 = vld [vmem:[%s1678 + $0x6c] sm:$0xe]
        %v3219 = vld [vmem:[%s1678 + $0x70] sm:$0xf]
        %v3220 = vld [vmem:[%s1678 + $0x74] sm:$0x1]
        %v3221 = vld [vmem:[%s1678 + $0x78] sm:$0xe]
        %v3222 = vld [vmem:[%s1678 + $0x7c] sm:$0xf]
        %v3223 = vld [vmem:[%s1678 + $0x80] sm:$0x1]
        %v3224 = vld [vmem:[%s1678 + $0x84] sm:$0xe]
        %v3225 = vld [vmem:[%s1678 + $0x88] sm:$0xf]
        %v3226 = vld [vmem:[%s1678 + $0x8c] sm:$0x1]
        %v3227 = vld [vmem:[%s1678 + $0x90] sm:$0xe]
        %v3228 = vld [vmem:[%s1678 + $0x94] sm:$0xf]
        %v3229 = vld [vmem:[%s1678 + $0x98] sm:$0x1]
        %v3230 = vld [vmem:[%s1678 + $0x9c] sm:$0xe]
        %v3231 = vld [vmem:[%s1678 + $0xa0] sm:$0xf]
        %v3232 = vld [vmem:[%s1678 + $0xa4] sm:$0x1]
        %v3233 = vld [vmem:[%s1678 + $0xa8] sm:$0xe]
        %v3234 = vld [vmem:[%s1678 + $0xac] sm:$0xf]
        %v3235 = vld [vmem:[%s1678 + $0xb0] sm:$0x1]
        %v3236 = vld [vmem:[%s1678 + $0xb4] sm:$0xe]
        %v3237 = vld [vmem:[%s1678 + $0xb8] sm:$0xf]
        %v3238 = vld [vmem:[%s1678 + $0xbc] sm:$0x1]
        %v3287 = vrot.slane %v3191, 5
        %v3288 = vrot.slane %v3287, 4
        %v3289 = vrot.slane %v3192, 5
        %v3290 = vsel %vm2454, %v3288, %v3289
        %v3291 = vrot.slane %v3289, 4
        %v3292 = vrot.slane %v3193, 5
        %v3293 = vsel %vm2454, %v3291, %v3292
        %v3294 = vrot.slane %v3194, 5
        %v3295 = vrot.slane %v3294, 4
        %v3296 = vrot.slane %v3195, 5
        %v3297 = vsel %vm2454, %v3295, %v3296
        %v3298 = vrot.slane %v3296, 4
        %v3299 = vrot.slane %v3196, 5
        %v3300 = vsel %vm2454, %v3298, %v3299
        %v3301 = vrot.slane %v3197, 5
        %v3302 = vrot.slane %v3301, 4
        %v3303 = vrot.slane %v3198, 5
        %v3304 = vsel %vm2454, %v3302, %v3303
        %v3305 = vrot.slane %v3303, 4
        %v3306 = vrot.slane %v3199, 5
        %v3307 = vsel %vm2454, %v3305, %v3306
        %v3308 = vrot.slane %v3200, 5
        %v3309 = vrot.slane %v3308, 4
        %v3310 = vrot.slane %v3201, 5
        %v3311 = vsel %vm2454, %v3309, %v3310
        %v3312 = vrot.slane %v3310, 4
        %v3313 = vrot.slane %v3202, 5
        %v3314 = vsel %vm2454, %v3312, %v3313
        %v3315 = vrot.slane %v3203, 5
        %v3316 = vrot.slane %v3315, 4
        %v3317 = vrot.slane %v3204, 5
        %v3318 = vsel %vm2454, %v3316, %v3317
        %v3319 = vrot.slane %v3317, 4
        %v3320 = vrot.slane %v3205, 5
        %v3321 = vsel %vm2454, %v3319, %v3320
        %v3322 = vrot.slane %v3206, 5
        %v3323 = vrot.slane %v3322, 4
        %v3324 = vrot.slane %v3207, 5
        %v3325 = vsel %vm2454, %v3323, %v3324
        %v3326 = vrot.slane %v3324, 4
        %v3327 = vrot.slane %v3208, 5
        %v3328 = vsel %vm2454, %v3326, %v3327
        %v3329 = vrot.slane %v3209, 5
        %v3330 = vrot.slane %v3329, 4
        %v3331 = vrot.slane %v3210, 5
        %v3332 = vsel %vm2454, %v3330, %v3331
        %v3333 = vrot.slane %v3331, 4
        %v3334 = vrot.slane %v3211, 5
        %v3335 = vsel %vm2454, %v3333, %v3334
        %v3336 = vrot.slane %v3212, 5
        %v3337 = vrot.slane %v3336, 4
        %v3338 = vrot.slane %v3213, 5
        %v3339 = vsel %vm2454, %v3337, %v3338
        %v3340 = vrot.slane %v3338, 4
        %v3341 = vrot.slane %v3214, 5
        %v3342 = vsel %vm2454, %v3340, %v3341
        %v3343 = vrot.slane %v3215, 5
        %v3344 = vrot.slane %v3343, 4
        %v3345 = vrot.slane %v3216, 5
        %v3346 = vsel %vm2454, %v3344, %v3345
        %v3347 = vrot.slane %v3345, 4
        %v3348 = vrot.slane %v3217, 5
        %v3349 = vsel %vm2454, %v3347, %v3348
        %v3350 = vrot.slane %v3218, 5
        %v3351 = vrot.slane %v3350, 4
        %v3352 = vrot.slane %v3219, 5
        %v3353 = vsel %vm2454, %v3351, %v3352
        %v3354 = vrot.slane %v3352, 4
        %v3355 = vrot.slane %v3220, 5
        %v3356 = vsel %vm2454, %v3354, %v3355
        %v3357 = vrot.slane %v3221, 5
        %v3358 = vrot.slane %v3357, 4
        %v3359 = vrot.slane %v3222, 5
        %v3360 = vsel %vm2454, %v3358, %v3359
        %v3361 = vrot.slane %v3359, 4
        %v3362 = vrot.slane %v3223, 5
        %v3363 = vsel %vm2454, %v3361, %v3362
        %v3364 = vrot.slane %v3224, 5
        %v3365 = vrot.slane %v3364, 4
        %v3366 = vrot.slane %v3225, 5
        %v3367 = vsel %vm2454, %v3365, %v3366
        %v3368 = vrot.slane %v3366, 4
        %v3369 = vrot.slane %v3226, 5
        %v3370 = vsel %vm2454, %v3368, %v3369
        %v3371 = vrot.slane %v3227, 5
        %v3372 = vrot.slane %v3371, 4
        %v3373 = vrot.slane %v3228, 5
        %v3374 = vsel %vm2454, %v3372, %v3373
        %v3375 = vrot.slane %v3373, 4
        %v3376 = vrot.slane %v3229, 5
        %v3377 = vsel %vm2454, %v3375, %v3376
        %v3378 = vrot.slane %v3230, 5
        %v3379 = vrot.slane %v3378, 4
        %v3380 = vrot.slane %v3231, 5
        %v3381 = vsel %vm2454, %v3379, %v3380
        %v3382 = vrot.slane %v3380, 4
        %v3383 = vrot.slane %v3232, 5
        %v3384 = vsel %vm2454, %v3382, %v3383
        %v3385 = vrot.slane %v3233, 5
        %v3386 = vrot.slane %v3385, 4
        %v3387 = vrot.slane %v3234, 5
        %v3388 = vsel %vm2454, %v3386, %v3387
        %v3389 = vrot.slane %v3387, 4
        %v3390 = vrot.slane %v3235, 5
        %v3391 = vsel %vm2454, %v3389, %v3390
        %v3392 = vrot.slane %v3236, 5
        %v3393 = vrot.slane %v3392, 4
        %v3394 = vrot.slane %v3237, 5
        %v3395 = vsel %vm2454, %v3393, %v3394
        %v3396 = vrot.slane %v3394, 4
        %v3397 = vrot.slane %v3238, 5
        %v3398 = vsel %vm2454, %v3396, %v3397
        %3431 = vst [vmem:[#allocation3 + $0x14] sm:$0xf] %v3290
        %3432 = vst [vmem:[#allocation3 + $0x38] sm:$0xf] %v3293
        %3433 = vst [vmem:[#allocation3 + $0x5c] sm:$0xf] %v3297
        %3434 = vst [vmem:[#allocation3 + $0x80] sm:$0xf] %v3300
        %3435 = vst [vmem:[#allocation3 + $0xa4] sm:$0xf] %v3304
        %3436 = vst [vmem:[#allocation3 + $0xc8] sm:$0xf] %v3307
        %3437 = vst [vmem:[#allocation3 + $0xec] sm:$0xf] %v3311
        %3438 = vst [vmem:[#allocation3 + $0x110] sm:$0xf] %v3314
        %3439 = vst [vmem:[#allocation3 + $0x134] sm:$0xf] %v3318
        %3440 = vst [vmem:[#allocation3 + $0x158] sm:$0xf] %v3321
        %3441 = vst [vmem:[#allocation3 + $0x17c] sm:$0xf] %v3325
        %3442 = vst [vmem:[#allocation3 + $0x1a0] sm:$0xf] %v3328
        %3443 = vst [vmem:[#allocation3 + $0x1c4] sm:$0xf] %v3332
        %3444 = vst [vmem:[#allocation3 + $0x1e8] sm:$0xf] %v3335
        %3445 = vst [vmem:[#allocation3 + $0x20c] sm:$0xf] %v3339
        %3446 = vst [vmem:[#allocation3 + $0x230] sm:$0xf] %v3342
        %3447 = vst [vmem:[#allocation3 + $0x254] sm:$0xf] %v3346
        %3448 = vst [vmem:[#allocation3 + $0x278] sm:$0xf] %v3349
        %3449 = vst [vmem:[#allocation3 + $0x29c] sm:$0xf] %v3353
        %3450 = vst [vmem:[#allocation3 + $0x2c0] sm:$0xf] %v3356
        %3451 = vst [vmem:[#allocation3 + $0x2e4] sm:$0xf] %v3360
        %3452 = vst [vmem:[#allocation3 + $0x308] sm:$0xf] %v3363
        %3453 = vst [vmem:[#allocation3 + $0x32c] sm:$0xf] %v3367
        %3454 = vst [vmem:[#allocation3 + $0x350] sm:$0xf] %v3370
        %3455 = vst [vmem:[#allocation3 + $0x374] sm:$0xf] %v3374
        %3456 = vst [vmem:[#allocation3 + $0x398] sm:$0xf] %v3377
        %3457 = vst [vmem:[#allocation3 + $0x3bc] sm:$0xf] %v3381
        %3458 = vst [vmem:[#allocation3 + $0x3e0] sm:$0xf] %v3384
        %3459 = vst [vmem:[#allocation3 + $0x404] sm:$0xf] %v3388
        %3460 = vst [vmem:[#allocation3 + $0x428] sm:$0xf] %v3391
        %3461 = vst [vmem:[#allocation3 + $0x44c] sm:$0xf] %v3395
        %3462 = vst [vmem:[#allocation3 + $0x470] sm:$0xf] %v3398
        %s3463 = scalar_lea.vmem [#allocation2], 24
        %v3464 = vld [vmem:[%s3463] sm:$0xf]
        %v3465 = vld [vmem:[%s3463 + $0x4] sm:$0xf]
        %v3466 = vld [vmem:[%s3463 + $0xc] sm:$0xf]
        %v3467 = vld [vmem:[%s3463 + $0x10] sm:$0xf]
        %v3468 = vld [vmem:[%s3463 + $0x18] sm:$0xf]
        %v3469 = vld [vmem:[%s3463 + $0x1c] sm:$0xf]
        %v3470 = vld [vmem:[%s3463 + $0x24] sm:$0xf]
        %v3471 = vld [vmem:[%s3463 + $0x28] sm:$0xf]
        %v3472 = vld [vmem:[%s3463 + $0x30] sm:$0xf]
        %v3473 = vld [vmem:[%s3463 + $0x34] sm:$0xf]
        %v3474 = vld [vmem:[%s3463 + $0x3c] sm:$0xf]
        %v3475 = vld [vmem:[%s3463 + $0x40] sm:$0xf]
        %v3476 = vld [vmem:[%s3463 + $0x48] sm:$0xf]
        %v3477 = vld [vmem:[%s3463 + $0x4c] sm:$0xf]
        %v3478 = vld [vmem:[%s3463 + $0x54] sm:$0xf]
        %v3479 = vld [vmem:[%s3463 + $0x58] sm:$0xf]
        %v3480 = vld [vmem:[%s3463 + $0x60] sm:$0xf]
        %v3481 = vld [vmem:[%s3463 + $0x64] sm:$0xf]
        %v3482 = vld [vmem:[%s3463 + $0x6c] sm:$0xf]
        %v3483 = vld [vmem:[%s3463 + $0x70] sm:$0xf]
        %v3484 = vld [vmem:[%s3463 + $0x78] sm:$0xf]
        %v3485 = vld [vmem:[%s3463 + $0x7c] sm:$0xf]
        %v3486 = vld [vmem:[%s3463 + $0x84] sm:$0xf]
        %v3487 = vld [vmem:[%s3463 + $0x88] sm:$0xf]
        %v3488 = vld [vmem:[%s3463 + $0x90] sm:$0xf]
        %v3489 = vld [vmem:[%s3463 + $0x94] sm:$0xf]
        %v3490 = vld [vmem:[%s3463 + $0x9c] sm:$0xf]
        %v3491 = vld [vmem:[%s3463 + $0xa0] sm:$0xf]
        %v3492 = vld [vmem:[%s3463 + $0xa8] sm:$0xf]
        %v3493 = vld [vmem:[%s3463 + $0xac] sm:$0xf]
        %v3494 = vld [vmem:[%s3463 + $0xb4] sm:$0xf]
        %v3495 = vld [vmem:[%s3463 + $0xb8] sm:$0xf]
        %3496 = vst [vmem:[#allocation3 + $0x18] sm:$0xf] %v3464
        %3497 = vst [vmem:[#allocation3 + $0x3c] sm:$0xf] %v3465
        %3498 = vst [vmem:[#allocation3 + $0x60] sm:$0xf] %v3466
        %3499 = vst [vmem:[#allocation3 + $0x84] sm:$0xf] %v3467
        %3500 = vst [vmem:[#allocation3 + $0xa8] sm:$0xf] %v3468
        %3501 = vst [vmem:[#allocation3 + $0xcc] sm:$0xf] %v3469
        %3502 = vst [vmem:[#allocation3 + $0xf0] sm:$0xf] %v3470
        %3503 = vst [vmem:[#allocation3 + $0x114] sm:$0xf] %v3471
        %3504 = vst [vmem:[#allocation3 + $0x138] sm:$0xf] %v3472
        %3505 = vst [vmem:[#allocation3 + $0x15c] sm:$0xf] %v3473
        %3506 = vst [vmem:[#allocation3 + $0x180] sm:$0xf] %v3474
        %3507 = vst [vmem:[#allocation3 + $0x1a4] sm:$0xf] %v3475
        %3508 = vst [vmem:[#allocation3 + $0x1c8] sm:$0xf] %v3476
        %3509 = vst [vmem:[#allocation3 + $0x1ec] sm:$0xf] %v3477
        %3510 = vst [vmem:[#allocation3 + $0x210] sm:$0xf] %v3478
        %3511 = vst [vmem:[#allocation3 + $0x234] sm:$0xf] %v3479
        %3512 = vst [vmem:[#allocation3 + $0x258] sm:$0xf] %v3480
        %3513 = vst [vmem:[#allocation3 + $0x27c] sm:$0xf] %v3481
        %3514 = vst [vmem:[#allocation3 + $0x2a0] sm:$0xf] %v3482
        %3515 = vst [vmem:[#allocation3 + $0x2c4] sm:$0xf] %v3483
        %3516 = vst [vmem:[#allocation3 + $0x2e8] sm:$0xf] %v3484
        %3517 = vst [vmem:[#allocation3 + $0x30c] sm:$0xf] %v3485
        %3518 = vst [vmem:[#allocation3 + $0x330] sm:$0xf] %v3486
        %3519 = vst [vmem:[#allocation3 + $0x354] sm:$0xf] %v3487
        %3520 = vst [vmem:[#allocation3 + $0x378] sm:$0xf] %v3488
        %3521 = vst [vmem:[#allocation3 + $0x39c] sm:$0xf] %v3489
        %3522 = vst [vmem:[#allocation3 + $0x3c0] sm:$0xf] %v3490
        %3523 = vst [vmem:[#allocation3 + $0x3e4] sm:$0xf] %v3491
        %3524 = vst [vmem:[#allocation3 + $0x408] sm:$0xf] %v3492
        %3525 = vst [vmem:[#allocation3 + $0x42c] sm:$0xf] %v3493
        %3526 = vst [vmem:[#allocation3 + $0x450] sm:$0xf] %v3494
        %3527 = vst [vmem:[#allocation3 + $0x474] sm:$0xf] %v3495
        %v3528 = vld [vmem:[%s3463] sm:$0xf]
        %v3529 = vld [vmem:[%s3463 + $0x4] sm:$0xf]
        %v3530 = vld [vmem:[%s3463 + $0x8] sm:$0x1]
        %v3531 = vld [vmem:[%s3463 + $0xc] sm:$0xf]
        %v3532 = vld [vmem:[%s3463 + $0x10] sm:$0xf]
        %v3533 = vld [vmem:[%s3463 + $0x14] sm:$0x1]
        %v3534 = vld [vmem:[%s3463 + $0x18] sm:$0xf]
        %v3535 = vld [vmem:[%s3463 + $0x1c] sm:$0xf]
        %v3536 = vld [vmem:[%s3463 + $0x20] sm:$0x1]
        %v3537 = vld [vmem:[%s3463 + $0x24] sm:$0xf]
        %v3538 = vld [vmem:[%s3463 + $0x28] sm:$0xf]
        %v3539 = vld [vmem:[%s3463 + $0x2c] sm:$0x1]
        %v3540 = vld [vmem:[%s3463 + $0x30] sm:$0xf]
        %v3541 = vld [vmem:[%s3463 + $0x34] sm:$0xf]
        %v3542 = vld [vmem:[%s3463 + $0x38] sm:$0x1]
        %v3543 = vld [vmem:[%s3463 + $0x3c] sm:$0xf]
        %v3544 = vld [vmem:[%s3463 + $0x40] sm:$0xf]
        %v3545 = vld [vmem:[%s3463 + $0x44] sm:$0x1]
        %v3546 = vld [vmem:[%s3463 + $0x48] sm:$0xf]
        %v3547 = vld [vmem:[%s3463 + $0x4c] sm:$0xf]
        %v3548 = vld [vmem:[%s3463 + $0x50] sm:$0x1]
        %v3549 = vld [vmem:[%s3463 + $0x54] sm:$0xf]
        %v3550 = vld [vmem:[%s3463 + $0x58] sm:$0xf]
        %v3551 = vld [vmem:[%s3463 + $0x5c] sm:$0x1]
        %v3552 = vld [vmem:[%s3463 + $0x60] sm:$0xf]
        %v3553 = vld [vmem:[%s3463 + $0x64] sm:$0xf]
        %v3554 = vld [vmem:[%s3463 + $0x68] sm:$0x1]
        %v3555 = vld [vmem:[%s3463 + $0x6c] sm:$0xf]
        %v3556 = vld [vmem:[%s3463 + $0x70] sm:$0xf]
        %v3557 = vld [vmem:[%s3463 + $0x74] sm:$0x1]
        %v3558 = vld [vmem:[%s3463 + $0x78] sm:$0xf]
        %v3559 = vld [vmem:[%s3463 + $0x7c] sm:$0xf]
        %v3560 = vld [vmem:[%s3463 + $0x80] sm:$0x1]
        %v3561 = vld [vmem:[%s3463 + $0x84] sm:$0xf]
        %v3562 = vld [vmem:[%s3463 + $0x88] sm:$0xf]
        %v3563 = vld [vmem:[%s3463 + $0x8c] sm:$0x1]
        %v3564 = vld [vmem:[%s3463 + $0x90] sm:$0xf]
        %v3565 = vld [vmem:[%s3463 + $0x94] sm:$0xf]
        %v3566 = vld [vmem:[%s3463 + $0x98] sm:$0x1]
        %v3567 = vld [vmem:[%s3463 + $0x9c] sm:$0xf]
        %v3568 = vld [vmem:[%s3463 + $0xa0] sm:$0xf]
        %v3569 = vld [vmem:[%s3463 + $0xa4] sm:$0x1]
        %v3570 = vld [vmem:[%s3463 + $0xa8] sm:$0xf]
        %v3571 = vld [vmem:[%s3463 + $0xac] sm:$0xf]
        %v3572 = vld [vmem:[%s3463 + $0xb0] sm:$0x1]
        %v3573 = vld [vmem:[%s3463 + $0xb4] sm:$0xf]
        %v3574 = vld [vmem:[%s3463 + $0xb8] sm:$0xf]
        %v3575 = vld [vmem:[%s3463 + $0xbc] sm:$0x1]
        %v3577 = vshrl.u32 %v3528, 16
        %v3579 = vrot.slane %v3577, 4
        %v3580 = vshll.u32 %v3528, 16
        %v3582 = vrot.slane %v3580, 5
        %v3583 = vor.u32 %v3579, %v3582
        %v3584 = vrot.slane %v3583, 4
        %v3586 = vshll.u32 %v3529, 16
        %v3588 = vrot.slane %v3586, 5
        %v3589 = vsel %vm1907, %v3584, %v3588
        %v3590 = vshrl.u32 %v3529, 16
        %v3592 = vrot.slane %v3590, 4
        %v3593 = vor.u32 %v3592, %v3588
        %v3594 = vrot.slane %v3593, 4
        %v3596 = vshll.u32 %v3530, 16
        %v3598 = vrot.slane %v3596, 5
        %v3599 = vsel %vm1907, %v3594, %v3598
        %v3601 = vshrl.u32 %v3531, 16
        %v3603 = vrot.slane %v3601, 4
        %v3604 = vshll.u32 %v3531, 16
        %v3606 = vrot.slane %v3604, 5
        %v3607 = vor.u32 %v3603, %v3606
        %v3608 = vrot.slane %v3607, 4
        %v3610 = vshll.u32 %v3532, 16
        %v3612 = vrot.slane %v3610, 5
        %v3613 = vsel %vm1907, %v3608, %v3612
        %v3614 = vshrl.u32 %v3532, 16
        %v3616 = vrot.slane %v3614, 4
        %v3617 = vor.u32 %v3616, %v3612
        %v3618 = vrot.slane %v3617, 4
        %v3620 = vshll.u32 %v3533, 16
        %v3622 = vrot.slane %v3620, 5
        %v3623 = vsel %vm1907, %v3618, %v3622
        %v3625 = vshrl.u32 %v3534, 16
        %v3627 = vrot.slane %v3625, 4
        %v3628 = vshll.u32 %v3534, 16
        %v3630 = vrot.slane %v3628, 5
        %v3631 = vor.u32 %v3627, %v3630
        %v3632 = vrot.slane %v3631, 4
        %v3634 = vshll.u32 %v3535, 16
        %v3636 = vrot.slane %v3634, 5
        %v3637 = vsel %vm1907, %v3632, %v3636
        %v3638 = vshrl.u32 %v3535, 16
        %v3640 = vrot.slane %v3638, 4
        %v3641 = vor.u32 %v3640, %v3636
        %v3642 = vrot.slane %v3641, 4
        %v3644 = vshll.u32 %v3536, 16
        %v3646 = vrot.slane %v3644, 5
        %v3647 = vsel %vm1907, %v3642, %v3646
        %v3649 = vshrl.u32 %v3537, 16
        %v3651 = vrot.slane %v3649, 4
        %v3652 = vshll.u32 %v3537, 16
        %v3654 = vrot.slane %v3652, 5
        %v3655 = vor.u32 %v3651, %v3654
        %v3656 = vrot.slane %v3655, 4
        %v3658 = vshll.u32 %v3538, 16
        %v3660 = vrot.slane %v3658, 5
        %v3661 = vsel %vm1907, %v3656, %v3660
        %v3662 = vshrl.u32 %v3538, 16
        %v3664 = vrot.slane %v3662, 4
        %v3665 = vor.u32 %v3664, %v3660
        %v3666 = vrot.slane %v3665, 4
        %v3668 = vshll.u32 %v3539, 16
        %v3670 = vrot.slane %v3668, 5
        %v3671 = vsel %vm1907, %v3666, %v3670
        %v3673 = vshrl.u32 %v3540, 16
        %v3675 = vrot.slane %v3673, 4
        %v3676 = vshll.u32 %v3540, 16
        %v3678 = vrot.slane %v3676, 5
        %v3679 = vor.u32 %v3675, %v3678
        %v3680 = vrot.slane %v3679, 4
        %v3682 = vshll.u32 %v3541, 16
        %v3684 = vrot.slane %v3682, 5
        %v3685 = vsel %vm1907, %v3680, %v3684
        %v3686 = vshrl.u32 %v3541, 16
        %v3688 = vrot.slane %v3686, 4
        %v3689 = vor.u32 %v3688, %v3684
        %v3690 = vrot.slane %v3689, 4
        %v3692 = vshll.u32 %v3542, 16
        %v3694 = vrot.slane %v3692, 5
        %v3695 = vsel %vm1907, %v3690, %v3694
        %v3697 = vshrl.u32 %v3543, 16
        %v3699 = vrot.slane %v3697, 4
        %v3700 = vshll.u32 %v3543, 16
        %v3702 = vrot.slane %v3700, 5
        %v3703 = vor.u32 %v3699, %v3702
        %v3704 = vrot.slane %v3703, 4
        %v3706 = vshll.u32 %v3544, 16
        %v3708 = vrot.slane %v3706, 5
        %v3709 = vsel %vm1907, %v3704, %v3708
        %v3710 = vshrl.u32 %v3544, 16
        %v3712 = vrot.slane %v3710, 4
        %v3713 = vor.u32 %v3712, %v3708
        %v3714 = vrot.slane %v3713, 4
        %v3716 = vshll.u32 %v3545, 16
        %v3718 = vrot.slane %v3716, 5
        %v3719 = vsel %vm1907, %v3714, %v3718
        %v3721 = vshrl.u32 %v3546, 16
        %v3723 = vrot.slane %v3721, 4
        %v3724 = vshll.u32 %v3546, 16
        %v3726 = vrot.slane %v3724, 5
        %v3727 = vor.u32 %v3723, %v3726
        %v3728 = vrot.slane %v3727, 4
        %v3730 = vshll.u32 %v3547, 16
        %v3732 = vrot.slane %v3730, 5
        %v3733 = vsel %vm1907, %v3728, %v3732
        %v3734 = vshrl.u32 %v3547, 16
        %v3736 = vrot.slane %v3734, 4
        %v3737 = vor.u32 %v3736, %v3732
        %v3738 = vrot.slane %v3737, 4
        %v3740 = vshll.u32 %v3548, 16
        %v3742 = vrot.slane %v3740, 5
        %v3743 = vsel %vm1907, %v3738, %v3742
        %v3745 = vshrl.u32 %v3549, 16
        %v3747 = vrot.slane %v3745, 4
        %v3748 = vshll.u32 %v3549, 16
        %v3750 = vrot.slane %v3748, 5
        %v3751 = vor.u32 %v3747, %v3750
        %v3752 = vrot.slane %v3751, 4
        %v3754 = vshll.u32 %v3550, 16
        %v3756 = vrot.slane %v3754, 5
        %v3757 = vsel %vm1907, %v3752, %v3756
        %v3758 = vshrl.u32 %v3550, 16
        %v3760 = vrot.slane %v3758, 4
        %v3761 = vor.u32 %v3760, %v3756
        %v3762 = vrot.slane %v3761, 4
        %v3764 = vshll.u32 %v3551, 16
        %v3766 = vrot.slane %v3764, 5
        %v3767 = vsel %vm1907, %v3762, %v3766
        %v3769 = vshrl.u32 %v3552, 16
        %v3771 = vrot.slane %v3769, 4
        %v3772 = vshll.u32 %v3552, 16
        %v3774 = vrot.slane %v3772, 5
        %v3775 = vor.u32 %v3771, %v3774
        %v3776 = vrot.slane %v3775, 4
        %v3778 = vshll.u32 %v3553, 16
        %v3780 = vrot.slane %v3778, 5
        %v3781 = vsel %vm1907, %v3776, %v3780
        %v3782 = vshrl.u32 %v3553, 16
        %v3784 = vrot.slane %v3782, 4
        %v3785 = vor.u32 %v3784, %v3780
        %v3786 = vrot.slane %v3785, 4
        %v3788 = vshll.u32 %v3554, 16
        %v3790 = vrot.slane %v3788, 5
        %v3791 = vsel %vm1907, %v3786, %v3790
        %v3793 = vshrl.u32 %v3555, 16
        %v3795 = vrot.slane %v3793, 4
        %v3796 = vshll.u32 %v3555, 16
        %v3798 = vrot.slane %v3796, 5
        %v3799 = vor.u32 %v3795, %v3798
        %v3800 = vrot.slane %v3799, 4
        %v3802 = vshll.u32 %v3556, 16
        %v3804 = vrot.slane %v3802, 5
        %v3805 = vsel %vm1907, %v3800, %v3804
        %v3806 = vshrl.u32 %v3556, 16
        %v3808 = vrot.slane %v3806, 4
        %v3809 = vor.u32 %v3808, %v3804
        %v3810 = vrot.slane %v3809, 4
        %v3812 = vshll.u32 %v3557, 16
        %v3814 = vrot.slane %v3812, 5
        %v3815 = vsel %vm1907, %v3810, %v3814
        %v3817 = vshrl.u32 %v3558, 16
        %v3819 = vrot.slane %v3817, 4
        %v3820 = vshll.u32 %v3558, 16
        %v3822 = vrot.slane %v3820, 5
        %v3823 = vor.u32 %v3819, %v3822
        %v3824 = vrot.slane %v3823, 4
        %v3826 = vshll.u32 %v3559, 16
        %v3828 = vrot.slane %v3826, 5
        %v3829 = vsel %vm1907, %v3824, %v3828
        %v3830 = vshrl.u32 %v3559, 16
        %v3832 = vrot.slane %v3830, 4
        %v3833 = vor.u32 %v3832, %v3828
        %v3834 = vrot.slane %v3833, 4
        %v3836 = vshll.u32 %v3560, 16
        %v3838 = vrot.slane %v3836, 5
        %v3839 = vsel %vm1907, %v3834, %v3838
        %v3841 = vshrl.u32 %v3561, 16
        %v3843 = vrot.slane %v3841, 4
        %v3844 = vshll.u32 %v3561, 16
        %v3846 = vrot.slane %v3844, 5
        %v3847 = vor.u32 %v3843, %v3846
        %v3848 = vrot.slane %v3847, 4
        %v3850 = vshll.u32 %v3562, 16
        %v3852 = vrot.slane %v3850, 5
        %v3853 = vsel %vm1907, %v3848, %v3852
        %v3854 = vshrl.u32 %v3562, 16
        %v3856 = vrot.slane %v3854, 4
        %v3857 = vor.u32 %v3856, %v3852
        %v3858 = vrot.slane %v3857, 4
        %v3860 = vshll.u32 %v3563, 16
        %v3862 = vrot.slane %v3860, 5
        %v3863 = vsel %vm1907, %v3858, %v3862
        %v3865 = vshrl.u32 %v3564, 16
        %v3867 = vrot.slane %v3865, 4
        %v3868 = vshll.u32 %v3564, 16
        %v3870 = vrot.slane %v3868, 5
        %v3871 = vor.u32 %v3867, %v3870
        %v3872 = vrot.slane %v3871, 4
        %v3874 = vshll.u32 %v3565, 16
        %v3876 = vrot.slane %v3874, 5
        %v3877 = vsel %vm1907, %v3872, %v3876
        %v3878 = vshrl.u32 %v3565, 16
        %v3880 = vrot.slane %v3878, 4
        %v3881 = vor.u32 %v3880, %v3876
        %v3882 = vrot.slane %v3881, 4
        %v3884 = vshll.u32 %v3566, 16
        %v3886 = vrot.slane %v3884, 5
        %v3887 = vsel %vm1907, %v3882, %v3886
        %v3889 = vshrl.u32 %v3567, 16
        %v3891 = vrot.slane %v3889, 4
        %v3892 = vshll.u32 %v3567, 16
        %v3894 = vrot.slane %v3892, 5
        %v3895 = vor.u32 %v3891, %v3894
        %v3896 = vrot.slane %v3895, 4
        %v3898 = vshll.u32 %v3568, 16
        %v3900 = vrot.slane %v3898, 5
        %v3901 = vsel %vm1907, %v3896, %v3900
        %v3902 = vshrl.u32 %v3568, 16
        %v3904 = vrot.slane %v3902, 4
        %v3905 = vor.u32 %v3904, %v3900
        %v3906 = vrot.slane %v3905, 4
        %v3908 = vshll.u32 %v3569, 16
        %v3910 = vrot.slane %v3908, 5
        %v3911 = vsel %vm1907, %v3906, %v3910
        %v3913 = vshrl.u32 %v3570, 16
        %v3915 = vrot.slane %v3913, 4
        %v3916 = vshll.u32 %v3570, 16
        %v3918 = vrot.slane %v3916, 5
        %v3919 = vor.u32 %v3915, %v3918
        %v3920 = vrot.slane %v3919, 4
        %v3922 = vshll.u32 %v3571, 16
        %v3924 = vrot.slane %v3922, 5
        %v3925 = vsel %vm1907, %v3920, %v3924
        %v3926 = vshrl.u32 %v3571, 16
        %v3928 = vrot.slane %v3926, 4
        %v3929 = vor.u32 %v3928, %v3924
        %v3930 = vrot.slane %v3929, 4
        %v3932 = vshll.u32 %v3572, 16
        %v3934 = vrot.slane %v3932, 5
        %v3935 = vsel %vm1907, %v3930, %v3934
        %v3937 = vshrl.u32 %v3573, 16
        %v3939 = vrot.slane %v3937, 4
        %v3940 = vshll.u32 %v3573, 16
        %v3942 = vrot.slane %v3940, 5
        %v3943 = vor.u32 %v3939, %v3942
        %v3944 = vrot.slane %v3943, 4
        %v3946 = vshll.u32 %v3574, 16
        %v3948 = vrot.slane %v3946, 5
        %v3949 = vsel %vm1907, %v3944, %v3948
        %v3950 = vshrl.u32 %v3574, 16
        %v3952 = vrot.slane %v3950, 4
        %v3953 = vor.u32 %v3952, %v3948
        %v3954 = vrot.slane %v3953, 4
        %v3956 = vshll.u32 %v3575, 16
        %v3958 = vrot.slane %v3956, 5
        %v3959 = vsel %vm1907, %v3954, %v3958
        %3992 = vst [vmem:[#allocation3 + $0x1c] sm:$0xf] %v3589
        %3993 = vst [vmem:[#allocation3 + $0x40] sm:$0xf] %v3599
        %3994 = vst [vmem:[#allocation3 + $0x64] sm:$0xf] %v3613
        %3995 = vst [vmem:[#allocation3 + $0x88] sm:$0xf] %v3623
        %3996 = vst [vmem:[#allocation3 + $0xac] sm:$0xf] %v3637
        %3997 = vst [vmem:[#allocation3 + $0xd0] sm:$0xf] %v3647
        %3998 = vst [vmem:[#allocation3 + $0xf4] sm:$0xf] %v3661
        %3999 = vst [vmem:[#allocation3 + $0x118] sm:$0xf] %v3671
        %4000 = vst [vmem:[#allocation3 + $0x13c] sm:$0xf] %v3685
        %4001 = vst [vmem:[#allocation3 + $0x160] sm:$0xf] %v3695
        %4002 = vst [vmem:[#allocation3 + $0x184] sm:$0xf] %v3709
        %4003 = vst [vmem:[#allocation3 + $0x1a8] sm:$0xf] %v3719
        %4004 = vst [vmem:[#allocation3 + $0x1cc] sm:$0xf] %v3733
        %4005 = vst [vmem:[#allocation3 + $0x1f0] sm:$0xf] %v3743
        %4006 = vst [vmem:[#allocation3 + $0x214] sm:$0xf] %v3757
        %4007 = vst [vmem:[#allocation3 + $0x238] sm:$0xf] %v3767
        %4008 = vst [vmem:[#allocation3 + $0x25c] sm:$0xf] %v3781
        %4009 = vst [vmem:[#allocation3 + $0x280] sm:$0xf] %v3791
        %4010 = vst [vmem:[#allocation3 + $0x2a4] sm:$0xf] %v3805
        %4011 = vst [vmem:[#allocation3 + $0x2c8] sm:$0xf] %v3815
        %4012 = vst [vmem:[#allocation3 + $0x2ec] sm:$0xf] %v3829
        %4013 = vst [vmem:[#allocation3 + $0x310] sm:$0xf] %v3839
        %4014 = vst [vmem:[#allocation3 + $0x334] sm:$0xf] %v3853
        %4015 = vst [vmem:[#allocation3 + $0x358] sm:$0xf] %v3863
        %4016 = vst [vmem:[#allocation3 + $0x37c] sm:$0xf] %v3877
        %4017 = vst [vmem:[#allocation3 + $0x3a0] sm:$0xf] %v3887
        %4018 = vst [vmem:[#allocation3 + $0x3c4] sm:$0xf] %v3901
        %4019 = vst [vmem:[#allocation3 + $0x3e8] sm:$0xf] %v3911
        %4020 = vst [vmem:[#allocation3 + $0x40c] sm:$0xf] %v3925
        %4021 = vst [vmem:[#allocation3 + $0x430] sm:$0xf] %v3935
        %4022 = vst [vmem:[#allocation3 + $0x454] sm:$0xf] %v3949
        %4023 = vst [vmem:[#allocation3 + $0x478] sm:$0xf] %v3959
        %v4024 = vld [vmem:[%s3463] sm:$0xe]
        %v4025 = vld [vmem:[%s3463 + $0x4] sm:$0xf]
        %v4026 = vld [vmem:[%s3463 + $0x8] sm:$0x1]
        %v4027 = vld [vmem:[%s3463 + $0xc] sm:$0xe]
        %v4028 = vld [vmem:[%s3463 + $0x10] sm:$0xf]
        %v4029 = vld [vmem:[%s3463 + $0x14] sm:$0x1]
        %v4030 = vld [vmem:[%s3463 + $0x18] sm:$0xe]
        %v4031 = vld [vmem:[%s3463 + $0x1c] sm:$0xf]
        %v4032 = vld [vmem:[%s3463 + $0x20] sm:$0x1]
        %v4033 = vld [vmem:[%s3463 + $0x24] sm:$0xe]
        %v4034 = vld [vmem:[%s3463 + $0x28] sm:$0xf]
        %v4035 = vld [vmem:[%s3463 + $0x2c] sm:$0x1]
        %v4036 = vld [vmem:[%s3463 + $0x30] sm:$0xe]
        %v4037 = vld [vmem:[%s3463 + $0x34] sm:$0xf]
        %v4038 = vld [vmem:[%s3463 + $0x38] sm:$0x1]
        %v4039 = vld [vmem:[%s3463 + $0x3c] sm:$0xe]
        %v4040 = vld [vmem:[%s3463 + $0x40] sm:$0xf]
        %v4041 = vld [vmem:[%s3463 + $0x44] sm:$0x1]
        %v4042 = vld [vmem:[%s3463 + $0x48] sm:$0xe]
        %v4043 = vld [vmem:[%s3463 + $0x4c] sm:$0xf]
        %v4044 = vld [vmem:[%s3463 + $0x50] sm:$0x1]
        %v4045 = vld [vmem:[%s3463 + $0x54] sm:$0xe]
        %v4046 = vld [vmem:[%s3463 + $0x58] sm:$0xf]
        %v4047 = vld [vmem:[%s3463 + $0x5c] sm:$0x1]
        %v4048 = vld [vmem:[%s3463 + $0x60] sm:$0xe]
        %v4049 = vld [vmem:[%s3463 + $0x64] sm:$0xf]
        %v4050 = vld [vmem:[%s3463 + $0x68] sm:$0x1]
        %v4051 = vld [vmem:[%s3463 + $0x6c] sm:$0xe]
        %v4052 = vld [vmem:[%s3463 + $0x70] sm:$0xf]
        %v4053 = vld [vmem:[%s3463 + $0x74] sm:$0x1]
        %v4054 = vld [vmem:[%s3463 + $0x78] sm:$0xe]
        %v4055 = vld [vmem:[%s3463 + $0x7c] sm:$0xf]
        %v4056 = vld [vmem:[%s3463 + $0x80] sm:$0x1]
        %v4057 = vld [vmem:[%s3463 + $0x84] sm:$0xe]
        %v4058 = vld [vmem:[%s3463 + $0x88] sm:$0xf]
        %v4059 = vld [vmem:[%s3463 + $0x8c] sm:$0x1]
        %v4060 = vld [vmem:[%s3463 + $0x90] sm:$0xe]
        %v4061 = vld [vmem:[%s3463 + $0x94] sm:$0xf]
        %v4062 = vld [vmem:[%s3463 + $0x98] sm:$0x1]
        %v4063 = vld [vmem:[%s3463 + $0x9c] sm:$0xe]
        %v4064 = vld [vmem:[%s3463 + $0xa0] sm:$0xf]
        %v4065 = vld [vmem:[%s3463 + $0xa4] sm:$0x1]
        %v4066 = vld [vmem:[%s3463 + $0xa8] sm:$0xe]
        %v4067 = vld [vmem:[%s3463 + $0xac] sm:$0xf]
        %v4068 = vld [vmem:[%s3463 + $0xb0] sm:$0x1]
        %v4069 = vld [vmem:[%s3463 + $0xb4] sm:$0xe]
        %v4070 = vld [vmem:[%s3463 + $0xb8] sm:$0xf]
        %v4071 = vld [vmem:[%s3463 + $0xbc] sm:$0x1]
        %v4120 = vrot.slane %v4024, 5
        %v4121 = vrot.slane %v4120, 4
        %v4122 = vrot.slane %v4025, 5
        %v4123 = vsel %vm2454, %v4121, %v4122
        %v4124 = vrot.slane %v4122, 4
        %v4125 = vrot.slane %v4026, 5
        %v4126 = vsel %vm2454, %v4124, %v4125
        %v4127 = vrot.slane %v4027, 5
        %v4128 = vrot.slane %v4127, 4
        %v4129 = vrot.slane %v4028, 5
        %v4130 = vsel %vm2454, %v4128, %v4129
        %v4131 = vrot.slane %v4129, 4
        %v4132 = vrot.slane %v4029, 5
        %v4133 = vsel %vm2454, %v4131, %v4132
        %v4134 = vrot.slane %v4030, 5
        %v4135 = vrot.slane %v4134, 4
        %v4136 = vrot.slane %v4031, 5
        %v4137 = vsel %vm2454, %v4135, %v4136
        %v4138 = vrot.slane %v4136, 4
        %v4139 = vrot.slane %v4032, 5
        %v4140 = vsel %vm2454, %v4138, %v4139
        %v4141 = vrot.slane %v4033, 5
        %v4142 = vrot.slane %v4141, 4
        %v4143 = vrot.slane %v4034, 5
        %v4144 = vsel %vm2454, %v4142, %v4143
        %v4145 = vrot.slane %v4143, 4
        %v4146 = vrot.slane %v4035, 5
        %v4147 = vsel %vm2454, %v4145, %v4146
        %v4148 = vrot.slane %v4036, 5
        %v4149 = vrot.slane %v4148, 4
        %v4150 = vrot.slane %v4037, 5
        %v4151 = vsel %vm2454, %v4149, %v4150
        %v4152 = vrot.slane %v4150, 4
        %v4153 = vrot.slane %v4038, 5
        %v4154 = vsel %vm2454, %v4152, %v4153
        %v4155 = vrot.slane %v4039, 5
        %v4156 = vrot.slane %v4155, 4
        %v4157 = vrot.slane %v4040, 5
        %v4158 = vsel %vm2454, %v4156, %v4157
        %v4159 = vrot.slane %v4157, 4
        %v4160 = vrot.slane %v4041, 5
        %v4161 = vsel %vm2454, %v4159, %v4160
        %v4162 = vrot.slane %v4042, 5
        %v4163 = vrot.slane %v4162, 4
        %v4164 = vrot.slane %v4043, 5
        %v4165 = vsel %vm2454, %v4163, %v4164
        %v4166 = vrot.slane %v4164, 4
        %v4167 = vrot.slane %v4044, 5
        %v4168 = vsel %vm2454, %v4166, %v4167
        %v4169 = vrot.slane %v4045, 5
        %v4170 = vrot.slane %v4169, 4
        %v4171 = vrot.slane %v4046, 5
        %v4172 = vsel %vm2454, %v4170, %v4171
        %v4173 = vrot.slane %v4171, 4
        %v4174 = vrot.slane %v4047, 5
        %v4175 = vsel %vm2454, %v4173, %v4174
        %v4176 = vrot.slane %v4048, 5
        %v4177 = vrot.slane %v4176, 4
        %v4178 = vrot.slane %v4049, 5
        %v4179 = vsel %vm2454, %v4177, %v4178
        %v4180 = vrot.slane %v4178, 4
        %v4181 = vrot.slane %v4050, 5
        %v4182 = vsel %vm2454, %v4180, %v4181
        %v4183 = vrot.slane %v4051, 5
        %v4184 = vrot.slane %v4183, 4
        %v4185 = vrot.slane %v4052, 5
        %v4186 = vsel %vm2454, %v4184, %v4185
        %v4187 = vrot.slane %v4185, 4
        %v4188 = vrot.slane %v4053, 5
        %v4189 = vsel %vm2454, %v4187, %v4188
        %v4190 = vrot.slane %v4054, 5
        %v4191 = vrot.slane %v4190, 4
        %v4192 = vrot.slane %v4055, 5
        %v4193 = vsel %vm2454, %v4191, %v4192
        %v4194 = vrot.slane %v4192, 4
        %v4195 = vrot.slane %v4056, 5
        %v4196 = vsel %vm2454, %v4194, %v4195
        %v4197 = vrot.slane %v4057, 5
        %v4198 = vrot.slane %v4197, 4
        %v4199 = vrot.slane %v4058, 5
        %v4200 = vsel %vm2454, %v4198, %v4199
        %v4201 = vrot.slane %v4199, 4
        %v4202 = vrot.slane %v4059, 5
        %v4203 = vsel %vm2454, %v4201, %v4202
        %v4204 = vrot.slane %v4060, 5
        %v4205 = vrot.slane %v4204, 4
        %v4206 = vrot.slane %v4061, 5
        %v4207 = vsel %vm2454, %v4205, %v4206
        %v4208 = vrot.slane %v4206, 4
        %v4209 = vrot.slane %v4062, 5
        %v4210 = vsel %vm2454, %v4208, %v4209
        %v4211 = vrot.slane %v4063, 5
        %v4212 = vrot.slane %v4211, 4
        %v4213 = vrot.slane %v4064, 5
        %v4214 = vsel %vm2454, %v4212, %v4213
        %v4215 = vrot.slane %v4213, 4
        %v4216 = vrot.slane %v4065, 5
        %v4217 = vsel %vm2454, %v4215, %v4216
        %v4218 = vrot.slane %v4066, 5
        %v4219 = vrot.slane %v4218, 4
        %v4220 = vrot.slane %v4067, 5
        %v4221 = vsel %vm2454, %v4219, %v4220
        %v4222 = vrot.slane %v4220, 4
        %v4223 = vrot.slane %v4068, 5
        %v4224 = vsel %vm2454, %v4222, %v4223
        %v4225 = vrot.slane %v4069, 5
        %v4226 = vrot.slane %v4225, 4
        %v4227 = vrot.slane %v4070, 5
        %v4228 = vsel %vm2454, %v4226, %v4227
        %v4229 = vrot.slane %v4227, 4
        %v4230 = vrot.slane %v4071, 5
        %v4231 = vsel %vm2454, %v4229, %v4230
        %4264 = vst [vmem:[#allocation3 + $0x20] sm:$0xf] %v4123
        %4265 = vst [vmem:[#allocation3 + $0x44] sm:$0xf] %v4126
        %4266 = vst [vmem:[#allocation3 + $0x68] sm:$0xf] %v4130
        %4267 = vst [vmem:[#allocation3 + $0x8c] sm:$0xf] %v4133
        %4268 = vst [vmem:[#allocation3 + $0xb0] sm:$0xf] %v4137
        %4269 = vst [vmem:[#allocation3 + $0xd4] sm:$0xf] %v4140
        %4270 = vst [vmem:[#allocation3 + $0xf8] sm:$0xf] %v4144
        %4271 = vst [vmem:[#allocation3 + $0x11c] sm:$0xf] %v4147
        %4272 = vst [vmem:[#allocation3 + $0x140] sm:$0xf] %v4151
        %4273 = vst [vmem:[#allocation3 + $0x164] sm:$0xf] %v4154
        %4274 = vst [vmem:[#allocation3 + $0x188] sm:$0xf] %v4158
        %4275 = vst [vmem:[#allocation3 + $0x1ac] sm:$0xf] %v4161
        %4276 = vst [vmem:[#allocation3 + $0x1d0] sm:$0xf] %v4165
        %4277 = vst [vmem:[#allocation3 + $0x1f4] sm:$0xf] %v4168
        %4278 = vst [vmem:[#allocation3 + $0x218] sm:$0xf] %v4172
        %4279 = vst [vmem:[#allocation3 + $0x23c] sm:$0xf] %v4175
        %4280 = vst [vmem:[#allocation3 + $0x260] sm:$0xf] %v4179
        %4281 = vst [vmem:[#allocation3 + $0x284] sm:$0xf] %v4182
        %4282 = vst [vmem:[#allocation3 + $0x2a8] sm:$0xf] %v4186
        %4283 = vst [vmem:[#allocation3 + $0x2cc] sm:$0xf] %v4189
        %4284 = vst [vmem:[#allocation3 + $0x2f0] sm:$0xf] %v4193
        %4285 = vst [vmem:[#allocation3 + $0x314] sm:$0xf] %v4196
        %4286 = vst [vmem:[#allocation3 + $0x338] sm:$0xf] %v4200
        %4287 = vst [vmem:[#allocation3 + $0x35c] sm:$0xf] %v4203
        %4288 = vst [vmem:[#allocation3 + $0x380] sm:$0xf] %v4207
        %4289 = vst [vmem:[#allocation3 + $0x3a4] sm:$0xf] %v4210
        %4290 = vst [vmem:[#allocation3 + $0x3c8] sm:$0xf] %v4214
        %4291 = vst [vmem:[#allocation3 + $0x3ec] sm:$0xf] %v4217
        %4292 = vst [vmem:[#allocation3 + $0x410] sm:$0xf] %v4221
        %4293 = vst [vmem:[#allocation3 + $0x434] sm:$0xf] %v4224
        %4294 = vst [vmem:[#allocation3 + $0x458] sm:$0xf] %v4228
        %4295 = vst [vmem:[#allocation3 + $0x47c] sm:$0xf] %v4231
        %v4296 = vld [vmem:[#allocation3] sm:$0xff]
        %v4297 = vld [vmem:[#allocation3 + $0x8] sm:$0xff]
        %v4298 = vld [vmem:[#allocation3 + $0x10] sm:$0xff]
        %v4299 = vld [vmem:[#allocation3 + $0x18] sm:$0xff]
        %v4300 = vld [vmem:[#allocation3 + $0x20] sm:$0xf]
        %v4301 = vld [vmem:[#allocation3 + $0x24] sm:$0xff]
        %v4302 = vld [vmem:[#allocation3 + $0x2c] sm:$0xff]
        %v4303 = vld [vmem:[#allocation3 + $0x34] sm:$0xff]
        %v4304 = vld [vmem:[#allocation3 + $0x3c] sm:$0xff]
        %v4305 = vld [vmem:[#allocation3 + $0x44] sm:$0xf]
        %v4306 = vld [vmem:[#allocation3 + $0x48] sm:$0xff]
        %v4307 = vld [vmem:[#allocation3 + $0x50] sm:$0xff]
        %v4308 = vld [vmem:[#allocation3 + $0x58] sm:$0xff]
        %v4309 = vld [vmem:[#allocation3 + $0x60] sm:$0xff]
        %v4310 = vld [vmem:[#allocation3 + $0x68] sm:$0xf]
        %v4311 = vld [vmem:[#allocation3 + $0x6c] sm:$0xff]
        %v4312 = vld [vmem:[#allocation3 + $0x74] sm:$0xff]
        %v4313 = vld [vmem:[#allocation3 + $0x7c] sm:$0xff]
        %v4314 = vld [vmem:[#allocation3 + $0x84] sm:$0xff]
        %v4315 = vld [vmem:[#allocation3 + $0x8c] sm:$0xf]
        %v4316 = vld [vmem:[#allocation3 + $0x90] sm:$0xff]
        %v4317 = vld [vmem:[#allocation3 + $0x98] sm:$0xff]
        %v4318 = vld [vmem:[#allocation3 + $0xa0] sm:$0xff]
        %v4319 = vld [vmem:[#allocation3 + $0xa8] sm:$0xff]
        %v4320 = vld [vmem:[#allocation3 + $0xb0] sm:$0xf]
        %v4321 = vld [vmem:[#allocation3 + $0xb4] sm:$0xff]
        %v4322 = vld [vmem:[#allocation3 + $0xbc] sm:$0xff]
        %v4323 = vld [vmem:[#allocation3 + $0xc4] sm:$0xff]
        %v4324 = vld [vmem:[#allocation3 + $0xcc] sm:$0xff]
        %v4325 = vld [vmem:[#allocation3 + $0xd4] sm:$0xf]
        %v4326 = vld [vmem:[#allocation3 + $0xd8] sm:$0xff]
        %v4327 = vld [vmem:[#allocation3 + $0xe0] sm:$0xff]
        %v4328 = vld [vmem:[#allocation3 + $0xe8] sm:$0xff]
        %v4329 = vld [vmem:[#allocation3 + $0xf0] sm:$0xff]
        %v4330 = vld [vmem:[#allocation3 + $0xf8] sm:$0xf]
        %v4331 = vld [vmem:[#allocation3 + $0xfc] sm:$0xff]
        %v4332 = vld [vmem:[#allocation3 + $0x104] sm:$0xff]
        %v4333 = vld [vmem:[#allocation3 + $0x10c] sm:$0xff]
        %v4334 = vld [vmem:[#allocation3 + $0x114] sm:$0xff]
        %v4335 = vld [vmem:[#allocation3 + $0x11c] sm:$0xf]
        %v4336 = vld [vmem:[#allocation3 + $0x120] sm:$0xff]
        %v4337 = vld [vmem:[#allocation3 + $0x128] sm:$0xff]
        %v4338 = vld [vmem:[#allocation3 + $0x130] sm:$0xff]
        %v4339 = vld [vmem:[#allocation3 + $0x138] sm:$0xff]
        %v4340 = vld [vmem:[#allocation3 + $0x140] sm:$0xf]
        %v4341 = vld [vmem:[#allocation3 + $0x144] sm:$0xff]
        %v4342 = vld [vmem:[#allocation3 + $0x14c] sm:$0xff]
        %v4343 = vld [vmem:[#allocation3 + $0x154] sm:$0xff]
        %v4344 = vld [vmem:[#allocation3 + $0x15c] sm:$0xff]
        %v4345 = vld [vmem:[#allocation3 + $0x164] sm:$0xf]
        %v4346 = vld [vmem:[#allocation3 + $0x168] sm:$0xff]
        %v4347 = vld [vmem:[#allocation3 + $0x170] sm:$0xff]
        %v4348 = vld [vmem:[#allocation3 + $0x178] sm:$0xff]
        %v4349 = vld [vmem:[#allocation3 + $0x180] sm:$0xff]
        %v4350 = vld [vmem:[#allocation3 + $0x188] sm:$0xf]
        %v4351 = vld [vmem:[#allocation3 + $0x18c] sm:$0xff]
        %v4352 = vld [vmem:[#allocation3 + $0x194] sm:$0xff]
        %v4353 = vld [vmem:[#allocation3 + $0x19c] sm:$0xff]
        %v4354 = vld [vmem:[#allocation3 + $0x1a4] sm:$0xff]
        %v4355 = vld [vmem:[#allocation3 + $0x1ac] sm:$0xf]
        %v4356 = vld [vmem:[#allocation3 + $0x1b0] sm:$0xff]
        %v4357 = vld [vmem:[#allocation3 + $0x1b8] sm:$0xff]
        %v4358 = vld [vmem:[#allocation3 + $0x1c0] sm:$0xff]
        %v4359 = vld [vmem:[#allocation3 + $0x1c8] sm:$0xff]
        %v4360 = vld [vmem:[#allocation3 + $0x1d0] sm:$0xf]
        %v4361 = vld [vmem:[#allocation3 + $0x1d4] sm:$0xff]
        %v4362 = vld [vmem:[#allocation3 + $0x1dc] sm:$0xff]
        %v4363 = vld [vmem:[#allocation3 + $0x1e4] sm:$0xff]
        %v4364 = vld [vmem:[#allocation3 + $0x1ec] sm:$0xff]
        %v4365 = vld [vmem:[#allocation3 + $0x1f4] sm:$0xf]
        %v4366 = vld [vmem:[#allocation3 + $0x1f8] sm:$0xff]
        %v4367 = vld [vmem:[#allocation3 + $0x200] sm:$0xff]
        %v4368 = vld [vmem:[#allocation3 + $0x208] sm:$0xff]
        %v4369 = vld [vmem:[#allocation3 + $0x210] sm:$0xff]
        %v4370 = vld [vmem:[#allocation3 + $0x218] sm:$0xf]
        %v4371 = vld [vmem:[#allocation3 + $0x21c] sm:$0xff]
        %v4372 = vld [vmem:[#allocation3 + $0x224] sm:$0xff]
        %v4373 = vld [vmem:[#allocation3 + $0x22c] sm:$0xff]
        %v4374 = vld [vmem:[#allocation3 + $0x234] sm:$0xff]
        %v4375 = vld [vmem:[#allocation3 + $0x23c] sm:$0xf]
        %v4376 = vld [vmem:[#allocation3 + $0x240] sm:$0xff]
        %v4377 = vld [vmem:[#allocation3 + $0x248] sm:$0xff]
        %v4378 = vld [vmem:[#allocation3 + $0x250] sm:$0xff]
        %v4379 = vld [vmem:[#allocation3 + $0x258] sm:$0xff]
        %v4380 = vld [vmem:[#allocation3 + $0x260] sm:$0xf]
        %v4381 = vld [vmem:[#allocation3 + $0x264] sm:$0xff]
        %v4382 = vld [vmem:[#allocation3 + $0x26c] sm:$0xff]
        %v4383 = vld [vmem:[#allocation3 + $0x274] sm:$0xff]
        %v4384 = vld [vmem:[#allocation3 + $0x27c] sm:$0xff]
        %v4385 = vld [vmem:[#allocation3 + $0x284] sm:$0xf]
        %v4386 = vld [vmem:[#allocation3 + $0x288] sm:$0xff]
        %v4387 = vld [vmem:[#allocation3 + $0x290] sm:$0xff]
        %v4388 = vld [vmem:[#allocation3 + $0x298] sm:$0xff]
        %v4389 = vld [vmem:[#allocation3 + $0x2a0] sm:$0xff]
        %v4390 = vld [vmem:[#allocation3 + $0x2a8] sm:$0xf]
        %v4391 = vld [vmem:[#allocation3 + $0x2ac] sm:$0xff]
        %v4392 = vld [vmem:[#allocation3 + $0x2b4] sm:$0xff]
        %v4393 = vld [vmem:[#allocation3 + $0x2bc] sm:$0xff]
        %v4394 = vld [vmem:[#allocation3 + $0x2c4] sm:$0xff]
        %v4395 = vld [vmem:[#allocation3 + $0x2cc] sm:$0xf]
        %v4396 = vld [vmem:[#allocation3 + $0x2d0] sm:$0xff]
        %v4397 = vld [vmem:[#allocation3 + $0x2d8] sm:$0xff]
        %v4398 = vld [vmem:[#allocation3 + $0x2e0] sm:$0xff]
        %v4399 = vld [vmem:[#allocation3 + $0x2e8] sm:$0xff]
        %v4400 = vld [vmem:[#allocation3 + $0x2f0] sm:$0xf]
        %v4401 = vld [vmem:[#allocation3 + $0x2f4] sm:$0xff]
        %v4402 = vld [vmem:[#allocation3 + $0x2fc] sm:$0xff]
        %v4403 = vld [vmem:[#allocation3 + $0x304] sm:$0xff]
        %v4404 = vld [vmem:[#allocation3 + $0x30c] sm:$0xff]
        %v4405 = vld [vmem:[#allocation3 + $0x314] sm:$0xf]
        %v4406 = vld [vmem:[#allocation3 + $0x318] sm:$0xff]
        %v4407 = vld [vmem:[#allocation3 + $0x320] sm:$0xff]
        %v4408 = vld [vmem:[#allocation3 + $0x328] sm:$0xff]
        %v4409 = vld [vmem:[#allocation3 + $0x330] sm:$0xff]
        %v4410 = vld [vmem:[#allocation3 + $0x338] sm:$0xf]
        %v4411 = vld [vmem:[#allocation3 + $0x33c] sm:$0xff]
        %v4412 = vld [vmem:[#allocation3 + $0x344] sm:$0xff]
        %v4413 = vld [vmem:[#allocation3 + $0x34c] sm:$0xff]
        %v4414 = vld [vmem:[#allocation3 + $0x354] sm:$0xff]
        %v4415 = vld [vmem:[#allocation3 + $0x35c] sm:$0xf]
        %v4416 = vld [vmem:[#allocation3 + $0x360] sm:$0xff]
        %v4417 = vld [vmem:[#allocation3 + $0x368] sm:$0xff]
        %v4418 = vld [vmem:[#allocation3 + $0x370] sm:$0xff]
        %v4419 = vld [vmem:[#allocation3 + $0x378] sm:$0xff]
        %v4420 = vld [vmem:[#allocation3 + $0x380] sm:$0xf]
        %v4421 = vld [vmem:[#allocation3 + $0x384] sm:$0xff]
        %v4422 = vld [vmem:[#allocation3 + $0x38c] sm:$0xff]
        %v4423 = vld [vmem:[#allocation3 + $0x394] sm:$0xff]
        %v4424 = vld [vmem:[#allocation3 + $0x39c] sm:$0xff]
        %v4425 = vld [vmem:[#allocation3 + $0x3a4] sm:$0xf]
        %v4426 = vld [vmem:[#allocation3 + $0x3a8] sm:$0xff]
        %v4427 = vld [vmem:[#allocation3 + $0x3b0] sm:$0xff]
        %v4428 = vld [vmem:[#allocation3 + $0x3b8] sm:$0xff]
        %v4429 = vld [vmem:[#allocation3 + $0x3c0] sm:$0xff]
        %v4430 = vld [vmem:[#allocation3 + $0x3c8] sm:$0xf]
        %v4431 = vld [vmem:[#allocation3 + $0x3cc] sm:$0xff]
        %v4432 = vld [vmem:[#allocation3 + $0x3d4] sm:$0xff]
        %v4433 = vld [vmem:[#allocation3 + $0x3dc] sm:$0xff]
        %v4434 = vld [vmem:[#allocation3 + $0x3e4] sm:$0xff]
        %v4435 = vld [vmem:[#allocation3 + $0x3ec] sm:$0xf]
        %v4436 = vld [vmem:[#allocation3 + $0x3f0] sm:$0xff]
        %v4437 = vld [vmem:[#allocation3 + $0x3f8] sm:$0xff]
        %v4438 = vld [vmem:[#allocation3 + $0x400] sm:$0xff]
        %v4439 = vld [vmem:[#allocation3 + $0x408] sm:$0xff]
        %v4440 = vld [vmem:[#allocation3 + $0x410] sm:$0xf]
        %v4441 = vld [vmem:[#allocation3 + $0x414] sm:$0xff]
        %v4442 = vld [vmem:[#allocation3 + $0x41c] sm:$0xff]
        %v4443 = vld [vmem:[#allocation3 + $0x424] sm:$0xff]
        %v4444 = vld [vmem:[#allocation3 + $0x42c] sm:$0xff]
        %v4445 = vld [vmem:[#allocation3 + $0x434] sm:$0xf]
        %v4446 = vld [vmem:[#allocation3 + $0x438] sm:$0xff]
        %v4447 = vld [vmem:[#allocation3 + $0x440] sm:$0xff]
        %v4448 = vld [vmem:[#allocation3 + $0x448] sm:$0xff]
        %v4449 = vld [vmem:[#allocation3 + $0x450] sm:$0xff]
        %v4450 = vld [vmem:[#allocation3 + $0x458] sm:$0xf]
        %v4451 = vld [vmem:[#allocation3 + $0x45c] sm:$0xff]
        %v4452 = vld [vmem:[#allocation3 + $0x464] sm:$0xff]
        %v4453 = vld [vmem:[#allocation3 + $0x46c] sm:$0xff]
        %v4454 = vld [vmem:[#allocation3 + $0x474] sm:$0xff]
        %v4455 = vld [vmem:[#allocation3 + $0x47c] sm:$0xf]
        %v4456 = vld [vmem:[#allocation9] sm:$0xf]
        %v4457 = vld [vmem:[#allocation9 + $0x4] sm:$0xf]
        %v4458 = vld [vmem:[#allocation9 + $0x8] sm:$0xf]
        %v4459 = vld [vmem:[#allocation9 + $0xc] sm:$0xf]
        %v4460 = vld [vmem:[#allocation9 + $0x10] sm:$0xf]
        %v4461 = vld [vmem:[#allocation9 + $0x14] sm:$0xf]
        %v4462 = vld [vmem:[#allocation9 + $0x18] sm:$0xf]
        %v4463 = vld [vmem:[#allocation9 + $0x1c] sm:$0xf]
        %v4464 = vld [vmem:[#allocation9 + $0x20] sm:$0xf]
        %v4465 = vld [vmem:[#allocation9 + $0x24] sm:$0xf]
        %v4466 = vld [vmem:[#allocation9 + $0x28] sm:$0xf]
        %v4467 = vld [vmem:[#allocation9 + $0x2c] sm:$0xf]
        %v4468 = vld [vmem:[#allocation9 + $0x30] sm:$0xf]
        %v4469 = vld [vmem:[#allocation9 + $0x34] sm:$0xf]
        %v4470 = vld [vmem:[#allocation9 + $0x38] sm:$0xf]
        %v4471 = vld [vmem:[#allocation9 + $0x3c] sm:$0xf]
        %v4472 = vld [vmem:[#allocation9 + $0x40] sm:$0xf]
        %v4473 = vld [vmem:[#allocation9 + $0x44] sm:$0xf]
        %v4474 = vld [vmem:[#allocation9 + $0x48] sm:$0xf]
        %v4475 = vld [vmem:[#allocation9 + $0x4c] sm:$0xf]
        %v4476 = vld [vmem:[#allocation9 + $0x50] sm:$0xf]
        %v4477 = vld [vmem:[#allocation9 + $0x54] sm:$0xf]
        %v4478 = vld [vmem:[#allocation9 + $0x58] sm:$0xf]
        %v4479 = vld [vmem:[#allocation9 + $0x5c] sm:$0xf]
        %v4480 = vld [vmem:[#allocation9 + $0x60] sm:$0xf]
        %v4481 = vld [vmem:[#allocation9 + $0x64] sm:$0xf]
        %v4482 = vld [vmem:[#allocation9 + $0x68] sm:$0xf]
        %v4483 = vld [vmem:[#allocation9 + $0x6c] sm:$0xf]
        %v4484 = vld [vmem:[#allocation9 + $0x70] sm:$0xf]
        %v4485 = vld [vmem:[#allocation9 + $0x74] sm:$0xf]
        %v4486 = vld [vmem:[#allocation9 + $0x78] sm:$0xf]
        %v4487 = vld [vmem:[#allocation9 + $0x7c] sm:$0xf]
        %v4488 = vld [vmem:[#allocation9 + $0x80] sm:$0xf]
        %v4489 = vld [vmem:[#allocation9 + $0x84] sm:$0xf]
        %v4490 = vld [vmem:[#allocation9 + $0x88] sm:$0xf]
        %v4491 = vld [vmem:[#allocation9 + $0x8c] sm:$0xf]
        %v4492 = vld [vmem:[#allocation9 + $0x90] sm:$0xf]
        %v4493 = vld [vmem:[#allocation9 + $0x94] sm:$0xf]
        %v4494 = vld [vmem:[#allocation9 + $0x98] sm:$0xf]
        %v4495 = vld [vmem:[#allocation9 + $0x9c] sm:$0xf]
        %v4496 = vld [vmem:[#allocation9 + $0xa0] sm:$0xf]
        %v4497 = vld [vmem:[#allocation9 + $0xa4] sm:$0xf]
        %v4498 = vld [vmem:[#allocation9 + $0xa8] sm:$0xf]
        %v4499 = vld [vmem:[#allocation9 + $0xac] sm:$0xf]
        %v4500 = vld [vmem:[#allocation9 + $0xb0] sm:$0xf]
        %v4501 = vld [vmem:[#allocation9 + $0xb4] sm:$0xf]
        %v4502 = vld [vmem:[#allocation9 + $0xb8] sm:$0xf]
        %v4503 = vld [vmem:[#allocation9 + $0xbc] sm:$0xf]
        %v4504 = vld [vmem:[#allocation9 + $0xc0] sm:$0xf]
        %v4505 = vld [vmem:[#allocation9 + $0xc4] sm:$0xf]
        %v4506 = vld [vmem:[#allocation9 + $0xc8] sm:$0xf]
        %v4507 = vld [vmem:[#allocation9 + $0xcc] sm:$0xf]
        %v4508 = vld [vmem:[#allocation9 + $0xd0] sm:$0xf]
        %v4509 = vld [vmem:[#allocation9 + $0xd4] sm:$0xf]
        %v4510 = vld [vmem:[#allocation9 + $0xd8] sm:$0xf]
        %v4511 = vld [vmem:[#allocation9 + $0xdc] sm:$0xf]
        %v4512 = vld [vmem:[#allocation9 + $0xe0] sm:$0xf]
        %v4513 = vld [vmem:[#allocation9 + $0xe4] sm:$0xf]
        %v4514 = vld [vmem:[#allocation9 + $0xe8] sm:$0xf]
        %v4515 = vld [vmem:[#allocation9 + $0xec] sm:$0xf]
        %v4516 = vld [vmem:[#allocation9 + $0xf0] sm:$0xf]
        %v4517 = vld [vmem:[#allocation9 + $0xf4] sm:$0xf]
        %v4518 = vld [vmem:[#allocation9 + $0xf8] sm:$0xf]
        %v4519 = vld [vmem:[#allocation9 + $0xfc] sm:$0xf]
        %v4520 = vld [vmem:[#allocation9 + $0x100] sm:$0xf]
        %v4521 = vld [vmem:[#allocation9 + $0x104] sm:$0xf]
        %v4522 = vld [vmem:[#allocation9 + $0x108] sm:$0xf]
        %v4523 = vld [vmem:[#allocation9 + $0x10c] sm:$0xf]
        %v4524 = vld [vmem:[#allocation9 + $0x110] sm:$0xf]
        %v4525 = vld [vmem:[#allocation9 + $0x114] sm:$0xf]
        %v4526 = vld [vmem:[#allocation9 + $0x118] sm:$0xf]
        %v4527 = vld [vmem:[#allocation9 + $0x11c] sm:$0xf]
        %v4528 = vld [vmem:[#allocation9 + $0x120] sm:$0xf]
        %v4529 = vld [vmem:[#allocation9 + $0x124] sm:$0xf]
        %v4530 = vld [vmem:[#allocation9 + $0x128] sm:$0xf]
        %v4531 = vld [vmem:[#allocation9 + $0x12c] sm:$0xf]
        %v4532 = vld [vmem:[#allocation9 + $0x130] sm:$0xf]
        %v4533 = vld [vmem:[#allocation9 + $0x134] sm:$0xf]
        %v4534 = vld [vmem:[#allocation9 + $0x138] sm:$0xf]
        %v4535 = vld [vmem:[#allocation9 + $0x13c] sm:$0xf]
        %v4536 = vld [vmem:[#allocation9 + $0x140] sm:$0xf]
        %v4537 = vld [vmem:[#allocation9 + $0x144] sm:$0xf]
        %v4538 = vld [vmem:[#allocation9 + $0x148] sm:$0xf]
        %v4539 = vld [vmem:[#allocation9 + $0x14c] sm:$0xf]
        %v4540 = vld [vmem:[#allocation9 + $0x150] sm:$0xf]
        %v4541 = vld [vmem:[#allocation9 + $0x154] sm:$0xf]
        %v4542 = vld [vmem:[#allocation9 + $0x158] sm:$0xf]
        %v4543 = vld [vmem:[#allocation9 + $0x15c] sm:$0xf]
        %v4544 = vld [vmem:[#allocation9 + $0x160] sm:$0xf]
        %v4545 = vld [vmem:[#allocation9 + $0x164] sm:$0xf]
        %v4546 = vld [vmem:[#allocation9 + $0x168] sm:$0xf]
        %v4547 = vld [vmem:[#allocation9 + $0x16c] sm:$0xf]
        %v4548 = vld [vmem:[#allocation9 + $0x170] sm:$0xf]
        %v4549 = vld [vmem:[#allocation9 + $0x174] sm:$0xf]
        %v4550 = vld [vmem:[#allocation9 + $0x178] sm:$0xf]
        %v4551 = vld [vmem:[#allocation9 + $0x17c] sm:$0xf]
        %v4552 = vld [vmem:[#allocation9 + $0x180] sm:$0xf]
        %v4553 = vld [vmem:[#allocation9 + $0x184] sm:$0xf]
        %v4554 = vld [vmem:[#allocation9 + $0x188] sm:$0xf]
        %v4555 = vld [vmem:[#allocation9 + $0x18c] sm:$0xf]
        %v4556 = vld [vmem:[#allocation9 + $0x190] sm:$0xf]
        %v4557 = vld [vmem:[#allocation9 + $0x194] sm:$0xf]
        %v4558 = vld [vmem:[#allocation9 + $0x198] sm:$0xf]
        %v4559 = vld [vmem:[#allocation9 + $0x19c] sm:$0xf]
        %v4560 = vld [vmem:[#allocation9 + $0x1a0] sm:$0xf]
        %v4561 = vld [vmem:[#allocation9 + $0x1a4] sm:$0xf]
        %v4562 = vld [vmem:[#allocation9 + $0x1a8] sm:$0xf]
        %v4563 = vld [vmem:[#allocation9 + $0x1ac] sm:$0xf]
        %v4564 = vld [vmem:[#allocation9 + $0x1b0] sm:$0xf]
        %v4565 = vld [vmem:[#allocation9 + $0x1b4] sm:$0xf]
        %v4566 = vld [vmem:[#allocation9 + $0x1b8] sm:$0xf]
        %v4567 = vld [vmem:[#allocation9 + $0x1bc] sm:$0xf]
        %v4568 = vld [vmem:[#allocation9 + $0x1c0] sm:$0xf]
        %v4569 = vld [vmem:[#allocation9 + $0x1c4] sm:$0xf]
        %v4570 = vld [vmem:[#allocation9 + $0x1c8] sm:$0xf]
        %v4571 = vld [vmem:[#allocation9 + $0x1cc] sm:$0xf]
        %v4572 = vld [vmem:[#allocation9 + $0x1d0] sm:$0xf]
        %v4573 = vld [vmem:[#allocation9 + $0x1d4] sm:$0xf]
        %v4574 = vld [vmem:[#allocation9 + $0x1d8] sm:$0xf]
        %v4575 = vld [vmem:[#allocation9 + $0x1dc] sm:$0xf]
        %v4576 = vld [vmem:[#allocation9 + $0x1e0] sm:$0xf]
        %v4577 = vld [vmem:[#allocation9 + $0x1e4] sm:$0xf]
        %v4578 = vld [vmem:[#allocation9 + $0x1e8] sm:$0xf]
        %v4579 = vld [vmem:[#allocation9 + $0x1ec] sm:$0xf]
        %v4580 = vld [vmem:[#allocation9 + $0x1f0] sm:$0xf]
        %v4581 = vld [vmem:[#allocation9 + $0x1f4] sm:$0xf]
        %v4582 = vld [vmem:[#allocation9 + $0x1f8] sm:$0xf]
        %v4583 = vld [vmem:[#allocation9 + $0x1fc] sm:$0xf]
        %v4584 = vld [vmem:[#allocation9 + $0x200] sm:$0xf]
        %v4585 = vld [vmem:[#allocation9 + $0x204] sm:$0xf]
        %v4586 = vld [vmem:[#allocation9 + $0x208] sm:$0xf]
        %v4587 = vld [vmem:[#allocation9 + $0x20c] sm:$0xf]
        %v4588 = vld [vmem:[#allocation9 + $0x210] sm:$0xf]
        %v4589 = vld [vmem:[#allocation9 + $0x214] sm:$0xf]
        %v4590 = vld [vmem:[#allocation9 + $0x218] sm:$0xf]
        %v4591 = vld [vmem:[#allocation9 + $0x21c] sm:$0xf]
        %v4592 = vld [vmem:[#allocation9 + $0x220] sm:$0xf]
        %v4593 = vld [vmem:[#allocation9 + $0x224] sm:$0xf]
        %v4594 = vld [vmem:[#allocation9 + $0x228] sm:$0xf]
        %v4595 = vld [vmem:[#allocation9 + $0x22c] sm:$0xf]
        %v4596 = vld [vmem:[#allocation9 + $0x230] sm:$0xf]
        %v4597 = vld [vmem:[#allocation9 + $0x234] sm:$0xf]
        %v4598 = vld [vmem:[#allocation9 + $0x238] sm:$0xf]
        %v4599 = vld [vmem:[#allocation9 + $0x23c] sm:$0xf]
        %v4600 = vld [vmem:[#allocation10] sm:$0x1]
        %v4602 = vperm.slane %v4600, 0
        %v4764 = vunpack.c.l.b16 %v4296
        %v4765 = vunpack.c.h.b16 %v4296
        %v4766 = vunpack.c.l.b16 %v4297
        %v4767 = vunpack.c.h.b16 %v4297
        %v4768 = vunpack.c.l.b16 %v4298
        %v4769 = vunpack.c.h.b16 %v4298
        %v4770 = vunpack.c.l.b16 %v4299
        %v4771 = vunpack.c.h.b16 %v4299
        %v4772 = vunpack.c.l.b16 %v4300
        %v4773 = vunpack.c.l.b16 %v4301
        %v4774 = vunpack.c.h.b16 %v4301
        %v4775 = vunpack.c.l.b16 %v4302
        %v4776 = vunpack.c.h.b16 %v4302
        %v4777 = vunpack.c.l.b16 %v4303
        %v4778 = vunpack.c.h.b16 %v4303
        %v4779 = vunpack.c.l.b16 %v4304
        %v4780 = vunpack.c.h.b16 %v4304
        %v4781 = vunpack.c.l.b16 %v4305
        %v4782 = vunpack.c.l.b16 %v4306
        %v4783 = vunpack.c.h.b16 %v4306
        %v4784 = vunpack.c.l.b16 %v4307
        %v4785 = vunpack.c.h.b16 %v4307
        %v4786 = vunpack.c.l.b16 %v4308
        %v4787 = vunpack.c.h.b16 %v4308
        %v4788 = vunpack.c.l.b16 %v4309
        %v4789 = vunpack.c.h.b16 %v4309
        %v4790 = vunpack.c.l.b16 %v4310
        %v4791 = vunpack.c.l.b16 %v4311
        %v4792 = vunpack.c.h.b16 %v4311
        %v4793 = vunpack.c.l.b16 %v4312
        %v4794 = vunpack.c.h.b16 %v4312
        %v4795 = vunpack.c.l.b16 %v4313
        %v4796 = vunpack.c.h.b16 %v4313
        %v4797 = vunpack.c.l.b16 %v4314
        %v4798 = vunpack.c.h.b16 %v4314
        %v4799 = vunpack.c.l.b16 %v4315
        %v4800 = vunpack.c.l.b16 %v4316
        %v4801 = vunpack.c.h.b16 %v4316
        %v4802 = vunpack.c.l.b16 %v4317
        %v4803 = vunpack.c.h.b16 %v4317
        %v4804 = vunpack.c.l.b16 %v4318
        %v4805 = vunpack.c.h.b16 %v4318
        %v4806 = vunpack.c.l.b16 %v4319
        %v4807 = vunpack.c.h.b16 %v4319
        %v4808 = vunpack.c.l.b16 %v4320
        %v4809 = vunpack.c.l.b16 %v4321
        %v4810 = vunpack.c.h.b16 %v4321
        %v4811 = vunpack.c.l.b16 %v4322
        %v4812 = vunpack.c.h.b16 %v4322
        %v4813 = vunpack.c.l.b16 %v4323
        %v4814 = vunpack.c.h.b16 %v4323
        %v4815 = vunpack.c.l.b16 %v4324
        %v4816 = vunpack.c.h.b16 %v4324
        %v4817 = vunpack.c.l.b16 %v4325
        %v4818 = vunpack.c.l.b16 %v4326
        %v4819 = vunpack.c.h.b16 %v4326
        %v4820 = vunpack.c.l.b16 %v4327
        %v4821 = vunpack.c.h.b16 %v4327
        %v4822 = vunpack.c.l.b16 %v4328
        %v4823 = vunpack.c.h.b16 %v4328
        %v4824 = vunpack.c.l.b16 %v4329
        %v4825 = vunpack.c.h.b16 %v4329
        %v4826 = vunpack.c.l.b16 %v4330
        %v4827 = vunpack.c.l.b16 %v4331
        %v4828 = vunpack.c.h.b16 %v4331
        %v4829 = vunpack.c.l.b16 %v4332
        %v4830 = vunpack.c.h.b16 %v4332
        %v4831 = vunpack.c.l.b16 %v4333
        %v4832 = vunpack.c.h.b16 %v4333
        %v4833 = vunpack.c.l.b16 %v4334
        %v4834 = vunpack.c.h.b16 %v4334
        %v4835 = vunpack.c.l.b16 %v4335
        %v4836 = vunpack.c.l.b16 %v4336
        %v4837 = vunpack.c.h.b16 %v4336
        %v4838 = vunpack.c.l.b16 %v4337
        %v4839 = vunpack.c.h.b16 %v4337
        %v4840 = vunpack.c.l.b16 %v4338
        %v4841 = vunpack.c.h.b16 %v4338
        %v4842 = vunpack.c.l.b16 %v4339
        %v4843 = vunpack.c.h.b16 %v4339
        %v4844 = vunpack.c.l.b16 %v4340
        %v4845 = vunpack.c.l.b16 %v4341
        %v4846 = vunpack.c.h.b16 %v4341
        %v4847 = vunpack.c.l.b16 %v4342
        %v4848 = vunpack.c.h.b16 %v4342
        %v4849 = vunpack.c.l.b16 %v4343
        %v4850 = vunpack.c.h.b16 %v4343
        %v4851 = vunpack.c.l.b16 %v4344
        %v4852 = vunpack.c.h.b16 %v4344
        %v4853 = vunpack.c.l.b16 %v4345
        %v4854 = vunpack.c.l.b16 %v4346
        %v4855 = vunpack.c.h.b16 %v4346
        %v4856 = vunpack.c.l.b16 %v4347
        %v4857 = vunpack.c.h.b16 %v4347
        %v4858 = vunpack.c.l.b16 %v4348
        %v4859 = vunpack.c.h.b16 %v4348
        %v4860 = vunpack.c.l.b16 %v4349
        %v4861 = vunpack.c.h.b16 %v4349
        %v4862 = vunpack.c.l.b16 %v4350
        %v4863 = vunpack.c.l.b16 %v4351
        %v4864 = vunpack.c.h.b16 %v4351
        %v4865 = vunpack.c.l.b16 %v4352
        %v4866 = vunpack.c.h.b16 %v4352
        %v4867 = vunpack.c.l.b16 %v4353
        %v4868 = vunpack.c.h.b16 %v4353
        %v4869 = vunpack.c.l.b16 %v4354
        %v4870 = vunpack.c.h.b16 %v4354
        %v4871 = vunpack.c.l.b16 %v4355
        %v4872 = vunpack.c.l.b16 %v4356
        %v4873 = vunpack.c.h.b16 %v4356
        %v4874 = vunpack.c.l.b16 %v4357
        %v4875 = vunpack.c.h.b16 %v4357
        %v4876 = vunpack.c.l.b16 %v4358
        %v4877 = vunpack.c.h.b16 %v4358
        %v4878 = vunpack.c.l.b16 %v4359
        %v4879 = vunpack.c.h.b16 %v4359
        %v4880 = vunpack.c.l.b16 %v4360
        %v4881 = vunpack.c.l.b16 %v4361
        %v4882 = vunpack.c.h.b16 %v4361
        %v4883 = vunpack.c.l.b16 %v4362
        %v4884 = vunpack.c.h.b16 %v4362
        %v4885 = vunpack.c.l.b16 %v4363
        %v4886 = vunpack.c.h.b16 %v4363
        %v4887 = vunpack.c.l.b16 %v4364
        %v4888 = vunpack.c.h.b16 %v4364
        %v4889 = vunpack.c.l.b16 %v4365
        %v4890 = vunpack.c.l.b16 %v4366
        %v4891 = vunpack.c.h.b16 %v4366
        %v4892 = vunpack.c.l.b16 %v4367
        %v4893 = vunpack.c.h.b16 %v4367
        %v4894 = vunpack.c.l.b16 %v4368
        %v4895 = vunpack.c.h.b16 %v4368
        %v4896 = vunpack.c.l.b16 %v4369
        %v4897 = vunpack.c.h.b16 %v4369
        %v4898 = vunpack.c.l.b16 %v4370
        %v4899 = vunpack.c.l.b16 %v4371
        %v4900 = vunpack.c.h.b16 %v4371
        %v4901 = vunpack.c.l.b16 %v4372
        %v4902 = vunpack.c.h.b16 %v4372
        %v4903 = vunpack.c.l.b16 %v4373
        %v4904 = vunpack.c.h.b16 %v4373
        %v4905 = vunpack.c.l.b16 %v4374
        %v4906 = vunpack.c.h.b16 %v4374
        %v4907 = vunpack.c.l.b16 %v4375
        %v4908 = vunpack.c.l.b16 %v4376
        %v4909 = vunpack.c.h.b16 %v4376
        %v4910 = vunpack.c.l.b16 %v4377
        %v4911 = vunpack.c.h.b16 %v4377
        %v4912 = vunpack.c.l.b16 %v4378
        %v4913 = vunpack.c.h.b16 %v4378
        %v4914 = vunpack.c.l.b16 %v4379
        %v4915 = vunpack.c.h.b16 %v4379
        %v4916 = vunpack.c.l.b16 %v4380
        %v4917 = vunpack.c.l.b16 %v4381
        %v4918 = vunpack.c.h.b16 %v4381
        %v4919 = vunpack.c.l.b16 %v4382
        %v4920 = vunpack.c.h.b16 %v4382
        %v4921 = vunpack.c.l.b16 %v4383
        %v4922 = vunpack.c.h.b16 %v4383
        %v4923 = vunpack.c.l.b16 %v4384
        %v4924 = vunpack.c.h.b16 %v4384
        %v4925 = vunpack.c.l.b16 %v4385
        %v4926 = vunpack.c.l.b16 %v4386
        %v4927 = vunpack.c.h.b16 %v4386
        %v4928 = vunpack.c.l.b16 %v4387
        %v4929 = vunpack.c.h.b16 %v4387
        %v4930 = vunpack.c.l.b16 %v4388
        %v4931 = vunpack.c.h.b16 %v4388
        %v4932 = vunpack.c.l.b16 %v4389
        %v4933 = vunpack.c.h.b16 %v4389
        %v4934 = vunpack.c.l.b16 %v4390
        %v4935 = vunpack.c.l.b16 %v4391
        %v4936 = vunpack.c.h.b16 %v4391
        %v4937 = vunpack.c.l.b16 %v4392
        %v4938 = vunpack.c.h.b16 %v4392
        %v4939 = vunpack.c.l.b16 %v4393
        %v4940 = vunpack.c.h.b16 %v4393
        %v4941 = vunpack.c.l.b16 %v4394
        %v4942 = vunpack.c.h.b16 %v4394
        %v4943 = vunpack.c.l.b16 %v4395
        %v4944 = vunpack.c.l.b16 %v4396
        %v4945 = vunpack.c.h.b16 %v4396
        %v4946 = vunpack.c.l.b16 %v4397
        %v4947 = vunpack.c.h.b16 %v4397
        %v4948 = vunpack.c.l.b16 %v4398
        %v4949 = vunpack.c.h.b16 %v4398
        %v4950 = vunpack.c.l.b16 %v4399
        %v4951 = vunpack.c.h.b16 %v4399
        %v4952 = vunpack.c.l.b16 %v4400
        %v4953 = vunpack.c.l.b16 %v4401
        %v4954 = vunpack.c.h.b16 %v4401
        %v4955 = vunpack.c.l.b16 %v4402
        %v4956 = vunpack.c.h.b16 %v4402
        %v4957 = vunpack.c.l.b16 %v4403
        %v4958 = vunpack.c.h.b16 %v4403
        %v4959 = vunpack.c.l.b16 %v4404
        %v4960 = vunpack.c.h.b16 %v4404
        %v4961 = vunpack.c.l.b16 %v4405
        %v4962 = vunpack.c.l.b16 %v4406
        %v4963 = vunpack.c.h.b16 %v4406
        %v4964 = vunpack.c.l.b16 %v4407
        %v4965 = vunpack.c.h.b16 %v4407
        %v4966 = vunpack.c.l.b16 %v4408
        %v4967 = vunpack.c.h.b16 %v4408
        %v4968 = vunpack.c.l.b16 %v4409
        %v4969 = vunpack.c.h.b16 %v4409
        %v4970 = vunpack.c.l.b16 %v4410
        %v4971 = vunpack.c.l.b16 %v4411
        %v4972 = vunpack.c.h.b16 %v4411
        %v4973 = vunpack.c.l.b16 %v4412
        %v4974 = vunpack.c.h.b16 %v4412
        %v4975 = vunpack.c.l.b16 %v4413
        %v4976 = vunpack.c.h.b16 %v4413
        %v4977 = vunpack.c.l.b16 %v4414
        %v4978 = vunpack.c.h.b16 %v4414
        %v4979 = vunpack.c.l.b16 %v4415
        %v4980 = vunpack.c.l.b16 %v4416
        %v4981 = vunpack.c.h.b16 %v4416
        %v4982 = vunpack.c.l.b16 %v4417
        %v4983 = vunpack.c.h.b16 %v4417
        %v4984 = vunpack.c.l.b16 %v4418
        %v4985 = vunpack.c.h.b16 %v4418
        %v4986 = vunpack.c.l.b16 %v4419
        %v4987 = vunpack.c.h.b16 %v4419
        %v4988 = vunpack.c.l.b16 %v4420
        %v4989 = vunpack.c.l.b16 %v4421
        %v4990 = vunpack.c.h.b16 %v4421
        %v4991 = vunpack.c.l.b16 %v4422
        %v4992 = vunpack.c.h.b16 %v4422
        %v4993 = vunpack.c.l.b16 %v4423
        %v4994 = vunpack.c.h.b16 %v4423
        %v4995 = vunpack.c.l.b16 %v4424
        %v4996 = vunpack.c.h.b16 %v4424
        %v4997 = vunpack.c.l.b16 %v4425
        %v4998 = vunpack.c.l.b16 %v4426
        %v4999 = vunpack.c.h.b16 %v4426
        %v5000 = vunpack.c.l.b16 %v4427
        %v5001 = vunpack.c.h.b16 %v4427
        %v5002 = vunpack.c.l.b16 %v4428
        %v5003 = vunpack.c.h.b16 %v4428
        %v5004 = vunpack.c.l.b16 %v4429
        %v5005 = vunpack.c.h.b16 %v4429
        %v5006 = vunpack.c.l.b16 %v4430
        %v5007 = vunpack.c.l.b16 %v4431
        %v5008 = vunpack.c.h.b16 %v4431
        %v5009 = vunpack.c.l.b16 %v4432
        %v5010 = vunpack.c.h.b16 %v4432
        %v5011 = vunpack.c.l.b16 %v4433
        %v5012 = vunpack.c.h.b16 %v4433
        %v5013 = vunpack.c.l.b16 %v4434
        %v5014 = vunpack.c.h.b16 %v4434
        %v5015 = vunpack.c.l.b16 %v4435
        %v5016 = vunpack.c.l.b16 %v4436
        %v5017 = vunpack.c.h.b16 %v4436
        %v5018 = vunpack.c.l.b16 %v4437
        %v5019 = vunpack.c.h.b16 %v4437
        %v5020 = vunpack.c.l.b16 %v4438
        %v5021 = vunpack.c.h.b16 %v4438
        %v5022 = vunpack.c.l.b16 %v4439
        %v5023 = vunpack.c.h.b16 %v4439
        %v5024 = vunpack.c.l.b16 %v4440
        %v5025 = vunpack.c.l.b16 %v4441
        %v5026 = vunpack.c.h.b16 %v4441
        %v5027 = vunpack.c.l.b16 %v4442
        %v5028 = vunpack.c.h.b16 %v4442
        %v5029 = vunpack.c.l.b16 %v4443
        %v5030 = vunpack.c.h.b16 %v4443
        %v5031 = vunpack.c.l.b16 %v4444
        %v5032 = vunpack.c.h.b16 %v4444
        %v5033 = vunpack.c.l.b16 %v4445
        %v5034 = vunpack.c.l.b16 %v4446
        %v5035 = vunpack.c.h.b16 %v4446
        %v5036 = vunpack.c.l.b16 %v4447
        %v5037 = vunpack.c.h.b16 %v4447
        %v5038 = vunpack.c.l.b16 %v4448
        %v5039 = vunpack.c.h.b16 %v4448
        %v5040 = vunpack.c.l.b16 %v4449
        %v5041 = vunpack.c.h.b16 %v4449
        %v5042 = vunpack.c.l.b16 %v4450
        %v5043 = vunpack.c.l.b16 %v4451
        %v5044 = vunpack.c.h.b16 %v4451
        %v5045 = vunpack.c.l.b16 %v4452
        %v5046 = vunpack.c.h.b16 %v4452
        %v5047 = vunpack.c.l.b16 %v4453
        %v5048 = vunpack.c.h.b16 %v4453
        %v5049 = vunpack.c.l.b16 %v4454
        %v5050 = vunpack.c.h.b16 %v4454
        %v5051 = vunpack.c.l.b16 %v4455
        %v5052 = vpack.c.b16 %v4773, %v4764
        %v5053 = vpack.c.b16 %v4774, %v4765
        %v5054 = vpack.c.b16 %v4775, %v4766
        %v5055 = vpack.c.b16 %v4776, %v4767
        %v5056 = vpack.c.b16 %v4777, %v4768
        %v5057 = vpack.c.b16 %v4778, %v4769
        %v5058 = vpack.c.b16 %v4779, %v4770
        %v5059 = vpack.c.b16 %v4780, %v4771
        %v5060 = vpack.c.b16 %v4781, %v4772
        %v5061 = vpack.c.b16 %v4791, %v4782
        %v5062 = vpack.c.b16 %v4792, %v4783
        %v5063 = vpack.c.b16 %v4793, %v4784
        %v5064 = vpack.c.b16 %v4794, %v4785
        %v5065 = vpack.c.b16 %v4795, %v4786
        %v5066 = vpack.c.b16 %v4796, %v4787
        %v5067 = vpack.c.b16 %v4797, %v4788
        %v5068 = vpack.c.b16 %v4798, %v4789
        %v5069 = vpack.c.b16 %v4799, %v4790
        %v5070 = vpack.c.b16 %v4809, %v4800
        %v5071 = vpack.c.b16 %v4810, %v4801
        %v5072 = vpack.c.b16 %v4811, %v4802
        %v5073 = vpack.c.b16 %v4812, %v4803
        %v5074 = vpack.c.b16 %v4813, %v4804
        %v5075 = vpack.c.b16 %v4814, %v4805
        %v5076 = vpack.c.b16 %v4815, %v4806
        %v5077 = vpack.c.b16 %v4816, %v4807
        %v5078 = vpack.c.b16 %v4817, %v4808
        %v5079 = vpack.c.b16 %v4827, %v4818
        %v5080 = vpack.c.b16 %v4828, %v4819
        %v5081 = vpack.c.b16 %v4829, %v4820
        %v5082 = vpack.c.b16 %v4830, %v4821
        %v5083 = vpack.c.b16 %v4831, %v4822
        %v5084 = vpack.c.b16 %v4832, %v4823
        %v5085 = vpack.c.b16 %v4833, %v4824
        %v5086 = vpack.c.b16 %v4834, %v4825
        %v5087 = vpack.c.b16 %v4835, %v4826
        %v5088 = vpack.c.b16 %v4845, %v4836
        %v5089 = vpack.c.b16 %v4846, %v4837
        %v5090 = vpack.c.b16 %v4847, %v4838
        %v5091 = vpack.c.b16 %v4848, %v4839
        %v5092 = vpack.c.b16 %v4849, %v4840
        %v5093 = vpack.c.b16 %v4850, %v4841
        %v5094 = vpack.c.b16 %v4851, %v4842
        %v5095 = vpack.c.b16 %v4852, %v4843
        %v5096 = vpack.c.b16 %v4853, %v4844
        %v5097 = vpack.c.b16 %v4863, %v4854
        %v5098 = vpack.c.b16 %v4864, %v4855
        %v5099 = vpack.c.b16 %v4865, %v4856
        %v5100 = vpack.c.b16 %v4866, %v4857
        %v5101 = vpack.c.b16 %v4867, %v4858
        %v5102 = vpack.c.b16 %v4868, %v4859
        %v5103 = vpack.c.b16 %v4869, %v4860
        %v5104 = vpack.c.b16 %v4870, %v4861
        %v5105 = vpack.c.b16 %v4871, %v4862
        %v5106 = vpack.c.b16 %v4881, %v4872
        %v5107 = vpack.c.b16 %v4882, %v4873
        %v5108 = vpack.c.b16 %v4883, %v4874
        %v5109 = vpack.c.b16 %v4884, %v4875
        %v5110 = vpack.c.b16 %v4885, %v4876
        %v5111 = vpack.c.b16 %v4886, %v4877
        %v5112 = vpack.c.b16 %v4887, %v4878
        %v5113 = vpack.c.b16 %v4888, %v4879
        %v5114 = vpack.c.b16 %v4889, %v4880
        %v5115 = vpack.c.b16 %v4899, %v4890
        %v5116 = vpack.c.b16 %v4900, %v4891
        %v5117 = vpack.c.b16 %v4901, %v4892
        %v5118 = vpack.c.b16 %v4902, %v4893
        %v5119 = vpack.c.b16 %v4903, %v4894
        %v5120 = vpack.c.b16 %v4904, %v4895
        %v5121 = vpack.c.b16 %v4905, %v4896
        %v5122 = vpack.c.b16 %v4906, %v4897
        %v5123 = vpack.c.b16 %v4907, %v4898
        %v5124 = vpack.c.b16 %v4917, %v4908
        %v5125 = vpack.c.b16 %v4918, %v4909
        %v5126 = vpack.c.b16 %v4919, %v4910
        %v5127 = vpack.c.b16 %v4920, %v4911
        %v5128 = vpack.c.b16 %v4921, %v4912
        %v5129 = vpack.c.b16 %v4922, %v4913
        %v5130 = vpack.c.b16 %v4923, %v4914
        %v5131 = vpack.c.b16 %v4924, %v4915
        %v5132 = vpack.c.b16 %v4925, %v4916
        %v5133 = vpack.c.b16 %v4935, %v4926
        %v5134 = vpack.c.b16 %v4936, %v4927
        %v5135 = vpack.c.b16 %v4937, %v4928
        %v5136 = vpack.c.b16 %v4938, %v4929
        %v5137 = vpack.c.b16 %v4939, %v4930
        %v5138 = vpack.c.b16 %v4940, %v4931
        %v5139 = vpack.c.b16 %v4941, %v4932
        %v5140 = vpack.c.b16 %v4942, %v4933
        %v5141 = vpack.c.b16 %v4943, %v4934
        %v5142 = vpack.c.b16 %v4953, %v4944
        %v5143 = vpack.c.b16 %v4954, %v4945
        %v5144 = vpack.c.b16 %v4955, %v4946
        %v5145 = vpack.c.b16 %v4956, %v4947
        %v5146 = vpack.c.b16 %v4957, %v4948
        %v5147 = vpack.c.b16 %v4958, %v4949
        %v5148 = vpack.c.b16 %v4959, %v4950
        %v5149 = vpack.c.b16 %v4960, %v4951
        %v5150 = vpack.c.b16 %v4961, %v4952
        %v5151 = vpack.c.b16 %v4971, %v4962
        %v5152 = vpack.c.b16 %v4972, %v4963
        %v5153 = vpack.c.b16 %v4973, %v4964
        %v5154 = vpack.c.b16 %v4974, %v4965
        %v5155 = vpack.c.b16 %v4975, %v4966
        %v5156 = vpack.c.b16 %v4976, %v4967
        %v5157 = vpack.c.b16 %v4977, %v4968
        %v5158 = vpack.c.b16 %v4978, %v4969
        %v5159 = vpack.c.b16 %v4979, %v4970
        %v5160 = vpack.c.b16 %v4989, %v4980
        %v5161 = vpack.c.b16 %v4990, %v4981
        %v5162 = vpack.c.b16 %v4991, %v4982
        %v5163 = vpack.c.b16 %v4992, %v4983
        %v5164 = vpack.c.b16 %v4993, %v4984
        %v5165 = vpack.c.b16 %v4994, %v4985
        %v5166 = vpack.c.b16 %v4995, %v4986
        %v5167 = vpack.c.b16 %v4996, %v4987
        %v5168 = vpack.c.b16 %v4997, %v4988
        %v5169 = vpack.c.b16 %v5007, %v4998
        %v5170 = vpack.c.b16 %v5008, %v4999
        %v5171 = vpack.c.b16 %v5009, %v5000
        %v5172 = vpack.c.b16 %v5010, %v5001
        %v5173 = vpack.c.b16 %v5011, %v5002
        %v5174 = vpack.c.b16 %v5012, %v5003
        %v5175 = vpack.c.b16 %v5013, %v5004
        %v5176 = vpack.c.b16 %v5014, %v5005
        %v5177 = vpack.c.b16 %v5015, %v5006
        %v5178 = vpack.c.b16 %v5025, %v5016
        %v5179 = vpack.c.b16 %v5026, %v5017
        %v5180 = vpack.c.b16 %v5027, %v5018
        %v5181 = vpack.c.b16 %v5028, %v5019
        %v5182 = vpack.c.b16 %v5029, %v5020
        %v5183 = vpack.c.b16 %v5030, %v5021
        %v5184 = vpack.c.b16 %v5031, %v5022
        %v5185 = vpack.c.b16 %v5032, %v5023
        %v5186 = vpack.c.b16 %v5033, %v5024
        %v5187 = vpack.c.b16 %v5043, %v5034
        %v5188 = vpack.c.b16 %v5044, %v5035
        %v5189 = vpack.c.b16 %v5045, %v5036
        %v5190 = vpack.c.b16 %v5046, %v5037
        %v5191 = vpack.c.b16 %v5047, %v5038
        %v5192 = vpack.c.b16 %v5048, %v5039
        %v5193 = vpack.c.b16 %v5049, %v5040
        %v5194 = vpack.c.b16 %v5050, %v5041
        %v5195 = vpack.c.b16 %v5051, %v5042
        %v5484 = vunpack.c.l.b16 %v4456
        %v5485 = vunpack.c.l.b16 %v4457
        %v5486 = vunpack.c.l.b16 %v4458
        %v5487 = vunpack.c.l.b16 %v4459
        %v5488 = vunpack.c.l.b16 %v4460
        %v5489 = vunpack.c.l.b16 %v4461
        %v5490 = vunpack.c.l.b16 %v4462
        %v5491 = vunpack.c.l.b16 %v4463
        %v5492 = vunpack.c.l.b16 %v4464
        %v5493 = vunpack.c.l.b16 %v4465
        %v5494 = vunpack.c.l.b16 %v4466
        %v5495 = vunpack.c.l.b16 %v4467
        %v5496 = vunpack.c.l.b16 %v4468
        %v5497 = vunpack.c.l.b16 %v4469
        %v5498 = vunpack.c.l.b16 %v4470
        %v5499 = vunpack.c.l.b16 %v4471
        %v5500 = vunpack.c.l.b16 %v4472
        %v5501 = vunpack.c.l.b16 %v4473
        %v5502 = vunpack.c.l.b16 %v4474
        %v5503 = vunpack.c.l.b16 %v4475
        %v5504 = vunpack.c.l.b16 %v4476
        %v5505 = vunpack.c.l.b16 %v4477
        %v5506 = vunpack.c.l.b16 %v4478
        %v5507 = vunpack.c.l.b16 %v4479
        %v5508 = vunpack.c.l.b16 %v4480
        %v5509 = vunpack.c.l.b16 %v4481
        %v5510 = vunpack.c.l.b16 %v4482
        %v5511 = vunpack.c.l.b16 %v4483
        %v5512 = vunpack.c.l.b16 %v4484
        %v5513 = vunpack.c.l.b16 %v4485
        %v5514 = vunpack.c.l.b16 %v4486
        %v5515 = vunpack.c.l.b16 %v4487
        %v5516 = vunpack.c.l.b16 %v4488
        %v5517 = vunpack.c.l.b16 %v4489
        %v5518 = vunpack.c.l.b16 %v4490
        %v5519 = vunpack.c.l.b16 %v4491
        %v5520 = vunpack.c.l.b16 %v4492
        %v5521 = vunpack.c.l.b16 %v4493
        %v5522 = vunpack.c.l.b16 %v4494
        %v5523 = vunpack.c.l.b16 %v4495
        %v5524 = vunpack.c.l.b16 %v4496
        %v5525 = vunpack.c.l.b16 %v4497
        %v5526 = vunpack.c.l.b16 %v4498
        %v5527 = vunpack.c.l.b16 %v4499
        %v5528 = vunpack.c.l.b16 %v4500
        %v5529 = vunpack.c.l.b16 %v4501
        %v5530 = vunpack.c.l.b16 %v4502
        %v5531 = vunpack.c.l.b16 %v4503
        %v5532 = vunpack.c.l.b16 %v4504
        %v5533 = vunpack.c.l.b16 %v4505
        %v5534 = vunpack.c.l.b16 %v4506
        %v5535 = vunpack.c.l.b16 %v4507
        %v5536 = vunpack.c.l.b16 %v4508
        %v5537 = vunpack.c.l.b16 %v4509
        %v5538 = vunpack.c.l.b16 %v4510
        %v5539 = vunpack.c.l.b16 %v4511
        %v5540 = vunpack.c.l.b16 %v4512
        %v5541 = vunpack.c.l.b16 %v4513
        %v5542 = vunpack.c.l.b16 %v4514
        %v5543 = vunpack.c.l.b16 %v4515
        %v5544 = vunpack.c.l.b16 %v4516
        %v5545 = vunpack.c.l.b16 %v4517
        %v5546 = vunpack.c.l.b16 %v4518
        %v5547 = vunpack.c.l.b16 %v4519
        %v5548 = vunpack.c.l.b16 %v4520
        %v5549 = vunpack.c.l.b16 %v4521
        %v5550 = vunpack.c.l.b16 %v4522
        %v5551 = vunpack.c.l.b16 %v4523
        %v5552 = vunpack.c.l.b16 %v4524
        %v5553 = vunpack.c.l.b16 %v4525
        %v5554 = vunpack.c.l.b16 %v4526
        %v5555 = vunpack.c.l.b16 %v4527
        %v5556 = vunpack.c.l.b16 %v4528
        %v5557 = vunpack.c.l.b16 %v4529
        %v5558 = vunpack.c.l.b16 %v4530
        %v5559 = vunpack.c.l.b16 %v4531
        %v5560 = vunpack.c.l.b16 %v4532
        %v5561 = vunpack.c.l.b16 %v4533
        %v5562 = vunpack.c.l.b16 %v4534
        %v5563 = vunpack.c.l.b16 %v4535
        %v5564 = vunpack.c.l.b16 %v4536
        %v5565 = vunpack.c.l.b16 %v4537
        %v5566 = vunpack.c.l.b16 %v4538
        %v5567 = vunpack.c.l.b16 %v4539
        %v5568 = vunpack.c.l.b16 %v4540
        %v5569 = vunpack.c.l.b16 %v4541
        %v5570 = vunpack.c.l.b16 %v4542
        %v5571 = vunpack.c.l.b16 %v4543
        %v5572 = vunpack.c.l.b16 %v4544
        %v5573 = vunpack.c.l.b16 %v4545
        %v5574 = vunpack.c.l.b16 %v4546
        %v5575 = vunpack.c.l.b16 %v4547
        %v5576 = vunpack.c.l.b16 %v4548
        %v5577 = vunpack.c.l.b16 %v4549
        %v5578 = vunpack.c.l.b16 %v4550
        %v5579 = vunpack.c.l.b16 %v4551
        %v5580 = vunpack.c.l.b16 %v4552
        %v5581 = vunpack.c.l.b16 %v4553
        %v5582 = vunpack.c.l.b16 %v4554
        %v5583 = vunpack.c.l.b16 %v4555
        %v5584 = vunpack.c.l.b16 %v4556
        %v5585 = vunpack.c.l.b16 %v4557
        %v5586 = vunpack.c.l.b16 %v4558
        %v5587 = vunpack.c.l.b16 %v4559
        %v5588 = vunpack.c.l.b16 %v4560
        %v5589 = vunpack.c.l.b16 %v4561
        %v5590 = vunpack.c.l.b16 %v4562
        %v5591 = vunpack.c.l.b16 %v4563
        %v5592 = vunpack.c.l.b16 %v4564
        %v5593 = vunpack.c.l.b16 %v4565
        %v5594 = vunpack.c.l.b16 %v4566
        %v5595 = vunpack.c.l.b16 %v4567
        %v5596 = vunpack.c.l.b16 %v4568
        %v5597 = vunpack.c.l.b16 %v4569
        %v5598 = vunpack.c.l.b16 %v4570
        %v5599 = vunpack.c.l.b16 %v4571
        %v5600 = vunpack.c.l.b16 %v4572
        %v5601 = vunpack.c.l.b16 %v4573
        %v5602 = vunpack.c.l.b16 %v4574
        %v5603 = vunpack.c.l.b16 %v4575
        %v5604 = vunpack.c.l.b16 %v4576
        %v5605 = vunpack.c.l.b16 %v4577
        %v5606 = vunpack.c.l.b16 %v4578
        %v5607 = vunpack.c.l.b16 %v4579
        %v5608 = vunpack.c.l.b16 %v4580
        %v5609 = vunpack.c.l.b16 %v4581
        %v5610 = vunpack.c.l.b16 %v4582
        %v5611 = vunpack.c.l.b16 %v4583
        %v5612 = vunpack.c.l.b16 %v4584
        %v5613 = vunpack.c.l.b16 %v4585
        %v5614 = vunpack.c.l.b16 %v4586
        %v5615 = vunpack.c.l.b16 %v4587
        %v5616 = vunpack.c.l.b16 %v4588
        %v5617 = vunpack.c.l.b16 %v4589
        %v5618 = vunpack.c.l.b16 %v4590
        %v5619 = vunpack.c.l.b16 %v4591
        %v5620 = vunpack.c.l.b16 %v4592
        %v5621 = vunpack.c.l.b16 %v4593
        %v5622 = vunpack.c.l.b16 %v4594
        %v5623 = vunpack.c.l.b16 %v4595
        %v5624 = vunpack.c.l.b16 %v4596
        %v5625 = vunpack.c.l.b16 %v4597
        %v5626 = vunpack.c.l.b16 %v4598
        %v5627 = vunpack.c.l.b16 %v4599
        %v5628 = vpack.c.b16 %v5485, %v5484
        %v5629 = vpack.c.b16 %v5487, %v5486
        %v5630 = vpack.c.b16 %v5489, %v5488
        %v5631 = vpack.c.b16 %v5491, %v5490
        %v5632 = vpack.c.b16 %v5493, %v5492
        %v5633 = vpack.c.b16 %v5495, %v5494
        %v5634 = vpack.c.b16 %v5497, %v5496
        %v5635 = vpack.c.b16 %v5499, %v5498
        %v5636 = vpack.c.b16 %v5501, %v5500
        %v5637 = vpack.c.b16 %v5503, %v5502
        %v5638 = vpack.c.b16 %v5505, %v5504
        %v5639 = vpack.c.b16 %v5507, %v5506
        %v5640 = vpack.c.b16 %v5509, %v5508
        %v5641 = vpack.c.b16 %v5511, %v5510
        %v5642 = vpack.c.b16 %v5513, %v5512
        %v5643 = vpack.c.b16 %v5515, %v5514
        %v5644 = vpack.c.b16 %v5517, %v5516
        %v5645 = vpack.c.b16 %v5519, %v5518
        %v5646 = vpack.c.b16 %v5521, %v5520
        %v5647 = vpack.c.b16 %v5523, %v5522
        %v5648 = vpack.c.b16 %v5525, %v5524
        %v5649 = vpack.c.b16 %v5527, %v5526
        %v5650 = vpack.c.b16 %v5529, %v5528
        %v5651 = vpack.c.b16 %v5531, %v5530
        %v5652 = vpack.c.b16 %v5533, %v5532
        %v5653 = vpack.c.b16 %v5535, %v5534
        %v5654 = vpack.c.b16 %v5537, %v5536
        %v5655 = vpack.c.b16 %v5539, %v5538
        %v5656 = vpack.c.b16 %v5541, %v5540
        %v5657 = vpack.c.b16 %v5543, %v5542
        %v5658 = vpack.c.b16 %v5545, %v5544
        %v5659 = vpack.c.b16 %v5547, %v5546
        %v5660 = vpack.c.b16 %v5549, %v5548
        %v5661 = vpack.c.b16 %v5551, %v5550
        %v5662 = vpack.c.b16 %v5553, %v5552
        %v5663 = vpack.c.b16 %v5555, %v5554
        %v5664 = vpack.c.b16 %v5557, %v5556
        %v5665 = vpack.c.b16 %v5559, %v5558
        %v5666 = vpack.c.b16 %v5561, %v5560
        %v5667 = vpack.c.b16 %v5563, %v5562
        %v5668 = vpack.c.b16 %v5565, %v5564
        %v5669 = vpack.c.b16 %v5567, %v5566
        %v5670 = vpack.c.b16 %v5569, %v5568
        %v5671 = vpack.c.b16 %v5571, %v5570
        %v5672 = vpack.c.b16 %v5573, %v5572
        %v5673 = vpack.c.b16 %v5575, %v5574
        %v5674 = vpack.c.b16 %v5577, %v5576
        %v5675 = vpack.c.b16 %v5579, %v5578
        %v5676 = vpack.c.b16 %v5581, %v5580
        %v5677 = vpack.c.b16 %v5583, %v5582
        %v5678 = vpack.c.b16 %v5585, %v5584
        %v5679 = vpack.c.b16 %v5587, %v5586
        %v5680 = vpack.c.b16 %v5589, %v5588
        %v5681 = vpack.c.b16 %v5591, %v5590
        %v5682 = vpack.c.b16 %v5593, %v5592
        %v5683 = vpack.c.b16 %v5595, %v5594
        %v5684 = vpack.c.b16 %v5597, %v5596
        %v5685 = vpack.c.b16 %v5599, %v5598
        %v5686 = vpack.c.b16 %v5601, %v5600
        %v5687 = vpack.c.b16 %v5603, %v5602
        %v5688 = vpack.c.b16 %v5605, %v5604
        %v5689 = vpack.c.b16 %v5607, %v5606
        %v5690 = vpack.c.b16 %v5609, %v5608
        %v5691 = vpack.c.b16 %v5611, %v5610
        %v5692 = vpack.c.b16 %v5613, %v5612
        %v5693 = vpack.c.b16 %v5615, %v5614
        %v5694 = vpack.c.b16 %v5617, %v5616
        %v5695 = vpack.c.b16 %v5619, %v5618
        %v5696 = vpack.c.b16 %v5621, %v5620
        %v5697 = vpack.c.b16 %v5623, %v5622
        %v5698 = vpack.c.b16 %v5625, %v5624
        %v5699 = vpack.c.b16 %v5627, %v5626
        %5772 = vmatpush.bf16.msra.mxu0 %v5635
        %5773 = vmatpush.bf16.msra.mxu0 %v5634
        %5774 = vmatpush.bf16.msra.mxu0 %v5633
        %5775 = vmatpush.bf16.msra.mxu0 %v5632
        %5776 = vmatpush.bf16.msra.mxu0 %v5631
        %5777 = vmatpush.bf16.msra.mxu0 %v5630
        %5778 = vmatpush.bf16.msra.mxu0 %v5629
        %5779 = vmatpush.bf16.msra.mxu0 %v5628
        %5780 = vmatmul.bf16.gmra.mxu0 %v5052
        %v5781 = vpop.f32.mrf.mxu0
        %v5782 = vadd.f32 %v4602, %v5781
        %v5783 = vpop.f32.mrf.mxu0
        %v5784 = vadd.f32 %v4602, %v5783
        %5785 = vmatmul.bf16.gmra.mxu0 %v5061
        %v5786 = vpop.f32.mrf.mxu0
        %v5787 = vadd.f32 %v4602, %v5786
        %v5788 = vpop.f32.mrf.mxu0
        %v5789 = vadd.f32 %v4602, %v5788
        %5790 = vmatmul.bf16.gmra.mxu0 %v5070
        %v5791 = vpop.f32.mrf.mxu0
        %v5792 = vadd.f32 %v4602, %v5791
        %v5793 = vpop.f32.mrf.mxu0
        %v5794 = vadd.f32 %v4602, %v5793
        %5795 = vmatmul.bf16.gmra.mxu0 %v5079
        %v5796 = vpop.f32.mrf.mxu0
        %v5797 = vadd.f32 %v4602, %v5796
        %v5798 = vpop.f32.mrf.mxu0
        %v5799 = vadd.f32 %v4602, %v5798
        %5800 = vmatmul.bf16.gmra.mxu0 %v5088
        %v5801 = vpop.f32.mrf.mxu0
        %v5802 = vadd.f32 %v4602, %v5801
        %v5803 = vpop.f32.mrf.mxu0
        %v5804 = vadd.f32 %v4602, %v5803
        %5805 = vmatmul.bf16.gmra.mxu0 %v5097
        %v5806 = vpop.f32.mrf.mxu0
        %v5807 = vadd.f32 %v4602, %v5806
        %v5808 = vpop.f32.mrf.mxu0
        %v5809 = vadd.f32 %v4602, %v5808
        %5810 = vmatmul.bf16.gmra.mxu0 %v5106
        %v5811 = vpop.f32.mrf.mxu0
        %v5812 = vadd.f32 %v4602, %v5811
        %v5813 = vpop.f32.mrf.mxu0
        %v5814 = vadd.f32 %v4602, %v5813
        %5815 = vmatmul.bf16.gmra.mxu0 %v5115
        %v5816 = vpop.f32.mrf.mxu0
        %v5817 = vadd.f32 %v4602, %v5816
        %v5818 = vpop.f32.mrf.mxu0
        %v5819 = vadd.f32 %v4602, %v5818
        %5820 = vmatmul.bf16.gmra.mxu0 %v5124
        %v5821 = vpop.f32.mrf.mxu0
        %v5822 = vadd.f32 %v4602, %v5821
        %v5823 = vpop.f32.mrf.mxu0
        %v5824 = vadd.f32 %v4602, %v5823
        %5825 = vmatmul.bf16.gmra.mxu0 %v5133
        %v5826 = vpop.f32.mrf.mxu0
        %v5827 = vadd.f32 %v4602, %v5826
        %v5828 = vpop.f32.mrf.mxu0
        %v5829 = vadd.f32 %v4602, %v5828
        %5830 = vmatmul.bf16.gmra.mxu0 %v5142
        %v5831 = vpop.f32.mrf.mxu0
        %v5832 = vadd.f32 %v4602, %v5831
        %v5833 = vpop.f32.mrf.mxu0
        %v5834 = vadd.f32 %v4602, %v5833
        %5835 = vmatmul.bf16.gmra.mxu0 %v5151
        %v5836 = vpop.f32.mrf.mxu0
        %v5837 = vadd.f32 %v4602, %v5836
        %v5838 = vpop.f32.mrf.mxu0
        %v5839 = vadd.f32 %v4602, %v5838
        %5840 = vmatmul.bf16.gmra.mxu0 %v5160
        %v5841 = vpop.f32.mrf.mxu0
        %v5842 = vadd.f32 %v4602, %v5841
        %v5843 = vpop.f32.mrf.mxu0
        %v5844 = vadd.f32 %v4602, %v5843
        %5845 = vmatmul.bf16.gmra.mxu0 %v5169
        %v5846 = vpop.f32.mrf.mxu0
        %v5847 = vadd.f32 %v4602, %v5846
        %v5848 = vpop.f32.mrf.mxu0
        %v5849 = vadd.f32 %v4602, %v5848
        %5850 = vmatmul.bf16.gmra.mxu0 %v5178
        %v5851 = vpop.f32.mrf.mxu0
        %v5852 = vadd.f32 %v4602, %v5851
        %v5853 = vpop.f32.mrf.mxu0
        %v5854 = vadd.f32 %v4602, %v5853
        %5855 = vmatmul.bf16.gmra.mxu0 %v5187
        %v5856 = vpop.f32.mrf.mxu0
        %v5857 = vadd.f32 %v4602, %v5856
        %v5858 = vpop.f32.mrf.mxu0
        %v5859 = vadd.f32 %v4602, %v5858
        %5860 = vdwg.mxu0
        %5861 = vmatpush.bf16.msra.mxu0 %v5643
        %5862 = vmatpush.bf16.msra.mxu0 %v5642
        %5863 = vmatpush.bf16.msra.mxu0 %v5641
        %5864 = vmatpush.bf16.msra.mxu0 %v5640
        %5865 = vmatpush.bf16.msra.mxu0 %v5639
        %5866 = vmatpush.bf16.msra.mxu0 %v5638
        %5867 = vmatpush.bf16.msra.mxu0 %v5637
        %5868 = vmatpush.bf16.msra.mxu0 %v5636
        %5869 = vmatmul.bf16.gmra.mxu0 %v5053
        %v5870 = vpop.f32.mrf.mxu0
        %v5871 = vadd.f32 %v5782, %v5870
        %v5872 = vpop.f32.mrf.mxu0
        %v5873 = vadd.f32 %v5784, %v5872
        %5874 = vmatmul.bf16.gmra.mxu0 %v5062
        %v5875 = vpop.f32.mrf.mxu0
        %v5876 = vadd.f32 %v5787, %v5875
        %v5877 = vpop.f32.mrf.mxu0
        %v5878 = vadd.f32 %v5789, %v5877
        %5879 = vmatmul.bf16.gmra.mxu0 %v5071
        %v5880 = vpop.f32.mrf.mxu0
        %v5881 = vadd.f32 %v5792, %v5880
        %v5882 = vpop.f32.mrf.mxu0
        %v5883 = vadd.f32 %v5794, %v5882
        %5884 = vmatmul.bf16.gmra.mxu0 %v5080
        %v5885 = vpop.f32.mrf.mxu0
        %v5886 = vadd.f32 %v5797, %v5885
        %v5887 = vpop.f32.mrf.mxu0
        %v5888 = vadd.f32 %v5799, %v5887
        %5889 = vmatmul.bf16.gmra.mxu0 %v5089
        %v5890 = vpop.f32.mrf.mxu0
        %v5891 = vadd.f32 %v5802, %v5890
        %v5892 = vpop.f32.mrf.mxu0
        %v5893 = vadd.f32 %v5804, %v5892
        %5894 = vmatmul.bf16.gmra.mxu0 %v5098
        %v5895 = vpop.f32.mrf.mxu0
        %v5896 = vadd.f32 %v5807, %v5895
        %v5897 = vpop.f32.mrf.mxu0
        %v5898 = vadd.f32 %v5809, %v5897
        %5899 = vmatmul.bf16.gmra.mxu0 %v5107
        %v5900 = vpop.f32.mrf.mxu0
        %v5901 = vadd.f32 %v5812, %v5900
        %v5902 = vpop.f32.mrf.mxu0
        %v5903 = vadd.f32 %v5814, %v5902
        %5904 = vmatmul.bf16.gmra.mxu0 %v5116
        %v5905 = vpop.f32.mrf.mxu0
        %v5906 = vadd.f32 %v5817, %v5905
        %v5907 = vpop.f32.mrf.mxu0
        %v5908 = vadd.f32 %v5819, %v5907
        %5909 = vmatmul.bf16.gmra.mxu0 %v5125
        %v5910 = vpop.f32.mrf.mxu0
        %v5911 = vadd.f32 %v5822, %v5910
        %v5912 = vpop.f32.mrf.mxu0
        %v5913 = vadd.f32 %v5824, %v5912
        %5914 = vmatmul.bf16.gmra.mxu0 %v5134
        %v5915 = vpop.f32.mrf.mxu0
        %v5916 = vadd.f32 %v5827, %v5915
        %v5917 = vpop.f32.mrf.mxu0
        %v5918 = vadd.f32 %v5829, %v5917
        %5919 = vmatmul.bf16.gmra.mxu0 %v5143
        %v5920 = vpop.f32.mrf.mxu0
        %v5921 = vadd.f32 %v5832, %v5920
        %v5922 = vpop.f32.mrf.mxu0
        %v5923 = vadd.f32 %v5834, %v5922
        %5924 = vmatmul.bf16.gmra.mxu0 %v5152
        %v5925 = vpop.f32.mrf.mxu0
        %v5926 = vadd.f32 %v5837, %v5925
        %v5927 = vpop.f32.mrf.mxu0
        %v5928 = vadd.f32 %v5839, %v5927
        %5929 = vmatmul.bf16.gmra.mxu0 %v5161
        %v5930 = vpop.f32.mrf.mxu0
        %v5931 = vadd.f32 %v5842, %v5930
        %v5932 = vpop.f32.mrf.mxu0
        %v5933 = vadd.f32 %v5844, %v5932
        %5934 = vmatmul.bf16.gmra.mxu0 %v5170
        %v5935 = vpop.f32.mrf.mxu0
        %v5936 = vadd.f32 %v5847, %v5935
        %v5937 = vpop.f32.mrf.mxu0
        %v5938 = vadd.f32 %v5849, %v5937
        %5939 = vmatmul.bf16.gmra.mxu0 %v5179
        %v5940 = vpop.f32.mrf.mxu0
        %v5941 = vadd.f32 %v5852, %v5940
        %v5942 = vpop.f32.mrf.mxu0
        %v5943 = vadd.f32 %v5854, %v5942
        %5944 = vmatmul.bf16.gmra.mxu0 %v5188
        %v5945 = vpop.f32.mrf.mxu0
        %v5946 = vadd.f32 %v5857, %v5945
        %v5947 = vpop.f32.mrf.mxu0
        %v5948 = vadd.f32 %v5859, %v5947
        %5949 = vdwg.mxu0
        %5950 = vmatpush.bf16.msra.mxu0 %v5651
        %5951 = vmatpush.bf16.msra.mxu0 %v5650
        %5952 = vmatpush.bf16.msra.mxu0 %v5649
        %5953 = vmatpush.bf16.msra.mxu0 %v5648
        %5954 = vmatpush.bf16.msra.mxu0 %v5647
        %5955 = vmatpush.bf16.msra.mxu0 %v5646
        %5956 = vmatpush.bf16.msra.mxu0 %v5645
        %5957 = vmatpush.bf16.msra.mxu0 %v5644
        %5958 = vmatmul.bf16.gmra.mxu0 %v5054
        %v5959 = vpop.f32.mrf.mxu0
        %v5960 = vadd.f32 %v5871, %v5959
        %v5961 = vpop.f32.mrf.mxu0
        %v5962 = vadd.f32 %v5873, %v5961
        %5963 = vmatmul.bf16.gmra.mxu0 %v5063
        %v5964 = vpop.f32.mrf.mxu0
        %v5965 = vadd.f32 %v5876, %v5964
        %v5966 = vpop.f32.mrf.mxu0
        %v5967 = vadd.f32 %v5878, %v5966
        %5968 = vmatmul.bf16.gmra.mxu0 %v5072
        %v5969 = vpop.f32.mrf.mxu0
        %v5970 = vadd.f32 %v5881, %v5969
        %v5971 = vpop.f32.mrf.mxu0
        %v5972 = vadd.f32 %v5883, %v5971
        %5973 = vmatmul.bf16.gmra.mxu0 %v5081
        %v5974 = vpop.f32.mrf.mxu0
        %v5975 = vadd.f32 %v5886, %v5974
        %v5976 = vpop.f32.mrf.mxu0
        %v5977 = vadd.f32 %v5888, %v5976
        %5978 = vmatmul.bf16.gmra.mxu0 %v5090
        %v5979 = vpop.f32.mrf.mxu0
        %v5980 = vadd.f32 %v5891, %v5979
        %v5981 = vpop.f32.mrf.mxu0
        %v5982 = vadd.f32 %v5893, %v5981
        %5983 = vmatmul.bf16.gmra.mxu0 %v5099
        %v5984 = vpop.f32.mrf.mxu0
        %v5985 = vadd.f32 %v5896, %v5984
        %v5986 = vpop.f32.mrf.mxu0
        %v5987 = vadd.f32 %v5898, %v5986
        %5988 = vmatmul.bf16.gmra.mxu0 %v5108
        %v5989 = vpop.f32.mrf.mxu0
        %v5990 = vadd.f32 %v5901, %v5989
        %v5991 = vpop.f32.mrf.mxu0
        %v5992 = vadd.f32 %v5903, %v5991
        %5993 = vmatmul.bf16.gmra.mxu0 %v5117
        %v5994 = vpop.f32.mrf.mxu0
        %v5995 = vadd.f32 %v5906, %v5994
        %v5996 = vpop.f32.mrf.mxu0
        %v5997 = vadd.f32 %v5908, %v5996
        %5998 = vmatmul.bf16.gmra.mxu0 %v5126
        %v5999 = vpop.f32.mrf.mxu0
        %v6000 = vadd.f32 %v5911, %v5999
        %v6001 = vpop.f32.mrf.mxu0
        %v6002 = vadd.f32 %v5913, %v6001
        %6003 = vmatmul.bf16.gmra.mxu0 %v5135
        %v6004 = vpop.f32.mrf.mxu0
        %v6005 = vadd.f32 %v5916, %v6004
        %v6006 = vpop.f32.mrf.mxu0
        %v6007 = vadd.f32 %v5918, %v6006
        %6008 = vmatmul.bf16.gmra.mxu0 %v5144
        %v6009 = vpop.f32.mrf.mxu0
        %v6010 = vadd.f32 %v5921, %v6009
        %v6011 = vpop.f32.mrf.mxu0
        %v6012 = vadd.f32 %v5923, %v6011
        %6013 = vmatmul.bf16.gmra.mxu0 %v5153
        %v6014 = vpop.f32.mrf.mxu0
        %v6015 = vadd.f32 %v5926, %v6014
        %v6016 = vpop.f32.mrf.mxu0
        %v6017 = vadd.f32 %v5928, %v6016
        %6018 = vmatmul.bf16.gmra.mxu0 %v5162
        %v6019 = vpop.f32.mrf.mxu0
        %v6020 = vadd.f32 %v5931, %v6019
        %v6021 = vpop.f32.mrf.mxu0
        %v6022 = vadd.f32 %v5933, %v6021
        %6023 = vmatmul.bf16.gmra.mxu0 %v5171
        %v6024 = vpop.f32.mrf.mxu0
        %v6025 = vadd.f32 %v5936, %v6024
        %v6026 = vpop.f32.mrf.mxu0
        %v6027 = vadd.f32 %v5938, %v6026
        %6028 = vmatmul.bf16.gmra.mxu0 %v5180
        %v6029 = vpop.f32.mrf.mxu0
        %v6030 = vadd.f32 %v5941, %v6029
        %v6031 = vpop.f32.mrf.mxu0
        %v6032 = vadd.f32 %v5943, %v6031
        %6033 = vmatmul.bf16.gmra.mxu0 %v5189
        %v6034 = vpop.f32.mrf.mxu0
        %v6035 = vadd.f32 %v5946, %v6034
        %v6036 = vpop.f32.mrf.mxu0
        %v6037 = vadd.f32 %v5948, %v6036
        %6038 = vdwg.mxu0
        %6039 = vmatpush.bf16.msra.mxu0 %v5659
        %6040 = vmatpush.bf16.msra.mxu0 %v5658
        %6041 = vmatpush.bf16.msra.mxu0 %v5657
        %6042 = vmatpush.bf16.msra.mxu0 %v5656
        %6043 = vmatpush.bf16.msra.mxu0 %v5655
        %6044 = vmatpush.bf16.msra.mxu0 %v5654
        %6045 = vmatpush.bf16.msra.mxu0 %v5653
        %6046 = vmatpush.bf16.msra.mxu0 %v5652
        %6047 = vmatmul.bf16.gmra.mxu0 %v5055
        %v6048 = vpop.f32.mrf.mxu0
        %v6049 = vadd.f32 %v5960, %v6048
        %v6050 = vpop.f32.mrf.mxu0
        %v6051 = vadd.f32 %v5962, %v6050
        %6052 = vmatmul.bf16.gmra.mxu0 %v5064
        %v6053 = vpop.f32.mrf.mxu0
        %v6054 = vadd.f32 %v5965, %v6053
        %v6055 = vpop.f32.mrf.mxu0
        %v6056 = vadd.f32 %v5967, %v6055
        %6057 = vmatmul.bf16.gmra.mxu0 %v5073
        %v6058 = vpop.f32.mrf.mxu0
        %v6059 = vadd.f32 %v5970, %v6058
        %v6060 = vpop.f32.mrf.mxu0
        %v6061 = vadd.f32 %v5972, %v6060
        %6062 = vmatmul.bf16.gmra.mxu0 %v5082
        %v6063 = vpop.f32.mrf.mxu0
        %v6064 = vadd.f32 %v5975, %v6063
        %v6065 = vpop.f32.mrf.mxu0
        %v6066 = vadd.f32 %v5977, %v6065
        %6067 = vmatmul.bf16.gmra.mxu0 %v5091
        %v6068 = vpop.f32.mrf.mxu0
        %v6069 = vadd.f32 %v5980, %v6068
        %v6070 = vpop.f32.mrf.mxu0
        %v6071 = vadd.f32 %v5982, %v6070
        %6072 = vmatmul.bf16.gmra.mxu0 %v5100
        %v6073 = vpop.f32.mrf.mxu0
        %v6074 = vadd.f32 %v5985, %v6073
        %v6075 = vpop.f32.mrf.mxu0
        %v6076 = vadd.f32 %v5987, %v6075
        %6077 = vmatmul.bf16.gmra.mxu0 %v5109
        %v6078 = vpop.f32.mrf.mxu0
        %v6079 = vadd.f32 %v5990, %v6078
        %v6080 = vpop.f32.mrf.mxu0
        %v6081 = vadd.f32 %v5992, %v6080
        %6082 = vmatmul.bf16.gmra.mxu0 %v5118
        %v6083 = vpop.f32.mrf.mxu0
        %v6084 = vadd.f32 %v5995, %v6083
        %v6085 = vpop.f32.mrf.mxu0
        %v6086 = vadd.f32 %v5997, %v6085
        %6087 = vmatmul.bf16.gmra.mxu0 %v5127
        %v6088 = vpop.f32.mrf.mxu0
        %v6089 = vadd.f32 %v6000, %v6088
        %v6090 = vpop.f32.mrf.mxu0
        %v6091 = vadd.f32 %v6002, %v6090
        %6092 = vmatmul.bf16.gmra.mxu0 %v5136
        %v6093 = vpop.f32.mrf.mxu0
        %v6094 = vadd.f32 %v6005, %v6093
        %v6095 = vpop.f32.mrf.mxu0
        %v6096 = vadd.f32 %v6007, %v6095
        %6097 = vmatmul.bf16.gmra.mxu0 %v5145
        %v6098 = vpop.f32.mrf.mxu0
        %v6099 = vadd.f32 %v6010, %v6098
        %v6100 = vpop.f32.mrf.mxu0
        %v6101 = vadd.f32 %v6012, %v6100
        %6102 = vmatmul.bf16.gmra.mxu0 %v5154
        %v6103 = vpop.f32.mrf.mxu0
        %v6104 = vadd.f32 %v6015, %v6103
        %v6105 = vpop.f32.mrf.mxu0
        %v6106 = vadd.f32 %v6017, %v6105
        %6107 = vmatmul.bf16.gmra.mxu0 %v5163
        %v6108 = vpop.f32.mrf.mxu0
        %v6109 = vadd.f32 %v6020, %v6108
        %v6110 = vpop.f32.mrf.mxu0
        %v6111 = vadd.f32 %v6022, %v6110
        %6112 = vmatmul.bf16.gmra.mxu0 %v5172
        %v6113 = vpop.f32.mrf.mxu0
        %v6114 = vadd.f32 %v6025, %v6113
        %v6115 = vpop.f32.mrf.mxu0
        %v6116 = vadd.f32 %v6027, %v6115
        %6117 = vmatmul.bf16.gmra.mxu0 %v5181
        %v6118 = vpop.f32.mrf.mxu0
        %v6119 = vadd.f32 %v6030, %v6118
        %v6120 = vpop.f32.mrf.mxu0
        %v6121 = vadd.f32 %v6032, %v6120
        %6122 = vmatmul.bf16.gmra.mxu0 %v5190
        %v6123 = vpop.f32.mrf.mxu0
        %v6124 = vadd.f32 %v6035, %v6123
        %v6125 = vpop.f32.mrf.mxu0
        %v6126 = vadd.f32 %v6037, %v6125
        %6127 = vdwg.mxu0
        %6128 = vmatpush.bf16.msra.mxu0 %v5667
        %6129 = vmatpush.bf16.msra.mxu0 %v5666
        %6130 = vmatpush.bf16.msra.mxu0 %v5665
        %6131 = vmatpush.bf16.msra.mxu0 %v5664
        %6132 = vmatpush.bf16.msra.mxu0 %v5663
        %6133 = vmatpush.bf16.msra.mxu0 %v5662
        %6134 = vmatpush.bf16.msra.mxu0 %v5661
        %6135 = vmatpush.bf16.msra.mxu0 %v5660
        %6136 = vmatmul.bf16.gmra.mxu0 %v5056
        %v6137 = vpop.f32.mrf.mxu0
        %v6138 = vadd.f32 %v6049, %v6137
        %v6139 = vpop.f32.mrf.mxu0
        %v6140 = vadd.f32 %v6051, %v6139
        %6141 = vmatmul.bf16.gmra.mxu0 %v5065
        %v6142 = vpop.f32.mrf.mxu0
        %v6143 = vadd.f32 %v6054, %v6142
        %v6144 = vpop.f32.mrf.mxu0
        %v6145 = vadd.f32 %v6056, %v6144
        %6146 = vmatmul.bf16.gmra.mxu0 %v5074
        %v6147 = vpop.f32.mrf.mxu0
        %v6148 = vadd.f32 %v6059, %v6147
        %v6149 = vpop.f32.mrf.mxu0
        %v6150 = vadd.f32 %v6061, %v6149
        %6151 = vmatmul.bf16.gmra.mxu0 %v5083
        %v6152 = vpop.f32.mrf.mxu0
        %v6153 = vadd.f32 %v6064, %v6152
        %v6154 = vpop.f32.mrf.mxu0
        %v6155 = vadd.f32 %v6066, %v6154
        %6156 = vmatmul.bf16.gmra.mxu0 %v5092
        %v6157 = vpop.f32.mrf.mxu0
        %v6158 = vadd.f32 %v6069, %v6157
        %v6159 = vpop.f32.mrf.mxu0
        %v6160 = vadd.f32 %v6071, %v6159
        %6161 = vmatmul.bf16.gmra.mxu0 %v5101
        %v6162 = vpop.f32.mrf.mxu0
        %v6163 = vadd.f32 %v6074, %v6162
        %v6164 = vpop.f32.mrf.mxu0
        %v6165 = vadd.f32 %v6076, %v6164
        %6166 = vmatmul.bf16.gmra.mxu0 %v5110
        %v6167 = vpop.f32.mrf.mxu0
        %v6168 = vadd.f32 %v6079, %v6167
        %v6169 = vpop.f32.mrf.mxu0
        %v6170 = vadd.f32 %v6081, %v6169
        %6171 = vmatmul.bf16.gmra.mxu0 %v5119
        %v6172 = vpop.f32.mrf.mxu0
        %v6173 = vadd.f32 %v6084, %v6172
        %v6174 = vpop.f32.mrf.mxu0
        %v6175 = vadd.f32 %v6086, %v6174
        %6176 = vmatmul.bf16.gmra.mxu0 %v5128
        %v6177 = vpop.f32.mrf.mxu0
        %v6178 = vadd.f32 %v6089, %v6177
        %v6179 = vpop.f32.mrf.mxu0
        %v6180 = vadd.f32 %v6091, %v6179
        %6181 = vmatmul.bf16.gmra.mxu0 %v5137
        %v6182 = vpop.f32.mrf.mxu0
        %v6183 = vadd.f32 %v6094, %v6182
        %v6184 = vpop.f32.mrf.mxu0
        %v6185 = vadd.f32 %v6096, %v6184
        %6186 = vmatmul.bf16.gmra.mxu0 %v5146
        %v6187 = vpop.f32.mrf.mxu0
        %v6188 = vadd.f32 %v6099, %v6187
        %v6189 = vpop.f32.mrf.mxu0
        %v6190 = vadd.f32 %v6101, %v6189
        %6191 = vmatmul.bf16.gmra.mxu0 %v5155
        %v6192 = vpop.f32.mrf.mxu0
        %v6193 = vadd.f32 %v6104, %v6192
        %v6194 = vpop.f32.mrf.mxu0
        %v6195 = vadd.f32 %v6106, %v6194
        %6196 = vmatmul.bf16.gmra.mxu0 %v5164
        %v6197 = vpop.f32.mrf.mxu0
        %v6198 = vadd.f32 %v6109, %v6197
        %v6199 = vpop.f32.mrf.mxu0
        %v6200 = vadd.f32 %v6111, %v6199
        %6201 = vmatmul.bf16.gmra.mxu0 %v5173
        %v6202 = vpop.f32.mrf.mxu0
        %v6203 = vadd.f32 %v6114, %v6202
        %v6204 = vpop.f32.mrf.mxu0
        %v6205 = vadd.f32 %v6116, %v6204
        %6206 = vmatmul.bf16.gmra.mxu0 %v5182
        %v6207 = vpop.f32.mrf.mxu0
        %v6208 = vadd.f32 %v6119, %v6207
        %v6209 = vpop.f32.mrf.mxu0
        %v6210 = vadd.f32 %v6121, %v6209
        %6211 = vmatmul.bf16.gmra.mxu0 %v5191
        %v6212 = vpop.f32.mrf.mxu0
        %v6213 = vadd.f32 %v6124, %v6212
        %v6214 = vpop.f32.mrf.mxu0
        %v6215 = vadd.f32 %v6126, %v6214
        %6216 = vdwg.mxu0
        %6217 = vmatpush.bf16.msra.mxu0 %v5675
        %6218 = vmatpush.bf16.msra.mxu0 %v5674
        %6219 = vmatpush.bf16.msra.mxu0 %v5673
        %6220 = vmatpush.bf16.msra.mxu0 %v5672
        %6221 = vmatpush.bf16.msra.mxu0 %v5671
        %6222 = vmatpush.bf16.msra.mxu0 %v5670
        %6223 = vmatpush.bf16.msra.mxu0 %v5669
        %6224 = vmatpush.bf16.msra.mxu0 %v5668
        %6225 = vmatmul.bf16.gmra.mxu0 %v5057
        %v6226 = vpop.f32.mrf.mxu0
        %v6227 = vadd.f32 %v6138, %v6226
        %v6228 = vpop.f32.mrf.mxu0
        %v6229 = vadd.f32 %v6140, %v6228
        %6230 = vmatmul.bf16.gmra.mxu0 %v5066
        %v6231 = vpop.f32.mrf.mxu0
        %v6232 = vadd.f32 %v6143, %v6231
        %v6233 = vpop.f32.mrf.mxu0
        %v6234 = vadd.f32 %v6145, %v6233
        %6235 = vmatmul.bf16.gmra.mxu0 %v5075
        %v6236 = vpop.f32.mrf.mxu0
        %v6237 = vadd.f32 %v6148, %v6236
        %v6238 = vpop.f32.mrf.mxu0
        %v6239 = vadd.f32 %v6150, %v6238
        %6240 = vmatmul.bf16.gmra.mxu0 %v5084
        %v6241 = vpop.f32.mrf.mxu0
        %v6242 = vadd.f32 %v6153, %v6241
        %v6243 = vpop.f32.mrf.mxu0
        %v6244 = vadd.f32 %v6155, %v6243
        %6245 = vmatmul.bf16.gmra.mxu0 %v5093
        %v6246 = vpop.f32.mrf.mxu0
        %v6247 = vadd.f32 %v6158, %v6246
        %v6248 = vpop.f32.mrf.mxu0
        %v6249 = vadd.f32 %v6160, %v6248
        %6250 = vmatmul.bf16.gmra.mxu0 %v5102
        %v6251 = vpop.f32.mrf.mxu0
        %v6252 = vadd.f32 %v6163, %v6251
        %v6253 = vpop.f32.mrf.mxu0
        %v6254 = vadd.f32 %v6165, %v6253
        %6255 = vmatmul.bf16.gmra.mxu0 %v5111
        %v6256 = vpop.f32.mrf.mxu0
        %v6257 = vadd.f32 %v6168, %v6256
        %v6258 = vpop.f32.mrf.mxu0
        %v6259 = vadd.f32 %v6170, %v6258
        %6260 = vmatmul.bf16.gmra.mxu0 %v5120
        %v6261 = vpop.f32.mrf.mxu0
        %v6262 = vadd.f32 %v6173, %v6261
        %v6263 = vpop.f32.mrf.mxu0
        %v6264 = vadd.f32 %v6175, %v6263
        %6265 = vmatmul.bf16.gmra.mxu0 %v5129
        %v6266 = vpop.f32.mrf.mxu0
        %v6267 = vadd.f32 %v6178, %v6266
        %v6268 = vpop.f32.mrf.mxu0
        %v6269 = vadd.f32 %v6180, %v6268
        %6270 = vmatmul.bf16.gmra.mxu0 %v5138
        %v6271 = vpop.f32.mrf.mxu0
        %v6272 = vadd.f32 %v6183, %v6271
        %v6273 = vpop.f32.mrf.mxu0
        %v6274 = vadd.f32 %v6185, %v6273
        %6275 = vmatmul.bf16.gmra.mxu0 %v5147
        %v6276 = vpop.f32.mrf.mxu0
        %v6277 = vadd.f32 %v6188, %v6276
        %v6278 = vpop.f32.mrf.mxu0
        %v6279 = vadd.f32 %v6190, %v6278
        %6280 = vmatmul.bf16.gmra.mxu0 %v5156
        %v6281 = vpop.f32.mrf.mxu0
        %v6282 = vadd.f32 %v6193, %v6281
        %v6283 = vpop.f32.mrf.mxu0
        %v6284 = vadd.f32 %v6195, %v6283
        %6285 = vmatmul.bf16.gmra.mxu0 %v5165
        %v6286 = vpop.f32.mrf.mxu0
        %v6287 = vadd.f32 %v6198, %v6286
        %v6288 = vpop.f32.mrf.mxu0
        %v6289 = vadd.f32 %v6200, %v6288
        %6290 = vmatmul.bf16.gmra.mxu0 %v5174
        %v6291 = vpop.f32.mrf.mxu0
        %v6292 = vadd.f32 %v6203, %v6291
        %v6293 = vpop.f32.mrf.mxu0
        %v6294 = vadd.f32 %v6205, %v6293
        %6295 = vmatmul.bf16.gmra.mxu0 %v5183
        %v6296 = vpop.f32.mrf.mxu0
        %v6297 = vadd.f32 %v6208, %v6296
        %v6298 = vpop.f32.mrf.mxu0
        %v6299 = vadd.f32 %v6210, %v6298
        %6300 = vmatmul.bf16.gmra.mxu0 %v5192
        %v6301 = vpop.f32.mrf.mxu0
        %v6302 = vadd.f32 %v6213, %v6301
        %v6303 = vpop.f32.mrf.mxu0
        %v6304 = vadd.f32 %v6215, %v6303
        %6305 = vdwg.mxu0
        %6306 = vmatpush.bf16.msra.mxu0 %v5683
        %6307 = vmatpush.bf16.msra.mxu0 %v5682
        %6308 = vmatpush.bf16.msra.mxu0 %v5681
        %6309 = vmatpush.bf16.msra.mxu0 %v5680
        %6310 = vmatpush.bf16.msra.mxu0 %v5679
        %6311 = vmatpush.bf16.msra.mxu0 %v5678
        %6312 = vmatpush.bf16.msra.mxu0 %v5677
        %6313 = vmatpush.bf16.msra.mxu0 %v5676
        %6314 = vmatmul.bf16.gmra.mxu0 %v5058
        %v6315 = vpop.f32.mrf.mxu0
        %v6316 = vadd.f32 %v6227, %v6315
        %v6317 = vpop.f32.mrf.mxu0
        %v6318 = vadd.f32 %v6229, %v6317
        %6319 = vmatmul.bf16.gmra.mxu0 %v5067
        %v6320 = vpop.f32.mrf.mxu0
        %v6321 = vadd.f32 %v6232, %v6320
        %v6322 = vpop.f32.mrf.mxu0
        %v6323 = vadd.f32 %v6234, %v6322
        %6324 = vmatmul.bf16.gmra.mxu0 %v5076
        %v6325 = vpop.f32.mrf.mxu0
        %v6326 = vadd.f32 %v6237, %v6325
        %v6327 = vpop.f32.mrf.mxu0
        %v6328 = vadd.f32 %v6239, %v6327
        %6329 = vmatmul.bf16.gmra.mxu0 %v5085
        %v6330 = vpop.f32.mrf.mxu0
        %v6331 = vadd.f32 %v6242, %v6330
        %v6332 = vpop.f32.mrf.mxu0
        %v6333 = vadd.f32 %v6244, %v6332
        %6334 = vmatmul.bf16.gmra.mxu0 %v5094
        %v6335 = vpop.f32.mrf.mxu0
        %v6336 = vadd.f32 %v6247, %v6335
        %v6337 = vpop.f32.mrf.mxu0
        %v6338 = vadd.f32 %v6249, %v6337
        %6339 = vmatmul.bf16.gmra.mxu0 %v5103
        %v6340 = vpop.f32.mrf.mxu0
        %v6341 = vadd.f32 %v6252, %v6340
        %v6342 = vpop.f32.mrf.mxu0
        %v6343 = vadd.f32 %v6254, %v6342
        %6344 = vmatmul.bf16.gmra.mxu0 %v5112
        %v6345 = vpop.f32.mrf.mxu0
        %v6346 = vadd.f32 %v6257, %v6345
        %v6347 = vpop.f32.mrf.mxu0
        %v6348 = vadd.f32 %v6259, %v6347
        %6349 = vmatmul.bf16.gmra.mxu0 %v5121
        %v6350 = vpop.f32.mrf.mxu0
        %v6351 = vadd.f32 %v6262, %v6350
        %v6352 = vpop.f32.mrf.mxu0
        %v6353 = vadd.f32 %v6264, %v6352
        %6354 = vmatmul.bf16.gmra.mxu0 %v5130
        %v6355 = vpop.f32.mrf.mxu0
        %v6356 = vadd.f32 %v6267, %v6355
        %v6357 = vpop.f32.mrf.mxu0
        %v6358 = vadd.f32 %v6269, %v6357
        %6359 = vmatmul.bf16.gmra.mxu0 %v5139
        %v6360 = vpop.f32.mrf.mxu0
        %v6361 = vadd.f32 %v6272, %v6360
        %v6362 = vpop.f32.mrf.mxu0
        %v6363 = vadd.f32 %v6274, %v6362
        %6364 = vmatmul.bf16.gmra.mxu0 %v5148
        %v6365 = vpop.f32.mrf.mxu0
        %v6366 = vadd.f32 %v6277, %v6365
        %v6367 = vpop.f32.mrf.mxu0
        %v6368 = vadd.f32 %v6279, %v6367
        %6369 = vmatmul.bf16.gmra.mxu0 %v5157
        %v6370 = vpop.f32.mrf.mxu0
        %v6371 = vadd.f32 %v6282, %v6370
        %v6372 = vpop.f32.mrf.mxu0
        %v6373 = vadd.f32 %v6284, %v6372
        %6374 = vmatmul.bf16.gmra.mxu0 %v5166
        %v6375 = vpop.f32.mrf.mxu0
        %v6376 = vadd.f32 %v6287, %v6375
        %v6377 = vpop.f32.mrf.mxu0
        %v6378 = vadd.f32 %v6289, %v6377
        %6379 = vmatmul.bf16.gmra.mxu0 %v5175
        %v6380 = vpop.f32.mrf.mxu0
        %v6381 = vadd.f32 %v6292, %v6380
        %v6382 = vpop.f32.mrf.mxu0
        %v6383 = vadd.f32 %v6294, %v6382
        %6384 = vmatmul.bf16.gmra.mxu0 %v5184
        %v6385 = vpop.f32.mrf.mxu0
        %v6386 = vadd.f32 %v6297, %v6385
        %v6387 = vpop.f32.mrf.mxu0
        %v6388 = vadd.f32 %v6299, %v6387
        %6389 = vmatmul.bf16.gmra.mxu0 %v5193
        %v6390 = vpop.f32.mrf.mxu0
        %v6391 = vadd.f32 %v6302, %v6390
        %v6392 = vpop.f32.mrf.mxu0
        %v6393 = vadd.f32 %v6304, %v6392
        %6394 = vdwg.mxu0
        %6395 = vmatpush.bf16.msra.mxu0 %v5691
        %6396 = vmatpush.bf16.msra.mxu0 %v5690
        %6397 = vmatpush.bf16.msra.mxu0 %v5689
        %6398 = vmatpush.bf16.msra.mxu0 %v5688
        %6399 = vmatpush.bf16.msra.mxu0 %v5687
        %6400 = vmatpush.bf16.msra.mxu0 %v5686
        %6401 = vmatpush.bf16.msra.mxu0 %v5685
        %6402 = vmatpush.bf16.msra.mxu0 %v5684
        %6403 = vmatmul.bf16.gmra.mxu0 %v5059
        %v6404 = vpop.f32.mrf.mxu0
        %v6405 = vadd.f32 %v6316, %v6404
        %v6406 = vpop.f32.mrf.mxu0
        %v6407 = vadd.f32 %v6318, %v6406
        %6408 = vmatmul.bf16.gmra.mxu0 %v5068
        %v6409 = vpop.f32.mrf.mxu0
        %v6410 = vadd.f32 %v6321, %v6409
        %v6411 = vpop.f32.mrf.mxu0
        %v6412 = vadd.f32 %v6323, %v6411
        %6413 = vmatmul.bf16.gmra.mxu0 %v5077
        %v6414 = vpop.f32.mrf.mxu0
        %v6415 = vadd.f32 %v6326, %v6414
        %v6416 = vpop.f32.mrf.mxu0
        %v6417 = vadd.f32 %v6328, %v6416
        %6418 = vmatmul.bf16.gmra.mxu0 %v5086
        %v6419 = vpop.f32.mrf.mxu0
        %v6420 = vadd.f32 %v6331, %v6419
        %v6421 = vpop.f32.mrf.mxu0
        %v6422 = vadd.f32 %v6333, %v6421
        %6423 = vmatmul.bf16.gmra.mxu0 %v5095
        %v6424 = vpop.f32.mrf.mxu0
        %v6425 = vadd.f32 %v6336, %v6424
        %v6426 = vpop.f32.mrf.mxu0
        %v6427 = vadd.f32 %v6338, %v6426
        %6428 = vmatmul.bf16.gmra.mxu0 %v5104
        %v6429 = vpop.f32.mrf.mxu0
        %v6430 = vadd.f32 %v6341, %v6429
        %v6431 = vpop.f32.mrf.mxu0
        %v6432 = vadd.f32 %v6343, %v6431
        %6433 = vmatmul.bf16.gmra.mxu0 %v5113
        %v6434 = vpop.f32.mrf.mxu0
        %v6435 = vadd.f32 %v6346, %v6434
        %v6436 = vpop.f32.mrf.mxu0
        %v6437 = vadd.f32 %v6348, %v6436
        %6438 = vmatmul.bf16.gmra.mxu0 %v5122
        %v6439 = vpop.f32.mrf.mxu0
        %v6440 = vadd.f32 %v6351, %v6439
        %v6441 = vpop.f32.mrf.mxu0
        %v6442 = vadd.f32 %v6353, %v6441
        %6443 = vmatmul.bf16.gmra.mxu0 %v5131
        %v6444 = vpop.f32.mrf.mxu0
        %v6445 = vadd.f32 %v6356, %v6444
        %v6446 = vpop.f32.mrf.mxu0
        %v6447 = vadd.f32 %v6358, %v6446
        %6448 = vmatmul.bf16.gmra.mxu0 %v5140
        %v6449 = vpop.f32.mrf.mxu0
        %v6450 = vadd.f32 %v6361, %v6449
        %v6451 = vpop.f32.mrf.mxu0
        %v6452 = vadd.f32 %v6363, %v6451
        %6453 = vmatmul.bf16.gmra.mxu0 %v5149
        %v6454 = vpop.f32.mrf.mxu0
        %v6455 = vadd.f32 %v6366, %v6454
        %v6456 = vpop.f32.mrf.mxu0
        %v6457 = vadd.f32 %v6368, %v6456
        %6458 = vmatmul.bf16.gmra.mxu0 %v5158
        %v6459 = vpop.f32.mrf.mxu0
        %v6460 = vadd.f32 %v6371, %v6459
        %v6461 = vpop.f32.mrf.mxu0
        %v6462 = vadd.f32 %v6373, %v6461
        %6463 = vmatmul.bf16.gmra.mxu0 %v5167
        %v6464 = vpop.f32.mrf.mxu0
        %v6465 = vadd.f32 %v6376, %v6464
        %v6466 = vpop.f32.mrf.mxu0
        %v6467 = vadd.f32 %v6378, %v6466
        %6468 = vmatmul.bf16.gmra.mxu0 %v5176
        %v6469 = vpop.f32.mrf.mxu0
        %v6470 = vadd.f32 %v6381, %v6469
        %v6471 = vpop.f32.mrf.mxu0
        %v6472 = vadd.f32 %v6383, %v6471
        %6473 = vmatmul.bf16.gmra.mxu0 %v5185
        %v6474 = vpop.f32.mrf.mxu0
        %v6475 = vadd.f32 %v6386, %v6474
        %v6476 = vpop.f32.mrf.mxu0
        %v6477 = vadd.f32 %v6388, %v6476
        %6478 = vmatmul.bf16.gmra.mxu0 %v5194
        %v6479 = vpop.f32.mrf.mxu0
        %v6480 = vadd.f32 %v6391, %v6479
        %v6481 = vpop.f32.mrf.mxu0
        %v6482 = vadd.f32 %v6393, %v6481
        %6483 = vdwg.mxu0
        %6484 = vmatpush.bf16.msra.mxu0 %v5699
        %6485 = vmatpush.bf16.msra.mxu0 %v5698
        %6486 = vmatpush.bf16.msra.mxu0 %v5697
        %6487 = vmatpush.bf16.msra.mxu0 %v5696
        %6488 = vmatpush.bf16.msra.mxu0 %v5695
        %6489 = vmatpush.bf16.msra.mxu0 %v5694
        %6490 = vmatpush.bf16.msra.mxu0 %v5693
        %6491 = vmatpush.bf16.msra.mxu0 %v5692
        %6492 = vmatmul.bf16.gmra.mxu0 %v5060
        %v6493 = vpop.f32.mrf.mxu0
        %v6494 = vadd.f32 %v6405, %v6493
        %v6495 = vpop.f32.mrf.mxu0
        %v6496 = vadd.f32 %v6407, %v6495
        %6497 = vmatmul.bf16.gmra.mxu0 %v5069
        %v6498 = vpop.f32.mrf.mxu0
        %v6499 = vadd.f32 %v6410, %v6498
        %v6500 = vpop.f32.mrf.mxu0
        %v6501 = vadd.f32 %v6412, %v6500
        %6502 = vmatmul.bf16.gmra.mxu0 %v5078
        %v6503 = vpop.f32.mrf.mxu0
        %v6504 = vadd.f32 %v6415, %v6503
        %v6505 = vpop.f32.mrf.mxu0
        %v6506 = vadd.f32 %v6417, %v6505
        %6507 = vmatmul.bf16.gmra.mxu0 %v5087
        %v6508 = vpop.f32.mrf.mxu0
        %v6509 = vadd.f32 %v6420, %v6508
        %v6510 = vpop.f32.mrf.mxu0
        %v6511 = vadd.f32 %v6422, %v6510
        %6512 = vmatmul.bf16.gmra.mxu0 %v5096
        %v6513 = vpop.f32.mrf.mxu0
        %v6514 = vadd.f32 %v6425, %v6513
        %v6515 = vpop.f32.mrf.mxu0
        %v6516 = vadd.f32 %v6427, %v6515
        %6517 = vmatmul.bf16.gmra.mxu0 %v5105
        %v6518 = vpop.f32.mrf.mxu0
        %v6519 = vadd.f32 %v6430, %v6518
        %v6520 = vpop.f32.mrf.mxu0
        %v6521 = vadd.f32 %v6432, %v6520
        %6522 = vmatmul.bf16.gmra.mxu0 %v5114
        %v6523 = vpop.f32.mrf.mxu0
        %v6524 = vadd.f32 %v6435, %v6523
        %v6525 = vpop.f32.mrf.mxu0
        %v6526 = vadd.f32 %v6437, %v6525
        %6527 = vmatmul.bf16.gmra.mxu0 %v5123
        %v6528 = vpop.f32.mrf.mxu0
        %v6529 = vadd.f32 %v6440, %v6528
        %v6530 = vpop.f32.mrf.mxu0
        %v6531 = vadd.f32 %v6442, %v6530
        %6532 = vmatmul.bf16.gmra.mxu0 %v5132
        %v6533 = vpop.f32.mrf.mxu0
        %v6534 = vadd.f32 %v6445, %v6533
        %v6535 = vpop.f32.mrf.mxu0
        %v6536 = vadd.f32 %v6447, %v6535
        %6537 = vmatmul.bf16.gmra.mxu0 %v5141
        %v6538 = vpop.f32.mrf.mxu0
        %v6539 = vadd.f32 %v6450, %v6538
        %v6540 = vpop.f32.mrf.mxu0
        %v6541 = vadd.f32 %v6452, %v6540
        %6542 = vmatmul.bf16.gmra.mxu0 %v5150
        %v6543 = vpop.f32.mrf.mxu0
        %v6544 = vadd.f32 %v6455, %v6543
        %v6545 = vpop.f32.mrf.mxu0
        %v6546 = vadd.f32 %v6457, %v6545
        %6547 = vmatmul.bf16.gmra.mxu0 %v5159
        %v6548 = vpop.f32.mrf.mxu0
        %v6549 = vadd.f32 %v6460, %v6548
        %v6550 = vpop.f32.mrf.mxu0
        %v6551 = vadd.f32 %v6462, %v6550
        %6552 = vmatmul.bf16.gmra.mxu0 %v5168
        %v6553 = vpop.f32.mrf.mxu0
        %v6554 = vadd.f32 %v6465, %v6553
        %v6555 = vpop.f32.mrf.mxu0
        %v6556 = vadd.f32 %v6467, %v6555
        %6557 = vmatmul.bf16.gmra.mxu0 %v5177
        %v6558 = vpop.f32.mrf.mxu0
        %v6559 = vadd.f32 %v6470, %v6558
        %v6560 = vpop.f32.mrf.mxu0
        %v6561 = vadd.f32 %v6472, %v6560
        %6562 = vmatmul.bf16.gmra.mxu0 %v5186
        %v6563 = vpop.f32.mrf.mxu0
        %v6564 = vadd.f32 %v6475, %v6563
        %v6565 = vpop.f32.mrf.mxu0
        %v6566 = vadd.f32 %v6477, %v6565
        %6567 = vmatmul.bf16.gmra.mxu0 %v5195
        %v6568 = vpop.f32.mrf.mxu0
        %v6569 = vadd.f32 %v6480, %v6568
        %v6570 = vpop.f32.mrf.mxu0
        %v6571 = vadd.f32 %v6482, %v6570
        %6572 = vdwg.mxu0
        %v6573 = vmax.f32 %v6494, 0.0
        %v6574 = vmax.f32 %v6496, 0.0
        %v6575 = vmax.f32 %v6499, 0.0
        %v6576 = vmax.f32 %v6501, 0.0
        %v6577 = vmax.f32 %v6504, 0.0
        %v6578 = vmax.f32 %v6506, 0.0
        %v6579 = vmax.f32 %v6509, 0.0
        %v6580 = vmax.f32 %v6511, 0.0
        %v6581 = vmax.f32 %v6514, 0.0
        %v6582 = vmax.f32 %v6516, 0.0
        %v6583 = vmax.f32 %v6519, 0.0
        %v6584 = vmax.f32 %v6521, 0.0
        %v6585 = vmax.f32 %v6524, 0.0
        %v6586 = vmax.f32 %v6526, 0.0
        %v6587 = vmax.f32 %v6529, 0.0
        %v6588 = vmax.f32 %v6531, 0.0
        %v6589 = vmax.f32 %v6534, 0.0
        %v6590 = vmax.f32 %v6536, 0.0
        %v6591 = vmax.f32 %v6539, 0.0
        %v6592 = vmax.f32 %v6541, 0.0
        %v6593 = vmax.f32 %v6544, 0.0
        %v6594 = vmax.f32 %v6546, 0.0
        %v6595 = vmax.f32 %v6549, 0.0
        %v6596 = vmax.f32 %v6551, 0.0
        %v6597 = vmax.f32 %v6554, 0.0
        %v6598 = vmax.f32 %v6556, 0.0
        %v6599 = vmax.f32 %v6559, 0.0
        %v6600 = vmax.f32 %v6561, 0.0
        %v6601 = vmax.f32 %v6564, 0.0
        %v6602 = vmax.f32 %v6566, 0.0
        %v6603 = vmax.f32 %v6569, 0.0
        %v6604 = vmax.f32 %v6571, 0.0
        %v6605 = vpack.c.bf16 %v6574, %v6573
        %v6606 = vpack.c.bf16 %v6576, %v6575
        %v6607 = vpack.c.bf16 %v6578, %v6577
        %v6608 = vpack.c.bf16 %v6580, %v6579
        %v6609 = vpack.c.bf16 %v6582, %v6581
        %v6610 = vpack.c.bf16 %v6584, %v6583
        %v6611 = vpack.c.bf16 %v6586, %v6585
        %v6612 = vpack.c.bf16 %v6588, %v6587
        %v6613 = vpack.c.bf16 %v6590, %v6589
        %v6614 = vpack.c.bf16 %v6592, %v6591
        %v6615 = vpack.c.bf16 %v6594, %v6593
        %v6616 = vpack.c.bf16 %v6596, %v6595
        %v6617 = vpack.c.bf16 %v6598, %v6597
        %v6618 = vpack.c.bf16 %v6600, %v6599
        %v6619 = vpack.c.bf16 %v6602, %v6601
        %v6620 = vpack.c.bf16 %v6604, %v6603
        %v6621 = vld [vmem:[#allocation12] sm:$0xff]
        %v6622 = vld [vmem:[#allocation12 + $0x8] sm:$0xff]
        %v6623 = vld [vmem:[#allocation12 + $0x10] sm:$0xff]
        %v6624 = vld [vmem:[#allocation12 + $0x18] sm:$0xff]
        %v6625 = vld [vmem:[#allocation12 + $0x20] sm:$0xff]
        %v6626 = vld [vmem:[#allocation12 + $0x28] sm:$0xff]
        %v6627 = vld [vmem:[#allocation12 + $0x30] sm:$0xff]
        %v6628 = vld [vmem:[#allocation12 + $0x38] sm:$0xff]
        %v6629 = vld [vmem:[#allocation12 + $0x40] sm:$0xff]
        %v6630 = vld [vmem:[#allocation12 + $0x48] sm:$0xff]
        %v6631 = vld [vmem:[#allocation12 + $0x50] sm:$0xff]
        %v6632 = vld [vmem:[#allocation12 + $0x58] sm:$0xff]
        %v6633 = vld [vmem:[#allocation12 + $0x60] sm:$0xff]
        %v6634 = vld [vmem:[#allocation12 + $0x68] sm:$0xff]
        %v6635 = vld [vmem:[#allocation12 + $0x70] sm:$0xff]
        %v6636 = vld [vmem:[#allocation12 + $0x78] sm:$0xff]
        %v6637 = vld [vmem:[#allocation12 + $0x80] sm:$0xff]
        %v6638 = vld [vmem:[#allocation12 + $0x88] sm:$0xff]
        %v6639 = vld [vmem:[#allocation12 + $0x90] sm:$0xff]
        %v6640 = vld [vmem:[#allocation12 + $0x98] sm:$0xff]
        %v6641 = vld [vmem:[#allocation12 + $0xa0] sm:$0xff]
        %v6642 = vld [vmem:[#allocation12 + $0xa8] sm:$0xff]
        %v6643 = vld [vmem:[#allocation12 + $0xb0] sm:$0xff]
        %v6644 = vld [vmem:[#allocation12 + $0xb8] sm:$0xff]
        %v6645 = vld [vmem:[#allocation12 + $0xc0] sm:$0xff]
        %v6646 = vld [vmem:[#allocation12 + $0xc8] sm:$0xff]
        %v6647 = vld [vmem:[#allocation12 + $0xd0] sm:$0xff]
        %v6648 = vld [vmem:[#allocation12 + $0xd8] sm:$0xff]
        %v6649 = vld [vmem:[#allocation12 + $0xe0] sm:$0xff]
        %v6650 = vld [vmem:[#allocation12 + $0xe8] sm:$0xff]
        %v6651 = vld [vmem:[#allocation12 + $0xf0] sm:$0xff]
        %v6652 = vld [vmem:[#allocation12 + $0xf8] sm:$0xff]
        %v6653 = vld [vmem:[%s6] sm:$0xf]
        %v6655 = vperm.slane %v6653, 0
        %v6656 = vperm.slane %v6653, 1
        %v6657 = vperm.slane %v6653, 2
        %v6658 = vperm.slane %v6653, 3
        %v6695 = vunpack.c.l.b16 %v6621
        %v6696 = vunpack.c.h.b16 %v6621
        %v6697 = vunpack.c.l.b16 %v6622
        %v6698 = vunpack.c.h.b16 %v6622
        %v6699 = vunpack.c.l.b16 %v6623
        %v6700 = vunpack.c.h.b16 %v6623
        %v6701 = vunpack.c.l.b16 %v6624
        %v6702 = vunpack.c.h.b16 %v6624
        %v6703 = vunpack.c.l.b16 %v6625
        %v6704 = vunpack.c.h.b16 %v6625
        %v6705 = vunpack.c.l.b16 %v6626
        %v6706 = vunpack.c.h.b16 %v6626
        %v6707 = vunpack.c.l.b16 %v6627
        %v6708 = vunpack.c.h.b16 %v6627
        %v6709 = vunpack.c.l.b16 %v6628
        %v6710 = vunpack.c.h.b16 %v6628
        %v6711 = vunpack.c.l.b16 %v6629
        %v6712 = vunpack.c.h.b16 %v6629
        %v6713 = vunpack.c.l.b16 %v6630
        %v6714 = vunpack.c.h.b16 %v6630
        %v6715 = vunpack.c.l.b16 %v6631
        %v6716 = vunpack.c.h.b16 %v6631
        %v6717 = vunpack.c.l.b16 %v6632
        %v6718 = vunpack.c.h.b16 %v6632
        %v6719 = vunpack.c.l.b16 %v6633
        %v6720 = vunpack.c.h.b16 %v6633
        %v6721 = vunpack.c.l.b16 %v6634
        %v6722 = vunpack.c.h.b16 %v6634
        %v6723 = vunpack.c.l.b16 %v6635
        %v6724 = vunpack.c.h.b16 %v6635
        %v6725 = vunpack.c.l.b16 %v6636
        %v6726 = vunpack.c.h.b16 %v6636
        %v6727 = vunpack.c.l.b16 %v6637
        %v6728 = vunpack.c.h.b16 %v6637
        %v6729 = vunpack.c.l.b16 %v6638
        %v6730 = vunpack.c.h.b16 %v6638
        %v6731 = vunpack.c.l.b16 %v6639
        %v6732 = vunpack.c.h.b16 %v6639
        %v6733 = vunpack.c.l.b16 %v6640
        %v6734 = vunpack.c.h.b16 %v6640
        %v6735 = vunpack.c.l.b16 %v6641
        %v6736 = vunpack.c.h.b16 %v6641
        %v6737 = vunpack.c.l.b16 %v6642
        %v6738 = vunpack.c.h.b16 %v6642
        %v6739 = vunpack.c.l.b16 %v6643
        %v6740 = vunpack.c.h.b16 %v6643
        %v6741 = vunpack.c.l.b16 %v6644
        %v6742 = vunpack.c.h.b16 %v6644
        %v6743 = vunpack.c.l.b16 %v6645
        %v6744 = vunpack.c.h.b16 %v6645
        %v6745 = vunpack.c.l.b16 %v6646
        %v6746 = vunpack.c.h.b16 %v6646
        %v6747 = vunpack.c.l.b16 %v6647
        %v6748 = vunpack.c.h.b16 %v6647
        %v6749 = vunpack.c.l.b16 %v6648
        %v6750 = vunpack.c.h.b16 %v6648
        %v6751 = vunpack.c.l.b16 %v6649
        %v6752 = vunpack.c.h.b16 %v6649
        %v6753 = vunpack.c.l.b16 %v6650
        %v6754 = vunpack.c.h.b16 %v6650
        %v6755 = vunpack.c.l.b16 %v6651
        %v6756 = vunpack.c.h.b16 %v6651
        %v6757 = vunpack.c.l.b16 %v6652
        %v6758 = vunpack.c.h.b16 %v6652
        %v6759 = vpack.c.b16 %v6699, %v6695
        %v6760 = vpack.c.b16 %v6700, %v6696
        %v6761 = vpack.c.b16 %v6701, %v6697
        %v6762 = vpack.c.b16 %v6702, %v6698
        %v6763 = vpack.c.b16 %v6707, %v6703
        %v6764 = vpack.c.b16 %v6708, %v6704
        %v6765 = vpack.c.b16 %v6709, %v6705
        %v6766 = vpack.c.b16 %v6710, %v6706
        %v6767 = vpack.c.b16 %v6715, %v6711
        %v6768 = vpack.c.b16 %v6716, %v6712
        %v6769 = vpack.c.b16 %v6717, %v6713
        %v6770 = vpack.c.b16 %v6718, %v6714
        %v6771 = vpack.c.b16 %v6723, %v6719
        %v6772 = vpack.c.b16 %v6724, %v6720
        %v6773 = vpack.c.b16 %v6725, %v6721
        %v6774 = vpack.c.b16 %v6726, %v6722
        %v6775 = vpack.c.b16 %v6731, %v6727
        %v6776 = vpack.c.b16 %v6732, %v6728
        %v6777 = vpack.c.b16 %v6733, %v6729
        %v6778 = vpack.c.b16 %v6734, %v6730
        %v6779 = vpack.c.b16 %v6739, %v6735
        %v6780 = vpack.c.b16 %v6740, %v6736
        %v6781 = vpack.c.b16 %v6741, %v6737
        %v6782 = vpack.c.b16 %v6742, %v6738
        %v6783 = vpack.c.b16 %v6747, %v6743
        %v6784 = vpack.c.b16 %v6748, %v6744
        %v6785 = vpack.c.b16 %v6749, %v6745
        %v6786 = vpack.c.b16 %v6750, %v6746
        %v6787 = vpack.c.b16 %v6755, %v6751
        %v6788 = vpack.c.b16 %v6756, %v6752
        %v6789 = vpack.c.b16 %v6757, %v6753
        %v6790 = vpack.c.b16 %v6758, %v6754
        %6823 = vmatpush.bf16.msra.mxu0 %v6787
        %6824 = vmatpush.bf16.msra.mxu0 %v6783
        %6825 = vmatpush.bf16.msra.mxu0 %v6779
        %6826 = vmatpush.bf16.msra.mxu0 %v6775
        %6827 = vmatpush.bf16.msra.mxu0 %v6771
        %6828 = vmatpush.bf16.msra.mxu0 %v6767
        %6829 = vmatpush.bf16.msra.mxu0 %v6763
        %6830 = vmatpush.bf16.msra.mxu0 %v6759
        %6831 = vmatmul.bf16.gmra.mxu0 %v6605
        %v6832 = vpop.f32.mrf.mxu0
        %v6833 = vadd.f32 %v6655, %v6832
        %v6834 = vpop.f32.mrf.mxu0
        %v6835 = vadd.f32 %v6655, %v6834
        %6836 = vmatmul.bf16.gmra.mxu0 %v6606
        %v6837 = vpop.f32.mrf.mxu0
        %v6838 = vadd.f32 %v6655, %v6837
        %v6839 = vpop.f32.mrf.mxu0
        %v6840 = vadd.f32 %v6655, %v6839
        %6841 = vmatmul.bf16.gmra.mxu0 %v6607
        %v6842 = vpop.f32.mrf.mxu0
        %v6843 = vadd.f32 %v6655, %v6842
        %v6844 = vpop.f32.mrf.mxu0
        %v6845 = vadd.f32 %v6655, %v6844
        %6846 = vmatmul.bf16.gmra.mxu0 %v6608
        %v6847 = vpop.f32.mrf.mxu0
        %v6848 = vadd.f32 %v6655, %v6847
        %v6849 = vpop.f32.mrf.mxu0
        %v6850 = vadd.f32 %v6655, %v6849
        %6851 = vmatmul.bf16.gmra.mxu0 %v6609
        %v6852 = vpop.f32.mrf.mxu0
        %v6853 = vadd.f32 %v6655, %v6852
        %v6854 = vpop.f32.mrf.mxu0
        %v6855 = vadd.f32 %v6655, %v6854
        %6856 = vmatmul.bf16.gmra.mxu0 %v6610
        %v6857 = vpop.f32.mrf.mxu0
        %v6858 = vadd.f32 %v6655, %v6857
        %v6859 = vpop.f32.mrf.mxu0
        %v6860 = vadd.f32 %v6655, %v6859
        %6861 = vmatmul.bf16.gmra.mxu0 %v6611
        %v6862 = vpop.f32.mrf.mxu0
        %v6863 = vadd.f32 %v6655, %v6862
        %v6864 = vpop.f32.mrf.mxu0
        %v6865 = vadd.f32 %v6655, %v6864
        %6866 = vmatmul.bf16.gmra.mxu0 %v6612
        %v6867 = vpop.f32.mrf.mxu0
        %v6868 = vadd.f32 %v6655, %v6867
        %v6869 = vpop.f32.mrf.mxu0
        %v6870 = vadd.f32 %v6655, %v6869
        %6871 = vmatmul.bf16.gmra.mxu0 %v6613
        %v6872 = vpop.f32.mrf.mxu0
        %v6873 = vadd.f32 %v6655, %v6872
        %v6874 = vpop.f32.mrf.mxu0
        %v6875 = vadd.f32 %v6655, %v6874
        %6876 = vmatmul.bf16.gmra.mxu0 %v6614
        %v6877 = vpop.f32.mrf.mxu0
        %v6878 = vadd.f32 %v6655, %v6877
        %v6879 = vpop.f32.mrf.mxu0
        %v6880 = vadd.f32 %v6655, %v6879
        %6881 = vmatmul.bf16.gmra.mxu0 %v6615
        %v6882 = vpop.f32.mrf.mxu0
        %v6883 = vadd.f32 %v6655, %v6882
        %v6884 = vpop.f32.mrf.mxu0
        %v6885 = vadd.f32 %v6655, %v6884
        %6886 = vmatmul.bf16.gmra.mxu0 %v6616
        %v6887 = vpop.f32.mrf.mxu0
        %v6888 = vadd.f32 %v6655, %v6887
        %v6889 = vpop.f32.mrf.mxu0
        %v6890 = vadd.f32 %v6655, %v6889
        %6891 = vmatmul.bf16.gmra.mxu0 %v6617
        %v6892 = vpop.f32.mrf.mxu0
        %v6893 = vadd.f32 %v6655, %v6892
        %v6894 = vpop.f32.mrf.mxu0
        %v6895 = vadd.f32 %v6655, %v6894
        %6896 = vmatmul.bf16.gmra.mxu0 %v6618
        %v6897 = vpop.f32.mrf.mxu0
        %v6898 = vadd.f32 %v6655, %v6897
        %v6899 = vpop.f32.mrf.mxu0
        %v6900 = vadd.f32 %v6655, %v6899
        %6901 = vmatmul.bf16.gmra.mxu0 %v6619
        %v6902 = vpop.f32.mrf.mxu0
        %v6903 = vadd.f32 %v6655, %v6902
        %v6904 = vpop.f32.mrf.mxu0
        %v6905 = vadd.f32 %v6655, %v6904
        %6906 = vmatmul.bf16.gmra.mxu0 %v6620
        %v6907 = vpop.f32.mrf.mxu0
        %v6908 = vadd.f32 %v6655, %v6907
        %v6909 = vpop.f32.mrf.mxu0
        %v6910 = vadd.f32 %v6655, %v6909
        %6911 = vdwg.mxu0
        %6912 = vmatpush.bf16.msra.mxu0 %v6788
        %6913 = vmatpush.bf16.msra.mxu0 %v6784
        %6914 = vmatpush.bf16.msra.mxu0 %v6780
        %6915 = vmatpush.bf16.msra.mxu0 %v6776
        %6916 = vmatpush.bf16.msra.mxu0 %v6772
        %6917 = vmatpush.bf16.msra.mxu0 %v6768
        %6918 = vmatpush.bf16.msra.mxu0 %v6764
        %6919 = vmatpush.bf16.msra.mxu0 %v6760
        %6920 = vmatmul.bf16.gmra.mxu0 %v6605
        %v6921 = vpop.f32.mrf.mxu0
        %v6922 = vadd.f32 %v6656, %v6921
        %v6923 = vpop.f32.mrf.mxu0
        %v6924 = vadd.f32 %v6656, %v6923
        %6925 = vmatmul.bf16.gmra.mxu0 %v6606
        %v6926 = vpop.f32.mrf.mxu0
        %v6927 = vadd.f32 %v6656, %v6926
        %v6928 = vpop.f32.mrf.mxu0
        %v6929 = vadd.f32 %v6656, %v6928
        %6930 = vmatmul.bf16.gmra.mxu0 %v6607
        %v6931 = vpop.f32.mrf.mxu0
        %v6932 = vadd.f32 %v6656, %v6931
        %v6933 = vpop.f32.mrf.mxu0
        %v6934 = vadd.f32 %v6656, %v6933
        %6935 = vmatmul.bf16.gmra.mxu0 %v6608
        %v6936 = vpop.f32.mrf.mxu0
        %v6937 = vadd.f32 %v6656, %v6936
        %v6938 = vpop.f32.mrf.mxu0
        %v6939 = vadd.f32 %v6656, %v6938
        %6940 = vmatmul.bf16.gmra.mxu0 %v6609
        %v6941 = vpop.f32.mrf.mxu0
        %v6942 = vadd.f32 %v6656, %v6941
        %v6943 = vpop.f32.mrf.mxu0
        %v6944 = vadd.f32 %v6656, %v6943
        %6945 = vmatmul.bf16.gmra.mxu0 %v6610
        %v6946 = vpop.f32.mrf.mxu0
        %v6947 = vadd.f32 %v6656, %v6946
        %v6948 = vpop.f32.mrf.mxu0
        %v6949 = vadd.f32 %v6656, %v6948
        %6950 = vmatmul.bf16.gmra.mxu0 %v6611
        %v6951 = vpop.f32.mrf.mxu0
        %v6952 = vadd.f32 %v6656, %v6951
        %v6953 = vpop.f32.mrf.mxu0
        %v6954 = vadd.f32 %v6656, %v6953
        %6955 = vmatmul.bf16.gmra.mxu0 %v6612
        %v6956 = vpop.f32.mrf.mxu0
        %v6957 = vadd.f32 %v6656, %v6956
        %v6958 = vpop.f32.mrf.mxu0
        %v6959 = vadd.f32 %v6656, %v6958
        %6960 = vmatmul.bf16.gmra.mxu0 %v6613
        %v6961 = vpop.f32.mrf.mxu0
        %v6962 = vadd.f32 %v6656, %v6961
        %v6963 = vpop.f32.mrf.mxu0
        %v6964 = vadd.f32 %v6656, %v6963
        %6965 = vmatmul.bf16.gmra.mxu0 %v6614
        %v6966 = vpop.f32.mrf.mxu0
        %v6967 = vadd.f32 %v6656, %v6966
        %v6968 = vpop.f32.mrf.mxu0
        %v6969 = vadd.f32 %v6656, %v6968
        %6970 = vmatmul.bf16.gmra.mxu0 %v6615
        %v6971 = vpop.f32.mrf.mxu0
        %v6972 = vadd.f32 %v6656, %v6971
        %v6973 = vpop.f32.mrf.mxu0
        %v6974 = vadd.f32 %v6656, %v6973
        %6975 = vmatmul.bf16.gmra.mxu0 %v6616
        %v6976 = vpop.f32.mrf.mxu0
        %v6977 = vadd.f32 %v6656, %v6976
        %v6978 = vpop.f32.mrf.mxu0
        %v6979 = vadd.f32 %v6656, %v6978
        %6980 = vmatmul.bf16.gmra.mxu0 %v6617
        %v6981 = vpop.f32.mrf.mxu0
        %v6982 = vadd.f32 %v6656, %v6981
        %v6983 = vpop.f32.mrf.mxu0
        %v6984 = vadd.f32 %v6656, %v6983
        %6985 = vmatmul.bf16.gmra.mxu0 %v6618
        %v6986 = vpop.f32.mrf.mxu0
        %v6987 = vadd.f32 %v6656, %v6986
        %v6988 = vpop.f32.mrf.mxu0
        %v6989 = vadd.f32 %v6656, %v6988
        %6990 = vmatmul.bf16.gmra.mxu0 %v6619
        %v6991 = vpop.f32.mrf.mxu0
        %v6992 = vadd.f32 %v6656, %v6991
        %v6993 = vpop.f32.mrf.mxu0
        %v6994 = vadd.f32 %v6656, %v6993
        %6995 = vmatmul.bf16.gmra.mxu0 %v6620
        %v6996 = vpop.f32.mrf.mxu0
        %v6997 = vadd.f32 %v6656, %v6996
        %v6998 = vpop.f32.mrf.mxu0
        %v6999 = vadd.f32 %v6656, %v6998
        %7000 = vdwg.mxu0
        %7001 = vmatpush.bf16.msra.mxu0 %v6789
        %7002 = vmatpush.bf16.msra.mxu0 %v6785
        %7003 = vmatpush.bf16.msra.mxu0 %v6781
        %7004 = vmatpush.bf16.msra.mxu0 %v6777
        %7005 = vmatpush.bf16.msra.mxu0 %v6773
        %7006 = vmatpush.bf16.msra.mxu0 %v6769
        %7007 = vmatpush.bf16.msra.mxu0 %v6765
        %7008 = vmatpush.bf16.msra.mxu0 %v6761
        %7009 = vmatmul.bf16.gmra.mxu0 %v6605
        %v7010 = vpop.f32.mrf.mxu0
        %v7011 = vadd.f32 %v6657, %v7010
        %v7012 = vpop.f32.mrf.mxu0
        %v7013 = vadd.f32 %v6657, %v7012
        %7014 = vmatmul.bf16.gmra.mxu0 %v6606
        %v7015 = vpop.f32.mrf.mxu0
        %v7016 = vadd.f32 %v6657, %v7015
        %v7017 = vpop.f32.mrf.mxu0
        %v7018 = vadd.f32 %v6657, %v7017
        %7019 = vmatmul.bf16.gmra.mxu0 %v6607
        %v7020 = vpop.f32.mrf.mxu0
        %v7021 = vadd.f32 %v6657, %v7020
        %v7022 = vpop.f32.mrf.mxu0
        %v7023 = vadd.f32 %v6657, %v7022
        %7024 = vmatmul.bf16.gmra.mxu0 %v6608
        %v7025 = vpop.f32.mrf.mxu0
        %v7026 = vadd.f32 %v6657, %v7025
        %v7027 = vpop.f32.mrf.mxu0
        %v7028 = vadd.f32 %v6657, %v7027
        %7029 = vmatmul.bf16.gmra.mxu0 %v6609
        %v7030 = vpop.f32.mrf.mxu0
        %v7031 = vadd.f32 %v6657, %v7030
        %v7032 = vpop.f32.mrf.mxu0
        %v7033 = vadd.f32 %v6657, %v7032
        %7034 = vmatmul.bf16.gmra.mxu0 %v6610
        %v7035 = vpop.f32.mrf.mxu0
        %v7036 = vadd.f32 %v6657, %v7035
        %v7037 = vpop.f32.mrf.mxu0
        %v7038 = vadd.f32 %v6657, %v7037
        %7039 = vmatmul.bf16.gmra.mxu0 %v6611
        %v7040 = vpop.f32.mrf.mxu0
        %v7041 = vadd.f32 %v6657, %v7040
        %v7042 = vpop.f32.mrf.mxu0
        %v7043 = vadd.f32 %v6657, %v7042
        %7044 = vmatmul.bf16.gmra.mxu0 %v6612
        %v7045 = vpop.f32.mrf.mxu0
        %v7046 = vadd.f32 %v6657, %v7045
        %v7047 = vpop.f32.mrf.mxu0
        %v7048 = vadd.f32 %v6657, %v7047
        %7049 = vmatmul.bf16.gmra.mxu0 %v6613
        %v7050 = vpop.f32.mrf.mxu0
        %v7051 = vadd.f32 %v6657, %v7050
        %v7052 = vpop.f32.mrf.mxu0
        %v7053 = vadd.f32 %v6657, %v7052
        %7054 = vmatmul.bf16.gmra.mxu0 %v6614
        %v7055 = vpop.f32.mrf.mxu0
        %v7056 = vadd.f32 %v6657, %v7055
        %v7057 = vpop.f32.mrf.mxu0
        %v7058 = vadd.f32 %v6657, %v7057
        %7059 = vmatmul.bf16.gmra.mxu0 %v6615
        %v7060 = vpop.f32.mrf.mxu0
        %v7061 = vadd.f32 %v6657, %v7060
        %v7062 = vpop.f32.mrf.mxu0
        %v7063 = vadd.f32 %v6657, %v7062
        %7064 = vmatmul.bf16.gmra.mxu0 %v6616
        %v7065 = vpop.f32.mrf.mxu0
        %v7066 = vadd.f32 %v6657, %v7065
        %v7067 = vpop.f32.mrf.mxu0
        %v7068 = vadd.f32 %v6657, %v7067
        %7069 = vmatmul.bf16.gmra.mxu0 %v6617
        %v7070 = vpop.f32.mrf.mxu0
        %v7071 = vadd.f32 %v6657, %v7070
        %v7072 = vpop.f32.mrf.mxu0
        %v7073 = vadd.f32 %v6657, %v7072
        %7074 = vmatmul.bf16.gmra.mxu0 %v6618
        %v7075 = vpop.f32.mrf.mxu0
        %v7076 = vadd.f32 %v6657, %v7075
        %v7077 = vpop.f32.mrf.mxu0
        %v7078 = vadd.f32 %v6657, %v7077
        %7079 = vmatmul.bf16.gmra.mxu0 %v6619
        %v7080 = vpop.f32.mrf.mxu0
        %v7081 = vadd.f32 %v6657, %v7080
        %v7082 = vpop.f32.mrf.mxu0
        %v7083 = vadd.f32 %v6657, %v7082
        %7084 = vmatmul.bf16.gmra.mxu0 %v6620
        %v7085 = vpop.f32.mrf.mxu0
        %v7086 = vadd.f32 %v6657, %v7085
        %v7087 = vpop.f32.mrf.mxu0
        %v7088 = vadd.f32 %v6657, %v7087
        %7089 = vdwg.mxu0
        %7090 = vmatpush.bf16.msra.mxu0 %v6790
        %7091 = vmatpush.bf16.msra.mxu0 %v6786
        %7092 = vmatpush.bf16.msra.mxu0 %v6782
        %7093 = vmatpush.bf16.msra.mxu0 %v6778
        %7094 = vmatpush.bf16.msra.mxu0 %v6774
        %7095 = vmatpush.bf16.msra.mxu0 %v6770
        %7096 = vmatpush.bf16.msra.mxu0 %v6766
        %7097 = vmatpush.bf16.msra.mxu0 %v6762
        %7098 = vmatmul.bf16.gmra.mxu0 %v6605
        %v7099 = vpop.f32.mrf.mxu0
        %v7100 = vadd.f32 %v6658, %v7099
        %v7101 = vpop.f32.mrf.mxu0
        %v7102 = vadd.f32 %v6658, %v7101
        %7103 = vmatmul.bf16.gmra.mxu0 %v6606
        %v7104 = vpop.f32.mrf.mxu0
        %v7105 = vadd.f32 %v6658, %v7104
        %v7106 = vpop.f32.mrf.mxu0
        %v7107 = vadd.f32 %v6658, %v7106
        %7108 = vmatmul.bf16.gmra.mxu0 %v6607
        %v7109 = vpop.f32.mrf.mxu0
        %v7110 = vadd.f32 %v6658, %v7109
        %v7111 = vpop.f32.mrf.mxu0
        %v7112 = vadd.f32 %v6658, %v7111
        %7113 = vmatmul.bf16.gmra.mxu0 %v6608
        %v7114 = vpop.f32.mrf.mxu0
        %v7115 = vadd.f32 %v6658, %v7114
        %v7116 = vpop.f32.mrf.mxu0
        %v7117 = vadd.f32 %v6658, %v7116
        %7118 = vmatmul.bf16.gmra.mxu0 %v6609
        %v7119 = vpop.f32.mrf.mxu0
        %v7120 = vadd.f32 %v6658, %v7119
        %v7121 = vpop.f32.mrf.mxu0
        %v7122 = vadd.f32 %v6658, %v7121
        %7123 = vmatmul.bf16.gmra.mxu0 %v6610
        %v7124 = vpop.f32.mrf.mxu0
        %v7125 = vadd.f32 %v6658, %v7124
        %v7126 = vpop.f32.mrf.mxu0
        %v7127 = vadd.f32 %v6658, %v7126
        %7128 = vmatmul.bf16.gmra.mxu0 %v6611
        %v7129 = vpop.f32.mrf.mxu0
        %v7130 = vadd.f32 %v6658, %v7129
        %v7131 = vpop.f32.mrf.mxu0
        %v7132 = vadd.f32 %v6658, %v7131
        %7133 = vmatmul.bf16.gmra.mxu0 %v6612
        %v7134 = vpop.f32.mrf.mxu0
        %v7135 = vadd.f32 %v6658, %v7134
        %v7136 = vpop.f32.mrf.mxu0
        %v7137 = vadd.f32 %v6658, %v7136
        %7138 = vmatmul.bf16.gmra.mxu0 %v6613
        %v7139 = vpop.f32.mrf.mxu0
        %v7140 = vadd.f32 %v6658, %v7139
        %v7141 = vpop.f32.mrf.mxu0
        %v7142 = vadd.f32 %v6658, %v7141
        %7143 = vmatmul.bf16.gmra.mxu0 %v6614
        %v7144 = vpop.f32.mrf.mxu0
        %v7145 = vadd.f32 %v6658, %v7144
        %v7146 = vpop.f32.mrf.mxu0
        %v7147 = vadd.f32 %v6658, %v7146
        %7148 = vmatmul.bf16.gmra.mxu0 %v6615
        %v7149 = vpop.f32.mrf.mxu0
        %v7150 = vadd.f32 %v6658, %v7149
        %v7151 = vpop.f32.mrf.mxu0
        %v7152 = vadd.f32 %v6658, %v7151
        %7153 = vmatmul.bf16.gmra.mxu0 %v6616
        %v7154 = vpop.f32.mrf.mxu0
        %v7155 = vadd.f32 %v6658, %v7154
        %v7156 = vpop.f32.mrf.mxu0
        %v7157 = vadd.f32 %v6658, %v7156
        %7158 = vmatmul.bf16.gmra.mxu0 %v6617
        %v7159 = vpop.f32.mrf.mxu0
        %v7160 = vadd.f32 %v6658, %v7159
        %v7161 = vpop.f32.mrf.mxu0
        %v7162 = vadd.f32 %v6658, %v7161
        %7163 = vmatmul.bf16.gmra.mxu0 %v6618
        %v7164 = vpop.f32.mrf.mxu0
        %v7165 = vadd.f32 %v6658, %v7164
        %v7166 = vpop.f32.mrf.mxu0
        %v7167 = vadd.f32 %v6658, %v7166
        %7168 = vmatmul.bf16.gmra.mxu0 %v6619
        %v7169 = vpop.f32.mrf.mxu0
        %v7170 = vadd.f32 %v6658, %v7169
        %v7171 = vpop.f32.mrf.mxu0
        %v7172 = vadd.f32 %v6658, %v7171
        %7173 = vmatmul.bf16.gmra.mxu0 %v6620
        %v7174 = vpop.f32.mrf.mxu0
        %v7175 = vadd.f32 %v6658, %v7174
        %v7176 = vpop.f32.mrf.mxu0
        %v7177 = vadd.f32 %v6658, %v7176
        %7178 = vdwg.mxu0
        %v7179 = vadd.f32 %v6833, %v364
        %v7180 = vadd.f32 %v6922, %v365
        %v7181 = vadd.f32 %v7011, %v366
        %v7182 = vadd.f32 %v7100, %v367
        %v7183 = vadd.f32 %v6835, %v368
        %v7184 = vadd.f32 %v6924, %v369
        %v7185 = vadd.f32 %v7013, %v370
        %v7186 = vadd.f32 %v7102, %v371
        %v7187 = vadd.f32 %v6838, %v372
        %v7188 = vadd.f32 %v6927, %v373
        %v7189 = vadd.f32 %v7016, %v374
        %v7190 = vadd.f32 %v7105, %v375
        %v7191 = vadd.f32 %v6840, %v376
        %v7192 = vadd.f32 %v6929, %v377
        %v7193 = vadd.f32 %v7018, %v378
        %v7194 = vadd.f32 %v7107, %v379
        %v7195 = vadd.f32 %v6843, %v380
        %v7196 = vadd.f32 %v6932, %v381
        %v7197 = vadd.f32 %v7021, %v382
        %v7198 = vadd.f32 %v7110, %v383
        %v7199 = vadd.f32 %v6845, %v384
        %v7200 = vadd.f32 %v6934, %v385
        %v7201 = vadd.f32 %v7023, %v386
        %v7202 = vadd.f32 %v7112, %v387
        %v7203 = vadd.f32 %v6848, %v388
        %v7204 = vadd.f32 %v6937, %v389
        %v7205 = vadd.f32 %v7026, %v390
        %v7206 = vadd.f32 %v7115, %v391
        %v7207 = vadd.f32 %v6850, %v392
        %v7208 = vadd.f32 %v6939, %v393
        %v7209 = vadd.f32 %v7028, %v394
        %v7210 = vadd.f32 %v7117, %v395
        %v7211 = vadd.f32 %v6853, %v396
        %v7212 = vadd.f32 %v6942, %v397
        %v7213 = vadd.f32 %v7031, %v398
        %v7214 = vadd.f32 %v7120, %v399
        %v7215 = vadd.f32 %v6855, %v400
        %v7216 = vadd.f32 %v6944, %v401
        %v7217 = vadd.f32 %v7033, %v402
        %v7218 = vadd.f32 %v7122, %v403
        %v7219 = vadd.f32 %v6858, %v404
        %v7220 = vadd.f32 %v6947, %v405
        %v7221 = vadd.f32 %v7036, %v406
        %v7222 = vadd.f32 %v7125, %v407
        %v7223 = vadd.f32 %v6860, %v408
        %v7224 = vadd.f32 %v6949, %v409
        %v7225 = vadd.f32 %v7038, %v410
        %v7226 = vadd.f32 %v7127, %v411
        %v7227 = vadd.f32 %v6863, %v412
        %v7228 = vadd.f32 %v6952, %v413
        %v7229 = vadd.f32 %v7041, %v414
        %v7230 = vadd.f32 %v7130, %v415
        %v7231 = vadd.f32 %v6865, %v416
        %v7232 = vadd.f32 %v6954, %v417
        %v7233 = vadd.f32 %v7043, %v418
        %v7234 = vadd.f32 %v7132, %v419
        %v7235 = vadd.f32 %v6868, %v420
        %v7236 = vadd.f32 %v6957, %v421
        %v7237 = vadd.f32 %v7046, %v422
        %v7238 = vadd.f32 %v7135, %v423
        %v7239 = vadd.f32 %v6870, %v424
        %v7240 = vadd.f32 %v6959, %v425
        %v7241 = vadd.f32 %v7048, %v426
        %v7242 = vadd.f32 %v7137, %v427
        %v7243 = vadd.f32 %v6873, %v428
        %v7244 = vadd.f32 %v6962, %v429
        %v7245 = vadd.f32 %v7051, %v430
        %v7246 = vadd.f32 %v7140, %v431
        %v7247 = vadd.f32 %v6875, %v432
        %v7248 = vadd.f32 %v6964, %v433
        %v7249 = vadd.f32 %v7053, %v434
        %v7250 = vadd.f32 %v7142, %v435
        %v7251 = vadd.f32 %v6878, %v436
        %v7252 = vadd.f32 %v6967, %v437
        %v7253 = vadd.f32 %v7056, %v438
        %v7254 = vadd.f32 %v7145, %v439
        %v7255 = vadd.f32 %v6880, %v440
        %v7256 = vadd.f32 %v6969, %v441
        %v7257 = vadd.f32 %v7058, %v442
        %v7258 = vadd.f32 %v7147, %v443
        %v7259 = vadd.f32 %v6883, %v444
        %v7260 = vadd.f32 %v6972, %v445
        %v7261 = vadd.f32 %v7061, %v446
        %v7262 = vadd.f32 %v7150, %v447
        %v7263 = vadd.f32 %v6885, %v448
        %v7264 = vadd.f32 %v6974, %v449
        %v7265 = vadd.f32 %v7063, %v450
        %v7266 = vadd.f32 %v7152, %v451
        %v7267 = vadd.f32 %v6888, %v452
        %v7268 = vadd.f32 %v6977, %v453
        %v7269 = vadd.f32 %v7066, %v454
        %v7270 = vadd.f32 %v7155, %v455
        %v7271 = vadd.f32 %v6890, %v456
        %v7272 = vadd.f32 %v6979, %v457
        %v7273 = vadd.f32 %v7068, %v458
        %v7274 = vadd.f32 %v7157, %v459
        %v7275 = vadd.f32 %v6893, %v460
        %v7276 = vadd.f32 %v6982, %v461
        %v7277 = vadd.f32 %v7071, %v462
        %v7278 = vadd.f32 %v7160, %v463
        %v7279 = vadd.f32 %v6895, %v464
        %v7280 = vadd.f32 %v6984, %v465
        %v7281 = vadd.f32 %v7073, %v466
        %v7282 = vadd.f32 %v7162, %v467
        %v7283 = vadd.f32 %v6898, %v468
        %v7284 = vadd.f32 %v6987, %v469
        %v7285 = vadd.f32 %v7076, %v470
        %v7286 = vadd.f32 %v7165, %v471
        %v7287 = vadd.f32 %v6900, %v472
        %v7288 = vadd.f32 %v6989, %v473
        %v7289 = vadd.f32 %v7078, %v474
        %v7290 = vadd.f32 %v7167, %v475
        %v7291 = vadd.f32 %v6903, %v476
        %v7292 = vadd.f32 %v6992, %v477
        %v7293 = vadd.f32 %v7081, %v478
        %v7294 = vadd.f32 %v7170, %v479
        %v7295 = vadd.f32 %v6905, %v480
        %v7296 = vadd.f32 %v6994, %v481
        %v7297 = vadd.f32 %v7083, %v482
        %v7298 = vadd.f32 %v7172, %v483
        %v7299 = vadd.f32 %v6908, %v484
        %v7300 = vadd.f32 %v6997, %v485
        %v7301 = vadd.f32 %v7086, %v486
        %v7302 = vadd.f32 %v7175, %v487
        %v7303 = vadd.f32 %v6910, %v488
        %v7304 = vadd.f32 %v6999, %v489
        %v7305 = vadd.f32 %v7088, %v490
        %v7306 = vadd.f32 %v7177, %v491
        %v7307 = vmax.f32 %v7179, 0.0
        %v7308 = vmax.f32 %v7180, 0.0
        %v7309 = vmax.f32 %v7181, 0.0
        %v7310 = vmax.f32 %v7182, 0.0
        %v7311 = vmax.f32 %v7183, 0.0
        %v7312 = vmax.f32 %v7184, 0.0
        %v7313 = vmax.f32 %v7185, 0.0
        %v7314 = vmax.f32 %v7186, 0.0
        %v7315 = vmax.f32 %v7187, 0.0
        %v7316 = vmax.f32 %v7188, 0.0
        %v7317 = vmax.f32 %v7189, 0.0
        %v7318 = vmax.f32 %v7190, 0.0
        %v7319 = vmax.f32 %v7191, 0.0
        %v7320 = vmax.f32 %v7192, 0.0
        %v7321 = vmax.f32 %v7193, 0.0
        %v7322 = vmax.f32 %v7194, 0.0
        %v7323 = vmax.f32 %v7195, 0.0
        %v7324 = vmax.f32 %v7196, 0.0
        %v7325 = vmax.f32 %v7197, 0.0
        %v7326 = vmax.f32 %v7198, 0.0
        %v7327 = vmax.f32 %v7199, 0.0
        %v7328 = vmax.f32 %v7200, 0.0
        %v7329 = vmax.f32 %v7201, 0.0
        %v7330 = vmax.f32 %v7202, 0.0
        %v7331 = vmax.f32 %v7203, 0.0
        %v7332 = vmax.f32 %v7204, 0.0
        %v7333 = vmax.f32 %v7205, 0.0
        %v7334 = vmax.f32 %v7206, 0.0
        %v7335 = vmax.f32 %v7207, 0.0
        %v7336 = vmax.f32 %v7208, 0.0
        %v7337 = vmax.f32 %v7209, 0.0
        %v7338 = vmax.f32 %v7210, 0.0
        %v7339 = vmax.f32 %v7211, 0.0
        %v7340 = vmax.f32 %v7212, 0.0
        %v7341 = vmax.f32 %v7213, 0.0
        %v7342 = vmax.f32 %v7214, 0.0
        %v7343 = vmax.f32 %v7215, 0.0
        %v7344 = vmax.f32 %v7216, 0.0
        %v7345 = vmax.f32 %v7217, 0.0
        %v7346 = vmax.f32 %v7218, 0.0
        %v7347 = vmax.f32 %v7219, 0.0
        %v7348 = vmax.f32 %v7220, 0.0
        %v7349 = vmax.f32 %v7221, 0.0
        %v7350 = vmax.f32 %v7222, 0.0
        %v7351 = vmax.f32 %v7223, 0.0
        %v7352 = vmax.f32 %v7224, 0.0
        %v7353 = vmax.f32 %v7225, 0.0
        %v7354 = vmax.f32 %v7226, 0.0
        %v7355 = vmax.f32 %v7227, 0.0
        %v7356 = vmax.f32 %v7228, 0.0
        %v7357 = vmax.f32 %v7229, 0.0
        %v7358 = vmax.f32 %v7230, 0.0
        %v7359 = vmax.f32 %v7231, 0.0
        %v7360 = vmax.f32 %v7232, 0.0
        %v7361 = vmax.f32 %v7233, 0.0
        %v7362 = vmax.f32 %v7234, 0.0
        %v7363 = vmax.f32 %v7235, 0.0
        %v7364 = vmax.f32 %v7236, 0.0
        %v7365 = vmax.f32 %v7237, 0.0
        %v7366 = vmax.f32 %v7238, 0.0
        %v7367 = vmax.f32 %v7239, 0.0
        %v7368 = vmax.f32 %v7240, 0.0
        %v7369 = vmax.f32 %v7241, 0.0
        %v7370 = vmax.f32 %v7242, 0.0
        %v7371 = vmax.f32 %v7243, 0.0
        %v7372 = vmax.f32 %v7244, 0.0
        %v7373 = vmax.f32 %v7245, 0.0
        %v7374 = vmax.f32 %v7246, 0.0
        %v7375 = vmax.f32 %v7247, 0.0
        %v7376 = vmax.f32 %v7248, 0.0
        %v7377 = vmax.f32 %v7249, 0.0
        %v7378 = vmax.f32 %v7250, 0.0
        %v7379 = vmax.f32 %v7251, 0.0
        %v7380 = vmax.f32 %v7252, 0.0
        %v7381 = vmax.f32 %v7253, 0.0
        %v7382 = vmax.f32 %v7254, 0.0
        %v7383 = vmax.f32 %v7255, 0.0
        %v7384 = vmax.f32 %v7256, 0.0
        %v7385 = vmax.f32 %v7257, 0.0
        %v7386 = vmax.f32 %v7258, 0.0
        %v7387 = vmax.f32 %v7259, 0.0
        %v7388 = vmax.f32 %v7260, 0.0
        %v7389 = vmax.f32 %v7261, 0.0
        %v7390 = vmax.f32 %v7262, 0.0
        %v7391 = vmax.f32 %v7263, 0.0
        %v7392 = vmax.f32 %v7264, 0.0
        %v7393 = vmax.f32 %v7265, 0.0
        %v7394 = vmax.f32 %v7266, 0.0
        %v7395 = vmax.f32 %v7267, 0.0
        %v7396 = vmax.f32 %v7268, 0.0
        %v7397 = vmax.f32 %v7269, 0.0
        %v7398 = vmax.f32 %v7270, 0.0
        %v7399 = vmax.f32 %v7271, 0.0
        %v7400 = vmax.f32 %v7272, 0.0
        %v7401 = vmax.f32 %v7273, 0.0
        %v7402 = vmax.f32 %v7274, 0.0
        %v7403 = vmax.f32 %v7275, 0.0
        %v7404 = vmax.f32 %v7276, 0.0
        %v7405 = vmax.f32 %v7277, 0.0
        %v7406 = vmax.f32 %v7278, 0.0
        %v7407 = vmax.f32 %v7279, 0.0
        %v7408 = vmax.f32 %v7280, 0.0
        %v7409 = vmax.f32 %v7281, 0.0
        %v7410 = vmax.f32 %v7282, 0.0
        %v7411 = vmax.f32 %v7283, 0.0
        %v7412 = vmax.f32 %v7284, 0.0
        %v7413 = vmax.f32 %v7285, 0.0
        %v7414 = vmax.f32 %v7286, 0.0
        %v7415 = vmax.f32 %v7287, 0.0
        %v7416 = vmax.f32 %v7288, 0.0
        %v7417 = vmax.f32 %v7289, 0.0
        %v7418 = vmax.f32 %v7290, 0.0
        %v7419 = vmax.f32 %v7291, 0.0
        %v7420 = vmax.f32 %v7292, 0.0
        %v7421 = vmax.f32 %v7293, 0.0
        %v7422 = vmax.f32 %v7294, 0.0
        %v7423 = vmax.f32 %v7295, 0.0
        %v7424 = vmax.f32 %v7296, 0.0
        %v7425 = vmax.f32 %v7297, 0.0
        %v7426 = vmax.f32 %v7298, 0.0
        %v7427 = vmax.f32 %v7299, 0.0
        %v7428 = vmax.f32 %v7300, 0.0
        %v7429 = vmax.f32 %v7301, 0.0
        %v7430 = vmax.f32 %v7302, 0.0
        %v7431 = vmax.f32 %v7303, 0.0
        %v7432 = vmax.f32 %v7304, 0.0
        %v7433 = vmax.f32 %v7305, 0.0
        %v7434 = vmax.f32 %v7306, 0.0
        %7435 = vst [vmem:[%s362] sm:$0xff] %v7307
        %7436 = vst [vmem:[%s362 + $0x8] sm:$0xff] %v7308
        %7437 = vst [vmem:[%s362 + $0x10] sm:$0xff] %v7309
        %7438 = vst [vmem:[%s362 + $0x18] sm:$0xff] %v7310
        %7439 = vst [vmem:[%s362 + $0x20] sm:$0xff] %v7311
        %7440 = vst [vmem:[%s362 + $0x28] sm:$0xff] %v7312
        %7441 = vst [vmem:[%s362 + $0x30] sm:$0xff] %v7313
        %7442 = vst [vmem:[%s362 + $0x38] sm:$0xff] %v7314
        %7443 = vst [vmem:[%s362 + $0x40] sm:$0xff] %v7315
        %7444 = vst [vmem:[%s362 + $0x48] sm:$0xff] %v7316
        %7445 = vst [vmem:[%s362 + $0x50] sm:$0xff] %v7317
        %7446 = vst [vmem:[%s362 + $0x58] sm:$0xff] %v7318
        %7447 = vst [vmem:[%s362 + $0x60] sm:$0xff] %v7319
        %7448 = vst [vmem:[%s362 + $0x68] sm:$0xff] %v7320
        %7449 = vst [vmem:[%s362 + $0x70] sm:$0xff] %v7321
        %7450 = vst [vmem:[%s362 + $0x78] sm:$0xff] %v7322
        %7451 = vst [vmem:[%s362 + $0x80] sm:$0xff] %v7323
        %7452 = vst [vmem:[%s362 + $0x88] sm:$0xff] %v7324
        %7453 = vst [vmem:[%s362 + $0x90] sm:$0xff] %v7325
        %7454 = vst [vmem:[%s362 + $0x98] sm:$0xff] %v7326
        %7455 = vst [vmem:[%s362 + $0xa0] sm:$0xff] %v7327
        %7456 = vst [vmem:[%s362 + $0xa8] sm:$0xff] %v7328
        %7457 = vst [vmem:[%s362 + $0xb0] sm:$0xff] %v7329
        %7458 = vst [vmem:[%s362 + $0xb8] sm:$0xff] %v7330
        %7459 = vst [vmem:[%s362 + $0xc0] sm:$0xff] %v7331
        %7460 = vst [vmem:[%s362 + $0xc8] sm:$0xff] %v7332
        %7461 = vst [vmem:[%s362 + $0xd0] sm:$0xff] %v7333
        %7462 = vst [vmem:[%s362 + $0xd8] sm:$0xff] %v7334
        %7463 = vst [vmem:[%s362 + $0xe0] sm:$0xff] %v7335
        %7464 = vst [vmem:[%s362 + $0xe8] sm:$0xff] %v7336
        %7465 = vst [vmem:[%s362 + $0xf0] sm:$0xff] %v7337
        %7466 = vst [vmem:[%s362 + $0xf8] sm:$0xff] %v7338
        %7467 = vst [vmem:[%s362 + $0x100] sm:$0xff] %v7339
        %7468 = vst [vmem:[%s362 + $0x108] sm:$0xff] %v7340
        %7469 = vst [vmem:[%s362 + $0x110] sm:$0xff] %v7341
        %7470 = vst [vmem:[%s362 + $0x118] sm:$0xff] %v7342
        %7471 = vst [vmem:[%s362 + $0x120] sm:$0xff] %v7343
        %7472 = vst [vmem:[%s362 + $0x128] sm:$0xff] %v7344
        %7473 = vst [vmem:[%s362 + $0x130] sm:$0xff] %v7345
        %7474 = vst [vmem:[%s362 + $0x138] sm:$0xff] %v7346
        %7475 = vst [vmem:[%s362 + $0x140] sm:$0xff] %v7347
        %7476 = vst [vmem:[%s362 + $0x148] sm:$0xff] %v7348
        %7477 = vst [vmem:[%s362 + $0x150] sm:$0xff] %v7349
        %7478 = vst [vmem:[%s362 + $0x158] sm:$0xff] %v7350
        %7479 = vst [vmem:[%s362 + $0x160] sm:$0xff] %v7351
        %7480 = vst [vmem:[%s362 + $0x168] sm:$0xff] %v7352
        %7481 = vst [vmem:[%s362 + $0x170] sm:$0xff] %v7353
        %7482 = vst [vmem:[%s362 + $0x178] sm:$0xff] %v7354
        %7483 = vst [vmem:[%s362 + $0x180] sm:$0xff] %v7355
        %7484 = vst [vmem:[%s362 + $0x188] sm:$0xff] %v7356
        %7485 = vst [vmem:[%s362 + $0x190] sm:$0xff] %v7357
        %7486 = vst [vmem:[%s362 + $0x198] sm:$0xff] %v7358
        %7487 = vst [vmem:[%s362 + $0x1a0] sm:$0xff] %v7359
        %7488 = vst [vmem:[%s362 + $0x1a8] sm:$0xff] %v7360
        %7489 = vst [vmem:[%s362 + $0x1b0] sm:$0xff] %v7361
        %7490 = vst [vmem:[%s362 + $0x1b8] sm:$0xff] %v7362
        %7491 = vst [vmem:[%s362 + $0x1c0] sm:$0xff] %v7363
        %7492 = vst [vmem:[%s362 + $0x1c8] sm:$0xff] %v7364
        %7493 = vst [vmem:[%s362 + $0x1d0] sm:$0xff] %v7365
        %7494 = vst [vmem:[%s362 + $0x1d8] sm:$0xff] %v7366
        %7495 = vst [vmem:[%s362 + $0x1e0] sm:$0xff] %v7367
        %7496 = vst [vmem:[%s362 + $0x1e8] sm:$0xff] %v7368
        %7497 = vst [vmem:[%s362 + $0x1f0] sm:$0xff] %v7369
        %7498 = vst [vmem:[%s362 + $0x1f8] sm:$0xff] %v7370
        %7499 = vst [vmem:[%s362 + $0x200] sm:$0xff] %v7371
        %7500 = vst [vmem:[%s362 + $0x208] sm:$0xff] %v7372
        %7501 = vst [vmem:[%s362 + $0x210] sm:$0xff] %v7373
        %7502 = vst [vmem:[%s362 + $0x218] sm:$0xff] %v7374
        %7503 = vst [vmem:[%s362 + $0x220] sm:$0xff] %v7375
        %7504 = vst [vmem:[%s362 + $0x228] sm:$0xff] %v7376
        %7505 = vst [vmem:[%s362 + $0x230] sm:$0xff] %v7377
        %7506 = vst [vmem:[%s362 + $0x238] sm:$0xff] %v7378
        %7507 = vst [vmem:[%s362 + $0x240] sm:$0xff] %v7379
        %7508 = vst [vmem:[%s362 + $0x248] sm:$0xff] %v7380
        %7509 = vst [vmem:[%s362 + $0x250] sm:$0xff] %v7381
        %7510 = vst [vmem:[%s362 + $0x258] sm:$0xff] %v7382
        %7511 = vst [vmem:[%s362 + $0x260] sm:$0xff] %v7383
        %7512 = vst [vmem:[%s362 + $0x268] sm:$0xff] %v7384
        %7513 = vst [vmem:[%s362 + $0x270] sm:$0xff] %v7385
        %7514 = vst [vmem:[%s362 + $0x278] sm:$0xff] %v7386
        %7515 = vst [vmem:[%s362 + $0x280] sm:$0xff] %v7387
        %7516 = vst [vmem:[%s362 + $0x288] sm:$0xff] %v7388
        %7517 = vst [vmem:[%s362 + $0x290] sm:$0xff] %v7389
        %7518 = vst [vmem:[%s362 + $0x298] sm:$0xff] %v7390
        %7519 = vst [vmem:[%s362 + $0x2a0] sm:$0xff] %v7391
        %7520 = vst [vmem:[%s362 + $0x2a8] sm:$0xff] %v7392
        %7521 = vst [vmem:[%s362 + $0x2b0] sm:$0xff] %v7393
        %7522 = vst [vmem:[%s362 + $0x2b8] sm:$0xff] %v7394
        %7523 = vst [vmem:[%s362 + $0x2c0] sm:$0xff] %v7395
        %7524 = vst [vmem:[%s362 + $0x2c8] sm:$0xff] %v7396
        %7525 = vst [vmem:[%s362 + $0x2d0] sm:$0xff] %v7397
        %7526 = vst [vmem:[%s362 + $0x2d8] sm:$0xff] %v7398
        %7527 = vst [vmem:[%s362 + $0x2e0] sm:$0xff] %v7399
        %7528 = vst [vmem:[%s362 + $0x2e8] sm:$0xff] %v7400
        %7529 = vst [vmem:[%s362 + $0x2f0] sm:$0xff] %v7401
        %7530 = vst [vmem:[%s362 + $0x2f8] sm:$0xff] %v7402
        %7531 = vst [vmem:[%s362 + $0x300] sm:$0xff] %v7403
        %7532 = vst [vmem:[%s362 + $0x308] sm:$0xff] %v7404
        %7533 = vst [vmem:[%s362 + $0x310] sm:$0xff] %v7405
        %7534 = vst [vmem:[%s362 + $0x318] sm:$0xff] %v7406
        %7535 = vst [vmem:[%s362 + $0x320] sm:$0xff] %v7407
        %7536 = vst [vmem:[%s362 + $0x328] sm:$0xff] %v7408
        %7537 = vst [vmem:[%s362 + $0x330] sm:$0xff] %v7409
        %7538 = vst [vmem:[%s362 + $0x338] sm:$0xff] %v7410
        %7539 = vst [vmem:[%s362 + $0x340] sm:$0xff] %v7411
        %7540 = vst [vmem:[%s362 + $0x348] sm:$0xff] %v7412
        %7541 = vst [vmem:[%s362 + $0x350] sm:$0xff] %v7413
        %7542 = vst [vmem:[%s362 + $0x358] sm:$0xff] %v7414
        %7543 = vst [vmem:[%s362 + $0x360] sm:$0xff] %v7415
        %7544 = vst [vmem:[%s362 + $0x368] sm:$0xff] %v7416
        %7545 = vst [vmem:[%s362 + $0x370] sm:$0xff] %v7417
        %7546 = vst [vmem:[%s362 + $0x378] sm:$0xff] %v7418
        %7547 = vst [vmem:[%s362 + $0x380] sm:$0xff] %v7419
        %7548 = vst [vmem:[%s362 + $0x388] sm:$0xff] %v7420
        %7549 = vst [vmem:[%s362 + $0x390] sm:$0xff] %v7421
        %7550 = vst [vmem:[%s362 + $0x398] sm:$0xff] %v7422
        %7551 = vst [vmem:[%s362 + $0x3a0] sm:$0xff] %v7423
        %7552 = vst [vmem:[%s362 + $0x3a8] sm:$0xff] %v7424
        %7553 = vst [vmem:[%s362 + $0x3b0] sm:$0xff] %v7425
        %7554 = vst [vmem:[%s362 + $0x3b8] sm:$0xff] %v7426
        %7555 = vst [vmem:[%s362 + $0x3c0] sm:$0xff] %v7427
        %7556 = vst [vmem:[%s362 + $0x3c8] sm:$0xff] %v7428
        %7557 = vst [vmem:[%s362 + $0x3d0] sm:$0xff] %v7429
        %7558 = vst [vmem:[%s362 + $0x3d8] sm:$0xff] %v7430
        %7559 = vst [vmem:[%s362 + $0x3e0] sm:$0xff] %v7431
        %7560 = vst [vmem:[%s362 + $0x3e8] sm:$0xff] %v7432
        %7561 = vst [vmem:[%s362 + $0x3f0] sm:$0xff] %v7433
        %7562 = vst [vmem:[%s362 + $0x3f8] sm:$0xff] %v7434
        %s7563 = sand.u32 %s186, 1
        %s7564 = scalar_lea.sflag [#allocation6], %s7563
        %s7565 = sand.u32 %s186, 1
        %s7566 = smul.addr %s7565, 1024
        %s7567 = scalar_lea.vmem [#allocation13], %s7566
        // Predicated region
        $region69: #{tpu_custom_call.1} parent=47 // pred_check
          %p7568 = pneg %p196
        $region70: #{tpu_custom_call.1} parent=47 // pred_check_branch
          %7570 = sbr.rel (%p7568) target = $region72
        $region71: #{tpu_custom_call.1} parent=47 // pred_region
          %7572 = vsyncadd %s7564, 0
          %s7573 = smul.addr %s26, 128
          %s7574 = smul.addr %s7573, 8
          %s7575 = scalar_lea.hbm %s7, %s7574
          %s7576 = sshll.u32 %s7567, 4
          %s7577 = int_to_ptr.vmem [resolvable:$true] %s7576
          %s7578 = sshll.u32 %s7575, 4
          %s7579 = int_to_ptr.hbm [resolvable:$true] %s7578
          %7584 = dma.vmem_to_hbm [thread:$0]  %s7577, 16384, %s7579, %s7564, 512, 512, 32
        $region72: #{tpu_custom_call.1} parent=47 // pred_fallthru
          _
      $region48: #{tpu_custom_call.1} parent=5 // pred_fallthru
        _
      %p7585 = scmp.le.s32.totalorder 2, %s21
      // Predicated region
      $region73: #{tpu_custom_call.1} parent=5 // pred_check
        %p7586 = pneg %p7585
      $region74: #{tpu_custom_call.1} parent=5 // pred_check_branch
        %7588 = sbr.rel (%p7586) target = $region76
      $region75: #{tpu_custom_call.1} parent=5 // pred_region
        %s7589 = ssub.s32 %s21, 2
        // Predicated region
        $region77: #{tpu_custom_call.1} parent=75 // pred_check
          %p7590 = pneg %p202
        $region78: #{tpu_custom_call.1} parent=75 // pred_check_branch
          %7592 = sbr.rel (%p7590) target = $region80
        $region79: #{tpu_custom_call.1} parent=75 // pred_region
          %s7593 = sand.u32 %s187, 1
          %s7594 = scalar_lea.sflag [#allocation6], %s7593
          %s7595 = sand.u32 %s187, 1
          %s7596 = smul.addr %s7595, 1024
          %s7597 = scalar_lea.vmem [#allocation13], %s7596
          %7599 = dma.done %s7594, 16384
        $region80: #{tpu_custom_call.1} parent=75 // pred_fallthru
          _
      $region76: #{tpu_custom_call.1} parent=5 // pred_fallthru
        _
    $region6: #{tpu_custom_call.1} parent=1 // loop_footer
      %s25 = sadd.s32 1, %s21
    $region7: #{tpu_custom_call.1} parent=1 // loop_footer_branch
      %20 = sbr.rel target = $region3
    $region8: #{tpu_custom_call.1} parent=1 // loop_exit
      _
    %7600 = vsyncpa [#allocation5], 1
    %s7601 = scalar_lea.sflag [#allocation5], 1
    %7602 = vsyncpa %s7601, 1
    %7603 = vsyncpa [#allocation8], 1
    %7604 = vsyncpa [#allocation11], 1
    %7605 = vsyncpa [#allocation6], 1
    %s7606 = scalar_lea.sflag [#allocation6], 1
    %7607 = vsyncpa %s7606, 1

</llo_original>
